<compile_context>
chip_gen: v6e
topology: v6e:2x2x1
jax: 0.10.0
libtpu: 0.0.40
codegen_flags: <defaults>
</compile_context>

<pallas_src>
import jax
import jax.numpy as jnp
import numpy as np
from jax import lax
from jax.experimental import pallas as pl
from jax.experimental.pallas import tpu as pltpu

# ---------------- model hyper-parameters (small, consistent with forward) ------
VOCAB = 100          # input_dim (shrunk from 44800)
HIDDEN = 32          # hidden_size
NUM_LAYERS = 3
NUM_HEADS = 4        # head_dim = 8
FF_SIZE = 64
MAX_LEN = 16
BATCH = 2
SEQ = 8
LN_EPS = 1e-5


# ---------------------------------------------------------------------------
# ONE fused Pallas kernel: embedding + 3 encoder layers + pooled fc head
# ---------------------------------------------------------------------------
def fused_forward_kernel(src_ref, seg_ref,                       # SMEM int ids
                         emb_ref, pos_ref, segtab_ref, pool_ref,  # tables
                         wqkv_ref, bqkv_ref, wo_ref, bo_ref,      # stacked (L,...)
                         g1_ref, bt1_ref, w1_ref, b1_ref,
                         w2_ref, b2_ref, g2_ref, bt2_ref,
                         fcw1_ref, fcb1_ref, fcw2_ref, fcb2_ref,  # head
                         enc_ref, score_ref,                      # outputs
                         x_scratch):                              # VMEM scratch
    B, S = src_ref.shape
    BS, H = x_scratch.shape
    NH = NUM_HEADS
    HD = H // NH
    scale = 1.0 / jnp.sqrt(jnp.float32(HD))

    # ---- embedding: token + positional + segment, gathered in-kernel --------
    # (ids are scalars in SMEM; tables are VMEM-resident; rows assembled into
    #  a (B*S, H) VMEM scratch -> no XLA-side gather, no extra HBM round trip)
    for b in range(B):
        for s in range(S):
            tok = src_ref[b, s]
            sg = seg_ref[b, s]
            row = (emb_ref[pl.ds(tok, 1), :]
                   + pos_ref[pl.ds(s, 1), :]
                   + segtab_ref[pl.ds(sg, 1), :])
            x_scratch[pl.ds(b * S + s, 1), :] = row

    x = x_scratch[...]                      # (B*S, H), stays VMEM/vreg resident

    def layer_norm(v, g, beta):
        mu = jnp.mean(v, axis=-1, keepdims=True)
        var = jnp.mean((v - mu) ** 2, axis=-1, keepdims=True)
        return (v - mu) * lax.rsqrt(var + LN_EPS) * g + beta

    # ---- encoder layers: static unroll, weights indexed by static layer id --
    for l in range(NUM_LAYERS):
        # fused QKV projection: one (B*S, H) x (H, 3H) matmul
        qkv = jnp.dot(x, wqkv_ref[l],
                      preferred_element_type=jnp.float32) + bqkv_ref[l]
        q = qkv[:, 0 * H:1 * H].reshape(B, S, H)
        k = qkv[:, 1 * H:2 * H].reshape(B, S, H)
        v = qkv[:, 2 * H:3 * H].reshape(B, S, H)

        # multi-head scaled dot-product attention, batched over B per head
        # (src_mask=None -> no additive mask)
        head_outs = []
        for h in range(NH):
            sl = slice(h * HD, (h + 1) * HD)
            qh, kh, vh = q[..., sl], k[..., sl], v[..., sl]
            sc = jnp.einsum("bqd,bkd->bqk", qh, kh,
                            preferred_element_type=jnp.float32) * scale
            sc = sc - jnp.max(sc, axis=-1, keepdims=True)
            p = jnp.exp(sc)
            p = p / jnp.sum(p, axis=-1, keepdims=True)
            o_h = jnp.einsum("bqk,bkd->bqd", p, vh,
                             preferred_element_type=jnp.float32)
            head_outs.append(o_h.reshape(BS, HD))
        attn = jnp.concatenate(head_outs, axis=-1)               # (B*S, H)
        attn = jnp.dot(attn, wo_ref[l],
                       preferred_element_type=jnp.float32) + bo_ref[l]

        # residual + LayerNorm 1
        y = layer_norm(x + attn, g1_ref[l], bt1_ref[l])

        # feed-forward: Linear -> ReLU -> Linear
        f = jnp.dot(y, w1_ref[l], preferred_element_type=jnp.float32) + b1_ref[l]
        f = jnp.maximum(f, 0.0)
        f = jnp.dot(f, w2_ref[l], preferred_element_type=jnp.float32) + b2_ref[l]

        # residual + LayerNorm 2
        x = layer_norm(y + f, g2_ref[l], bt2_ref[l])

    # encoder output (== BERTorGPTBase.forward return value)
    enc_ref[...] = x.reshape(B, S, H)

    # ---- regression head: mean-pool over seq (as a matmul) + fc MLP ---------
    pooled = jnp.dot(pool_ref[...], x, preferred_element_type=jnp.float32)  # (B, H)
    hid = jnp.dot(pooled, fcw1_ref[...],
                  preferred_element_type=jnp.float32) + fcb1_ref[...]
    hid = jnp.maximum(hid, 0.0)
    score_ref[...] = jnp.dot(hid, fcw2_ref[...],
                             preferred_element_type=jnp.float32) + fcb2_ref[...]


def bert_or_gpt_forward(params, src, seg_seq):
    B, S = src.shape
    H = HIDDEN
    BS = B * S

    # mean-pool over sequence expressed as a tiny (B, B*S) matmul (lane/MXU
    # friendly; avoids in-kernel cross-sublane reductions).  Layout plumbing only.
    pool = jnp.kron(jnp.eye(B, dtype=jnp.float32),
                    jnp.full((1, S), 1.0 / S, dtype=jnp.float32))   # (B, B*S)

    smem = pl.BlockSpec(memory_space=pltpu.MemorySpace.SMEM)
    vmem = pl.BlockSpec(memory_space=pltpu.MemorySpace.VMEM)

    in_specs = [smem, smem] + [vmem] * 20
    out_shape = (jax.ShapeDtypeStruct((B, S, H), jnp.float32),   # encoder output
                 jax.ShapeDtypeStruct((B, 1), jnp.float32))      # regression head
    out_specs = (vmem, vmem)

    enc, score = pl.pallas_call(
        fused_forward_kernel,
        out_shape=out_shape,
        in_specs=in_specs,
        out_specs=out_specs,
        scratch_shapes=[pltpu.VMEM((BS, H), jnp.float32)],
    )(src, seg_seq,
      params["emb"], params["pos"], params["seg"], pool,
      params["wqkv"], params["bqkv"], params["wo"], params["bo"],
      params["g1"], params["bt1"], params["w1"], params["b1"],
      params["w2"], params["b2"], params["g2"], params["bt2"],
      params["fc_w1"], params["fc_b1"], params["fc_w2"], params["fc_b2"])
    return enc, score.reshape(-1)


# ---------------------------------------------------------------------------
# Parameters (deterministic init in-script; per-layer weights stacked on L)
# ---------------------------------------------------------------------------
def init_params(key):
    keys = iter(jax.random.split(key, 24))
    nrm = lambda shape, s=0.05: (s * jax.random.normal(next(keys), shape)
                                 ).astype(jnp.float32)
    L = NUM_LAYERS
    return {
        "emb": jax.random.normal(next(keys), (VOCAB, HIDDEN), jnp.float32),
        "pos": jnp.zeros((MAX_LEN, HIDDEN), jnp.float32),     # torch.zeros init
        "seg": jax.random.normal(next(keys), (2, HIDDEN), jnp.float32),
        # encoder layers, stacked with a leading layer dim (fused QKV weights)
        "wqkv": nrm((L, HIDDEN, 3 * HIDDEN)), "bqkv": nrm((L, 1, 3 * HIDDEN)),
        "wo":   nrm((L, HIDDEN, HIDDEN)),     "bo":   nrm((L, 1, HIDDEN)),
        "g1":  jnp.ones((L, 1, HIDDEN), jnp.float32),
        "bt1": jnp.zeros((L, 1, HIDDEN), jnp.float32),
        "w1":  nrm((L, HIDDEN, FF_SIZE)),     "b1":   nrm((L, 1, FF_SIZE)),
        "w2":  nrm((L, FF_SIZE, HIDDEN)),     "b2":   nrm((L, 1, HIDDEN)),
        "g2":  jnp.ones((L, 1, HIDDEN), jnp.float32),
        "bt2": jnp.zeros((L, 1, HIDDEN), jnp.float32),
        # regression head
        "fc_w1": nrm((HIDDEN, HIDDEN)), "fc_b1": nrm((1, HIDDEN)),
        "fc_w2": nrm((HIDDEN, 1)),      "fc_b2": nrm((1, 1)),
    }


# ---------------------------------------------------------------------------
# Pure-JAX reference for verification
# ---------------------------------------------------------------------------
def reference_forward(params, src, seg_seq):
    B, S = src.shape
    x = (params["emb"][src] + params["pos"][None, :S, :]
         + params["seg"][seg_seq]).astype(jnp.float32)
    hd = HIDDEN // NUM_HEADS
    scale = 1.0 / np.sqrt(hd)

    def ln(v, g, b):
        mu = jnp.mean(v, axis=-1, keepdims=True)
        var = jnp.mean((v - mu) ** 2, axis=-1, keepdims=True)
        return (v - mu) / jnp.sqrt(var + LN_EPS) * g + b

    for l in range(NUM_LAYERS):
        wq, wk, wv = jnp.split(params["wqkv"][l], 3, axis=1)
        bq, bk, bv = jnp.split(params["bqkv"][l], 3, axis=1)
        q = x @ wq + bq
        k = x @ wk + bk
        v = x @ wv + bv
        q = q.reshape(B, S, NUM_HEADS, hd).transpose(0, 2, 1, 3)
        k = k.reshape(B, S, NUM_HEADS, hd).transpose(0, 2, 1, 3)
        v = v.reshape(B, S, NUM_HEADS, hd).transpose(0, 2, 1, 3)
        s = jnp.einsum("bhqd,bhkd->bhqk", q, k) * scale
        p = jax.nn.softmax(s, axis=-1)
        a = jnp.einsum("bhqk,bhkd->bhqd", p, v)
        a = a.transpose(0, 2, 1, 3).reshape(B, S, HIDDEN)
        a = a @ params["wo"][l] + params["bo"][l]
        y = ln(x + a, params["g1"][l], params["bt1"][l])
        f = (jnp.maximum(y @ params["w1"][l] + params["b1"][l], 0.0)
             @ params["w2"][l] + params["b2"][l])
        x = ln(y + f, params["g2"][l], params["bt2"][l])

    pooled = x.mean(axis=1)
    h = jnp.maximum(pooled @ params["fc_w1"] + params["fc_b1"], 0.0)
    score = (h @ params["fc_w2"] + params["fc_b2"]).reshape(-1)
    return x, score


if __name__ == "__main__":
    key = jax.random.PRNGKey(0)
    k_params, k_src, k_seg = jax.random.split(key, 3)

    params = init_params(k_params)
    src = jax.random.randint(k_src, (BATCH, SEQ), 0, VOCAB, dtype=jnp.int32)
    seg_seq = jax.random.randint(k_seg, (BATCH, SEQ), 0, 2, dtype=jnp.int32)

    enc, score = bert_or_gpt_forward(params, src, seg_seq)
    enc = jax.block_until_ready(enc)
    score = jax.block_until_ready(score)

    enc_ref, score_ref = reference_forward(params, src, seg_seq)
    enc_ref = jax.block_until_ready(enc_ref)
    score_ref = jax.block_until_ready(score_ref)

    assert enc.shape == (BATCH, SEQ, HIDDEN), enc.shape
    assert score.shape == (BATCH,), score.shape
    np.testing.assert_allclose(np.asarray(enc), np.asarray(enc_ref),
                               rtol=1e-4, atol=1e-4)
    np.testing.assert_allclose(np.asarray(score), np.asarray(score_ref),
                               rtol=1e-4, atol=1e-4)
    print("KERNEL_OK")
</pallas_src>

<mosaic_0001>
module attributes {stable_mosaic.version = 11 : i64} {
  func.func @fused_forward_kernel(%arg0: memref<2x8xi32, #tpu.memory_space<smem>>, %arg1: memref<2x8xi32, #tpu.memory_space<smem>>, %arg2: memref<100x32xf32, #tpu.memory_space<vmem>>, %arg3: memref<16x32xf32, #tpu.memory_space<vmem>>, %arg4: memref<2x32xf32, #tpu.memory_space<vmem>>, %arg5: memref<2x16xf32, #tpu.memory_space<vmem>>, %arg6: memref<3x32x96xf32, #tpu.memory_space<vmem>>, %arg7: memref<3x1x96xf32, #tpu.memory_space<vmem>>, %arg8: memref<3x32x32xf32, #tpu.memory_space<vmem>>, %arg9: memref<3x1x32xf32, #tpu.memory_space<vmem>>, %arg10: memref<3x1x32xf32, #tpu.memory_space<vmem>>, %arg11: memref<3x1x32xf32, #tpu.memory_space<vmem>>, %arg12: memref<3x32x64xf32, #tpu.memory_space<vmem>>, %arg13: memref<3x1x64xf32, #tpu.memory_space<vmem>>, %arg14: memref<3x64x32xf32, #tpu.memory_space<vmem>>, %arg15: memref<3x1x32xf32, #tpu.memory_space<vmem>>, %arg16: memref<3x1x32xf32, #tpu.memory_space<vmem>>, %arg17: memref<3x1x32xf32, #tpu.memory_space<vmem>>, %arg18: memref<32x32xf32, #tpu.memory_space<vmem>>, %arg19: memref<1x32xf32, #tpu.memory_space<vmem>>, %arg20: memref<32x1xf32, #tpu.memory_space<vmem>>, %arg21: memref<1x1xf32, #tpu.memory_space<vmem>>, %arg22: memref<2x8x32xf32, #tpu.memory_space<vmem>>, %arg23: memref<2x1xf32, #tpu.memory_space<vmem>>, %arg24: memref<16x32xf32, #tpu.memory_space<vmem>>) attributes {dimension_semantics = [], scalar_prefetch = 0 : i64, scratch_operands = 1 : i64, tpu.core_type = #tpu.core_type<tc>} {
    %cst = arith.constant 8.000000e+00 : f32
    %0 = math.sqrt %cst : f32
    %cst_0 = arith.constant 1.000000e+00 : f32
    %1 = arith.divf %cst_0, %0 : f32
    %c0 = arith.constant 0 : index
    %c0_1 = arith.constant 0 : index
    %2 = memref.load %arg0[%c0, %c0_1] : memref<2x8xi32, #tpu.memory_space<smem>>
    %c0_2 = arith.constant 0 : index
    %c0_3 = arith.constant 0 : index
    %3 = memref.load %arg1[%c0_2, %c0_3] : memref<2x8xi32, #tpu.memory_space<smem>>
    %4 = arith.index_cast %2 : i32 to index
    %c0_4 = arith.constant 0 : index
    %5 = vector.load %arg2[%4, %c0_4] : memref<100x32xf32, #tpu.memory_space<vmem>>, vector<1x32xf32>
    %c0_5 = arith.constant 0 : index
    %c0_6 = arith.constant 0 : index
    %6 = vector.load %arg3[%c0_5, %c0_6] : memref<16x32xf32, #tpu.memory_space<vmem>>, vector<1x32xf32>
    %7 = arith.addf %5, %6 : vector<1x32xf32>
    %8 = arith.index_cast %3 : i32 to index
    %c0_7 = arith.constant 0 : index
    %9 = vector.load %arg4[%8, %c0_7] : memref<2x32xf32, #tpu.memory_space<vmem>>, vector<1x32xf32>
    %10 = arith.addf %7, %9 : vector<1x32xf32>
    %c0_8 = arith.constant 0 : index
    %c0_9 = arith.constant 0 : index
    %11 = vector.load %arg24[%c0_8, %c0_9] : memref<16x32xf32, #tpu.memory_space<vmem>>, vector<1x32xf32>
    tpu.vector_store %arg24[%c0_8, %c0_9], %10 {strides = array<i32>} : memref<16x32xf32, #tpu.memory_space<vmem>>, vector<1x32xf32>,
    %c0_10 = arith.constant 0 : index
    %c1 = arith.constant 1 : index
    %12 = memref.load %arg0[%c0_10, %c1] : memref<2x8xi32, #tpu.memory_space<smem>>
    %c0_11 = arith.constant 0 : index
    %c1_12 = arith.constant 1 : index
    %13 = memref.load %arg1[%c0_11, %c1_12] : memref<2x8xi32, #tpu.memory_space<smem>>
    %14 = arith.index_cast %12 : i32 to index
    %c0_13 = arith.constant 0 : index
    %15 = vector.load %arg2[%14, %c0_13] : memref<100x32xf32, #tpu.memory_space<vmem>>, vector<1x32xf32>
    %c1_14 = arith.constant 1 : index
    %c0_15 = arith.constant 0 : index
    %16 = vector.load %arg3[%c1_14, %c0_15] : memref<16x32xf32, #tpu.memory_space<vmem>>, vector<1x32xf32>
    %17 = arith.addf %15, %16 : vector<1x32xf32>
    %18 = arith.index_cast %13 : i32 to index
    %c0_16 = arith.constant 0 : index
    %19 = vector.load %arg4[%18, %c0_16] : memref<2x32xf32, #tpu.memory_space<vmem>>, vector<1x32xf32>
    %20 = arith.addf %17, %19 : vector<1x32xf32>
    %c1_17 = arith.constant 1 : index
    %c0_18 = arith.constant 0 : index
    %21 = vector.load %arg24[%c1_17, %c0_18] : memref<16x32xf32, #tpu.memory_space<vmem>>, vector<1x32xf32>
    tpu.vector_store %arg24[%c1_17, %c0_18], %20 {strides = array<i32>} : memref<16x32xf32, #tpu.memory_space<vmem>>, vector<1x32xf32>,
    %c0_19 = arith.constant 0 : index
    %c2 = arith.constant 2 : index
    %22 = memref.load %arg0[%c0_19, %c2] : memref<2x8xi32, #tpu.memory_space<smem>>
    %c0_20 = arith.constant 0 : index
    %c2_21 = arith.constant 2 : index
    %23 = memref.load %arg1[%c0_20, %c2_21] : memref<2x8xi32, #tpu.memory_space<smem>>
    %24 = arith.index_cast %22 : i32 to index
    %c0_22 = arith.constant 0 : index
    %25 = vector.load %arg2[%24, %c0_22] : memref<100x32xf32, #tpu.memory_space<vmem>>, vector<1x32xf32>
    %c2_23 = arith.constant 2 : index
    %c0_24 = arith.constant 0 : index
    %26 = vector.load %arg3[%c2_23, %c0_24] : memref<16x32xf32, #tpu.memory_space<vmem>>, vector<1x32xf32>
    %27 = arith.addf %25, %26 : vector<1x32xf32>
    %28 = arith.index_cast %23 : i32 to index
    %c0_25 = arith.constant 0 : index
    %29 = vector.load %arg4[%28, %c0_25] : memref<2x32xf32, #tpu.memory_space<vmem>>, vector<1x32xf32>
    %30 = arith.addf %27, %29 : vector<1x32xf32>
    %c2_26 = arith.constant 2 : index
    %c0_27 = arith.constant 0 : index
    %31 = vector.load %arg24[%c2_26, %c0_27] : memref<16x32xf32, #tpu.memory_space<vmem>>, vector<1x32xf32>
    tpu.vector_store %arg24[%c2_26, %c0_27], %30 {strides = array<i32>} : memref<16x32xf32, #tpu.memory_space<vmem>>, vector<1x32xf32>,
    %c0_28 = arith.constant 0 : index
    %c3 = arith.constant 3 : index
    %32 = memref.load %arg0[%c0_28, %c3] : memref<2x8xi32, #tpu.memory_space<smem>>
    %c0_29 = arith.constant 0 : index
    %c3_30 = arith.constant 3 : index
    %33 = memref.load %arg1[%c0_29, %c3_30] : memref<2x8xi32, #tpu.memory_space<smem>>
    %34 = arith.index_cast %32 : i32 to index
    %c0_31 = arith.constant 0 : index
    %35 = vector.load %arg2[%34, %c0_31] : memref<100x32xf32, #tpu.memory_space<vmem>>, vector<1x32xf32>
    %c3_32 = arith.constant 3 : index
    %c0_33 = arith.constant 0 : index
    %36 = vector.load %arg3[%c3_32, %c0_33] : memref<16x32xf32, #tpu.memory_space<vmem>>, vector<1x32xf32>
    %37 = arith.addf %35, %36 : vector<1x32xf32>
    %38 = arith.index_cast %33 : i32 to index
    %c0_34 = arith.constant 0 : index
    %39 = vector.load %arg4[%38, %c0_34] : memref<2x32xf32, #tpu.memory_space<vmem>>, vector<1x32xf32>
    %40 = arith.addf %37, %39 : vector<1x32xf32>
    %c3_35 = arith.constant 3 : index
    %c0_36 = arith.constant 0 : index
    %41 = vector.load %arg24[%c3_35, %c0_36] : memref<16x32xf32, #tpu.memory_space<vmem>>, vector<1x32xf32>
    tpu.vector_store %arg24[%c3_35, %c0_36], %40 {strides = array<i32>} : memref<16x32xf32, #tpu.memory_space<vmem>>, vector<1x32xf32>,
    %c0_37 = arith.constant 0 : index
    %c4 = arith.constant 4 : index
    %42 = memref.load %arg0[%c0_37, %c4] : memref<2x8xi32, #tpu.memory_space<smem>>
    %c0_38 = arith.constant 0 : index
    %c4_39 = arith.constant 4 : index
    %43 = memref.load %arg1[%c0_38, %c4_39] : memref<2x8xi32, #tpu.memory_space<smem>>
    %44 = arith.index_cast %42 : i32 to index
    %c0_40 = arith.constant 0 : index
    %45 = vector.load %arg2[%44, %c0_40] : memref<100x32xf32, #tpu.memory_space<vmem>>, vector<1x32xf32>
    %c4_41 = arith.constant 4 : index
    %c0_42 = arith.constant 0 : index
    %46 = vector.load %arg3[%c4_41, %c0_42] : memref<16x32xf32, #tpu.memory_space<vmem>>, vector<1x32xf32>
    %47 = arith.addf %45, %46 : vector<1x32xf32>
    %48 = arith.index_cast %43 : i32 to index
    %c0_43 = arith.constant 0 : index
    %49 = vector.load %arg4[%48, %c0_43] : memref<2x32xf32, #tpu.memory_space<vmem>>, vector<1x32xf32>
    %50 = arith.addf %47, %49 : vector<1x32xf32>
    %c4_44 = arith.constant 4 : index
    %c0_45 = arith.constant 0 : index
    %51 = vector.load %arg24[%c4_44, %c0_45] : memref<16x32xf32, #tpu.memory_space<vmem>>, vector<1x32xf32>
    tpu.vector_store %arg24[%c4_44, %c0_45], %50 {strides = array<i32>} : memref<16x32xf32, #tpu.memory_space<vmem>>, vector<1x32xf32>,
    %c0_46 = arith.constant 0 : index
    %c5 = arith.constant 5 : index
    %52 = memref.load %arg0[%c0_46, %c5] : memref<2x8xi32, #tpu.memory_space<smem>>
    %c0_47 = arith.constant 0 : index
    %c5_48 = arith.constant 5 : index
    %53 = memref.load %arg1[%c0_47, %c5_48] : memref<2x8xi32, #tpu.memory_space<smem>>
    %54 = arith.index_cast %52 : i32 to index
    %c0_49 = arith.constant 0 : index
    %55 = vector.load %arg2[%54, %c0_49] : memref<100x32xf32, #tpu.memory_space<vmem>>, vector<1x32xf32>
    %c5_50 = arith.constant 5 : index
    %c0_51 = arith.constant 0 : index
    %56 = vector.load %arg3[%c5_50, %c0_51] : memref<16x32xf32, #tpu.memory_space<vmem>>, vector<1x32xf32>
    %57 = arith.addf %55, %56 : vector<1x32xf32>
    %58 = arith.index_cast %53 : i32 to index
    %c0_52 = arith.constant 0 : index
    %59 = vector.load %arg4[%58, %c0_52] : memref<2x32xf32, #tpu.memory_space<vmem>>, vector<1x32xf32>
    %60 = arith.addf %57, %59 : vector<1x32xf32>
    %c5_53 = arith.constant 5 : index
    %c0_54 = arith.constant 0 : index
    %61 = vector.load %arg24[%c5_53, %c0_54] : memref<16x32xf32, #tpu.memory_space<vmem>>, vector<1x32xf32>
    tpu.vector_store %arg24[%c5_53, %c0_54], %60 {strides = array<i32>} : memref<16x32xf32, #tpu.memory_space<vmem>>, vector<1x32xf32>,
    %c0_55 = arith.constant 0 : index
    %c6 = arith.constant 6 : index
    %62 = memref.load %arg0[%c0_55, %c6] : memref<2x8xi32, #tpu.memory_space<smem>>
    %c0_56 = arith.constant 0 : index
    %c6_57 = arith.constant 6 : index
    %63 = memref.load %arg1[%c0_56, %c6_57] : memref<2x8xi32, #tpu.memory_space<smem>>
    %64 = arith.index_cast %62 : i32 to index
    %c0_58 = arith.constant 0 : index
    %65 = vector.load %arg2[%64, %c0_58] : memref<100x32xf32, #tpu.memory_space<vmem>>, vector<1x32xf32>
    %c6_59 = arith.constant 6 : index
    %c0_60 = arith.constant 0 : index
    %66 = vector.load %arg3[%c6_59, %c0_60] : memref<16x32xf32, #tpu.memory_space<vmem>>, vector<1x32xf32>
    %67 = arith.addf %65, %66 : vector<1x32xf32>
    %68 = arith.index_cast %63 : i32 to index
    %c0_61 = arith.constant 0 : index
    %69 = vector.load %arg4[%68, %c0_61] : memref<2x32xf32, #tpu.memory_space<vmem>>, vector<1x32xf32>
    %70 = arith.addf %67, %69 : vector<1x32xf32>
    %c6_62 = arith.constant 6 : index
    %c0_63 = arith.constant 0 : index
    %71 = vector.load %arg24[%c6_62, %c0_63] : memref<16x32xf32, #tpu.memory_space<vmem>>, vector<1x32xf32>
    tpu.vector_store %arg24[%c6_62, %c0_63], %70 {strides = array<i32>} : memref<16x32xf32, #tpu.memory_space<vmem>>, vector<1x32xf32>,
    %c0_64 = arith.constant 0 : index
    %c7 = arith.constant 7 : index
    %72 = memref.load %arg0[%c0_64, %c7] : memref<2x8xi32, #tpu.memory_space<smem>>
    %c0_65 = arith.constant 0 : index
    %c7_66 = arith.constant 7 : index
    %73 = memref.load %arg1[%c0_65, %c7_66] : memref<2x8xi32, #tpu.memory_space<smem>>
    %74 = arith.index_cast %72 : i32 to index
    %c0_67 = arith.constant 0 : index
    %75 = vector.load %arg2[%74, %c0_67] : memref<100x32xf32, #tpu.memory_space<vmem>>, vector<1x32xf32>
    %c7_68 = arith.constant 7 : index
    %c0_69 = arith.constant 0 : index
    %76 = vector.load %arg3[%c7_68, %c0_69] : memref<16x32xf32, #tpu.memory_space<vmem>>, vector<1x32xf32>
    %77 = arith.addf %75, %76 : vector<1x32xf32>
    %78 = arith.index_cast %73 : i32 to index
    %c0_70 = arith.constant 0 : index
    %79 = vector.load %arg4[%78, %c0_70] : memref<2x32xf32, #tpu.memory_space<vmem>>, vector<1x32xf32>
    %80 = arith.addf %77, %79 : vector<1x32xf32>
    %c7_71 = arith.constant 7 : index
    %c0_72 = arith.constant 0 : index
    %81 = vector.load %arg24[%c7_71, %c0_72] : memref<16x32xf32, #tpu.memory_space<vmem>>, vector<1x32xf32>
    tpu.vector_store %arg24[%c7_71, %c0_72], %80 {strides = array<i32>} : memref<16x32xf32, #tpu.memory_space<vmem>>, vector<1x32xf32>,
    %c1_73 = arith.constant 1 : index
    %c0_74 = arith.constant 0 : index
    %82 = memref.load %arg0[%c1_73, %c0_74] : memref<2x8xi32, #tpu.memory_space<smem>>
    %c1_75 = arith.constant 1 : index
    %c0_76 = arith.constant 0 : index
    %83 = memref.load %arg1[%c1_75, %c0_76] : memref<2x8xi32, #tpu.memory_space<smem>>
    %84 = arith.index_cast %82 : i32 to index
    %c0_77 = arith.constant 0 : index
    %85 = vector.load %arg2[%84, %c0_77] : memref<100x32xf32, #tpu.memory_space<vmem>>, vector<1x32xf32>
    %c0_78 = arith.constant 0 : index
    %c0_79 = arith.constant 0 : index
    %86 = vector.load %arg3[%c0_78, %c0_79] : memref<16x32xf32, #tpu.memory_space<vmem>>, vector<1x32xf32>
    %87 = arith.addf %85, %86 : vector<1x32xf32>
    %88 = arith.index_cast %83 : i32 to index
    %c0_80 = arith.constant 0 : index
    %89 = vector.load %arg4[%88, %c0_80] : memref<2x32xf32, #tpu.memory_space<vmem>>, vector<1x32xf32>
    %90 = arith.addf %87, %89 : vector<1x32xf32>
    %c8 = arith.constant 8 : index
    %c0_81 = arith.constant 0 : index
    %91 = vector.load %arg24[%c8, %c0_81] : memref<16x32xf32, #tpu.memory_space<vmem>>, vector<1x32xf32>
    tpu.vector_store %arg24[%c8, %c0_81], %90 {strides = array<i32>} : memref<16x32xf32, #tpu.memory_space<vmem>>, vector<1x32xf32>,
    %c1_82 = arith.constant 1 : index
    %c1_83 = arith.constant 1 : index
    %92 = memref.load %arg0[%c1_82, %c1_83] : memref<2x8xi32, #tpu.memory_space<smem>>
    %c1_84 = arith.constant 1 : index
    %c1_85 = arith.constant 1 : index
    %93 = memref.load %arg1[%c1_84, %c1_85] : memref<2x8xi32, #tpu.memory_space<smem>>
    %94 = arith.index_cast %92 : i32 to index
    %c0_86 = arith.constant 0 : index
    %95 = vector.load %arg2[%94, %c0_86] : memref<100x32xf32, #tpu.memory_space<vmem>>, vector<1x32xf32>
    %c1_87 = arith.constant 1 : index
    %c0_88 = arith.constant 0 : index
    %96 = vector.load %arg3[%c1_87, %c0_88] : memref<16x32xf32, #tpu.memory_space<vmem>>, vector<1x32xf32>
    %97 = arith.addf %95, %96 : vector<1x32xf32>
    %98 = arith.index_cast %93 : i32 to index
    %c0_89 = arith.constant 0 : index
    %99 = vector.load %arg4[%98, %c0_89] : memref<2x32xf32, #tpu.memory_space<vmem>>, vector<1x32xf32>
    %100 = arith.addf %97, %99 : vector<1x32xf32>
    %c9 = arith.constant 9 : index
    %c0_90 = arith.constant 0 : index
    %101 = vector.load %arg24[%c9, %c0_90] : memref<16x32xf32, #tpu.memory_space<vmem>>, vector<1x32xf32>
    tpu.vector_store %arg24[%c9, %c0_90], %100 {strides = array<i32>} : memref<16x32xf32, #tpu.memory_space<vmem>>, vector<1x32xf32>,
    %c1_91 = arith.constant 1 : index
    %c2_92 = arith.constant 2 : index
    %102 = memref.load %arg0[%c1_91, %c2_92] : memref<2x8xi32, #tpu.memory_space<smem>>
    %c1_93 = arith.constant 1 : index
    %c2_94 = arith.constant 2 : index
    %103 = memref.load %arg1[%c1_93, %c2_94] : memref<2x8xi32, #tpu.memory_space<smem>>
    %104 = arith.index_cast %102 : i32 to index
    %c0_95 = arith.constant 0 : index
    %105 = vector.load %arg2[%104, %c0_95] : memref<100x32xf32, #tpu.memory_space<vmem>>, vector<1x32xf32>
    %c2_96 = arith.constant 2 : index
    %c0_97 = arith.constant 0 : index
    %106 = vector.load %arg3[%c2_96, %c0_97] : memref<16x32xf32, #tpu.memory_space<vmem>>, vector<1x32xf32>
    %107 = arith.addf %105, %106 : vector<1x32xf32>
    %108 = arith.index_cast %103 : i32 to index
    %c0_98 = arith.constant 0 : index
    %109 = vector.load %arg4[%108, %c0_98] : memref<2x32xf32, #tpu.memory_space<vmem>>, vector<1x32xf32>
    %110 = arith.addf %107, %109 : vector<1x32xf32>
    %c10 = arith.constant 10 : index
    %c0_99 = arith.constant 0 : index
    %111 = vector.load %arg24[%c10, %c0_99] : memref<16x32xf32, #tpu.memory_space<vmem>>, vector<1x32xf32>
    tpu.vector_store %arg24[%c10, %c0_99], %110 {strides = array<i32>} : memref<16x32xf32, #tpu.memory_space<vmem>>, vector<1x32xf32>,
    %c1_100 = arith.constant 1 : index
    %c3_101 = arith.constant 3 : index
    %112 = memref.load %arg0[%c1_100, %c3_101] : memref<2x8xi32, #tpu.memory_space<smem>>
    %c1_102 = arith.constant 1 : index
    %c3_103 = arith.constant 3 : index
    %113 = memref.load %arg1[%c1_102, %c3_103] : memref<2x8xi32, #tpu.memory_space<smem>>
    %114 = arith.index_cast %112 : i32 to index
    %c0_104 = arith.constant 0 : index
    %115 = vector.load %arg2[%114, %c0_104] : memref<100x32xf32, #tpu.memory_space<vmem>>, vector<1x32xf32>
    %c3_105 = arith.constant 3 : index
    %c0_106 = arith.constant 0 : index
    %116 = vector.load %arg3[%c3_105, %c0_106] : memref<16x32xf32, #tpu.memory_space<vmem>>, vector<1x32xf32>
    %117 = arith.addf %115, %116 : vector<1x32xf32>
    %118 = arith.index_cast %113 : i32 to index
    %c0_107 = arith.constant 0 : index
    %119 = vector.load %arg4[%118, %c0_107] : memref<2x32xf32, #tpu.memory_space<vmem>>, vector<1x32xf32>
    %120 = arith.addf %117, %119 : vector<1x32xf32>
    %c11 = arith.constant 11 : index
    %c0_108 = arith.constant 0 : index
    %121 = vector.load %arg24[%c11, %c0_108] : memref<16x32xf32, #tpu.memory_space<vmem>>, vector<1x32xf32>
    tpu.vector_store %arg24[%c11, %c0_108], %120 {strides = array<i32>} : memref<16x32xf32, #tpu.memory_space<vmem>>, vector<1x32xf32>,
    %c1_109 = arith.constant 1 : index
    %c4_110 = arith.constant 4 : index
    %122 = memref.load %arg0[%c1_109, %c4_110] : memref<2x8xi32, #tpu.memory_space<smem>>
    %c1_111 = arith.constant 1 : index
    %c4_112 = arith.constant 4 : index
    %123 = memref.load %arg1[%c1_111, %c4_112] : memref<2x8xi32, #tpu.memory_space<smem>>
    %124 = arith.index_cast %122 : i32 to index
    %c0_113 = arith.constant 0 : index
    %125 = vector.load %arg2[%124, %c0_113] : memref<100x32xf32, #tpu.memory_space<vmem>>, vector<1x32xf32>
    %c4_114 = arith.constant 4 : index
    %c0_115 = arith.constant 0 : index
    %126 = vector.load %arg3[%c4_114, %c0_115] : memref<16x32xf32, #tpu.memory_space<vmem>>, vector<1x32xf32>
    %127 = arith.addf %125, %126 : vector<1x32xf32>
    %128 = arith.index_cast %123 : i32 to index
    %c0_116 = arith.constant 0 : index
    %129 = vector.load %arg4[%128, %c0_116] : memref<2x32xf32, #tpu.memory_space<vmem>>, vector<1x32xf32>
    %130 = arith.addf %127, %129 : vector<1x32xf32>
    %c12 = arith.constant 12 : index
    %c0_117 = arith.constant 0 : index
    %131 = vector.load %arg24[%c12, %c0_117] : memref<16x32xf32, #tpu.memory_space<vmem>>, vector<1x32xf32>
    tpu.vector_store %arg24[%c12, %c0_117], %130 {strides = array<i32>} : memref<16x32xf32, #tpu.memory_space<vmem>>, vector<1x32xf32>,
    %c1_118 = arith.constant 1 : index
    %c5_119 = arith.constant 5 : index
    %132 = memref.load %arg0[%c1_118, %c5_119] : memref<2x8xi32, #tpu.memory_space<smem>>
    %c1_120 = arith.constant 1 : index
    %c5_121 = arith.constant 5 : index
    %133 = memref.load %arg1[%c1_120, %c5_121] : memref<2x8xi32, #tpu.memory_space<smem>>
    %134 = arith.index_cast %132 : i32 to index
    %c0_122 = arith.constant 0 : index
    %135 = vector.load %arg2[%134, %c0_122] : memref<100x32xf32, #tpu.memory_space<vmem>>, vector<1x32xf32>
    %c5_123 = arith.constant 5 : index
    %c0_124 = arith.constant 0 : index
    %136 = vector.load %arg3[%c5_123, %c0_124] : memref<16x32xf32, #tpu.memory_space<vmem>>, vector<1x32xf32>
    %137 = arith.addf %135, %136 : vector<1x32xf32>
    %138 = arith.index_cast %133 : i32 to index
    %c0_125 = arith.constant 0 : index
    %139 = vector.load %arg4[%138, %c0_125] : memref<2x32xf32, #tpu.memory_space<vmem>>, vector<1x32xf32>
    %140 = arith.addf %137, %139 : vector<1x32xf32>
    %c13 = arith.constant 13 : index
    %c0_126 = arith.constant 0 : index
    %141 = vector.load %arg24[%c13, %c0_126] : memref<16x32xf32, #tpu.memory_space<vmem>>, vector<1x32xf32>
    tpu.vector_store %arg24[%c13, %c0_126], %140 {strides = array<i32>} : memref<16x32xf32, #tpu.memory_space<vmem>>, vector<1x32xf32>,
    %c1_127 = arith.constant 1 : index
    %c6_128 = arith.constant 6 : index
    %142 = memref.load %arg0[%c1_127, %c6_128] : memref<2x8xi32, #tpu.memory_space<smem>>
    %c1_129 = arith.constant 1 : index
    %c6_130 = arith.constant 6 : index
    %143 = memref.load %arg1[%c1_129, %c6_130] : memref<2x8xi32, #tpu.memory_space<smem>>
    %144 = arith.index_cast %142 : i32 to index
    %c0_131 = arith.constant 0 : index
    %145 = vector.load %arg2[%144, %c0_131] : memref<100x32xf32, #tpu.memory_space<vmem>>, vector<1x32xf32>
    %c6_132 = arith.constant 6 : index
    %c0_133 = arith.constant 0 : index
    %146 = vector.load %arg3[%c6_132, %c0_133] : memref<16x32xf32, #tpu.memory_space<vmem>>, vector<1x32xf32>
    %147 = arith.addf %145, %146 : vector<1x32xf32>
    %148 = arith.index_cast %143 : i32 to index
    %c0_134 = arith.constant 0 : index
    %149 = vector.load %arg4[%148, %c0_134] : memref<2x32xf32, #tpu.memory_space<vmem>>, vector<1x32xf32>
    %150 = arith.addf %147, %149 : vector<1x32xf32>
    %c14 = arith.constant 14 : index
    %c0_135 = arith.constant 0 : index
    %151 = vector.load %arg24[%c14, %c0_135] : memref<16x32xf32, #tpu.memory_space<vmem>>, vector<1x32xf32>
    tpu.vector_store %arg24[%c14, %c0_135], %150 {strides = array<i32>} : memref<16x32xf32, #tpu.memory_space<vmem>>, vector<1x32xf32>,
    %c1_136 = arith.constant 1 : index
    %c7_137 = arith.constant 7 : index
    %152 = memref.load %arg0[%c1_136, %c7_137] : memref<2x8xi32, #tpu.memory_space<smem>>
    %c1_138 = arith.constant 1 : index
    %c7_139 = arith.constant 7 : index
    %153 = memref.load %arg1[%c1_138, %c7_139] : memref<2x8xi32, #tpu.memory_space<smem>>
    %154 = arith.index_cast %152 : i32 to index
    %c0_140 = arith.constant 0 : index
    %155 = vector.load %arg2[%154, %c0_140] : memref<100x32xf32, #tpu.memory_space<vmem>>, vector<1x32xf32>
    %c7_141 = arith.constant 7 : index
    %c0_142 = arith.constant 0 : index
    %156 = vector.load %arg3[%c7_141, %c0_142] : memref<16x32xf32, #tpu.memory_space<vmem>>, vector<1x32xf32>
    %157 = arith.addf %155, %156 : vector<1x32xf32>
    %158 = arith.index_cast %153 : i32 to index
    %c0_143 = arith.constant 0 : index
    %159 = vector.load %arg4[%158, %c0_143] : memref<2x32xf32, #tpu.memory_space<vmem>>, vector<1x32xf32>
    %160 = arith.addf %157, %159 : vector<1x32xf32>
    %c15 = arith.constant 15 : index
    %c0_144 = arith.constant 0 : index
    %161 = vector.load %arg24[%c15, %c0_144] : memref<16x32xf32, #tpu.memory_space<vmem>>, vector<1x32xf32>
    tpu.vector_store %arg24[%c15, %c0_144], %160 {strides = array<i32>} : memref<16x32xf32, #tpu.memory_space<vmem>>, vector<1x32xf32>,
    %c0_145 = arith.constant 0 : index
    %c0_146 = arith.constant 0 : index
    %162 = vector.load %arg24[%c0_145, %c0_146] : memref<16x32xf32, #tpu.memory_space<vmem>>, vector<16x32xf32>
    %c0_147 = arith.constant 0 : index
    %c0_148 = arith.constant 0 : index
    %c0_149 = arith.constant 0 : index
    %163 = vector.load %arg6[%c0_147, %c0_148, %c0_149] : memref<3x32x96xf32, #tpu.memory_space<vmem>>, vector<1x32x96xf32>
    %164 = vector.shape_cast %163 : vector<1x32x96xf32> to vector<32x96xf32>
    %cst_150 = arith.constant dense<0.000000e+00> : vector<16x96xf32>
    %165 = tpu.matmul %162, %164, %cst_150 {dimension_numbers = #tpu.dot_dimension_numbers<[1], [0], [0], [1], [0, 0, 1, 1], [], []>} : vector<16x32xf32>, vector<32x96xf32>, vector<16x96xf32> -> vector<16x96xf32>
    %c0_151 = arith.constant 0 : index
    %c0_152 = arith.constant 0 : index
    %c0_153 = arith.constant 0 : index
    %166 = vector.load %arg7[%c0_151, %c0_152, %c0_153] : memref<3x1x96xf32, #tpu.memory_space<vmem>>, vector<1x1x96xf32>
    %167 = vector.shape_cast %166 : vector<1x1x96xf32> to vector<1x96xf32>
    %168 = vector.broadcast %167 : vector<1x96xf32> to vector<16x96xf32>
    %169 = arith.addf %165, %168 : vector<16x96xf32>
    %170 = vector.extract_strided_slice %169 {offsets = [0, 0], sizes = [16, 32], strides = [1, 1]} : vector<16x96xf32> to vector<16x32xf32>
    %171 = vector.shape_cast %170 : vector<16x32xf32> to vector<2x8x32xf32>
    %172 = vector.extract_strided_slice %169 {offsets = [0, 32], sizes = [16, 32], strides = [1, 1]} : vector<16x96xf32> to vector<16x32xf32>
    %173 = vector.shape_cast %172 : vector<16x32xf32> to vector<2x8x32xf32>
    %174 = vector.extract_strided_slice %169 {offsets = [0, 64], sizes = [16, 32], strides = [1, 1]} : vector<16x96xf32> to vector<16x32xf32>
    %175 = vector.shape_cast %174 : vector<16x32xf32> to vector<2x8x32xf32>
    %176 = vector.extract_strided_slice %171 {offsets = [0, 0, 0], sizes = [2, 8, 8], strides = [1, 1, 1]} : vector<2x8x32xf32> to vector<2x8x8xf32>
    %177 = vector.extract_strided_slice %173 {offsets = [0, 0, 0], sizes = [2, 8, 8], strides = [1, 1, 1]} : vector<2x8x32xf32> to vector<2x8x8xf32>
    %178 = vector.extract_strided_slice %175 {offsets = [0, 0, 0], sizes = [2, 8, 8], strides = [1, 1, 1]} : vector<2x8x32xf32> to vector<2x8x8xf32>
    "tpu.trace_start"() <{level = 10 : i32, message = "bqd,bkd->bqk"}> : () -> ()
    %cst_154 = arith.constant dense<0.000000e+00> : vector<2x8x8xf32>
    %179 = tpu.matmul %176, %177, %cst_154 {dimension_numbers = #tpu.dot_dimension_numbers<[2], [2], [1], [1], [0, 0, 0, 1, 1, 1], [0], [0]>} : vector<2x8x8xf32>, vector<2x8x8xf32>, vector<2x8x8xf32> -> vector<2x8x8xf32>
    "tpu.trace_stop"() : () -> ()
    %180 = vector.broadcast %1 : f32 to vector<2x8x8xf32>
    %181 = arith.mulf %179, %180 : vector<2x8x8xf32>
    %cst_155 = arith.constant dense<0xFF800000> : vector<2x8xf32>
    %182 = vector.multi_reduction <maximumf>, %181, %cst_155 [2] : vector<2x8x8xf32> to vector<2x8xf32>
    %183 = vector.shape_cast %182 : vector<2x8xf32> to vector<2x8x1xf32>
    %184 = vector.broadcast %183 : vector<2x8x1xf32> to vector<2x8x8xf32>
    %185 = arith.subf %181, %184 : vector<2x8x8xf32>
    %186 = math.exp %185 : vector<2x8x8xf32>
    %cst_156 = arith.constant dense<0.000000e+00> : vector<2x8xf32>
    %187 = vector.multi_reduction <add>, %186, %cst_156 [2] : vector<2x8x8xf32> to vector<2x8xf32>
    %188 = vector.shape_cast %187 : vector<2x8xf32> to vector<2x8x1xf32>
    %189 = vector.broadcast %188 : vector<2x8x1xf32> to vector<2x8x8xf32>
    %190 = arith.divf %186, %189 : vector<2x8x8xf32>
    "tpu.trace_start"() <{level = 10 : i32, message = "bqk,bkd->bqd"}> : () -> ()
    %cst_157 = arith.constant dense<0.000000e+00> : vector<2x8x8xf32>
    %191 = tpu.matmul %190, %178, %cst_157 {dimension_numbers = #tpu.dot_dimension_numbers<[2], [1], [1], [2], [0, 0, 0, 1, 1, 2], [0], [0]>} : vector<2x8x8xf32>, vector<2x8x8xf32>, vector<2x8x8xf32> -> vector<2x8x8xf32>
    "tpu.trace_stop"() : () -> ()
    %192 = vector.shape_cast %191 : vector<2x8x8xf32> to vector<16x8xf32>
    %193 = vector.extract_strided_slice %171 {offsets = [0, 0, 8], sizes = [2, 8, 8], strides = [1, 1, 1]} : vector<2x8x32xf32> to vector<2x8x8xf32>
    %194 = vector.extract_strided_slice %173 {offsets = [0, 0, 8], sizes = [2, 8, 8], strides = [1, 1, 1]} : vector<2x8x32xf32> to vector<2x8x8xf32>
    %195 = vector.extract_strided_slice %175 {offsets = [0, 0, 8], sizes = [2, 8, 8], strides = [1, 1, 1]} : vector<2x8x32xf32> to vector<2x8x8xf32>
    "tpu.trace_start"() <{level = 10 : i32, message = "bqd,bkd->bqk"}> : () -> ()
    %cst_158 = arith.constant dense<0.000000e+00> : vector<2x8x8xf32>
    %196 = tpu.matmul %193, %194, %cst_158 {dimension_numbers = #tpu.dot_dimension_numbers<[2], [2], [1], [1], [0, 0, 0, 1, 1, 1], [0], [0]>} : vector<2x8x8xf32>, vector<2x8x8xf32>, vector<2x8x8xf32> -> vector<2x8x8xf32>
    "tpu.trace_stop"() : () -> ()
    %197 = vector.broadcast %1 : f32 to vector<2x8x8xf32>
    %198 = arith.mulf %196, %197 : vector<2x8x8xf32>
    %cst_159 = arith.constant dense<0xFF800000> : vector<2x8xf32>
    %199 = vector.multi_reduction <maximumf>, %198, %cst_159 [2] : vector<2x8x8xf32> to vector<2x8xf32>
    %200 = vector.shape_cast %199 : vector<2x8xf32> to vector<2x8x1xf32>
    %201 = vector.broadcast %200 : vector<2x8x1xf32> to vector<2x8x8xf32>
    %202 = arith.subf %198, %201 : vector<2x8x8xf32>
    %203 = math.exp %202 : vector<2x8x8xf32>
    %cst_160 = arith.constant dense<0.000000e+00> : vector<2x8xf32>
    %204 = vector.multi_reduction <add>, %203, %cst_160 [2] : vector<2x8x8xf32> to vector<2x8xf32>
    %205 = vector.shape_cast %204 : vector<2x8xf32> to vector<2x8x1xf32>
    %206 = vector.broadcast %205 : vector<2x8x1xf32> to vector<2x8x8xf32>
    %207 = arith.divf %203, %206 : vector<2x8x8xf32>
    "tpu.trace_start"() <{level = 10 : i32, message = "bqk,bkd->bqd"}> : () -> ()
    %cst_161 = arith.constant dense<0.000000e+00> : vector<2x8x8xf32>
    %208 = tpu.matmul %207, %195, %cst_161 {dimension_numbers = #tpu.dot_dimension_numbers<[2], [1], [1], [2], [0, 0, 0, 1, 1, 2], [0], [0]>} : vector<2x8x8xf32>, vector<2x8x8xf32>, vector<2x8x8xf32> -> vector<2x8x8xf32>
    "tpu.trace_stop"() : () -> ()
    %209 = vector.shape_cast %208 : vector<2x8x8xf32> to vector<16x8xf32>
    %210 = vector.extract_strided_slice %171 {offsets = [0, 0, 16], sizes = [2, 8, 8], strides = [1, 1, 1]} : vector<2x8x32xf32> to vector<2x8x8xf32>
    %211 = vector.extract_strided_slice %173 {offsets = [0, 0, 16], sizes = [2, 8, 8], strides = [1, 1, 1]} : vector<2x8x32xf32> to vector<2x8x8xf32>
    %212 = vector.extract_strided_slice %175 {offsets = [0, 0, 16], sizes = [2, 8, 8], strides = [1, 1, 1]} : vector<2x8x32xf32> to vector<2x8x8xf32>
    "tpu.trace_start"() <{level = 10 : i32, message = "bqd,bkd->bqk"}> : () -> ()
    %cst_162 = arith.constant dense<0.000000e+00> : vector<2x8x8xf32>
    %213 = tpu.matmul %210, %211, %cst_162 {dimension_numbers = #tpu.dot_dimension_numbers<[2], [2], [1], [1], [0, 0, 0, 1, 1, 1], [0], [0]>} : vector<2x8x8xf32>, vector<2x8x8xf32>, vector<2x8x8xf32> -> vector<2x8x8xf32>
    "tpu.trace_stop"() : () -> ()
    %214 = vector.broadcast %1 : f32 to vector<2x8x8xf32>
    %215 = arith.mulf %213, %214 : vector<2x8x8xf32>
    %cst_163 = arith.constant dense<0xFF800000> : vector<2x8xf32>
    %216 = vector.multi_reduction <maximumf>, %215, %cst_163 [2] : vector<2x8x8xf32> to vector<2x8xf32>
    %217 = vector.shape_cast %216 : vector<2x8xf32> to vector<2x8x1xf32>
    %218 = vector.broadcast %217 : vector<2x8x1xf32> to vector<2x8x8xf32>
    %219 = arith.subf %215, %218 : vector<2x8x8xf32>
    %220 = math.exp %219 : vector<2x8x8xf32>
    %cst_164 = arith.constant dense<0.000000e+00> : vector<2x8xf32>
    %221 = vector.multi_reduction <add>, %220, %cst_164 [2] : vector<2x8x8xf32> to vector<2x8xf32>
    %222 = vector.shape_cast %221 : vector<2x8xf32> to vector<2x8x1xf32>
    %223 = vector.broadcast %222 : vector<2x8x1xf32> to vector<2x8x8xf32>
    %224 = arith.divf %220, %223 : vector<2x8x8xf32>
    "tpu.trace_start"() <{level = 10 : i32, message = "bqk,bkd->bqd"}> : () -> ()
    %cst_165 = arith.constant dense<0.000000e+00> : vector<2x8x8xf32>
    %225 = tpu.matmul %224, %212, %cst_165 {dimension_numbers = #tpu.dot_dimension_numbers<[2], [1], [1], [2], [0, 0, 0, 1, 1, 2], [0], [0]>} : vector<2x8x8xf32>, vector<2x8x8xf32>, vector<2x8x8xf32> -> vector<2x8x8xf32>
    "tpu.trace_stop"() : () -> ()
    %226 = vector.shape_cast %225 : vector<2x8x8xf32> to vector<16x8xf32>
    %227 = vector.extract_strided_slice %171 {offsets = [0, 0, 24], sizes = [2, 8, 8], strides = [1, 1, 1]} : vector<2x8x32xf32> to vector<2x8x8xf32>
    %228 = vector.extract_strided_slice %173 {offsets = [0, 0, 24], sizes = [2, 8, 8], strides = [1, 1, 1]} : vector<2x8x32xf32> to vector<2x8x8xf32>
    %229 = vector.extract_strided_slice %175 {offsets = [0, 0, 24], sizes = [2, 8, 8], strides = [1, 1, 1]} : vector<2x8x32xf32> to vector<2x8x8xf32>
    "tpu.trace_start"() <{level = 10 : i32, message = "bqd,bkd->bqk"}> : () -> ()
    %cst_166 = arith.constant dense<0.000000e+00> : vector<2x8x8xf32>
    %230 = tpu.matmul %227, %228, %cst_166 {dimension_numbers = #tpu.dot_dimension_numbers<[2], [2], [1], [1], [0, 0, 0, 1, 1, 1], [0], [0]>} : vector<2x8x8xf32>, vector<2x8x8xf32>, vector<2x8x8xf32> -> vector<2x8x8xf32>
    "tpu.trace_stop"() : () -> ()
    %231 = vector.broadcast %1 : f32 to vector<2x8x8xf32>
    %232 = arith.mulf %230, %231 : vector<2x8x8xf32>
    %cst_167 = arith.constant dense<0xFF800000> : vector<2x8xf32>
    %233 = vector.multi_reduction <maximumf>, %232, %cst_167 [2] : vector<2x8x8xf32> to vector<2x8xf32>
    %234 = vector.shape_cast %233 : vector<2x8xf32> to vector<2x8x1xf32>
    %235 = vector.broadcast %234 : vector<2x8x1xf32> to vector<2x8x8xf32>
    %236 = arith.subf %232, %235 : vector<2x8x8xf32>
    %237 = math.exp %236 : vector<2x8x8xf32>
    %cst_168 = arith.constant dense<0.000000e+00> : vector<2x8xf32>
    %238 = vector.multi_reduction <add>, %237, %cst_168 [2] : vector<2x8x8xf32> to vector<2x8xf32>
    %239 = vector.shape_cast %238 : vector<2x8xf32> to vector<2x8x1xf32>
    %240 = vector.broadcast %239 : vector<2x8x1xf32> to vector<2x8x8xf32>
    %241 = arith.divf %237, %240 : vector<2x8x8xf32>
    "tpu.trace_start"() <{level = 10 : i32, message = "bqk,bkd->bqd"}> : () -> ()
    %cst_169 = arith.constant dense<0.000000e+00> : vector<2x8x8xf32>
    %242 = tpu.matmul %241, %229, %cst_169 {dimension_numbers = #tpu.dot_dimension_numbers<[2], [1], [1], [2], [0, 0, 0, 1, 1, 2], [0], [0]>} : vector<2x8x8xf32>, vector<2x8x8xf32>, vector<2x8x8xf32> -> vector<2x8x8xf32>
    "tpu.trace_stop"() : () -> ()
    %243 = vector.shape_cast %242 : vector<2x8x8xf32> to vector<16x8xf32>
    %244 = tpu.concatenate %192, %209, %226, %243 in 1 : vector<16x8xf32>, vector<16x8xf32>, vector<16x8xf32>, vector<16x8xf32> -> vector<16x32xf32>
    %c0_170 = arith.constant 0 : index
    %c0_171 = arith.constant 0 : index
    %c0_172 = arith.constant 0 : index
    %245 = vector.load %arg8[%c0_170, %c0_171, %c0_172] : memref<3x32x32xf32, #tpu.memory_space<vmem>>, vector<1x32x32xf32>
    %246 = vector.shape_cast %245 : vector<1x32x32xf32> to vector<32x32xf32>
    %cst_173 = arith.constant dense<0.000000e+00> : vector<16x32xf32>
    %247 = tpu.matmul %244, %246, %cst_173 {dimension_numbers = #tpu.dot_dimension_numbers<[1], [0], [0], [1], [0, 0, 1, 1], [], []>} : vector<16x32xf32>, vector<32x32xf32>, vector<16x32xf32> -> vector<16x32xf32>
    %c0_174 = arith.constant 0 : index
    %c0_175 = arith.constant 0 : index
    %c0_176 = arith.constant 0 : index
    %248 = vector.load %arg9[%c0_174, %c0_175, %c0_176] : memref<3x1x32xf32, #tpu.memory_space<vmem>>, vector<1x1x32xf32>
    %249 = vector.shape_cast %248 : vector<1x1x32xf32> to vector<1x32xf32>
    %250 = vector.broadcast %249 : vector<1x32xf32> to vector<16x32xf32>
    %251 = arith.addf %247, %250 : vector<16x32xf32>
    %252 = arith.addf %162, %251 : vector<16x32xf32>
    %c0_177 = arith.constant 0 : index
    %c0_178 = arith.constant 0 : index
    %c0_179 = arith.constant 0 : index
    %253 = vector.load %arg10[%c0_177, %c0_178, %c0_179] : memref<3x1x32xf32, #tpu.memory_space<vmem>>, vector<1x1x32xf32>
    %254 = vector.shape_cast %253 : vector<1x1x32xf32> to vector<1x32xf32>
    %c0_180 = arith.constant 0 : index
    %c0_181 = arith.constant 0 : index
    %c0_182 = arith.constant 0 : index
    %255 = vector.load %arg11[%c0_180, %c0_181, %c0_182] : memref<3x1x32xf32, #tpu.memory_space<vmem>>, vector<1x1x32xf32>
    %256 = vector.shape_cast %255 : vector<1x1x32xf32> to vector<1x32xf32>
    %cst_183 = arith.constant dense<0.000000e+00> : vector<16xf32>
    %257 = vector.multi_reduction <add>, %252, %cst_183 [1] : vector<16x32xf32> to vector<16xf32>
    %258 = vector.shape_cast %257 : vector<16xf32> to vector<16x1xf32>
    %cst_184 = arith.constant 3.200000e+01 : f32
    %259 = vector.broadcast %cst_184 : f32 to vector<16x1xf32>
    %260 = arith.divf %258, %259 : vector<16x1xf32>
    %261 = vector.broadcast %260 : vector<16x1xf32> to vector<16x32xf32>
    %262 = arith.subf %252, %261 : vector<16x32xf32>
    %263 = arith.mulf %262, %262 : vector<16x32xf32>
    %cst_185 = arith.constant dense<0.000000e+00> : vector<16xf32>
    %264 = vector.multi_reduction <add>, %263, %cst_185 [1] : vector<16x32xf32> to vector<16xf32>
    %265 = vector.shape_cast %264 : vector<16xf32> to vector<16x1xf32>
    %cst_186 = arith.constant 3.200000e+01 : f32
    %266 = vector.broadcast %cst_186 : f32 to vector<16x1xf32>
    %267 = arith.divf %265, %266 : vector<16x1xf32>
    %268 = vector.broadcast %260 : vector<16x1xf32> to vector<16x32xf32>
    %269 = arith.subf %252, %268 : vector<16x32xf32>
    %cst_187 = arith.constant 9.99999974E-6 : f32
    %270 = vector.broadcast %cst_187 : f32 to vector<16x1xf32>
    %271 = arith.addf %267, %270 : vector<16x1xf32>
    %272 = math.rsqrt %271 : vector<16x1xf32>
    %273 = vector.broadcast %272 : vector<16x1xf32> to vector<16x32xf32>
    %274 = arith.mulf %269, %273 : vector<16x32xf32>
    %275 = vector.broadcast %254 : vector<1x32xf32> to vector<16x32xf32>
    %276 = arith.mulf %274, %275 : vector<16x32xf32>
    %277 = vector.broadcast %256 : vector<1x32xf32> to vector<16x32xf32>
    %278 = arith.addf %276, %277 : vector<16x32xf32>
    %c0_188 = arith.constant 0 : index
    %c0_189 = arith.constant 0 : index
    %c0_190 = arith.constant 0 : index
    %279 = vector.load %arg12[%c0_188, %c0_189, %c0_190] : memref<3x32x64xf32, #tpu.memory_space<vmem>>, vector<1x32x64xf32>
    %280 = vector.shape_cast %279 : vector<1x32x64xf32> to vector<32x64xf32>
    %cst_191 = arith.constant dense<0.000000e+00> : vector<16x64xf32>
    %281 = tpu.matmul %278, %280, %cst_191 {dimension_numbers = #tpu.dot_dimension_numbers<[1], [0], [0], [1], [0, 0, 1, 1], [], []>} : vector<16x32xf32>, vector<32x64xf32>, vector<16x64xf32> -> vector<16x64xf32>
    %c0_192 = arith.constant 0 : index
    %c0_193 = arith.constant 0 : index
    %c0_194 = arith.constant 0 : index
    %282 = vector.load %arg13[%c0_192, %c0_193, %c0_194] : memref<3x1x64xf32, #tpu.memory_space<vmem>>, vector<1x1x64xf32>
    %283 = vector.shape_cast %282 : vector<1x1x64xf32> to vector<1x64xf32>
    %284 = vector.broadcast %283 : vector<1x64xf32> to vector<16x64xf32>
    %285 = arith.addf %281, %284 : vector<16x64xf32>
    %cst_195 = arith.constant 0.000000e+00 : f32
    %286 = vector.broadcast %cst_195 : f32 to vector<16x64xf32>
    %287 = arith.maximumf %285, %286 : vector<16x64xf32>
    %c0_196 = arith.constant 0 : index
    %c0_197 = arith.constant 0 : index
    %c0_198 = arith.constant 0 : index
    %288 = vector.load %arg14[%c0_196, %c0_197, %c0_198] : memref<3x64x32xf32, #tpu.memory_space<vmem>>, vector<1x64x32xf32>
    %289 = vector.shape_cast %288 : vector<1x64x32xf32> to vector<64x32xf32>
    %cst_199 = arith.constant dense<0.000000e+00> : vector<16x32xf32>
    %290 = tpu.matmul %287, %289, %cst_199 {dimension_numbers = #tpu.dot_dimension_numbers<[1], [0], [0], [1], [0, 0, 1, 1], [], []>} : vector<16x64xf32>, vector<64x32xf32>, vector<16x32xf32> -> vector<16x32xf32>
    %c0_200 = arith.constant 0 : index
    %c0_201 = arith.constant 0 : index
    %c0_202 = arith.constant 0 : index
    %291 = vector.load %arg15[%c0_200, %c0_201, %c0_202] : memref<3x1x32xf32, #tpu.memory_space<vmem>>, vector<1x1x32xf32>
    %292 = vector.shape_cast %291 : vector<1x1x32xf32> to vector<1x32xf32>
    %293 = vector.broadcast %292 : vector<1x32xf32> to vector<16x32xf32>
    %294 = arith.addf %290, %293 : vector<16x32xf32>
    %295 = arith.addf %278, %294 : vector<16x32xf32>
    %c0_203 = arith.constant 0 : index
    %c0_204 = arith.constant 0 : index
    %c0_205 = arith.constant 0 : index
    %296 = vector.load %arg16[%c0_203, %c0_204, %c0_205] : memref<3x1x32xf32, #tpu.memory_space<vmem>>, vector<1x1x32xf32>
    %297 = vector.shape_cast %296 : vector<1x1x32xf32> to vector<1x32xf32>
    %c0_206 = arith.constant 0 : index
    %c0_207 = arith.constant 0 : index
    %c0_208 = arith.constant 0 : index
    %298 = vector.load %arg17[%c0_206, %c0_207, %c0_208] : memref<3x1x32xf32, #tpu.memory_space<vmem>>, vector<1x1x32xf32>
    %299 = vector.shape_cast %298 : vector<1x1x32xf32> to vector<1x32xf32>
    %cst_209 = arith.constant dense<0.000000e+00> : vector<16xf32>
    %300 = vector.multi_reduction <add>, %295, %cst_209 [1] : vector<16x32xf32> to vector<16xf32>
    %301 = vector.shape_cast %300 : vector<16xf32> to vector<16x1xf32>
    %cst_210 = arith.constant 3.200000e+01 : f32
    %302 = vector.broadcast %cst_210 : f32 to vector<16x1xf32>
    %303 = arith.divf %301, %302 : vector<16x1xf32>
    %304 = vector.broadcast %303 : vector<16x1xf32> to vector<16x32xf32>
    %305 = arith.subf %295, %304 : vector<16x32xf32>
    %306 = arith.mulf %305, %305 : vector<16x32xf32>
    %cst_211 = arith.constant dense<0.000000e+00> : vector<16xf32>
    %307 = vector.multi_reduction <add>, %306, %cst_211 [1] : vector<16x32xf32> to vector<16xf32>
    %308 = vector.shape_cast %307 : vector<16xf32> to vector<16x1xf32>
    %cst_212 = arith.constant 3.200000e+01 : f32
    %309 = vector.broadcast %cst_212 : f32 to vector<16x1xf32>
    %310 = arith.divf %308, %309 : vector<16x1xf32>
    %311 = vector.broadcast %303 : vector<16x1xf32> to vector<16x32xf32>
    %312 = arith.subf %295, %311 : vector<16x32xf32>
    %cst_213 = arith.constant 9.99999974E-6 : f32
    %313 = vector.broadcast %cst_213 : f32 to vector<16x1xf32>
    %314 = arith.addf %310, %313 : vector<16x1xf32>
    %315 = math.rsqrt %314 : vector<16x1xf32>
    %316 = vector.broadcast %315 : vector<16x1xf32> to vector<16x32xf32>
    %317 = arith.mulf %312, %316 : vector<16x32xf32>
    %318 = vector.broadcast %297 : vector<1x32xf32> to vector<16x32xf32>
    %319 = arith.mulf %317, %318 : vector<16x32xf32>
    %320 = vector.broadcast %299 : vector<1x32xf32> to vector<16x32xf32>
    %321 = arith.addf %319, %320 : vector<16x32xf32>
    %c1_214 = arith.constant 1 : index
    %c0_215 = arith.constant 0 : index
    %c0_216 = arith.constant 0 : index
    %322 = vector.load %arg6[%c1_214, %c0_215, %c0_216] : memref<3x32x96xf32, #tpu.memory_space<vmem>>, vector<1x32x96xf32>
    %323 = vector.shape_cast %322 : vector<1x32x96xf32> to vector<32x96xf32>
    %cst_217 = arith.constant dense<0.000000e+00> : vector<16x96xf32>
    %324 = tpu.matmul %321, %323, %cst_217 {dimension_numbers = #tpu.dot_dimension_numbers<[1], [0], [0], [1], [0, 0, 1, 1], [], []>} : vector<16x32xf32>, vector<32x96xf32>, vector<16x96xf32> -> vector<16x96xf32>
    %c1_218 = arith.constant 1 : index
    %c0_219 = arith.constant 0 : index
    %c0_220 = arith.constant 0 : index
    %325 = vector.load %arg7[%c1_218, %c0_219, %c0_220] : memref<3x1x96xf32, #tpu.memory_space<vmem>>, vector<1x1x96xf32>
    %326 = vector.shape_cast %325 : vector<1x1x96xf32> to vector<1x96xf32>
    %327 = vector.broadcast %326 : vector<1x96xf32> to vector<16x96xf32>
    %328 = arith.addf %324, %327 : vector<16x96xf32>
    %329 = vector.extract_strided_slice %328 {offsets = [0, 0], sizes = [16, 32], strides = [1, 1]} : vector<16x96xf32> to vector<16x32xf32>
    %330 = vector.shape_cast %329 : vector<16x32xf32> to vector<2x8x32xf32>
    %331 = vector.extract_strided_slice %328 {offsets = [0, 32], sizes = [16, 32], strides = [1, 1]} : vector<16x96xf32> to vector<16x32xf32>
    %332 = vector.shape_cast %331 : vector<16x32xf32> to vector<2x8x32xf32>
    %333 = vector.extract_strided_slice %328 {offsets = [0, 64], sizes = [16, 32], strides = [1, 1]} : vector<16x96xf32> to vector<16x32xf32>
    %334 = vector.shape_cast %333 : vector<16x32xf32> to vector<2x8x32xf32>
    %335 = vector.extract_strided_slice %330 {offsets = [0, 0, 0], sizes = [2, 8, 8], strides = [1, 1, 1]} : vector<2x8x32xf32> to vector<2x8x8xf32>
    %336 = vector.extract_strided_slice %332 {offsets = [0, 0, 0], sizes = [2, 8, 8], strides = [1, 1, 1]} : vector<2x8x32xf32> to vector<2x8x8xf32>
    %337 = vector.extract_strided_slice %334 {offsets = [0, 0, 0], sizes = [2, 8, 8], strides = [1, 1, 1]} : vector<2x8x32xf32> to vector<2x8x8xf32>
    "tpu.trace_start"() <{level = 10 : i32, message = "bqd,bkd->bqk"}> : () -> ()
    %cst_221 = arith.constant dense<0.000000e+00> : vector<2x8x8xf32>
    %338 = tpu.matmul %335, %336, %cst_221 {dimension_numbers = #tpu.dot_dimension_numbers<[2], [2], [1], [1], [0, 0, 0, 1, 1, 1], [0], [0]>} : vector<2x8x8xf32>, vector<2x8x8xf32>, vector<2x8x8xf32> -> vector<2x8x8xf32>
    "tpu.trace_stop"() : () -> ()
    %339 = vector.broadcast %1 : f32 to vector<2x8x8xf32>
    %340 = arith.mulf %338, %339 : vector<2x8x8xf32>
    %cst_222 = arith.constant dense<0xFF800000> : vector<2x8xf32>
    %341 = vector.multi_reduction <maximumf>, %340, %cst_222 [2] : vector<2x8x8xf32> to vector<2x8xf32>
    %342 = vector.shape_cast %341 : vector<2x8xf32> to vector<2x8x1xf32>
    %343 = vector.broadcast %342 : vector<2x8x1xf32> to vector<2x8x8xf32>
    %344 = arith.subf %340, %343 : vector<2x8x8xf32>
    %345 = math.exp %344 : vector<2x8x8xf32>
    %cst_223 = arith.constant dense<0.000000e+00> : vector<2x8xf32>
    %346 = vector.multi_reduction <add>, %345, %cst_223 [2] : vector<2x8x8xf32> to vector<2x8xf32>
    %347 = vector.shape_cast %346 : vector<2x8xf32> to vector<2x8x1xf32>
    %348 = vector.broadcast %347 : vector<2x8x1xf32> to vector<2x8x8xf32>
    %349 = arith.divf %345, %348 : vector<2x8x8xf32>
    "tpu.trace_start"() <{level = 10 : i32, message = "bqk,bkd->bqd"}> : () -> ()
    %cst_224 = arith.constant dense<0.000000e+00> : vector<2x8x8xf32>
    %350 = tpu.matmul %349, %337, %cst_224 {dimension_numbers = #tpu.dot_dimension_numbers<[2], [1], [1], [2], [0, 0, 0, 1, 1, 2], [0], [0]>} : vector<2x8x8xf32>, vector<2x8x8xf32>, vector<2x8x8xf32> -> vector<2x8x8xf32>
    "tpu.trace_stop"() : () -> ()
    %351 = vector.shape_cast %350 : vector<2x8x8xf32> to vector<16x8xf32>
    %352 = vector.extract_strided_slice %330 {offsets = [0, 0, 8], sizes = [2, 8, 8], strides = [1, 1, 1]} : vector<2x8x32xf32> to vector<2x8x8xf32>
    %353 = vector.extract_strided_slice %332 {offsets = [0, 0, 8], sizes = [2, 8, 8], strides = [1, 1, 1]} : vector<2x8x32xf32> to vector<2x8x8xf32>
    %354 = vector.extract_strided_slice %334 {offsets = [0, 0, 8], sizes = [2, 8, 8], strides = [1, 1, 1]} : vector<2x8x32xf32> to vector<2x8x8xf32>
    "tpu.trace_start"() <{level = 10 : i32, message = "bqd,bkd->bqk"}> : () -> ()
    %cst_225 = arith.constant dense<0.000000e+00> : vector<2x8x8xf32>
    %355 = tpu.matmul %352, %353, %cst_225 {dimension_numbers = #tpu.dot_dimension_numbers<[2], [2], [1], [1], [0, 0, 0, 1, 1, 1], [0], [0]>} : vector<2x8x8xf32>, vector<2x8x8xf32>, vector<2x8x8xf32> -> vector<2x8x8xf32>
    "tpu.trace_stop"() : () -> ()
    %356 = vector.broadcast %1 : f32 to vector<2x8x8xf32>
    %357 = arith.mulf %355, %356 : vector<2x8x8xf32>
    %cst_226 = arith.constant dense<0xFF800000> : vector<2x8xf32>
    %358 = vector.multi_reduction <maximumf>, %357, %cst_226 [2] : vector<2x8x8xf32> to vector<2x8xf32>
    %359 = vector.shape_cast %358 : vector<2x8xf32> to vector<2x8x1xf32>
    %360 = vector.broadcast %359 : vector<2x8x1xf32> to vector<2x8x8xf32>
    %361 = arith.subf %357, %360 : vector<2x8x8xf32>
    %362 = math.exp %361 : vector<2x8x8xf32>
    %cst_227 = arith.constant dense<0.000000e+00> : vector<2x8xf32>
    %363 = vector.multi_reduction <add>, %362, %cst_227 [2] : vector<2x8x8xf32> to vector<2x8xf32>
    %364 = vector.shape_cast %363 : vector<2x8xf32> to vector<2x8x1xf32>
    %365 = vector.broadcast %364 : vector<2x8x1xf32> to vector<2x8x8xf32>
    %366 = arith.divf %362, %365 : vector<2x8x8xf32>
    "tpu.trace_start"() <{level = 10 : i32, message = "bqk,bkd->bqd"}> : () -> ()
    %cst_228 = arith.constant dense<0.000000e+00> : vector<2x8x8xf32>
    %367 = tpu.matmul %366, %354, %cst_228 {dimension_numbers = #tpu.dot_dimension_numbers<[2], [1], [1], [2], [0, 0, 0, 1, 1, 2], [0], [0]>} : vector<2x8x8xf32>, vector<2x8x8xf32>, vector<2x8x8xf32> -> vector<2x8x8xf32>
    "tpu.trace_stop"() : () -> ()
    %368 = vector.shape_cast %367 : vector<2x8x8xf32> to vector<16x8xf32>
    %369 = vector.extract_strided_slice %330 {offsets = [0, 0, 16], sizes = [2, 8, 8], strides = [1, 1, 1]} : vector<2x8x32xf32> to vector<2x8x8xf32>
    %370 = vector.extract_strided_slice %332 {offsets = [0, 0, 16], sizes = [2, 8, 8], strides = [1, 1, 1]} : vector<2x8x32xf32> to vector<2x8x8xf32>
    %371 = vector.extract_strided_slice %334 {offsets = [0, 0, 16], sizes = [2, 8, 8], strides = [1, 1, 1]} : vector<2x8x32xf32> to vector<2x8x8xf32>
    "tpu.trace_start"() <{level = 10 : i32, message = "bqd,bkd->bqk"}> : () -> ()
    %cst_229 = arith.constant dense<0.000000e+00> : vector<2x8x8xf32>
    %372 = tpu.matmul %369, %370, %cst_229 {dimension_numbers = #tpu.dot_dimension_numbers<[2], [2], [1], [1], [0, 0, 0, 1, 1, 1], [0], [0]>} : vector<2x8x8xf32>, vector<2x8x8xf32>, vector<2x8x8xf32> -> vector<2x8x8xf32>
    "tpu.trace_stop"() : () -> ()
    %373 = vector.broadcast %1 : f32 to vector<2x8x8xf32>
    %374 = arith.mulf %372, %373 : vector<2x8x8xf32>
    %cst_230 = arith.constant dense<0xFF800000> : vector<2x8xf32>
    %375 = vector.multi_reduction <maximumf>, %374, %cst_230 [2] : vector<2x8x8xf32> to vector<2x8xf32>
    %376 = vector.shape_cast %375 : vector<2x8xf32> to vector<2x8x1xf32>
    %377 = vector.broadcast %376 : vector<2x8x1xf32> to vector<2x8x8xf32>
    %378 = arith.subf %374, %377 : vector<2x8x8xf32>
    %379 = math.exp %378 : vector<2x8x8xf32>
    %cst_231 = arith.constant dense<0.000000e+00> : vector<2x8xf32>
    %380 = vector.multi_reduction <add>, %379, %cst_231 [2] : vector<2x8x8xf32> to vector<2x8xf32>
    %381 = vector.shape_cast %380 : vector<2x8xf32> to vector<2x8x1xf32>
    %382 = vector.broadcast %381 : vector<2x8x1xf32> to vector<2x8x8xf32>
    %383 = arith.divf %379, %382 : vector<2x8x8xf32>
    "tpu.trace_start"() <{level = 10 : i32, message = "bqk,bkd->bqd"}> : () -> ()
    %cst_232 = arith.constant dense<0.000000e+00> : vector<2x8x8xf32>
    %384 = tpu.matmul %383, %371, %cst_232 {dimension_numbers = #tpu.dot_dimension_numbers<[2], [1], [1], [2], [0, 0, 0, 1, 1, 2], [0], [0]>} : vector<2x8x8xf32>, vector<2x8x8xf32>, vector<2x8x8xf32> -> vector<2x8x8xf32>
    "tpu.trace_stop"() : () -> ()
    %385 = vector.shape_cast %384 : vector<2x8x8xf32> to vector<16x8xf32>
    %386 = vector.extract_strided_slice %330 {offsets = [0, 0, 24], sizes = [2, 8, 8], strides = [1, 1, 1]} : vector<2x8x32xf32> to vector<2x8x8xf32>
    %387 = vector.extract_strided_slice %332 {offsets = [0, 0, 24], sizes = [2, 8, 8], strides = [1, 1, 1]} : vector<2x8x32xf32> to vector<2x8x8xf32>
    %388 = vector.extract_strided_slice %334 {offsets = [0, 0, 24], sizes = [2, 8, 8], strides = [1, 1, 1]} : vector<2x8x32xf32> to vector<2x8x8xf32>
    "tpu.trace_start"() <{level = 10 : i32, message = "bqd,bkd->bqk"}> : () -> ()
    %cst_233 = arith.constant dense<0.000000e+00> : vector<2x8x8xf32>
    %389 = tpu.matmul %386, %387, %cst_233 {dimension_numbers = #tpu.dot_dimension_numbers<[2], [2], [1], [1], [0, 0, 0, 1, 1, 1], [0], [0]>} : vector<2x8x8xf32>, vector<2x8x8xf32>, vector<2x8x8xf32> -> vector<2x8x8xf32>
    "tpu.trace_stop"() : () -> ()
    %390 = vector.broadcast %1 : f32 to vector<2x8x8xf32>
    %391 = arith.mulf %389, %390 : vector<2x8x8xf32>
    %cst_234 = arith.constant dense<0xFF800000> : vector<2x8xf32>
    %392 = vector.multi_reduction <maximumf>, %391, %cst_234 [2] : vector<2x8x8xf32> to vector<2x8xf32>
    %393 = vector.shape_cast %392 : vector<2x8xf32> to vector<2x8x1xf32>
    %394 = vector.broadcast %393 : vector<2x8x1xf32> to vector<2x8x8xf32>
    %395 = arith.subf %391, %394 : vector<2x8x8xf32>
    %396 = math.exp %395 : vector<2x8x8xf32>
    %cst_235 = arith.constant dense<0.000000e+00> : vector<2x8xf32>
    %397 = vector.multi_reduction <add>, %396, %cst_235 [2] : vector<2x8x8xf32> to vector<2x8xf32>
    %398 = vector.shape_cast %397 : vector<2x8xf32> to vector<2x8x1xf32>
    %399 = vector.broadcast %398 : vector<2x8x1xf32> to vector<2x8x8xf32>
    %400 = arith.divf %396, %399 : vector<2x8x8xf32>
    "tpu.trace_start"() <{level = 10 : i32, message = "bqk,bkd->bqd"}> : () -> ()
    %cst_236 = arith.constant dense<0.000000e+00> : vector<2x8x8xf32>
    %401 = tpu.matmul %400, %388, %cst_236 {dimension_numbers = #tpu.dot_dimension_numbers<[2], [1], [1], [2], [0, 0, 0, 1, 1, 2], [0], [0]>} : vector<2x8x8xf32>, vector<2x8x8xf32>, vector<2x8x8xf32> -> vector<2x8x8xf32>
    "tpu.trace_stop"() : () -> ()
    %402 = vector.shape_cast %401 : vector<2x8x8xf32> to vector<16x8xf32>
    %403 = tpu.concatenate %351, %368, %385, %402 in 1 : vector<16x8xf32>, vector<16x8xf32>, vector<16x8xf32>, vector<16x8xf32> -> vector<16x32xf32>
    %c1_237 = arith.constant 1 : index
    %c0_238 = arith.constant 0 : index
    %c0_239 = arith.constant 0 : index
    %404 = vector.load %arg8[%c1_237, %c0_238, %c0_239] : memref<3x32x32xf32, #tpu.memory_space<vmem>>, vector<1x32x32xf32>
    %405 = vector.shape_cast %404 : vector<1x32x32xf32> to vector<32x32xf32>
    %cst_240 = arith.constant dense<0.000000e+00> : vector<16x32xf32>
    %406 = tpu.matmul %403, %405, %cst_240 {dimension_numbers = #tpu.dot_dimension_numbers<[1], [0], [0], [1], [0, 0, 1, 1], [], []>} : vector<16x32xf32>, vector<32x32xf32>, vector<16x32xf32> -> vector<16x32xf32>
    %c1_241 = arith.constant 1 : index
    %c0_242 = arith.constant 0 : index
    %c0_243 = arith.constant 0 : index
    %407 = vector.load %arg9[%c1_241, %c0_242, %c0_243] : memref<3x1x32xf32, #tpu.memory_space<vmem>>, vector<1x1x32xf32>
    %408 = vector.shape_cast %407 : vector<1x1x32xf32> to vector<1x32xf32>
    %409 = vector.broadcast %408 : vector<1x32xf32> to vector<16x32xf32>
    %410 = arith.addf %406, %409 : vector<16x32xf32>
    %411 = arith.addf %321, %410 : vector<16x32xf32>
    %c1_244 = arith.constant 1 : index
    %c0_245 = arith.constant 0 : index
    %c0_246 = arith.constant 0 : index
    %412 = vector.load %arg10[%c1_244, %c0_245, %c0_246] : memref<3x1x32xf32, #tpu.memory_space<vmem>>, vector<1x1x32xf32>
    %413 = vector.shape_cast %412 : vector<1x1x32xf32> to vector<1x32xf32>
    %c1_247 = arith.constant 1 : index
    %c0_248 = arith.constant 0 : index
    %c0_249 = arith.constant 0 : index
    %414 = vector.load %arg11[%c1_247, %c0_248, %c0_249] : memref<3x1x32xf32, #tpu.memory_space<vmem>>, vector<1x1x32xf32>
    %415 = vector.shape_cast %414 : vector<1x1x32xf32> to vector<1x32xf32>
    %cst_250 = arith.constant dense<0.000000e+00> : vector<16xf32>
    %416 = vector.multi_reduction <add>, %411, %cst_250 [1] : vector<16x32xf32> to vector<16xf32>
    %417 = vector.shape_cast %416 : vector<16xf32> to vector<16x1xf32>
    %cst_251 = arith.constant 3.200000e+01 : f32
    %418 = vector.broadcast %cst_251 : f32 to vector<16x1xf32>
    %419 = arith.divf %417, %418 : vector<16x1xf32>
    %420 = vector.broadcast %419 : vector<16x1xf32> to vector<16x32xf32>
    %421 = arith.subf %411, %420 : vector<16x32xf32>
    %422 = arith.mulf %421, %421 : vector<16x32xf32>
    %cst_252 = arith.constant dense<0.000000e+00> : vector<16xf32>
    %423 = vector.multi_reduction <add>, %422, %cst_252 [1] : vector<16x32xf32> to vector<16xf32>
    %424 = vector.shape_cast %423 : vector<16xf32> to vector<16x1xf32>
    %cst_253 = arith.constant 3.200000e+01 : f32
    %425 = vector.broadcast %cst_253 : f32 to vector<16x1xf32>
    %426 = arith.divf %424, %425 : vector<16x1xf32>
    %427 = vector.broadcast %419 : vector<16x1xf32> to vector<16x32xf32>
    %428 = arith.subf %411, %427 : vector<16x32xf32>
    %cst_254 = arith.constant 9.99999974E-6 : f32
    %429 = vector.broadcast %cst_254 : f32 to vector<16x1xf32>
    %430 = arith.addf %426, %429 : vector<16x1xf32>
    %431 = math.rsqrt %430 : vector<16x1xf32>
    %432 = vector.broadcast %431 : vector<16x1xf32> to vector<16x32xf32>
    %433 = arith.mulf %428, %432 : vector<16x32xf32>
    %434 = vector.broadcast %413 : vector<1x32xf32> to vector<16x32xf32>
    %435 = arith.mulf %433, %434 : vector<16x32xf32>
    %436 = vector.broadcast %415 : vector<1x32xf32> to vector<16x32xf32>
    %437 = arith.addf %435, %436 : vector<16x32xf32>
    %c1_255 = arith.constant 1 : index
    %c0_256 = arith.constant 0 : index
    %c0_257 = arith.constant 0 : index
    %438 = vector.load %arg12[%c1_255, %c0_256, %c0_257] : memref<3x32x64xf32, #tpu.memory_space<vmem>>, vector<1x32x64xf32>
    %439 = vector.shape_cast %438 : vector<1x32x64xf32> to vector<32x64xf32>
    %cst_258 = arith.constant dense<0.000000e+00> : vector<16x64xf32>
    %440 = tpu.matmul %437, %439, %cst_258 {dimension_numbers = #tpu.dot_dimension_numbers<[1], [0], [0], [1], [0, 0, 1, 1], [], []>} : vector<16x32xf32>, vector<32x64xf32>, vector<16x64xf32> -> vector<16x64xf32>
    %c1_259 = arith.constant 1 : index
    %c0_260 = arith.constant 0 : index
    %c0_261 = arith.constant 0 : index
    %441 = vector.load %arg13[%c1_259, %c0_260, %c0_261] : memref<3x1x64xf32, #tpu.memory_space<vmem>>, vector<1x1x64xf32>
    %442 = vector.shape_cast %441 : vector<1x1x64xf32> to vector<1x64xf32>
    %443 = vector.broadcast %442 : vector<1x64xf32> to vector<16x64xf32>
    %444 = arith.addf %440, %443 : vector<16x64xf32>
    %cst_262 = arith.constant 0.000000e+00 : f32
    %445 = vector.broadcast %cst_262 : f32 to vector<16x64xf32>
    %446 = arith.maximumf %444, %445 : vector<16x64xf32>
    %c1_263 = arith.constant 1 : index
    %c0_264 = arith.constant 0 : index
    %c0_265 = arith.constant 0 : index
    %447 = vector.load %arg14[%c1_263, %c0_264, %c0_265] : memref<3x64x32xf32, #tpu.memory_space<vmem>>, vector<1x64x32xf32>
    %448 = vector.shape_cast %447 : vector<1x64x32xf32> to vector<64x32xf32>
    %cst_266 = arith.constant dense<0.000000e+00> : vector<16x32xf32>
    %449 = tpu.matmul %446, %448, %cst_266 {dimension_numbers = #tpu.dot_dimension_numbers<[1], [0], [0], [1], [0, 0, 1, 1], [], []>} : vector<16x64xf32>, vector<64x32xf32>, vector<16x32xf32> -> vector<16x32xf32>
    %c1_267 = arith.constant 1 : index
    %c0_268 = arith.constant 0 : index
    %c0_269 = arith.constant 0 : index
    %450 = vector.load %arg15[%c1_267, %c0_268, %c0_269] : memref<3x1x32xf32, #tpu.memory_space<vmem>>, vector<1x1x32xf32>
    %451 = vector.shape_cast %450 : vector<1x1x32xf32> to vector<1x32xf32>
    %452 = vector.broadcast %451 : vector<1x32xf32> to vector<16x32xf32>
    %453 = arith.addf %449, %452 : vector<16x32xf32>
    %454 = arith.addf %437, %453 : vector<16x32xf32>
    %c1_270 = arith.constant 1 : index
    %c0_271 = arith.constant 0 : index
    %c0_272 = arith.constant 0 : index
    %455 = vector.load %arg16[%c1_270, %c0_271, %c0_272] : memref<3x1x32xf32, #tpu.memory_space<vmem>>, vector<1x1x32xf32>
    %456 = vector.shape_cast %455 : vector<1x1x32xf32> to vector<1x32xf32>
    %c1_273 = arith.constant 1 : index
    %c0_274 = arith.constant 0 : index
    %c0_275 = arith.constant 0 : index
    %457 = vector.load %arg17[%c1_273, %c0_274, %c0_275] : memref<3x1x32xf32, #tpu.memory_space<vmem>>, vector<1x1x32xf32>
    %458 = vector.shape_cast %457 : vector<1x1x32xf32> to vector<1x32xf32>
    %cst_276 = arith.constant dense<0.000000e+00> : vector<16xf32>
    %459 = vector.multi_reduction <add>, %454, %cst_276 [1] : vector<16x32xf32> to vector<16xf32>
    %460 = vector.shape_cast %459 : vector<16xf32> to vector<16x1xf32>
    %cst_277 = arith.constant 3.200000e+01 : f32
    %461 = vector.broadcast %cst_277 : f32 to vector<16x1xf32>
    %462 = arith.divf %460, %461 : vector<16x1xf32>
    %463 = vector.broadcast %462 : vector<16x1xf32> to vector<16x32xf32>
    %464 = arith.subf %454, %463 : vector<16x32xf32>
    %465 = arith.mulf %464, %464 : vector<16x32xf32>
    %cst_278 = arith.constant dense<0.000000e+00> : vector<16xf32>
    %466 = vector.multi_reduction <add>, %465, %cst_278 [1] : vector<16x32xf32> to vector<16xf32>
    %467 = vector.shape_cast %466 : vector<16xf32> to vector<16x1xf32>
    %cst_279 = arith.constant 3.200000e+01 : f32
    %468 = vector.broadcast %cst_279 : f32 to vector<16x1xf32>
    %469 = arith.divf %467, %468 : vector<16x1xf32>
    %470 = vector.broadcast %462 : vector<16x1xf32> to vector<16x32xf32>
    %471 = arith.subf %454, %470 : vector<16x32xf32>
    %cst_280 = arith.constant 9.99999974E-6 : f32
    %472 = vector.broadcast %cst_280 : f32 to vector<16x1xf32>
    %473 = arith.addf %469, %472 : vector<16x1xf32>
    %474 = math.rsqrt %473 : vector<16x1xf32>
    %475 = vector.broadcast %474 : vector<16x1xf32> to vector<16x32xf32>
    %476 = arith.mulf %471, %475 : vector<16x32xf32>
    %477 = vector.broadcast %456 : vector<1x32xf32> to vector<16x32xf32>
    %478 = arith.mulf %476, %477 : vector<16x32xf32>
    %479 = vector.broadcast %458 : vector<1x32xf32> to vector<16x32xf32>
    %480 = arith.addf %478, %479 : vector<16x32xf32>
    %c2_281 = arith.constant 2 : index
    %c0_282 = arith.constant 0 : index
    %c0_283 = arith.constant 0 : index
    %481 = vector.load %arg6[%c2_281, %c0_282, %c0_283] : memref<3x32x96xf32, #tpu.memory_space<vmem>>, vector<1x32x96xf32>
    %482 = vector.shape_cast %481 : vector<1x32x96xf32> to vector<32x96xf32>
    %cst_284 = arith.constant dense<0.000000e+00> : vector<16x96xf32>
    %483 = tpu.matmul %480, %482, %cst_284 {dimension_numbers = #tpu.dot_dimension_numbers<[1], [0], [0], [1], [0, 0, 1, 1], [], []>} : vector<16x32xf32>, vector<32x96xf32>, vector<16x96xf32> -> vector<16x96xf32>
    %c2_285 = arith.constant 2 : index
    %c0_286 = arith.constant 0 : index
    %c0_287 = arith.constant 0 : index
    %484 = vector.load %arg7[%c2_285, %c0_286, %c0_287] : memref<3x1x96xf32, #tpu.memory_space<vmem>>, vector<1x1x96xf32>
    %485 = vector.shape_cast %484 : vector<1x1x96xf32> to vector<1x96xf32>
    %486 = vector.broadcast %485 : vector<1x96xf32> to vector<16x96xf32>
    %487 = arith.addf %483, %486 : vector<16x96xf32>
    %488 = vector.extract_strided_slice %487 {offsets = [0, 0], sizes = [16, 32], strides = [1, 1]} : vector<16x96xf32> to vector<16x32xf32>
    %489 = vector.shape_cast %488 : vector<16x32xf32> to vector<2x8x32xf32>
    %490 = vector.extract_strided_slice %487 {offsets = [0, 32], sizes = [16, 32], strides = [1, 1]} : vector<16x96xf32> to vector<16x32xf32>
    %491 = vector.shape_cast %490 : vector<16x32xf32> to vector<2x8x32xf32>
    %492 = vector.extract_strided_slice %487 {offsets = [0, 64], sizes = [16, 32], strides = [1, 1]} : vector<16x96xf32> to vector<16x32xf32>
    %493 = vector.shape_cast %492 : vector<16x32xf32> to vector<2x8x32xf32>
    %494 = vector.extract_strided_slice %489 {offsets = [0, 0, 0], sizes = [2, 8, 8], strides = [1, 1, 1]} : vector<2x8x32xf32> to vector<2x8x8xf32>
    %495 = vector.extract_strided_slice %491 {offsets = [0, 0, 0], sizes = [2, 8, 8], strides = [1, 1, 1]} : vector<2x8x32xf32> to vector<2x8x8xf32>
    %496 = vector.extract_strided_slice %493 {offsets = [0, 0, 0], sizes = [2, 8, 8], strides = [1, 1, 1]} : vector<2x8x32xf32> to vector<2x8x8xf32>
    "tpu.trace_start"() <{level = 10 : i32, message = "bqd,bkd->bqk"}> : () -> ()
    %cst_288 = arith.constant dense<0.000000e+00> : vector<2x8x8xf32>
    %497 = tpu.matmul %494, %495, %cst_288 {dimension_numbers = #tpu.dot_dimension_numbers<[2], [2], [1], [1], [0, 0, 0, 1, 1, 1], [0], [0]>} : vector<2x8x8xf32>, vector<2x8x8xf32>, vector<2x8x8xf32> -> vector<2x8x8xf32>
    "tpu.trace_stop"() : () -> ()
    %498 = vector.broadcast %1 : f32 to vector<2x8x8xf32>
    %499 = arith.mulf %497, %498 : vector<2x8x8xf32>
    %cst_289 = arith.constant dense<0xFF800000> : vector<2x8xf32>
    %500 = vector.multi_reduction <maximumf>, %499, %cst_289 [2] : vector<2x8x8xf32> to vector<2x8xf32>
    %501 = vector.shape_cast %500 : vector<2x8xf32> to vector<2x8x1xf32>
    %502 = vector.broadcast %501 : vector<2x8x1xf32> to vector<2x8x8xf32>
    %503 = arith.subf %499, %502 : vector<2x8x8xf32>
    %504 = math.exp %503 : vector<2x8x8xf32>
    %cst_290 = arith.constant dense<0.000000e+00> : vector<2x8xf32>
    %505 = vector.multi_reduction <add>, %504, %cst_290 [2] : vector<2x8x8xf32> to vector<2x8xf32>
    %506 = vector.shape_cast %505 : vector<2x8xf32> to vector<2x8x1xf32>
    %507 = vector.broadcast %506 : vector<2x8x1xf32> to vector<2x8x8xf32>
    %508 = arith.divf %504, %507 : vector<2x8x8xf32>
    "tpu.trace_start"() <{level = 10 : i32, message = "bqk,bkd->bqd"}> : () -> ()
    %cst_291 = arith.constant dense<0.000000e+00> : vector<2x8x8xf32>
    %509 = tpu.matmul %508, %496, %cst_291 {dimension_numbers = #tpu.dot_dimension_numbers<[2], [1], [1], [2], [0, 0, 0, 1, 1, 2], [0], [0]>} : vector<2x8x8xf32>, vector<2x8x8xf32>, vector<2x8x8xf32> -> vector<2x8x8xf32>
    "tpu.trace_stop"() : () -> ()
    %510 = vector.shape_cast %509 : vector<2x8x8xf32> to vector<16x8xf32>
    %511 = vector.extract_strided_slice %489 {offsets = [0, 0, 8], sizes = [2, 8, 8], strides = [1, 1, 1]} : vector<2x8x32xf32> to vector<2x8x8xf32>
    %512 = vector.extract_strided_slice %491 {offsets = [0, 0, 8], sizes = [2, 8, 8], strides = [1, 1, 1]} : vector<2x8x32xf32> to vector<2x8x8xf32>
    %513 = vector.extract_strided_slice %493 {offsets = [0, 0, 8], sizes = [2, 8, 8], strides = [1, 1, 1]} : vector<2x8x32xf32> to vector<2x8x8xf32>
    "tpu.trace_start"() <{level = 10 : i32, message = "bqd,bkd->bqk"}> : () -> ()
    %cst_292 = arith.constant dense<0.000000e+00> : vector<2x8x8xf32>
    %514 = tpu.matmul %511, %512, %cst_292 {dimension_numbers = #tpu.dot_dimension_numbers<[2], [2], [1], [1], [0, 0, 0, 1, 1, 1], [0], [0]>} : vector<2x8x8xf32>, vector<2x8x8xf32>, vector<2x8x8xf32> -> vector<2x8x8xf32>
    "tpu.trace_stop"() : () -> ()
    %515 = vector.broadcast %1 : f32 to vector<2x8x8xf32>
    %516 = arith.mulf %514, %515 : vector<2x8x8xf32>
    %cst_293 = arith.constant dense<0xFF800000> : vector<2x8xf32>
    %517 = vector.multi_reduction <maximumf>, %516, %cst_293 [2] : vector<2x8x8xf32> to vector<2x8xf32>
    %518 = vector.shape_cast %517 : vector<2x8xf32> to vector<2x8x1xf32>
    %519 = vector.broadcast %518 : vector<2x8x1xf32> to vector<2x8x8xf32>
    %520 = arith.subf %516, %519 : vector<2x8x8xf32>
    %521 = math.exp %520 : vector<2x8x8xf32>
    %cst_294 = arith.constant dense<0.000000e+00> : vector<2x8xf32>
    %522 = vector.multi_reduction <add>, %521, %cst_294 [2] : vector<2x8x8xf32> to vector<2x8xf32>
    %523 = vector.shape_cast %522 : vector<2x8xf32> to vector<2x8x1xf32>
    %524 = vector.broadcast %523 : vector<2x8x1xf32> to vector<2x8x8xf32>
    %525 = arith.divf %521, %524 : vector<2x8x8xf32>
    "tpu.trace_start"() <{level = 10 : i32, message = "bqk,bkd->bqd"}> : () -> ()
    %cst_295 = arith.constant dense<0.000000e+00> : vector<2x8x8xf32>
    %526 = tpu.matmul %525, %513, %cst_295 {dimension_numbers = #tpu.dot_dimension_numbers<[2], [1], [1], [2], [0, 0, 0, 1, 1, 2], [0], [0]>} : vector<2x8x8xf32>, vector<2x8x8xf32>, vector<2x8x8xf32> -> vector<2x8x8xf32>
    "tpu.trace_stop"() : () -> ()
    %527 = vector.shape_cast %526 : vector<2x8x8xf32> to vector<16x8xf32>
    %528 = vector.extract_strided_slice %489 {offsets = [0, 0, 16], sizes = [2, 8, 8], strides = [1, 1, 1]} : vector<2x8x32xf32> to vector<2x8x8xf32>
    %529 = vector.extract_strided_slice %491 {offsets = [0, 0, 16], sizes = [2, 8, 8], strides = [1, 1, 1]} : vector<2x8x32xf32> to vector<2x8x8xf32>
    %530 = vector.extract_strided_slice %493 {offsets = [0, 0, 16], sizes = [2, 8, 8], strides = [1, 1, 1]} : vector<2x8x32xf32> to vector<2x8x8xf32>
    "tpu.trace_start"() <{level = 10 : i32, message = "bqd,bkd->bqk"}> : () -> ()
    %cst_296 = arith.constant dense<0.000000e+00> : vector<2x8x8xf32>
    %531 = tpu.matmul %528, %529, %cst_296 {dimension_numbers = #tpu.dot_dimension_numbers<[2], [2], [1], [1], [0, 0, 0, 1, 1, 1], [0], [0]>} : vector<2x8x8xf32>, vector<2x8x8xf32>, vector<2x8x8xf32> -> vector<2x8x8xf32>
    "tpu.trace_stop"() : () -> ()
    %532 = vector.broadcast %1 : f32 to vector<2x8x8xf32>
    %533 = arith.mulf %531, %532 : vector<2x8x8xf32>
    %cst_297 = arith.constant dense<0xFF800000> : vector<2x8xf32>
    %534 = vector.multi_reduction <maximumf>, %533, %cst_297 [2] : vector<2x8x8xf32> to vector<2x8xf32>
    %535 = vector.shape_cast %534 : vector<2x8xf32> to vector<2x8x1xf32>
    %536 = vector.broadcast %535 : vector<2x8x1xf32> to vector<2x8x8xf32>
    %537 = arith.subf %533, %536 : vector<2x8x8xf32>
    %538 = math.exp %537 : vector<2x8x8xf32>
    %cst_298 = arith.constant dense<0.000000e+00> : vector<2x8xf32>
    %539 = vector.multi_reduction <add>, %538, %cst_298 [2] : vector<2x8x8xf32> to vector<2x8xf32>
    %540 = vector.shape_cast %539 : vector<2x8xf32> to vector<2x8x1xf32>
    %541 = vector.broadcast %540 : vector<2x8x1xf32> to vector<2x8x8xf32>
    %542 = arith.divf %538, %541 : vector<2x8x8xf32>
    "tpu.trace_start"() <{level = 10 : i32, message = "bqk,bkd->bqd"}> : () -> ()
    %cst_299 = arith.constant dense<0.000000e+00> : vector<2x8x8xf32>
    %543 = tpu.matmul %542, %530, %cst_299 {dimension_numbers = #tpu.dot_dimension_numbers<[2], [1], [1], [2], [0, 0, 0, 1, 1, 2], [0], [0]>} : vector<2x8x8xf32>, vector<2x8x8xf32>, vector<2x8x8xf32> -> vector<2x8x8xf32>
    "tpu.trace_stop"() : () -> ()
    %544 = vector.shape_cast %543 : vector<2x8x8xf32> to vector<16x8xf32>
    %545 = vector.extract_strided_slice %489 {offsets = [0, 0, 24], sizes = [2, 8, 8], strides = [1, 1, 1]} : vector<2x8x32xf32> to vector<2x8x8xf32>
    %546 = vector.extract_strided_slice %491 {offsets = [0, 0, 24], sizes = [2, 8, 8], strides = [1, 1, 1]} : vector<2x8x32xf32> to vector<2x8x8xf32>
    %547 = vector.extract_strided_slice %493 {offsets = [0, 0, 24], sizes = [2, 8, 8], strides = [1, 1, 1]} : vector<2x8x32xf32> to vector<2x8x8xf32>
    "tpu.trace_start"() <{level = 10 : i32, message = "bqd,bkd->bqk"}> : () -> ()
    %cst_300 = arith.constant dense<0.000000e+00> : vector<2x8x8xf32>
    %548 = tpu.matmul %545, %546, %cst_300 {dimension_numbers = #tpu.dot_dimension_numbers<[2], [2], [1], [1], [0, 0, 0, 1, 1, 1], [0], [0]>} : vector<2x8x8xf32>, vector<2x8x8xf32>, vector<2x8x8xf32> -> vector<2x8x8xf32>
    "tpu.trace_stop"() : () -> ()
    %549 = vector.broadcast %1 : f32 to vector<2x8x8xf32>
    %550 = arith.mulf %548, %549 : vector<2x8x8xf32>
    %cst_301 = arith.constant dense<0xFF800000> : vector<2x8xf32>
    %551 = vector.multi_reduction <maximumf>, %550, %cst_301 [2] : vector<2x8x8xf32> to vector<2x8xf32>
    %552 = vector.shape_cast %551 : vector<2x8xf32> to vector<2x8x1xf32>
    %553 = vector.broadcast %552 : vector<2x8x1xf32> to vector<2x8x8xf32>
    %554 = arith.subf %550, %553 : vector<2x8x8xf32>
    %555 = math.exp %554 : vector<2x8x8xf32>
    %cst_302 = arith.constant dense<0.000000e+00> : vector<2x8xf32>
    %556 = vector.multi_reduction <add>, %555, %cst_302 [2] : vector<2x8x8xf32> to vector<2x8xf32>
    %557 = vector.shape_cast %556 : vector<2x8xf32> to vector<2x8x1xf32>
    %558 = vector.broadcast %557 : vector<2x8x1xf32> to vector<2x8x8xf32>
    %559 = arith.divf %555, %558 : vector<2x8x8xf32>
    "tpu.trace_start"() <{level = 10 : i32, message = "bqk,bkd->bqd"}> : () -> ()
    %cst_303 = arith.constant dense<0.000000e+00> : vector<2x8x8xf32>
    %560 = tpu.matmul %559, %547, %cst_303 {dimension_numbers = #tpu.dot_dimension_numbers<[2], [1], [1], [2], [0, 0, 0, 1, 1, 2], [0], [0]>} : vector<2x8x8xf32>, vector<2x8x8xf32>, vector<2x8x8xf32> -> vector<2x8x8xf32>
    "tpu.trace_stop"() : () -> ()
    %561 = vector.shape_cast %560 : vector<2x8x8xf32> to vector<16x8xf32>
    %562 = tpu.concatenate %510, %527, %544, %561 in 1 : vector<16x8xf32>, vector<16x8xf32>, vector<16x8xf32>, vector<16x8xf32> -> vector<16x32xf32>
    %c2_304 = arith.constant 2 : index
    %c0_305 = arith.constant 0 : index
    %c0_306 = arith.constant 0 : index
    %563 = vector.load %arg8[%c2_304, %c0_305, %c0_306] : memref<3x32x32xf32, #tpu.memory_space<vmem>>, vector<1x32x32xf32>
    %564 = vector.shape_cast %563 : vector<1x32x32xf32> to vector<32x32xf32>
    %cst_307 = arith.constant dense<0.000000e+00> : vector<16x32xf32>
    %565 = tpu.matmul %562, %564, %cst_307 {dimension_numbers = #tpu.dot_dimension_numbers<[1], [0], [0], [1], [0, 0, 1, 1], [], []>} : vector<16x32xf32>, vector<32x32xf32>, vector<16x32xf32> -> vector<16x32xf32>
    %c2_308 = arith.constant 2 : index
    %c0_309 = arith.constant 0 : index
    %c0_310 = arith.constant 0 : index
    %566 = vector.load %arg9[%c2_308, %c0_309, %c0_310] : memref<3x1x32xf32, #tpu.memory_space<vmem>>, vector<1x1x32xf32>
    %567 = vector.shape_cast %566 : vector<1x1x32xf32> to vector<1x32xf32>
    %568 = vector.broadcast %567 : vector<1x32xf32> to vector<16x32xf32>
    %569 = arith.addf %565, %568 : vector<16x32xf32>
    %570 = arith.addf %480, %569 : vector<16x32xf32>
    %c2_311 = arith.constant 2 : index
    %c0_312 = arith.constant 0 : index
    %c0_313 = arith.constant 0 : index
    %571 = vector.load %arg10[%c2_311, %c0_312, %c0_313] : memref<3x1x32xf32, #tpu.memory_space<vmem>>, vector<1x1x32xf32>
    %572 = vector.shape_cast %571 : vector<1x1x32xf32> to vector<1x32xf32>
    %c2_314 = arith.constant 2 : index
    %c0_315 = arith.constant 0 : index
    %c0_316 = arith.constant 0 : index
    %573 = vector.load %arg11[%c2_314, %c0_315, %c0_316] : memref<3x1x32xf32, #tpu.memory_space<vmem>>, vector<1x1x32xf32>
    %574 = vector.shape_cast %573 : vector<1x1x32xf32> to vector<1x32xf32>
    %cst_317 = arith.constant dense<0.000000e+00> : vector<16xf32>
    %575 = vector.multi_reduction <add>, %570, %cst_317 [1] : vector<16x32xf32> to vector<16xf32>
    %576 = vector.shape_cast %575 : vector<16xf32> to vector<16x1xf32>
    %cst_318 = arith.constant 3.200000e+01 : f32
    %577 = vector.broadcast %cst_318 : f32 to vector<16x1xf32>
    %578 = arith.divf %576, %577 : vector<16x1xf32>
    %579 = vector.broadcast %578 : vector<16x1xf32> to vector<16x32xf32>
    %580 = arith.subf %570, %579 : vector<16x32xf32>
    %581 = arith.mulf %580, %580 : vector<16x32xf32>
    %cst_319 = arith.constant dense<0.000000e+00> : vector<16xf32>
    %582 = vector.multi_reduction <add>, %581, %cst_319 [1] : vector<16x32xf32> to vector<16xf32>
    %583 = vector.shape_cast %582 : vector<16xf32> to vector<16x1xf32>
    %cst_320 = arith.constant 3.200000e+01 : f32
    %584 = vector.broadcast %cst_320 : f32 to vector<16x1xf32>
    %585 = arith.divf %583, %584 : vector<16x1xf32>
    %586 = vector.broadcast %578 : vector<16x1xf32> to vector<16x32xf32>
    %587 = arith.subf %570, %586 : vector<16x32xf32>
    %cst_321 = arith.constant 9.99999974E-6 : f32
    %588 = vector.broadcast %cst_321 : f32 to vector<16x1xf32>
    %589 = arith.addf %585, %588 : vector<16x1xf32>
    %590 = math.rsqrt %589 : vector<16x1xf32>
    %591 = vector.broadcast %590 : vector<16x1xf32> to vector<16x32xf32>
    %592 = arith.mulf %587, %591 : vector<16x32xf32>
    %593 = vector.broadcast %572 : vector<1x32xf32> to vector<16x32xf32>
    %594 = arith.mulf %592, %593 : vector<16x32xf32>
    %595 = vector.broadcast %574 : vector<1x32xf32> to vector<16x32xf32>
    %596 = arith.addf %594, %595 : vector<16x32xf32>
    %c2_322 = arith.constant 2 : index
    %c0_323 = arith.constant 0 : index
    %c0_324 = arith.constant 0 : index
    %597 = vector.load %arg12[%c2_322, %c0_323, %c0_324] : memref<3x32x64xf32, #tpu.memory_space<vmem>>, vector<1x32x64xf32>
    %598 = vector.shape_cast %597 : vector<1x32x64xf32> to vector<32x64xf32>
    %cst_325 = arith.constant dense<0.000000e+00> : vector<16x64xf32>
    %599 = tpu.matmul %596, %598, %cst_325 {dimension_numbers = #tpu.dot_dimension_numbers<[1], [0], [0], [1], [0, 0, 1, 1], [], []>} : vector<16x32xf32>, vector<32x64xf32>, vector<16x64xf32> -> vector<16x64xf32>
    %c2_326 = arith.constant 2 : index
    %c0_327 = arith.constant 0 : index
    %c0_328 = arith.constant 0 : index
    %600 = vector.load %arg13[%c2_326, %c0_327, %c0_328] : memref<3x1x64xf32, #tpu.memory_space<vmem>>, vector<1x1x64xf32>
    %601 = vector.shape_cast %600 : vector<1x1x64xf32> to vector<1x64xf32>
    %602 = vector.broadcast %601 : vector<1x64xf32> to vector<16x64xf32>
    %603 = arith.addf %599, %602 : vector<16x64xf32>
    %cst_329 = arith.constant 0.000000e+00 : f32
    %604 = vector.broadcast %cst_329 : f32 to vector<16x64xf32>
    %605 = arith.maximumf %603, %604 : vector<16x64xf32>
    %c2_330 = arith.constant 2 : index
    %c0_331 = arith.constant 0 : index
    %c0_332 = arith.constant 0 : index
    %606 = vector.load %arg14[%c2_330, %c0_331, %c0_332] : memref<3x64x32xf32, #tpu.memory_space<vmem>>, vector<1x64x32xf32>
    %607 = vector.shape_cast %606 : vector<1x64x32xf32> to vector<64x32xf32>
    %cst_333 = arith.constant dense<0.000000e+00> : vector<16x32xf32>
    %608 = tpu.matmul %605, %607, %cst_333 {dimension_numbers = #tpu.dot_dimension_numbers<[1], [0], [0], [1], [0, 0, 1, 1], [], []>} : vector<16x64xf32>, vector<64x32xf32>, vector<16x32xf32> -> vector<16x32xf32>
    %c2_334 = arith.constant 2 : index
    %c0_335 = arith.constant 0 : index
    %c0_336 = arith.constant 0 : index
    %609 = vector.load %arg15[%c2_334, %c0_335, %c0_336] : memref<3x1x32xf32, #tpu.memory_space<vmem>>, vector<1x1x32xf32>
    %610 = vector.shape_cast %609 : vector<1x1x32xf32> to vector<1x32xf32>
    %611 = vector.broadcast %610 : vector<1x32xf32> to vector<16x32xf32>
    %612 = arith.addf %608, %611 : vector<16x32xf32>
    %613 = arith.addf %596, %612 : vector<16x32xf32>
    %c2_337 = arith.constant 2 : index
    %c0_338 = arith.constant 0 : index
    %c0_339 = arith.constant 0 : index
    %614 = vector.load %arg16[%c2_337, %c0_338, %c0_339] : memref<3x1x32xf32, #tpu.memory_space<vmem>>, vector<1x1x32xf32>
    %615 = vector.shape_cast %614 : vector<1x1x32xf32> to vector<1x32xf32>
    %c2_340 = arith.constant 2 : index
    %c0_341 = arith.constant 0 : index
    %c0_342 = arith.constant 0 : index
    %616 = vector.load %arg17[%c2_340, %c0_341, %c0_342] : memref<3x1x32xf32, #tpu.memory_space<vmem>>, vector<1x1x32xf32>
    %617 = vector.shape_cast %616 : vector<1x1x32xf32> to vector<1x32xf32>
    %cst_343 = arith.constant dense<0.000000e+00> : vector<16xf32>
    %618 = vector.multi_reduction <add>, %613, %cst_343 [1] : vector<16x32xf32> to vector<16xf32>
    %619 = vector.shape_cast %618 : vector<16xf32> to vector<16x1xf32>
    %cst_344 = arith.constant 3.200000e+01 : f32
    %620 = vector.broadcast %cst_344 : f32 to vector<16x1xf32>
    %621 = arith.divf %619, %620 : vector<16x1xf32>
    %622 = vector.broadcast %621 : vector<16x1xf32> to vector<16x32xf32>
    %623 = arith.subf %613, %622 : vector<16x32xf32>
    %624 = arith.mulf %623, %623 : vector<16x32xf32>
    %cst_345 = arith.constant dense<0.000000e+00> : vector<16xf32>
    %625 = vector.multi_reduction <add>, %624, %cst_345 [1] : vector<16x32xf32> to vector<16xf32>
    %626 = vector.shape_cast %625 : vector<16xf32> to vector<16x1xf32>
    %cst_346 = arith.constant 3.200000e+01 : f32
    %627 = vector.broadcast %cst_346 : f32 to vector<16x1xf32>
    %628 = arith.divf %626, %627 : vector<16x1xf32>
    %629 = vector.broadcast %621 : vector<16x1xf32> to vector<16x32xf32>
    %630 = arith.subf %613, %629 : vector<16x32xf32>
    %cst_347 = arith.constant 9.99999974E-6 : f32
    %631 = vector.broadcast %cst_347 : f32 to vector<16x1xf32>
    %632 = arith.addf %628, %631 : vector<16x1xf32>
    %633 = math.rsqrt %632 : vector<16x1xf32>
    %634 = vector.broadcast %633 : vector<16x1xf32> to vector<16x32xf32>
    %635 = arith.mulf %630, %634 : vector<16x32xf32>
    %636 = vector.broadcast %615 : vector<1x32xf32> to vector<16x32xf32>
    %637 = arith.mulf %635, %636 : vector<16x32xf32>
    %638 = vector.broadcast %617 : vector<1x32xf32> to vector<16x32xf32>
    %639 = arith.addf %637, %638 : vector<16x32xf32>
    %640 = vector.shape_cast %639 : vector<16x32xf32> to vector<2x8x32xf32>
    %c0_348 = arith.constant 0 : index
    %c0_349 = arith.constant 0 : index
    %c0_350 = arith.constant 0 : index
    %641 = vector.load %arg22[%c0_348, %c0_349, %c0_350] : memref<2x8x32xf32, #tpu.memory_space<vmem>>, vector<2x8x32xf32>
    tpu.vector_store %arg22[%c0_348, %c0_349, %c0_350], %640 {strides = array<i32>} : memref<2x8x32xf32, #tpu.memory_space<vmem>>, vector<2x8x32xf32>,
    %c0_351 = arith.constant 0 : index
    %c0_352 = arith.constant 0 : index
    %642 = vector.load %arg5[%c0_351, %c0_352] : memref<2x16xf32, #tpu.memory_space<vmem>>, vector<2x16xf32>
    %cst_353 = arith.constant dense<0.000000e+00> : vector<2x32xf32>
    %643 = tpu.matmul %642, %639, %cst_353 {dimension_numbers = #tpu.dot_dimension_numbers<[1], [0], [0], [1], [0, 0, 1, 1], [], []>} : vector<2x16xf32>, vector<16x32xf32>, vector<2x32xf32> -> vector<2x32xf32>
    %c0_354 = arith.constant 0 : index
    %c0_355 = arith.constant 0 : index
    %644 = vector.load %arg18[%c0_354, %c0_355] : memref<32x32xf32, #tpu.memory_space<vmem>>, vector<32x32xf32>
    %cst_356 = arith.constant dense<0.000000e+00> : vector<2x32xf32>
    %645 = tpu.matmul %643, %644, %cst_356 {dimension_numbers = #tpu.dot_dimension_numbers<[1], [0], [0], [1], [0, 0, 1, 1], [], []>} : vector<2x32xf32>, vector<32x32xf32>, vector<2x32xf32> -> vector<2x32xf32>
    %c0_357 = arith.constant 0 : index
    %c0_358 = arith.constant 0 : index
    %646 = vector.load %arg19[%c0_357, %c0_358] : memref<1x32xf32, #tpu.memory_space<vmem>>, vector<1x32xf32>
    %647 = vector.broadcast %646 : vector<1x32xf32> to vector<2x32xf32>
    %648 = arith.addf %645, %647 : vector<2x32xf32>
    %cst_359 = arith.constant 0.000000e+00 : f32
    %649 = vector.broadcast %cst_359 : f32 to vector<2x32xf32>
    %650 = arith.maximumf %648, %649 : vector<2x32xf32>
    %c0_360 = arith.constant 0 : index
    %c0_361 = arith.constant 0 : index
    %651 = vector.load %arg20[%c0_360, %c0_361] : memref<32x1xf32, #tpu.memory_space<vmem>>, vector<32x1xf32>
    %cst_362 = arith.constant dense<0.000000e+00> : vector<2x1xf32>
    %652 = tpu.matmul %650, %651, %cst_362 {dimension_numbers = #tpu.dot_dimension_numbers<[1], [0], [0], [1], [0, 0, 1, 1], [], []>} : vector<2x32xf32>, vector<32x1xf32>, vector<2x1xf32> -> vector<2x1xf32>
    %c0_363 = arith.constant 0 : index
    %c0_364 = arith.constant 0 : index
    %653 = vector.load %arg21[%c0_363, %c0_364] : memref<1x1xf32, #tpu.memory_space<vmem>>, vector<1x1xf32>
    %654 = vector.broadcast %653 : vector<1x1xf32> to vector<2x1xf32>
    %655 = arith.addf %652, %654 : vector<2x1xf32>
    %c0_365 = arith.constant 0 : index
    %c0_366 = arith.constant 0 : index
    %656 = vector.load %arg23[%c0_365, %c0_366] : memref<2x1xf32, #tpu.memory_space<vmem>>, vector<2x1xf32>
    tpu.vector_store %arg23[%c0_365, %c0_366], %655 {strides = array<i32>} : memref<2x1xf32, #tpu.memory_space<vmem>>, vector<2x1xf32>,
    return
  }
}

</mosaic_0001>

<llo_original>
// kernel: tpu_custom_call.1
$region0: #{tpu_custom_call.1}
  #allocation0 [shape = 'u32[]', space=smem, size = 0x4, offset = 0x4, fixed_abs, tag = 'smem constant byte address 0x4 - core index']
  #allocation1 [shape = 'u32[144,128]{1,0:T(1,128)}', space=vmem, size = 0x12000, scoped, tag = 'internal scratch']
  #allocation2 [shape = 'f32[16,32]{1,0:T(8,128)}', space=vmem, size = 0x2000, scoped, tag = 'scratch operand']
  #allocation3 [shape = 'f32[1,1]{1,0:T(1,128)S(1)}', space=vmem, size = 0x200, scoped, tag = 'scoped memory for tpu_custom_call.1']
  %s0 = inlined_call_operand.vmem [shape: s32[2,8], index: 0, kind: input, shape index: {}]
  %s1 = inlined_call_operand.vmem [shape: s32[2,8], index: 1, kind: input, shape index: {}]
  %s2 = inlined_call_operand.vmem [shape: f32[100,32], index: 2, kind: input, shape index: {}]
  %s3 = inlined_call_operand.vmem [shape: f32[16,32], index: 3, kind: input, shape index: {}]
  %s4 = inlined_call_operand.vmem [shape: f32[2,32], index: 4, kind: input, shape index: {}]
  %s5 = inlined_call_operand.vmem [shape: f32[2,16], index: 5, kind: input, shape index: {}]
  %s6 = inlined_call_operand.vmem [shape: f32[3,32,96], index: 6, kind: input, shape index: {}]
  %s7 = inlined_call_operand.vmem [shape: f32[3,1,96], index: 7, kind: input, shape index: {}]
  %s8 = inlined_call_operand.vmem [shape: f32[3,32,32], index: 8, kind: input, shape index: {}]
  %s9 = inlined_call_operand.vmem [shape: f32[3,1,32], index: 9, kind: input, shape index: {}]
  %s10 = inlined_call_operand.vmem [shape: f32[3,1,32], index: 10, kind: input, shape index: {}]
  %s11 = inlined_call_operand.vmem [shape: f32[3,1,32], index: 11, kind: input, shape index: {}]
  %s12 = inlined_call_operand.vmem [shape: f32[3,32,64], index: 12, kind: input, shape index: {}]
  %s13 = inlined_call_operand.vmem [shape: f32[3,1,64], index: 13, kind: input, shape index: {}]
  %s14 = inlined_call_operand.vmem [shape: f32[3,64,32], index: 14, kind: input, shape index: {}]
  %s15 = inlined_call_operand.vmem [shape: f32[3,1,32], index: 15, kind: input, shape index: {}]
  %s16 = inlined_call_operand.vmem [shape: f32[3,1,32], index: 16, kind: input, shape index: {}]
  %s17 = inlined_call_operand.vmem [shape: f32[3,1,32], index: 17, kind: input, shape index: {}]
  %s18 = inlined_call_operand.vmem [shape: f32[32,32], index: 18, kind: input, shape index: {}]
  %s19 = inlined_call_operand.vmem [shape: f32[1,32], index: 19, kind: input, shape index: {}]
  %s20 = inlined_call_operand.vmem [shape: f32[32,1], index: 20, kind: input, shape index: {}]
  %s21 = inlined_call_operand.<no memory space> [shape: f32[1,1], index: 21, kind: input, shape index: {}]
  %s22 = inlined_call_operand.hbm [shape: f32[2,8,32], index: 22, kind: output, shape index: {0}]
  %s23 = inlined_call_operand.vmem [shape: f32[2,1], index: 23, kind: output, shape index: {1}]
  %24 = xla_tuple %s22, %s23
  %s25 = sld [smem:[#allocation0]]
  $region114: #{tpu_custom_call.1} parent=0
    _
  %s27 = ssub.s32 1, %s25
  %s28 = scalar_select 0, %s27, %s25
  %v29 = vstv %s21
  %30 = vst [vmem:[#allocation3] sm:$0x1] %v29
  $region1: #{tpu_custom_call.1} parent=0
    #allocation4 [shape = 'u8[1024]{0}', space=smem, size = 0x400, scoped, tag = 'input window, operand 0, single buffered']
    #allocation5 [shape = 's32[1]{0}', space=sflag, size = 0x4, scoped, tag = 'scoped memory for tpu_custom_call.1']
    #allocation6 [shape = 's32[1]{0}', space=sflag, size = 0x4, scoped, tag = 'scoped memory for tpu_custom_call.1']
    #allocation7 [shape = 'u8[1024]{0}', space=smem, size = 0x400, scoped, tag = 'input window, operand 1, single buffered']
    #allocation8 [shape = 's32[1]{0}', space=sflag, size = 0x4, scoped, tag = 'scoped memory for tpu_custom_call.1']
    #allocation9 [shape = 'u8[8192]{0}', space=vmem, size = 0x2000, scoped, tag = 'output window, operand 0, single buffered']
    %31 = vsyncpa [#allocation6], 0
    %32 = vsyncpa [#allocation8], 0
    %33 = vsyncpa [#allocation5], 0
    // Predicated region
    $region2: #{tpu_custom_call.1} parent=1 // pred_check
      _
    $region3: #{tpu_custom_call.1} parent=1 // pred_check_branch
      %35 = sbr.rel (0) target = $region5
    $region4: #{tpu_custom_call.1} parent=1 // pred_region
      %s37 = ssub.s32 32, 32
      %38 = vsyncadd [#allocation6], %s37
      %s40 = sshll.u32 %s0, 4
      %s41 = int_to_ptr.vmem [resolvable:$true] %s40
      %43 = dma.vmem_to_smem %s41, 32, [#allocation4], [#allocation6]
    $region5: #{tpu_custom_call.1} parent=1 // pred_fallthru
      _
    // Predicated region
    $region6: #{tpu_custom_call.1} parent=1 // pred_check
      _
    $region7: #{tpu_custom_call.1} parent=1 // pred_check_branch
      %45 = sbr.rel (0) target = $region9
    $region8: #{tpu_custom_call.1} parent=1 // pred_region
      %s47 = ssub.s32 32, 32
      %48 = vsyncadd [#allocation8], %s47
      %s50 = sshll.u32 %s1, 4
      %s51 = int_to_ptr.vmem [resolvable:$true] %s50
      %53 = dma.vmem_to_smem %s51, 32, [#allocation7], [#allocation8]
    $region9: #{tpu_custom_call.1} parent=1 // pred_fallthru
      _
    // Predicated region
    $region10: #{tpu_custom_call.1} parent=1 // pred_check
      _
    $region11: #{tpu_custom_call.1} parent=1 // pred_check_branch
      %55 = sbr.rel (0) target = $region13
    $region12: #{tpu_custom_call.1} parent=1 // pred_region
      _
    $region13: #{tpu_custom_call.1} parent=1 // pred_fallthru
      _
    // Predicated region
    $region14: #{tpu_custom_call.1} parent=1 // pred_check
      _
    $region15: #{tpu_custom_call.1} parent=1 // pred_check_branch
      %57 = sbr.rel (0) target = $region17
    $region16: #{tpu_custom_call.1} parent=1 // pred_region
      _
    $region17: #{tpu_custom_call.1} parent=1 // pred_fallthru
      _
    // Predicated region
    $region18: #{tpu_custom_call.1} parent=1 // pred_check
      _
    $region19: #{tpu_custom_call.1} parent=1 // pred_check_branch
      %59 = sbr.rel (0) target = $region21
    $region20: #{tpu_custom_call.1} parent=1 // pred_region
      _
    $region21: #{tpu_custom_call.1} parent=1 // pred_fallthru
      _
    // Predicated region
    $region22: #{tpu_custom_call.1} parent=1 // pred_check
      _
    $region23: #{tpu_custom_call.1} parent=1 // pred_check_branch
      %61 = sbr.rel (0) target = $region25
    $region24: #{tpu_custom_call.1} parent=1 // pred_region
      _
    $region25: #{tpu_custom_call.1} parent=1 // pred_fallthru
      _
    // Predicated region
    $region26: #{tpu_custom_call.1} parent=1 // pred_check
      _
    $region27: #{tpu_custom_call.1} parent=1 // pred_check_branch
      %63 = sbr.rel (0) target = $region29
    $region28: #{tpu_custom_call.1} parent=1 // pred_region
      _
    $region29: #{tpu_custom_call.1} parent=1 // pred_fallthru
      _
    // Predicated region
    $region30: #{tpu_custom_call.1} parent=1 // pred_check
      _
    $region31: #{tpu_custom_call.1} parent=1 // pred_check_branch
      %65 = sbr.rel (0) target = $region33
    $region32: #{tpu_custom_call.1} parent=1 // pred_region
      _
    $region33: #{tpu_custom_call.1} parent=1 // pred_fallthru
      _
    // Predicated region
    $region34: #{tpu_custom_call.1} parent=1 // pred_check
      _
    $region35: #{tpu_custom_call.1} parent=1 // pred_check_branch
      %67 = sbr.rel (0) target = $region37
    $region36: #{tpu_custom_call.1} parent=1 // pred_region
      _
    $region37: #{tpu_custom_call.1} parent=1 // pred_fallthru
      _
    // Predicated region
    $region38: #{tpu_custom_call.1} parent=1 // pred_check
      _
    $region39: #{tpu_custom_call.1} parent=1 // pred_check_branch
      %69 = sbr.rel (0) target = $region41
    $region40: #{tpu_custom_call.1} parent=1 // pred_region
      _
    $region41: #{tpu_custom_call.1} parent=1 // pred_fallthru
      _
    // Predicated region
    $region42: #{tpu_custom_call.1} parent=1 // pred_check
      _
    $region43: #{tpu_custom_call.1} parent=1 // pred_check_branch
      %71 = sbr.rel (0) target = $region45
    $region44: #{tpu_custom_call.1} parent=1 // pred_region
      _
    $region45: #{tpu_custom_call.1} parent=1 // pred_fallthru
      _
    // Predicated region
    $region46: #{tpu_custom_call.1} parent=1 // pred_check
      _
    $region47: #{tpu_custom_call.1} parent=1 // pred_check_branch
      %73 = sbr.rel (0) target = $region49
    $region48: #{tpu_custom_call.1} parent=1 // pred_region
      _
    $region49: #{tpu_custom_call.1} parent=1 // pred_fallthru
      _
    // Predicated region
    $region50: #{tpu_custom_call.1} parent=1 // pred_check
      _
    $region51: #{tpu_custom_call.1} parent=1 // pred_check_branch
      %75 = sbr.rel (0) target = $region53
    $region52: #{tpu_custom_call.1} parent=1 // pred_region
      _
    $region53: #{tpu_custom_call.1} parent=1 // pred_fallthru
      _
    // Predicated region
    $region54: #{tpu_custom_call.1} parent=1 // pred_check
      _
    $region55: #{tpu_custom_call.1} parent=1 // pred_check_branch
      %77 = sbr.rel (0) target = $region57
    $region56: #{tpu_custom_call.1} parent=1 // pred_region
      _
    $region57: #{tpu_custom_call.1} parent=1 // pred_fallthru
      _
    // Predicated region
    $region58: #{tpu_custom_call.1} parent=1 // pred_check
      _
    $region59: #{tpu_custom_call.1} parent=1 // pred_check_branch
      %79 = sbr.rel (0) target = $region61
    $region60: #{tpu_custom_call.1} parent=1 // pred_region
      _
    $region61: #{tpu_custom_call.1} parent=1 // pred_fallthru
      _
    // Predicated region
    $region62: #{tpu_custom_call.1} parent=1 // pred_check
      _
    $region63: #{tpu_custom_call.1} parent=1 // pred_check_branch
      %81 = sbr.rel (0) target = $region65
    $region64: #{tpu_custom_call.1} parent=1 // pred_region
      _
    $region65: #{tpu_custom_call.1} parent=1 // pred_fallthru
      _
    // Predicated region
    $region66: #{tpu_custom_call.1} parent=1 // pred_check
      _
    $region67: #{tpu_custom_call.1} parent=1 // pred_check_branch
      %83 = sbr.rel (0) target = $region69
    $region68: #{tpu_custom_call.1} parent=1 // pred_region
      _
    $region69: #{tpu_custom_call.1} parent=1 // pred_fallthru
      _
    // Predicated region
    $region70: #{tpu_custom_call.1} parent=1 // pred_check
      _
    $region71: #{tpu_custom_call.1} parent=1 // pred_check_branch
      %85 = sbr.rel (0) target = $region73
    $region72: #{tpu_custom_call.1} parent=1 // pred_region
      _
    $region73: #{tpu_custom_call.1} parent=1 // pred_fallthru
      _
    // Predicated region
    $region74: #{tpu_custom_call.1} parent=1 // pred_check
      _
    $region75: #{tpu_custom_call.1} parent=1 // pred_check_branch
      %87 = sbr.rel (0) target = $region77
    $region76: #{tpu_custom_call.1} parent=1 // pred_region
      _
    $region77: #{tpu_custom_call.1} parent=1 // pred_fallthru
      _
    // Predicated region
    $region78: #{tpu_custom_call.1} parent=1 // pred_check
      _
    $region79: #{tpu_custom_call.1} parent=1 // pred_check_branch
      %89 = sbr.rel (0) target = $region81
    $region80: #{tpu_custom_call.1} parent=1 // pred_region
      _
    $region81: #{tpu_custom_call.1} parent=1 // pred_fallthru
      _
    // Predicated region
    $region82: #{tpu_custom_call.1} parent=1 // pred_check
      _
    $region83: #{tpu_custom_call.1} parent=1 // pred_check_branch
      %91 = sbr.rel (0) target = $region85
    $region84: #{tpu_custom_call.1} parent=1 // pred_region
      _
    $region85: #{tpu_custom_call.1} parent=1 // pred_fallthru
      _
    // Predicated region
    $region86: #{tpu_custom_call.1} parent=1 // pred_check
      _
    $region87: #{tpu_custom_call.1} parent=1 // pred_check_branch
      %93 = sbr.rel (0) target = $region89
    $region88: #{tpu_custom_call.1} parent=1 // pred_region
      _
    $region89: #{tpu_custom_call.1} parent=1 // pred_fallthru
      _
    // Predicated region
    $region90: #{tpu_custom_call.1} parent=1 // pred_check
      _
    $region91: #{tpu_custom_call.1} parent=1 // pred_check_branch
      %95 = sbr.rel (0) target = $region93
    $region92: #{tpu_custom_call.1} parent=1 // pred_region
      %96 = dma.done [#allocation6], 32
    $region93: #{tpu_custom_call.1} parent=1 // pred_fallthru
      _
    // Predicated region
    $region94: #{tpu_custom_call.1} parent=1 // pred_check
      _
    $region95: #{tpu_custom_call.1} parent=1 // pred_check_branch
      %98 = sbr.rel (0) target = $region97
    $region96: #{tpu_custom_call.1} parent=1 // pred_region
      %99 = dma.done [#allocation8], 32
    $region97: #{tpu_custom_call.1} parent=1 // pred_fallthru
      _
    %100 = sfence
    %s101 = sld [smem:[#allocation4]]
    %s102 = sld [smem:[#allocation7]]
    %s103 = scalar_lea.vmem %s2, %s101
    %v104 = vld [vmem:[%s103] sm:$0x1]
    %v105 = vld [vmem:[%s3] sm:$0x1]
    %v106 = vadd.f32 %v104, %v105
    %s107 = scalar_lea.vmem %s4, %s102
    %v108 = vld [vmem:[%s107] sm:$0x1]
    %v109 = vadd.f32 %v106, %v108
    %vm110 = vcmask 253952
    %111 = vst.msk [vmem:[#allocation2] sm:$0x1] %vm110, %v109
    %s112 = sld [smem:[#allocation4 + $0x1]]
    %s113 = sld [smem:[#allocation7 + $0x1]]
    %s114 = scalar_lea.vmem %s2, %s112
    %v115 = vld [vmem:[%s114] sm:$0x1]
    %v116 = vld [vmem:[%s3 + $0x1] sm:$0x1]
    %v117 = vadd.f32 %v115, %v116
    %s118 = scalar_lea.vmem %s4, %s113
    %v119 = vld [vmem:[%s118] sm:$0x1]
    %v120 = vadd.f32 %v117, %v119
    %121 = vst.msk [vmem:[#allocation2 + $0x1] sm:$0x1] %vm110, %v120
    %s122 = sld [smem:[#allocation4 + $0x2]]
    %s123 = sld [smem:[#allocation7 + $0x2]]
    %s124 = scalar_lea.vmem %s2, %s122
    %v125 = vld [vmem:[%s124] sm:$0x1]
    %v126 = vld [vmem:[%s3 + $0x2] sm:$0x1]
    %v127 = vadd.f32 %v125, %v126
    %s128 = scalar_lea.vmem %s4, %s123
    %v129 = vld [vmem:[%s128] sm:$0x1]
    %v130 = vadd.f32 %v127, %v129
    %131 = vst.msk [vmem:[#allocation2 + $0x2] sm:$0x1] %vm110, %v130
    %s132 = sld [smem:[#allocation4 + $0x3]]
    %s133 = sld [smem:[#allocation7 + $0x3]]
    %s134 = scalar_lea.vmem %s2, %s132
    %v135 = vld [vmem:[%s134] sm:$0x1]
    %v136 = vld [vmem:[%s3 + $0x3] sm:$0x1]
    %v137 = vadd.f32 %v135, %v136
    %s138 = scalar_lea.vmem %s4, %s133
    %v139 = vld [vmem:[%s138] sm:$0x1]
    %v140 = vadd.f32 %v137, %v139
    %141 = vst.msk [vmem:[#allocation2 + $0x3] sm:$0x1] %vm110, %v140
    %s142 = sld [smem:[#allocation4 + $0x4]]
    %s143 = sld [smem:[#allocation7 + $0x4]]
    %s144 = scalar_lea.vmem %s2, %s142
    %v145 = vld [vmem:[%s144] sm:$0x1]
    %v146 = vld [vmem:[%s3 + $0x4] sm:$0x1]
    %v147 = vadd.f32 %v145, %v146
    %s148 = scalar_lea.vmem %s4, %s143
    %v149 = vld [vmem:[%s148] sm:$0x1]
    %v150 = vadd.f32 %v147, %v149
    %151 = vst.msk [vmem:[#allocation2 + $0x4] sm:$0x1] %vm110, %v150
    %s152 = sld [smem:[#allocation4 + $0x5]]
    %s153 = sld [smem:[#allocation7 + $0x5]]
    %s154 = scalar_lea.vmem %s2, %s152
    %v155 = vld [vmem:[%s154] sm:$0x1]
    %v156 = vld [vmem:[%s3 + $0x5] sm:$0x1]
    %v157 = vadd.f32 %v155, %v156
    %s158 = scalar_lea.vmem %s4, %s153
    %v159 = vld [vmem:[%s158] sm:$0x1]
    %v160 = vadd.f32 %v157, %v159
    %161 = vst.msk [vmem:[#allocation2 + $0x5] sm:$0x1] %vm110, %v160
    %s162 = sld [smem:[#allocation4 + $0x6]]
    %s163 = sld [smem:[#allocation7 + $0x6]]
    %s164 = scalar_lea.vmem %s2, %s162
    %v165 = vld [vmem:[%s164] sm:$0x1]
    %v166 = vld [vmem:[%s3 + $0x6] sm:$0x1]
    %v167 = vadd.f32 %v165, %v166
    %s168 = scalar_lea.vmem %s4, %s163
    %v169 = vld [vmem:[%s168] sm:$0x1]
    %v170 = vadd.f32 %v167, %v169
    %171 = vst.msk [vmem:[#allocation2 + $0x6] sm:$0x1] %vm110, %v170
    %s172 = sld [smem:[#allocation4 + $0x7]]
    %s173 = sld [smem:[#allocation7 + $0x7]]
    %s174 = scalar_lea.vmem %s2, %s172
    %v175 = vld [vmem:[%s174] sm:$0x1]
    %v176 = vld [vmem:[%s3 + $0x7] sm:$0x1]
    %v177 = vadd.f32 %v175, %v176
    %s178 = scalar_lea.vmem %s4, %s173
    %v179 = vld [vmem:[%s178] sm:$0x1]
    %v180 = vadd.f32 %v177, %v179
    %181 = vst.msk [vmem:[#allocation2 + $0x7] sm:$0x1] %vm110, %v180
    %s182 = sld [smem:[#allocation4 + $0x80]]
    %s183 = sld [smem:[#allocation7 + $0x80]]
    %s184 = scalar_lea.vmem %s2, %s182
    %v185 = vld [vmem:[%s184] sm:$0x1]
    %v186 = vld [vmem:[%s3] sm:$0x1]
    %v187 = vadd.f32 %v185, %v186
    %s188 = scalar_lea.vmem %s4, %s183
    %v189 = vld [vmem:[%s188] sm:$0x1]
    %v190 = vadd.f32 %v187, %v189
    %191 = vst.msk [vmem:[#allocation2 + $0x8] sm:$0x1] %vm110, %v190
    %s192 = sld [smem:[#allocation4 + $0x81]]
    %s193 = sld [smem:[#allocation7 + $0x81]]
    %s194 = scalar_lea.vmem %s2, %s192
    %v195 = vld [vmem:[%s194] sm:$0x1]
    %v196 = vld [vmem:[%s3 + $0x1] sm:$0x1]
    %v197 = vadd.f32 %v195, %v196
    %s198 = scalar_lea.vmem %s4, %s193
    %v199 = vld [vmem:[%s198] sm:$0x1]
    %v200 = vadd.f32 %v197, %v199
    %201 = vst.msk [vmem:[#allocation2 + $0x9] sm:$0x1] %vm110, %v200
    %s202 = sld [smem:[#allocation4 + $0x82]]
    %s203 = sld [smem:[#allocation7 + $0x82]]
    %s204 = scalar_lea.vmem %s2, %s202
    %v205 = vld [vmem:[%s204] sm:$0x1]
    %v206 = vld [vmem:[%s3 + $0x2] sm:$0x1]
    %v207 = vadd.f32 %v205, %v206
    %s208 = scalar_lea.vmem %s4, %s203
    %v209 = vld [vmem:[%s208] sm:$0x1]
    %v210 = vadd.f32 %v207, %v209
    %211 = vst.msk [vmem:[#allocation2 + $0xa] sm:$0x1] %vm110, %v210
    %s212 = sld [smem:[#allocation4 + $0x83]]
    %s213 = sld [smem:[#allocation7 + $0x83]]
    %s214 = scalar_lea.vmem %s2, %s212
    %v215 = vld [vmem:[%s214] sm:$0x1]
    %v216 = vld [vmem:[%s3 + $0x3] sm:$0x1]
    %v217 = vadd.f32 %v215, %v216
    %s218 = scalar_lea.vmem %s4, %s213
    %v219 = vld [vmem:[%s218] sm:$0x1]
    %v220 = vadd.f32 %v217, %v219
    %221 = vst.msk [vmem:[#allocation2 + $0xb] sm:$0x1] %vm110, %v220
    %s222 = sld [smem:[#allocation4 + $0x84]]
    %s223 = sld [smem:[#allocation7 + $0x84]]
    %s224 = scalar_lea.vmem %s2, %s222
    %v225 = vld [vmem:[%s224] sm:$0x1]
    %v226 = vld [vmem:[%s3 + $0x4] sm:$0x1]
    %v227 = vadd.f32 %v225, %v226
    %s228 = scalar_lea.vmem %s4, %s223
    %v229 = vld [vmem:[%s228] sm:$0x1]
    %v230 = vadd.f32 %v227, %v229
    %231 = vst.msk [vmem:[#allocation2 + $0xc] sm:$0x1] %vm110, %v230
    %s232 = sld [smem:[#allocation4 + $0x85]]
    %s233 = sld [smem:[#allocation7 + $0x85]]
    %s234 = scalar_lea.vmem %s2, %s232
    %v235 = vld [vmem:[%s234] sm:$0x1]
    %v236 = vld [vmem:[%s3 + $0x5] sm:$0x1]
    %v237 = vadd.f32 %v235, %v236
    %s238 = scalar_lea.vmem %s4, %s233
    %v239 = vld [vmem:[%s238] sm:$0x1]
    %v240 = vadd.f32 %v237, %v239
    %241 = vst.msk [vmem:[#allocation2 + $0xd] sm:$0x1] %vm110, %v240
    %s242 = sld [smem:[#allocation4 + $0x86]]
    %s243 = sld [smem:[#allocation7 + $0x86]]
    %s244 = scalar_lea.vmem %s2, %s242
    %v245 = vld [vmem:[%s244] sm:$0x1]
    %v246 = vld [vmem:[%s3 + $0x6] sm:$0x1]
    %v247 = vadd.f32 %v245, %v246
    %s248 = scalar_lea.vmem %s4, %s243
    %v249 = vld [vmem:[%s248] sm:$0x1]
    %v250 = vadd.f32 %v247, %v249
    %251 = vst.msk [vmem:[#allocation2 + $0xe] sm:$0x1] %vm110, %v250
    %s252 = sld [smem:[#allocation4 + $0x87]]
    %s253 = sld [smem:[#allocation7 + $0x87]]
    %s254 = scalar_lea.vmem %s2, %s252
    %v255 = vld [vmem:[%s254] sm:$0x1]
    %v256 = vld [vmem:[%s3 + $0x7] sm:$0x1]
    %v257 = vadd.f32 %v255, %v256
    %s258 = scalar_lea.vmem %s4, %s253
    %v259 = vld [vmem:[%s258] sm:$0x1]
    %v260 = vadd.f32 %v257, %v259
    %261 = vst.msk [vmem:[#allocation2 + $0xf] sm:$0x1] %vm110, %v260
    %v262 = vld [vmem:[#allocation2] sm:$0xff]
    %v263 = vld [vmem:[#allocation2 + $0x8] sm:$0xff]
    %v264 = vld [vmem:[%s6] sm:$0xff]
    %v265 = vld [vmem:[%s6 + $0x8] sm:$0xff]
    %v266 = vld [vmem:[%s6 + $0x10] sm:$0xff]
    %v267 = vld [vmem:[%s6 + $0x18] sm:$0xff]
    %v268 = vld [vmem:[%s7] sm:$0x1]
    %v270 = vlaneseq
    %v271 = vshrl.u32 %v270, 7
    %v272 = vsub.s32 0, %v271
    %v273 = vrot.slane %v268, %v272
    %vm275 = vcmask 261120
    %v277 = vsel %vm275, %v262, 0
    %v280 = vsel %vm275, %v263, 0
    %282 = vmatprep.subr.mxu0 0.0
    %283 = vmatpush1.msra.mxu0 0.0
    %284 = vmatprep.subr.mxu0 0.0
    %285 = vmatpush1.msra.mxu0 0.0
    %286 = vmatprep.subr.mxu0 0.0
    %287 = vmatpush1.msra.mxu0 0.0
    %288 = vmatprep.subr.mxu0 0.0
    %289 = vmatpush1.msra.mxu0 0.0
    %290 = vmatprep.subr.mxu0 0.0
    %291 = vmatpush1.msra.mxu0 0.0
    %292 = vmatprep.subr.mxu0 0.0
    %293 = vmatpush1.msra.mxu0 0.0
    %294 = vmatprep.subr.mxu0 0.0
    %295 = vmatpush1.msra.mxu0 0.0
    %296 = vmatprep.subr.mxu0 0.0
    %297 = vmatpush1.msra.mxu0 0.0
    %298 = vmatprep.subr.mxu0 0.0
    %299 = vmatpush1.msra.mxu0 0.0
    %300 = vmatprep.subr.mxu0 0.0
    %301 = vmatpush1.msra.mxu0 0.0
    %302 = vmatprep.subr.mxu0 0.0
    %303 = vmatpush1.msra.mxu0 0.0
    %304 = vmatprep.subr.mxu0 0.0
    %305 = vmatpush1.msra.mxu0 0.0
    %306 = vmatprep.subr.mxu0 0.0
    %307 = vmatpush1.msra.mxu0 %v267
    %308 = vmatprep.subr.mxu0 0.0
    %309 = vmatpush1.msra.mxu0 %v266
    %310 = vmatprep.subr.mxu0 0.0
    %311 = vmatpush1.msra.mxu0 %v265
    %312 = vmatprep.subr.mxu0 0.0
    %313 = vmatpush1.msra.mxu0 %v264
    %314 = vmatprep.subr.mxu0 0.0
    %315 = vmatpush2.msra.mxu0 0.0
    %316 = vmatprep.subr.mxu0 0.0
    %317 = vmatpush2.msra.mxu0 0.0
    %318 = vmatprep.subr.mxu0 0.0
    %319 = vmatpush2.msra.mxu0 0.0
    %320 = vmatprep.subr.mxu0 0.0
    %321 = vmatpush2.msra.mxu0 0.0
    %322 = vmatprep.subr.mxu0 0.0
    %323 = vmatpush2.msra.mxu0 0.0
    %324 = vmatprep.subr.mxu0 0.0
    %325 = vmatpush2.msra.mxu0 0.0
    %326 = vmatprep.subr.mxu0 0.0
    %327 = vmatpush2.msra.mxu0 0.0
    %328 = vmatprep.subr.mxu0 0.0
    %329 = vmatpush2.msra.mxu0 0.0
    %330 = vmatprep.subr.mxu0 0.0
    %331 = vmatpush2.msra.mxu0 0.0
    %332 = vmatprep.subr.mxu0 0.0
    %333 = vmatpush2.msra.mxu0 0.0
    %334 = vmatprep.subr.mxu0 0.0
    %335 = vmatpush2.msra.mxu0 0.0
    %336 = vmatprep.subr.mxu0 0.0
    %337 = vmatpush2.msra.mxu0 0.0
    %338 = vmatprep.subr.mxu0 0.0
    %339 = vmatpush2.msra.mxu0 0.0
    %340 = vmatprep.subr.mxu0 0.0
    %341 = vmatpush2.msra.mxu0 0.0
    %342 = vmatprep.subr.mxu0 0.0
    %343 = vmatpush2.msra.mxu0 0.0
    %344 = vmatprep.subr.mxu0 0.0
    %345 = vmatpush2.msra.mxu0 0.0
    %346 = vmatprep.mubr.f32.mxu0 0.0
    %347 = vmatmul.mubr.f32.gmra.mxu0 %v277
    %v348 = vpop.f32.mrf.mxu0
    %v349 = vadd.f32 %v273, %v348
    %v350 = vpop.f32.mrf.mxu0
    %351 = vmatprep.mubr.f32.mxu0 0.0
    %352 = vmatmul.mubr.f32.gmra.mxu0 %v280
    %v353 = vpop.f32.mrf.mxu0
    %v354 = vadd.f32 %v273, %v353
    %v355 = vpop.f32.mrf.mxu0
    %356 = vdwg.mxu0
    %358 = vrot.lane.b32.xlu0 %v349, 96
    %v359 = vpop.permute.xlu0 %358
    %vm360 = vcmask 64512
    %v361 = vsel %vm360, %v349, 0
    %v363 = vsel %vm360, %v359, 0
    %365 = vmatprep.subr.mxu0 0.0
    %366 = vmatpush1.xpose.msra.mxu0 0.0
    %367 = vmatprep.subr.mxu0 0.0
    %368 = vmatpush1.xpose.msra.mxu0 0.0
    %369 = vmatprep.subr.mxu0 0.0
    %370 = vmatpush1.xpose.msra.mxu0 0.0
    %371 = vmatprep.subr.mxu0 0.0
    %372 = vmatpush1.xpose.msra.mxu0 0.0
    %373 = vmatprep.subr.mxu0 0.0
    %374 = vmatpush1.xpose.msra.mxu0 0.0
    %375 = vmatprep.subr.mxu0 0.0
    %376 = vmatpush1.xpose.msra.mxu0 0.0
    %377 = vmatprep.subr.mxu0 0.0
    %378 = vmatpush1.xpose.msra.mxu0 0.0
    %379 = vmatprep.subr.mxu0 0.0
    %380 = vmatpush1.xpose.msra.mxu0 0.0
    %381 = vmatprep.subr.mxu0 0.0
    %382 = vmatpush1.xpose.msra.mxu0 0.0
    %383 = vmatprep.subr.mxu0 0.0
    %384 = vmatpush1.xpose.msra.mxu0 0.0
    %385 = vmatprep.subr.mxu0 0.0
    %386 = vmatpush1.xpose.msra.mxu0 0.0
    %387 = vmatprep.subr.mxu0 0.0
    %388 = vmatpush1.xpose.msra.mxu0 0.0
    %389 = vmatprep.subr.mxu0 0.0
    %390 = vmatpush1.xpose.msra.mxu0 0.0
    %391 = vmatprep.subr.mxu0 0.0
    %392 = vmatpush1.xpose.msra.mxu0 0.0
    %393 = vmatprep.subr.mxu0 0.0
    %394 = vmatpush1.xpose.msra.mxu0 0.0
    %395 = vmatprep.subr.mxu0 0.0
    %396 = vmatpush1.xpose.msra.mxu0 %v363
    %397 = vmatprep.subr.mxu0 0.0
    %398 = vmatpush2.xpose.msra.mxu0 0.0
    %399 = vmatprep.subr.mxu0 0.0
    %400 = vmatpush2.xpose.msra.mxu0 0.0
    %401 = vmatprep.subr.mxu0 0.0
    %402 = vmatpush2.xpose.msra.mxu0 0.0
    %403 = vmatprep.subr.mxu0 0.0
    %404 = vmatpush2.xpose.msra.mxu0 0.0
    %405 = vmatprep.subr.mxu0 0.0
    %406 = vmatpush2.xpose.msra.mxu0 0.0
    %407 = vmatprep.subr.mxu0 0.0
    %408 = vmatpush2.xpose.msra.mxu0 0.0
    %409 = vmatprep.subr.mxu0 0.0
    %410 = vmatpush2.xpose.msra.mxu0 0.0
    %411 = vmatprep.subr.mxu0 0.0
    %412 = vmatpush2.xpose.msra.mxu0 0.0
    %413 = vmatprep.subr.mxu0 0.0
    %414 = vmatpush2.xpose.msra.mxu0 0.0
    %415 = vmatprep.subr.mxu0 0.0
    %416 = vmatpush2.xpose.msra.mxu0 0.0
    %417 = vmatprep.subr.mxu0 0.0
    %418 = vmatpush2.xpose.msra.mxu0 0.0
    %419 = vmatprep.subr.mxu0 0.0
    %420 = vmatpush2.xpose.msra.mxu0 0.0
    %421 = vmatprep.subr.mxu0 0.0
    %422 = vmatpush2.xpose.msra.mxu0 0.0
    %423 = vmatprep.subr.mxu0 0.0
    %424 = vmatpush2.xpose.msra.mxu0 0.0
    %425 = vmatprep.subr.mxu0 0.0
    %426 = vmatpush2.xpose.msra.mxu0 0.0
    %427 = vmatprep.subr.mxu0 0.0
    %428 = vmatpush2.xpose.msra.mxu0 0.0
    %429 = vmatprep.mubr.f32.mxu0 0.0
    %430 = vmatmul.mubr.f32.gmra.mxu0 %v361
    %v431 = vpop.f32.mrf.mxu0
    %v432 = vadd.f32 0.0, %v431
    %v433 = vpop.f32.mrf.mxu0
    %434 = vdwg.mxu0
    %436 = vrot.lane.b32.xlu0 %v354, 96
    %v437 = vpop.permute.xlu0 %436
    %v438 = vsel %vm360, %v354, 0
    %v440 = vsel %vm360, %v437, 0
    %442 = vmatprep.subr.mxu0 0.0
    %443 = vmatpush1.xpose.msra.mxu0 0.0
    %444 = vmatprep.subr.mxu0 0.0
    %445 = vmatpush1.xpose.msra.mxu0 0.0
    %446 = vmatprep.subr.mxu0 0.0
    %447 = vmatpush1.xpose.msra.mxu0 0.0
    %448 = vmatprep.subr.mxu0 0.0
    %449 = vmatpush1.xpose.msra.mxu0 0.0
    %450 = vmatprep.subr.mxu0 0.0
    %451 = vmatpush1.xpose.msra.mxu0 0.0
    %452 = vmatprep.subr.mxu0 0.0
    %453 = vmatpush1.xpose.msra.mxu0 0.0
    %454 = vmatprep.subr.mxu0 0.0
    %455 = vmatpush1.xpose.msra.mxu0 0.0
    %456 = vmatprep.subr.mxu0 0.0
    %457 = vmatpush1.xpose.msra.mxu0 0.0
    %458 = vmatprep.subr.mxu0 0.0
    %459 = vmatpush1.xpose.msra.mxu0 0.0
    %460 = vmatprep.subr.mxu0 0.0
    %461 = vmatpush1.xpose.msra.mxu0 0.0
    %462 = vmatprep.subr.mxu0 0.0
    %463 = vmatpush1.xpose.msra.mxu0 0.0
    %464 = vmatprep.subr.mxu0 0.0
    %465 = vmatpush1.xpose.msra.mxu0 0.0
    %466 = vmatprep.subr.mxu0 0.0
    %467 = vmatpush1.xpose.msra.mxu0 0.0
    %468 = vmatprep.subr.mxu0 0.0
    %469 = vmatpush1.xpose.msra.mxu0 0.0
    %470 = vmatprep.subr.mxu0 0.0
    %471 = vmatpush1.xpose.msra.mxu0 0.0
    %472 = vmatprep.subr.mxu0 0.0
    %473 = vmatpush1.xpose.msra.mxu0 %v440
    %474 = vmatprep.subr.mxu0 0.0
    %475 = vmatpush2.xpose.msra.mxu0 0.0
    %476 = vmatprep.subr.mxu0 0.0
    %477 = vmatpush2.xpose.msra.mxu0 0.0
    %478 = vmatprep.subr.mxu0 0.0
    %479 = vmatpush2.xpose.msra.mxu0 0.0
    %480 = vmatprep.subr.mxu0 0.0
    %481 = vmatpush2.xpose.msra.mxu0 0.0
    %482 = vmatprep.subr.mxu0 0.0
    %483 = vmatpush2.xpose.msra.mxu0 0.0
    %484 = vmatprep.subr.mxu0 0.0
    %485 = vmatpush2.xpose.msra.mxu0 0.0
    %486 = vmatprep.subr.mxu0 0.0
    %487 = vmatpush2.xpose.msra.mxu0 0.0
    %488 = vmatprep.subr.mxu0 0.0
    %489 = vmatpush2.xpose.msra.mxu0 0.0
    %490 = vmatprep.subr.mxu0 0.0
    %491 = vmatpush2.xpose.msra.mxu0 0.0
    %492 = vmatprep.subr.mxu0 0.0
    %493 = vmatpush2.xpose.msra.mxu0 0.0
    %494 = vmatprep.subr.mxu0 0.0
    %495 = vmatpush2.xpose.msra.mxu0 0.0
    %496 = vmatprep.subr.mxu0 0.0
    %497 = vmatpush2.xpose.msra.mxu0 0.0
    %498 = vmatprep.subr.mxu0 0.0
    %499 = vmatpush2.xpose.msra.mxu0 0.0
    %500 = vmatprep.subr.mxu0 0.0
    %501 = vmatpush2.xpose.msra.mxu0 0.0
    %502 = vmatprep.subr.mxu0 0.0
    %503 = vmatpush2.xpose.msra.mxu0 0.0
    %504 = vmatprep.subr.mxu0 0.0
    %505 = vmatpush2.xpose.msra.mxu0 0.0
    %506 = vmatprep.mubr.f32.mxu0 0.0
    %507 = vmatmul.mubr.f32.gmra.mxu0 %v438
    %v508 = vpop.f32.mrf.mxu0
    %v509 = vadd.f32 0.0, %v508
    %v510 = vpop.f32.mrf.mxu0
    %511 = vdwg.mxu0
    %v512 = vmul.f32 %v432, 0.35355338
    %v513 = vmul.f32 %v509, 0.35355338
    %v514 = vsel %vm360, %v512, -inf
    %515 = vmax.xlane.f32.xlu0 %v514
    %v516 = vpop.xlane.xlu0 %515
    %v517 = vsel %vm360, %v513, -inf
    %518 = vmax.xlane.f32.xlu0 %v517
    %v519 = vpop.xlane.xlu0 %518
    %v520 = vsub.f32 %v512, %v516
    %v521 = vsub.f32 %v513, %v519
    %v522 = vmul.f32 %v520, 1.442695
    %v523 = vpow.pop %v522
    %v524 = vmul.f32 %v521, 1.442695
    %v525 = vpow.pop %v524
    %v526 = vsel %vm360, %v523, 0.0
    %527 = vadd.xlane.f32.xlu0 %v526
    %v528 = vpop.xlane.xlu0 %527
    %v529 = vsel %vm360, %v525, 0.0
    %530 = vadd.xlane.f32.xlu0 %v529
    %v531 = vpop.xlane.xlu0 %530
    %v532 = vrcp.pop %v528
    %v533 = vmul.f32 %v523, %v532
    %v534 = vrcp.pop %v531
    %v535 = vmul.f32 %v525, %v534
    %536 = vrot.lane.b32.xlu0 %v349, 64
    %v537 = vpop.permute.xlu0 %536
    %v540 = vsel %vm360, %v533, 0
    %542 = vmatprep.subr.mxu0 0.0
    %543 = vmatpush1.msra.mxu0 0.0
    %544 = vmatprep.subr.mxu0 0.0
    %545 = vmatpush1.msra.mxu0 0.0
    %546 = vmatprep.subr.mxu0 0.0
    %547 = vmatpush1.msra.mxu0 0.0
    %548 = vmatprep.subr.mxu0 0.0
    %549 = vmatpush1.msra.mxu0 0.0
    %550 = vmatprep.subr.mxu0 0.0
    %551 = vmatpush1.msra.mxu0 0.0
    %552 = vmatprep.subr.mxu0 0.0
    %553 = vmatpush1.msra.mxu0 0.0
    %554 = vmatprep.subr.mxu0 0.0
    %555 = vmatpush1.msra.mxu0 0.0
    %556 = vmatprep.subr.mxu0 0.0
    %557 = vmatpush1.msra.mxu0 0.0
    %558 = vmatprep.subr.mxu0 0.0
    %559 = vmatpush1.msra.mxu0 0.0
    %560 = vmatprep.subr.mxu0 0.0
    %561 = vmatpush1.msra.mxu0 0.0
    %562 = vmatprep.subr.mxu0 0.0
    %563 = vmatpush1.msra.mxu0 0.0
    %564 = vmatprep.subr.mxu0 0.0
    %565 = vmatpush1.msra.mxu0 0.0
    %566 = vmatprep.subr.mxu0 0.0
    %567 = vmatpush1.msra.mxu0 0.0
    %568 = vmatprep.subr.mxu0 0.0
    %569 = vmatpush1.msra.mxu0 0.0
    %570 = vmatprep.subr.mxu0 0.0
    %571 = vmatpush1.msra.mxu0 0.0
    %572 = vmatprep.subr.mxu0 0.0
    %573 = vmatpush1.msra.mxu0 %v537
    %574 = vmatprep.subr.mxu0 0.0
    %575 = vmatpush2.msra.mxu0 0.0
    %576 = vmatprep.subr.mxu0 0.0
    %577 = vmatpush2.msra.mxu0 0.0
    %578 = vmatprep.subr.mxu0 0.0
    %579 = vmatpush2.msra.mxu0 0.0
    %580 = vmatprep.subr.mxu0 0.0
    %581 = vmatpush2.msra.mxu0 0.0
    %582 = vmatprep.subr.mxu0 0.0
    %583 = vmatpush2.msra.mxu0 0.0
    %584 = vmatprep.subr.mxu0 0.0
    %585 = vmatpush2.msra.mxu0 0.0
    %586 = vmatprep.subr.mxu0 0.0
    %587 = vmatpush2.msra.mxu0 0.0
    %588 = vmatprep.subr.mxu0 0.0
    %589 = vmatpush2.msra.mxu0 0.0
    %590 = vmatprep.subr.mxu0 0.0
    %591 = vmatpush2.msra.mxu0 0.0
    %592 = vmatprep.subr.mxu0 0.0
    %593 = vmatpush2.msra.mxu0 0.0
    %594 = vmatprep.subr.mxu0 0.0
    %595 = vmatpush2.msra.mxu0 0.0
    %596 = vmatprep.subr.mxu0 0.0
    %597 = vmatpush2.msra.mxu0 0.0
    %598 = vmatprep.subr.mxu0 0.0
    %599 = vmatpush2.msra.mxu0 0.0
    %600 = vmatprep.subr.mxu0 0.0
    %601 = vmatpush2.msra.mxu0 0.0
    %602 = vmatprep.subr.mxu0 0.0
    %603 = vmatpush2.msra.mxu0 0.0
    %604 = vmatprep.subr.mxu0 0.0
    %605 = vmatpush2.msra.mxu0 0.0
    %606 = vmatprep.mubr.f32.mxu0 0.0
    %607 = vmatmul.mubr.f32.gmra.mxu0 %v540
    %v608 = vpop.f32.mrf.mxu0
    %v609 = vadd.f32 0.0, %v608
    %v610 = vpop.f32.mrf.mxu0
    %611 = vdwg.mxu0
    %612 = vrot.lane.b32.xlu0 %v354, 64
    %v613 = vpop.permute.xlu0 %612
    %v616 = vsel %vm360, %v535, 0
    %618 = vmatprep.subr.mxu0 0.0
    %619 = vmatpush1.msra.mxu0 0.0
    %620 = vmatprep.subr.mxu0 0.0
    %621 = vmatpush1.msra.mxu0 0.0
    %622 = vmatprep.subr.mxu0 0.0
    %623 = vmatpush1.msra.mxu0 0.0
    %624 = vmatprep.subr.mxu0 0.0
    %625 = vmatpush1.msra.mxu0 0.0
    %626 = vmatprep.subr.mxu0 0.0
    %627 = vmatpush1.msra.mxu0 0.0
    %628 = vmatprep.subr.mxu0 0.0
    %629 = vmatpush1.msra.mxu0 0.0
    %630 = vmatprep.subr.mxu0 0.0
    %631 = vmatpush1.msra.mxu0 0.0
    %632 = vmatprep.subr.mxu0 0.0
    %633 = vmatpush1.msra.mxu0 0.0
    %634 = vmatprep.subr.mxu0 0.0
    %635 = vmatpush1.msra.mxu0 0.0
    %636 = vmatprep.subr.mxu0 0.0
    %637 = vmatpush1.msra.mxu0 0.0
    %638 = vmatprep.subr.mxu0 0.0
    %639 = vmatpush1.msra.mxu0 0.0
    %640 = vmatprep.subr.mxu0 0.0
    %641 = vmatpush1.msra.mxu0 0.0
    %642 = vmatprep.subr.mxu0 0.0
    %643 = vmatpush1.msra.mxu0 0.0
    %644 = vmatprep.subr.mxu0 0.0
    %645 = vmatpush1.msra.mxu0 0.0
    %646 = vmatprep.subr.mxu0 0.0
    %647 = vmatpush1.msra.mxu0 0.0
    %648 = vmatprep.subr.mxu0 0.0
    %649 = vmatpush1.msra.mxu0 %v613
    %650 = vmatprep.subr.mxu0 0.0
    %651 = vmatpush2.msra.mxu0 0.0
    %652 = vmatprep.subr.mxu0 0.0
    %653 = vmatpush2.msra.mxu0 0.0
    %654 = vmatprep.subr.mxu0 0.0
    %655 = vmatpush2.msra.mxu0 0.0
    %656 = vmatprep.subr.mxu0 0.0
    %657 = vmatpush2.msra.mxu0 0.0
    %658 = vmatprep.subr.mxu0 0.0
    %659 = vmatpush2.msra.mxu0 0.0
    %660 = vmatprep.subr.mxu0 0.0
    %661 = vmatpush2.msra.mxu0 0.0
    %662 = vmatprep.subr.mxu0 0.0
    %663 = vmatpush2.msra.mxu0 0.0
    %664 = vmatprep.subr.mxu0 0.0
    %665 = vmatpush2.msra.mxu0 0.0
    %666 = vmatprep.subr.mxu0 0.0
    %667 = vmatpush2.msra.mxu0 0.0
    %668 = vmatprep.subr.mxu0 0.0
    %669 = vmatpush2.msra.mxu0 0.0
    %670 = vmatprep.subr.mxu0 0.0
    %671 = vmatpush2.msra.mxu0 0.0
    %672 = vmatprep.subr.mxu0 0.0
    %673 = vmatpush2.msra.mxu0 0.0
    %674 = vmatprep.subr.mxu0 0.0
    %675 = vmatpush2.msra.mxu0 0.0
    %676 = vmatprep.subr.mxu0 0.0
    %677 = vmatpush2.msra.mxu0 0.0
    %678 = vmatprep.subr.mxu0 0.0
    %679 = vmatpush2.msra.mxu0 0.0
    %680 = vmatprep.subr.mxu0 0.0
    %681 = vmatpush2.msra.mxu0 0.0
    %682 = vmatprep.mubr.f32.mxu0 0.0
    %683 = vmatmul.mubr.f32.gmra.mxu0 %v616
    %v684 = vpop.f32.mrf.mxu0
    %v685 = vadd.f32 0.0, %v684
    %v686 = vpop.f32.mrf.mxu0
    %687 = vdwg.mxu0
    %688 = vrot.lane.b32.xlu0 %v349, 120
    %v689 = vpop.permute.xlu0 %688
    %690 = vrot.lane.b32.xlu0 %v349, 88
    %v691 = vpop.permute.xlu0 %690
    %v692 = vsel %vm360, %v689, 0
    %v694 = vsel %vm360, %v691, 0
    %696 = vmatprep.subr.mxu0 0.0
    %697 = vmatpush1.xpose.msra.mxu0 0.0
    %698 = vmatprep.subr.mxu0 0.0
    %699 = vmatpush1.xpose.msra.mxu0 0.0
    %700 = vmatprep.subr.mxu0 0.0
    %701 = vmatpush1.xpose.msra.mxu0 0.0
    %702 = vmatprep.subr.mxu0 0.0
    %703 = vmatpush1.xpose.msra.mxu0 0.0
    %704 = vmatprep.subr.mxu0 0.0
    %705 = vmatpush1.xpose.msra.mxu0 0.0
    %706 = vmatprep.subr.mxu0 0.0
    %707 = vmatpush1.xpose.msra.mxu0 0.0
    %708 = vmatprep.subr.mxu0 0.0
    %709 = vmatpush1.xpose.msra.mxu0 0.0
    %710 = vmatprep.subr.mxu0 0.0
    %711 = vmatpush1.xpose.msra.mxu0 0.0
    %712 = vmatprep.subr.mxu0 0.0
    %713 = vmatpush1.xpose.msra.mxu0 0.0
    %714 = vmatprep.subr.mxu0 0.0
    %715 = vmatpush1.xpose.msra.mxu0 0.0
    %716 = vmatprep.subr.mxu0 0.0
    %717 = vmatpush1.xpose.msra.mxu0 0.0
    %718 = vmatprep.subr.mxu0 0.0
    %719 = vmatpush1.xpose.msra.mxu0 0.0
    %720 = vmatprep.subr.mxu0 0.0
    %721 = vmatpush1.xpose.msra.mxu0 0.0
    %722 = vmatprep.subr.mxu0 0.0
    %723 = vmatpush1.xpose.msra.mxu0 0.0
    %724 = vmatprep.subr.mxu0 0.0
    %725 = vmatpush1.xpose.msra.mxu0 0.0
    %726 = vmatprep.subr.mxu0 0.0
    %727 = vmatpush1.xpose.msra.mxu0 %v694
    %728 = vmatprep.subr.mxu0 0.0
    %729 = vmatpush2.xpose.msra.mxu0 0.0
    %730 = vmatprep.subr.mxu0 0.0
    %731 = vmatpush2.xpose.msra.mxu0 0.0
    %732 = vmatprep.subr.mxu0 0.0
    %733 = vmatpush2.xpose.msra.mxu0 0.0
    %734 = vmatprep.subr.mxu0 0.0
    %735 = vmatpush2.xpose.msra.mxu0 0.0
    %736 = vmatprep.subr.mxu0 0.0
    %737 = vmatpush2.xpose.msra.mxu0 0.0
    %738 = vmatprep.subr.mxu0 0.0
    %739 = vmatpush2.xpose.msra.mxu0 0.0
    %740 = vmatprep.subr.mxu0 0.0
    %741 = vmatpush2.xpose.msra.mxu0 0.0
    %742 = vmatprep.subr.mxu0 0.0
    %743 = vmatpush2.xpose.msra.mxu0 0.0
    %744 = vmatprep.subr.mxu0 0.0
    %745 = vmatpush2.xpose.msra.mxu0 0.0
    %746 = vmatprep.subr.mxu0 0.0
    %747 = vmatpush2.xpose.msra.mxu0 0.0
    %748 = vmatprep.subr.mxu0 0.0
    %749 = vmatpush2.xpose.msra.mxu0 0.0
    %750 = vmatprep.subr.mxu0 0.0
    %751 = vmatpush2.xpose.msra.mxu0 0.0
    %752 = vmatprep.subr.mxu0 0.0
    %753 = vmatpush2.xpose.msra.mxu0 0.0
    %754 = vmatprep.subr.mxu0 0.0
    %755 = vmatpush2.xpose.msra.mxu0 0.0
    %756 = vmatprep.subr.mxu0 0.0
    %757 = vmatpush2.xpose.msra.mxu0 0.0
    %758 = vmatprep.subr.mxu0 0.0
    %759 = vmatpush2.xpose.msra.mxu0 0.0
    %760 = vmatprep.mubr.f32.mxu0 0.0
    %761 = vmatmul.mubr.f32.gmra.mxu0 %v692
    %v762 = vpop.f32.mrf.mxu0
    %v763 = vadd.f32 0.0, %v762
    %v764 = vpop.f32.mrf.mxu0
    %765 = vdwg.mxu0
    %766 = vrot.lane.b32.xlu0 %v354, 120
    %v767 = vpop.permute.xlu0 %766
    %768 = vrot.lane.b32.xlu0 %v354, 88
    %v769 = vpop.permute.xlu0 %768
    %v770 = vsel %vm360, %v767, 0
    %v772 = vsel %vm360, %v769, 0
    %774 = vmatprep.subr.mxu0 0.0
    %775 = vmatpush1.xpose.msra.mxu0 0.0
    %776 = vmatprep.subr.mxu0 0.0
    %777 = vmatpush1.xpose.msra.mxu0 0.0
    %778 = vmatprep.subr.mxu0 0.0
    %779 = vmatpush1.xpose.msra.mxu0 0.0
    %780 = vmatprep.subr.mxu0 0.0
    %781 = vmatpush1.xpose.msra.mxu0 0.0
    %782 = vmatprep.subr.mxu0 0.0
    %783 = vmatpush1.xpose.msra.mxu0 0.0
    %784 = vmatprep.subr.mxu0 0.0
    %785 = vmatpush1.xpose.msra.mxu0 0.0
    %786 = vmatprep.subr.mxu0 0.0
    %787 = vmatpush1.xpose.msra.mxu0 0.0
    %788 = vmatprep.subr.mxu0 0.0
    %789 = vmatpush1.xpose.msra.mxu0 0.0
    %790 = vmatprep.subr.mxu0 0.0
    %791 = vmatpush1.xpose.msra.mxu0 0.0
    %792 = vmatprep.subr.mxu0 0.0
    %793 = vmatpush1.xpose.msra.mxu0 0.0
    %794 = vmatprep.subr.mxu0 0.0
    %795 = vmatpush1.xpose.msra.mxu0 0.0
    %796 = vmatprep.subr.mxu0 0.0
    %797 = vmatpush1.xpose.msra.mxu0 0.0
    %798 = vmatprep.subr.mxu0 0.0
    %799 = vmatpush1.xpose.msra.mxu0 0.0
    %800 = vmatprep.subr.mxu0 0.0
    %801 = vmatpush1.xpose.msra.mxu0 0.0
    %802 = vmatprep.subr.mxu0 0.0
    %803 = vmatpush1.xpose.msra.mxu0 0.0
    %804 = vmatprep.subr.mxu0 0.0
    %805 = vmatpush1.xpose.msra.mxu0 %v772
    %806 = vmatprep.subr.mxu0 0.0
    %807 = vmatpush2.xpose.msra.mxu0 0.0
    %808 = vmatprep.subr.mxu0 0.0
    %809 = vmatpush2.xpose.msra.mxu0 0.0
    %810 = vmatprep.subr.mxu0 0.0
    %811 = vmatpush2.xpose.msra.mxu0 0.0
    %812 = vmatprep.subr.mxu0 0.0
    %813 = vmatpush2.xpose.msra.mxu0 0.0
    %814 = vmatprep.subr.mxu0 0.0
    %815 = vmatpush2.xpose.msra.mxu0 0.0
    %816 = vmatprep.subr.mxu0 0.0
    %817 = vmatpush2.xpose.msra.mxu0 0.0
    %818 = vmatprep.subr.mxu0 0.0
    %819 = vmatpush2.xpose.msra.mxu0 0.0
    %820 = vmatprep.subr.mxu0 0.0
    %821 = vmatpush2.xpose.msra.mxu0 0.0
    %822 = vmatprep.subr.mxu0 0.0
    %823 = vmatpush2.xpose.msra.mxu0 0.0
    %824 = vmatprep.subr.mxu0 0.0
    %825 = vmatpush2.xpose.msra.mxu0 0.0
    %826 = vmatprep.subr.mxu0 0.0
    %827 = vmatpush2.xpose.msra.mxu0 0.0
    %828 = vmatprep.subr.mxu0 0.0
    %829 = vmatpush2.xpose.msra.mxu0 0.0
    %830 = vmatprep.subr.mxu0 0.0
    %831 = vmatpush2.xpose.msra.mxu0 0.0
    %832 = vmatprep.subr.mxu0 0.0
    %833 = vmatpush2.xpose.msra.mxu0 0.0
    %834 = vmatprep.subr.mxu0 0.0
    %835 = vmatpush2.xpose.msra.mxu0 0.0
    %836 = vmatprep.subr.mxu0 0.0
    %837 = vmatpush2.xpose.msra.mxu0 0.0
    %838 = vmatprep.mubr.f32.mxu0 0.0
    %839 = vmatmul.mubr.f32.gmra.mxu0 %v770
    %v840 = vpop.f32.mrf.mxu0
    %v841 = vadd.f32 0.0, %v840
    %v842 = vpop.f32.mrf.mxu0
    %843 = vdwg.mxu0
    %v844 = vmul.f32 %v763, 0.35355338
    %v845 = vmul.f32 %v841, 0.35355338
    %v846 = vsel %vm360, %v844, -inf
    %847 = vmax.xlane.f32.xlu0 %v846
    %v848 = vpop.xlane.xlu0 %847
    %v849 = vsel %vm360, %v845, -inf
    %850 = vmax.xlane.f32.xlu0 %v849
    %v851 = vpop.xlane.xlu0 %850
    %v852 = vsub.f32 %v844, %v848
    %v853 = vsub.f32 %v845, %v851
    %v854 = vmul.f32 %v852, 1.442695
    %v855 = vpow.pop %v854
    %v856 = vmul.f32 %v853, 1.442695
    %v857 = vpow.pop %v856
    %v858 = vsel %vm360, %v855, 0.0
    %859 = vadd.xlane.f32.xlu0 %v858
    %v860 = vpop.xlane.xlu0 %859
    %v861 = vsel %vm360, %v857, 0.0
    %862 = vadd.xlane.f32.xlu0 %v861
    %v863 = vpop.xlane.xlu0 %862
    %v864 = vrcp.pop %v860
    %v865 = vmul.f32 %v855, %v864
    %v866 = vrcp.pop %v863
    %v867 = vmul.f32 %v857, %v866
    %868 = vrot.lane.b32.xlu0 %v349, 56
    %v869 = vpop.permute.xlu0 %868
    %v872 = vsel %vm360, %v865, 0
    %874 = vmatprep.subr.mxu0 0.0
    %875 = vmatpush1.msra.mxu0 0.0
    %876 = vmatprep.subr.mxu0 0.0
    %877 = vmatpush1.msra.mxu0 0.0
    %878 = vmatprep.subr.mxu0 0.0
    %879 = vmatpush1.msra.mxu0 0.0
    %880 = vmatprep.subr.mxu0 0.0
    %881 = vmatpush1.msra.mxu0 0.0
    %882 = vmatprep.subr.mxu0 0.0
    %883 = vmatpush1.msra.mxu0 0.0
    %884 = vmatprep.subr.mxu0 0.0
    %885 = vmatpush1.msra.mxu0 0.0
    %886 = vmatprep.subr.mxu0 0.0
    %887 = vmatpush1.msra.mxu0 0.0
    %888 = vmatprep.subr.mxu0 0.0
    %889 = vmatpush1.msra.mxu0 0.0
    %890 = vmatprep.subr.mxu0 0.0
    %891 = vmatpush1.msra.mxu0 0.0
    %892 = vmatprep.subr.mxu0 0.0
    %893 = vmatpush1.msra.mxu0 0.0
    %894 = vmatprep.subr.mxu0 0.0
    %895 = vmatpush1.msra.mxu0 0.0
    %896 = vmatprep.subr.mxu0 0.0
    %897 = vmatpush1.msra.mxu0 0.0
    %898 = vmatprep.subr.mxu0 0.0
    %899 = vmatpush1.msra.mxu0 0.0
    %900 = vmatprep.subr.mxu0 0.0
    %901 = vmatpush1.msra.mxu0 0.0
    %902 = vmatprep.subr.mxu0 0.0
    %903 = vmatpush1.msra.mxu0 0.0
    %904 = vmatprep.subr.mxu0 0.0
    %905 = vmatpush1.msra.mxu0 %v869
    %906 = vmatprep.subr.mxu0 0.0
    %907 = vmatpush2.msra.mxu0 0.0
    %908 = vmatprep.subr.mxu0 0.0
    %909 = vmatpush2.msra.mxu0 0.0
    %910 = vmatprep.subr.mxu0 0.0
    %911 = vmatpush2.msra.mxu0 0.0
    %912 = vmatprep.subr.mxu0 0.0
    %913 = vmatpush2.msra.mxu0 0.0
    %914 = vmatprep.subr.mxu0 0.0
    %915 = vmatpush2.msra.mxu0 0.0
    %916 = vmatprep.subr.mxu0 0.0
    %917 = vmatpush2.msra.mxu0 0.0
    %918 = vmatprep.subr.mxu0 0.0
    %919 = vmatpush2.msra.mxu0 0.0
    %920 = vmatprep.subr.mxu0 0.0
    %921 = vmatpush2.msra.mxu0 0.0
    %922 = vmatprep.subr.mxu0 0.0
    %923 = vmatpush2.msra.mxu0 0.0
    %924 = vmatprep.subr.mxu0 0.0
    %925 = vmatpush2.msra.mxu0 0.0
    %926 = vmatprep.subr.mxu0 0.0
    %927 = vmatpush2.msra.mxu0 0.0
    %928 = vmatprep.subr.mxu0 0.0
    %929 = vmatpush2.msra.mxu0 0.0
    %930 = vmatprep.subr.mxu0 0.0
    %931 = vmatpush2.msra.mxu0 0.0
    %932 = vmatprep.subr.mxu0 0.0
    %933 = vmatpush2.msra.mxu0 0.0
    %934 = vmatprep.subr.mxu0 0.0
    %935 = vmatpush2.msra.mxu0 0.0
    %936 = vmatprep.subr.mxu0 0.0
    %937 = vmatpush2.msra.mxu0 0.0
    %938 = vmatprep.mubr.f32.mxu0 0.0
    %939 = vmatmul.mubr.f32.gmra.mxu0 %v872
    %v940 = vpop.f32.mrf.mxu0
    %v941 = vadd.f32 0.0, %v940
    %v942 = vpop.f32.mrf.mxu0
    %943 = vdwg.mxu0
    %944 = vrot.lane.b32.xlu0 %v354, 56
    %v945 = vpop.permute.xlu0 %944
    %v948 = vsel %vm360, %v867, 0
    %950 = vmatprep.subr.mxu0 0.0
    %951 = vmatpush1.msra.mxu0 0.0
    %952 = vmatprep.subr.mxu0 0.0
    %953 = vmatpush1.msra.mxu0 0.0
    %954 = vmatprep.subr.mxu0 0.0
    %955 = vmatpush1.msra.mxu0 0.0
    %956 = vmatprep.subr.mxu0 0.0
    %957 = vmatpush1.msra.mxu0 0.0
    %958 = vmatprep.subr.mxu0 0.0
    %959 = vmatpush1.msra.mxu0 0.0
    %960 = vmatprep.subr.mxu0 0.0
    %961 = vmatpush1.msra.mxu0 0.0
    %962 = vmatprep.subr.mxu0 0.0
    %963 = vmatpush1.msra.mxu0 0.0
    %964 = vmatprep.subr.mxu0 0.0
    %965 = vmatpush1.msra.mxu0 0.0
    %966 = vmatprep.subr.mxu0 0.0
    %967 = vmatpush1.msra.mxu0 0.0
    %968 = vmatprep.subr.mxu0 0.0
    %969 = vmatpush1.msra.mxu0 0.0
    %970 = vmatprep.subr.mxu0 0.0
    %971 = vmatpush1.msra.mxu0 0.0
    %972 = vmatprep.subr.mxu0 0.0
    %973 = vmatpush1.msra.mxu0 0.0
    %974 = vmatprep.subr.mxu0 0.0
    %975 = vmatpush1.msra.mxu0 0.0
    %976 = vmatprep.subr.mxu0 0.0
    %977 = vmatpush1.msra.mxu0 0.0
    %978 = vmatprep.subr.mxu0 0.0
    %979 = vmatpush1.msra.mxu0 0.0
    %980 = vmatprep.subr.mxu0 0.0
    %981 = vmatpush1.msra.mxu0 %v945
    %982 = vmatprep.subr.mxu0 0.0
    %983 = vmatpush2.msra.mxu0 0.0
    %984 = vmatprep.subr.mxu0 0.0
    %985 = vmatpush2.msra.mxu0 0.0
    %986 = vmatprep.subr.mxu0 0.0
    %987 = vmatpush2.msra.mxu0 0.0
    %988 = vmatprep.subr.mxu0 0.0
    %989 = vmatpush2.msra.mxu0 0.0
    %990 = vmatprep.subr.mxu0 0.0
    %991 = vmatpush2.msra.mxu0 0.0
    %992 = vmatprep.subr.mxu0 0.0
    %993 = vmatpush2.msra.mxu0 0.0
    %994 = vmatprep.subr.mxu0 0.0
    %995 = vmatpush2.msra.mxu0 0.0
    %996 = vmatprep.subr.mxu0 0.0
    %997 = vmatpush2.msra.mxu0 0.0
    %998 = vmatprep.subr.mxu0 0.0
    %999 = vmatpush2.msra.mxu0 0.0
    %1000 = vmatprep.subr.mxu0 0.0
    %1001 = vmatpush2.msra.mxu0 0.0
    %1002 = vmatprep.subr.mxu0 0.0
    %1003 = vmatpush2.msra.mxu0 0.0
    %1004 = vmatprep.subr.mxu0 0.0
    %1005 = vmatpush2.msra.mxu0 0.0
    %1006 = vmatprep.subr.mxu0 0.0
    %1007 = vmatpush2.msra.mxu0 0.0
    %1008 = vmatprep.subr.mxu0 0.0
    %1009 = vmatpush2.msra.mxu0 0.0
    %1010 = vmatprep.subr.mxu0 0.0
    %1011 = vmatpush2.msra.mxu0 0.0
    %1012 = vmatprep.subr.mxu0 0.0
    %1013 = vmatpush2.msra.mxu0 0.0
    %1014 = vmatprep.mubr.f32.mxu0 0.0
    %1015 = vmatmul.mubr.f32.gmra.mxu0 %v948
    %v1016 = vpop.f32.mrf.mxu0
    %v1017 = vadd.f32 0.0, %v1016
    %v1018 = vpop.f32.mrf.mxu0
    %1019 = vdwg.mxu0
    %1020 = vrot.lane.b32.xlu0 %v349, 112
    %v1021 = vpop.permute.xlu0 %1020
    %1022 = vrot.lane.b32.xlu0 %v349, 80
    %v1023 = vpop.permute.xlu0 %1022
    %v1024 = vsel %vm360, %v1021, 0
    %v1026 = vsel %vm360, %v1023, 0
    %1028 = vmatprep.subr.mxu0 0.0
    %1029 = vmatpush1.xpose.msra.mxu0 0.0
    %1030 = vmatprep.subr.mxu0 0.0
    %1031 = vmatpush1.xpose.msra.mxu0 0.0
    %1032 = vmatprep.subr.mxu0 0.0
    %1033 = vmatpush1.xpose.msra.mxu0 0.0
    %1034 = vmatprep.subr.mxu0 0.0
    %1035 = vmatpush1.xpose.msra.mxu0 0.0
    %1036 = vmatprep.subr.mxu0 0.0
    %1037 = vmatpush1.xpose.msra.mxu0 0.0
    %1038 = vmatprep.subr.mxu0 0.0
    %1039 = vmatpush1.xpose.msra.mxu0 0.0
    %1040 = vmatprep.subr.mxu0 0.0
    %1041 = vmatpush1.xpose.msra.mxu0 0.0
    %1042 = vmatprep.subr.mxu0 0.0
    %1043 = vmatpush1.xpose.msra.mxu0 0.0
    %1044 = vmatprep.subr.mxu0 0.0
    %1045 = vmatpush1.xpose.msra.mxu0 0.0
    %1046 = vmatprep.subr.mxu0 0.0
    %1047 = vmatpush1.xpose.msra.mxu0 0.0
    %1048 = vmatprep.subr.mxu0 0.0
    %1049 = vmatpush1.xpose.msra.mxu0 0.0
    %1050 = vmatprep.subr.mxu0 0.0
    %1051 = vmatpush1.xpose.msra.mxu0 0.0
    %1052 = vmatprep.subr.mxu0 0.0
    %1053 = vmatpush1.xpose.msra.mxu0 0.0
    %1054 = vmatprep.subr.mxu0 0.0
    %1055 = vmatpush1.xpose.msra.mxu0 0.0
    %1056 = vmatprep.subr.mxu0 0.0
    %1057 = vmatpush1.xpose.msra.mxu0 0.0
    %1058 = vmatprep.subr.mxu0 0.0
    %1059 = vmatpush1.xpose.msra.mxu0 %v1026
    %1060 = vmatprep.subr.mxu0 0.0
    %1061 = vmatpush2.xpose.msra.mxu0 0.0
    %1062 = vmatprep.subr.mxu0 0.0
    %1063 = vmatpush2.xpose.msra.mxu0 0.0
    %1064 = vmatprep.subr.mxu0 0.0
    %1065 = vmatpush2.xpose.msra.mxu0 0.0
    %1066 = vmatprep.subr.mxu0 0.0
    %1067 = vmatpush2.xpose.msra.mxu0 0.0
    %1068 = vmatprep.subr.mxu0 0.0
    %1069 = vmatpush2.xpose.msra.mxu0 0.0
    %1070 = vmatprep.subr.mxu0 0.0
    %1071 = vmatpush2.xpose.msra.mxu0 0.0
    %1072 = vmatprep.subr.mxu0 0.0
    %1073 = vmatpush2.xpose.msra.mxu0 0.0
    %1074 = vmatprep.subr.mxu0 0.0
    %1075 = vmatpush2.xpose.msra.mxu0 0.0
    %1076 = vmatprep.subr.mxu0 0.0
    %1077 = vmatpush2.xpose.msra.mxu0 0.0
    %1078 = vmatprep.subr.mxu0 0.0
    %1079 = vmatpush2.xpose.msra.mxu0 0.0
    %1080 = vmatprep.subr.mxu0 0.0
    %1081 = vmatpush2.xpose.msra.mxu0 0.0
    %1082 = vmatprep.subr.mxu0 0.0
    %1083 = vmatpush2.xpose.msra.mxu0 0.0
    %1084 = vmatprep.subr.mxu0 0.0
    %1085 = vmatpush2.xpose.msra.mxu0 0.0
    %1086 = vmatprep.subr.mxu0 0.0
    %1087 = vmatpush2.xpose.msra.mxu0 0.0
    %1088 = vmatprep.subr.mxu0 0.0
    %1089 = vmatpush2.xpose.msra.mxu0 0.0
    %1090 = vmatprep.subr.mxu0 0.0
    %1091 = vmatpush2.xpose.msra.mxu0 0.0
    %1092 = vmatprep.mubr.f32.mxu0 0.0
    %1093 = vmatmul.mubr.f32.gmra.mxu0 %v1024
    %v1094 = vpop.f32.mrf.mxu0
    %v1095 = vadd.f32 0.0, %v1094
    %v1096 = vpop.f32.mrf.mxu0
    %1097 = vdwg.mxu0
    %1098 = vrot.lane.b32.xlu0 %v354, 112
    %v1099 = vpop.permute.xlu0 %1098
    %1100 = vrot.lane.b32.xlu0 %v354, 80
    %v1101 = vpop.permute.xlu0 %1100
    %v1102 = vsel %vm360, %v1099, 0
    %v1104 = vsel %vm360, %v1101, 0
    %1106 = vmatprep.subr.mxu0 0.0
    %1107 = vmatpush1.xpose.msra.mxu0 0.0
    %1108 = vmatprep.subr.mxu0 0.0
    %1109 = vmatpush1.xpose.msra.mxu0 0.0
    %1110 = vmatprep.subr.mxu0 0.0
    %1111 = vmatpush1.xpose.msra.mxu0 0.0
    %1112 = vmatprep.subr.mxu0 0.0
    %1113 = vmatpush1.xpose.msra.mxu0 0.0
    %1114 = vmatprep.subr.mxu0 0.0
    %1115 = vmatpush1.xpose.msra.mxu0 0.0
    %1116 = vmatprep.subr.mxu0 0.0
    %1117 = vmatpush1.xpose.msra.mxu0 0.0
    %1118 = vmatprep.subr.mxu0 0.0
    %1119 = vmatpush1.xpose.msra.mxu0 0.0
    %1120 = vmatprep.subr.mxu0 0.0
    %1121 = vmatpush1.xpose.msra.mxu0 0.0
    %1122 = vmatprep.subr.mxu0 0.0
    %1123 = vmatpush1.xpose.msra.mxu0 0.0
    %1124 = vmatprep.subr.mxu0 0.0
    %1125 = vmatpush1.xpose.msra.mxu0 0.0
    %1126 = vmatprep.subr.mxu0 0.0
    %1127 = vmatpush1.xpose.msra.mxu0 0.0
    %1128 = vmatprep.subr.mxu0 0.0
    %1129 = vmatpush1.xpose.msra.mxu0 0.0
    %1130 = vmatprep.subr.mxu0 0.0
    %1131 = vmatpush1.xpose.msra.mxu0 0.0
    %1132 = vmatprep.subr.mxu0 0.0
    %1133 = vmatpush1.xpose.msra.mxu0 0.0
    %1134 = vmatprep.subr.mxu0 0.0
    %1135 = vmatpush1.xpose.msra.mxu0 0.0
    %1136 = vmatprep.subr.mxu0 0.0
    %1137 = vmatpush1.xpose.msra.mxu0 %v1104
    %1138 = vmatprep.subr.mxu0 0.0
    %1139 = vmatpush2.xpose.msra.mxu0 0.0
    %1140 = vmatprep.subr.mxu0 0.0
    %1141 = vmatpush2.xpose.msra.mxu0 0.0
    %1142 = vmatprep.subr.mxu0 0.0
    %1143 = vmatpush2.xpose.msra.mxu0 0.0
    %1144 = vmatprep.subr.mxu0 0.0
    %1145 = vmatpush2.xpose.msra.mxu0 0.0
    %1146 = vmatprep.subr.mxu0 0.0
    %1147 = vmatpush2.xpose.msra.mxu0 0.0
    %1148 = vmatprep.subr.mxu0 0.0
    %1149 = vmatpush2.xpose.msra.mxu0 0.0
    %1150 = vmatprep.subr.mxu0 0.0
    %1151 = vmatpush2.xpose.msra.mxu0 0.0
    %1152 = vmatprep.subr.mxu0 0.0
    %1153 = vmatpush2.xpose.msra.mxu0 0.0
    %1154 = vmatprep.subr.mxu0 0.0
    %1155 = vmatpush2.xpose.msra.mxu0 0.0
    %1156 = vmatprep.subr.mxu0 0.0
    %1157 = vmatpush2.xpose.msra.mxu0 0.0
    %1158 = vmatprep.subr.mxu0 0.0
    %1159 = vmatpush2.xpose.msra.mxu0 0.0
    %1160 = vmatprep.subr.mxu0 0.0
    %1161 = vmatpush2.xpose.msra.mxu0 0.0
    %1162 = vmatprep.subr.mxu0 0.0
    %1163 = vmatpush2.xpose.msra.mxu0 0.0
    %1164 = vmatprep.subr.mxu0 0.0
    %1165 = vmatpush2.xpose.msra.mxu0 0.0
    %1166 = vmatprep.subr.mxu0 0.0
    %1167 = vmatpush2.xpose.msra.mxu0 0.0
    %1168 = vmatprep.subr.mxu0 0.0
    %1169 = vmatpush2.xpose.msra.mxu0 0.0
    %1170 = vmatprep.mubr.f32.mxu0 0.0
    %1171 = vmatmul.mubr.f32.gmra.mxu0 %v1102
    %v1172 = vpop.f32.mrf.mxu0
    %v1173 = vadd.f32 0.0, %v1172
    %v1174 = vpop.f32.mrf.mxu0
    %1175 = vdwg.mxu0
    %v1176 = vmul.f32 %v1095, 0.35355338
    %v1177 = vmul.f32 %v1173, 0.35355338
    %v1178 = vsel %vm360, %v1176, -inf
    %1179 = vmax.xlane.f32.xlu0 %v1178
    %v1180 = vpop.xlane.xlu0 %1179
    %v1181 = vsel %vm360, %v1177, -inf
    %1182 = vmax.xlane.f32.xlu0 %v1181
    %v1183 = vpop.xlane.xlu0 %1182
    %v1184 = vsub.f32 %v1176, %v1180
    %v1185 = vsub.f32 %v1177, %v1183
    %v1186 = vmul.f32 %v1184, 1.442695
    %v1187 = vpow.pop %v1186
    %v1188 = vmul.f32 %v1185, 1.442695
    %v1189 = vpow.pop %v1188
    %v1190 = vsel %vm360, %v1187, 0.0
    %1191 = vadd.xlane.f32.xlu0 %v1190
    %v1192 = vpop.xlane.xlu0 %1191
    %v1193 = vsel %vm360, %v1189, 0.0
    %1194 = vadd.xlane.f32.xlu0 %v1193
    %v1195 = vpop.xlane.xlu0 %1194
    %v1196 = vrcp.pop %v1192
    %v1197 = vmul.f32 %v1187, %v1196
    %v1198 = vrcp.pop %v1195
    %v1199 = vmul.f32 %v1189, %v1198
    %1200 = vrot.lane.b32.xlu0 %v349, 48
    %v1201 = vpop.permute.xlu0 %1200
    %v1204 = vsel %vm360, %v1197, 0
    %1206 = vmatprep.subr.mxu0 0.0
    %1207 = vmatpush1.msra.mxu0 0.0
    %1208 = vmatprep.subr.mxu0 0.0
    %1209 = vmatpush1.msra.mxu0 0.0
    %1210 = vmatprep.subr.mxu0 0.0
    %1211 = vmatpush1.msra.mxu0 0.0
    %1212 = vmatprep.subr.mxu0 0.0
    %1213 = vmatpush1.msra.mxu0 0.0
    %1214 = vmatprep.subr.mxu0 0.0
    %1215 = vmatpush1.msra.mxu0 0.0
    %1216 = vmatprep.subr.mxu0 0.0
    %1217 = vmatpush1.msra.mxu0 0.0
    %1218 = vmatprep.subr.mxu0 0.0
    %1219 = vmatpush1.msra.mxu0 0.0
    %1220 = vmatprep.subr.mxu0 0.0
    %1221 = vmatpush1.msra.mxu0 0.0
    %1222 = vmatprep.subr.mxu0 0.0
    %1223 = vmatpush1.msra.mxu0 0.0
    %1224 = vmatprep.subr.mxu0 0.0
    %1225 = vmatpush1.msra.mxu0 0.0
    %1226 = vmatprep.subr.mxu0 0.0
    %1227 = vmatpush1.msra.mxu0 0.0
    %1228 = vmatprep.subr.mxu0 0.0
    %1229 = vmatpush1.msra.mxu0 0.0
    %1230 = vmatprep.subr.mxu0 0.0
    %1231 = vmatpush1.msra.mxu0 0.0
    %1232 = vmatprep.subr.mxu0 0.0
    %1233 = vmatpush1.msra.mxu0 0.0
    %1234 = vmatprep.subr.mxu0 0.0
    %1235 = vmatpush1.msra.mxu0 0.0
    %1236 = vmatprep.subr.mxu0 0.0
    %1237 = vmatpush1.msra.mxu0 %v1201
    %1238 = vmatprep.subr.mxu0 0.0
    %1239 = vmatpush2.msra.mxu0 0.0
    %1240 = vmatprep.subr.mxu0 0.0
    %1241 = vmatpush2.msra.mxu0 0.0
    %1242 = vmatprep.subr.mxu0 0.0
    %1243 = vmatpush2.msra.mxu0 0.0
    %1244 = vmatprep.subr.mxu0 0.0
    %1245 = vmatpush2.msra.mxu0 0.0
    %1246 = vmatprep.subr.mxu0 0.0
    %1247 = vmatpush2.msra.mxu0 0.0
    %1248 = vmatprep.subr.mxu0 0.0
    %1249 = vmatpush2.msra.mxu0 0.0
    %1250 = vmatprep.subr.mxu0 0.0
    %1251 = vmatpush2.msra.mxu0 0.0
    %1252 = vmatprep.subr.mxu0 0.0
    %1253 = vmatpush2.msra.mxu0 0.0
    %1254 = vmatprep.subr.mxu0 0.0
    %1255 = vmatpush2.msra.mxu0 0.0
    %1256 = vmatprep.subr.mxu0 0.0
    %1257 = vmatpush2.msra.mxu0 0.0
    %1258 = vmatprep.subr.mxu0 0.0
    %1259 = vmatpush2.msra.mxu0 0.0
    %1260 = vmatprep.subr.mxu0 0.0
    %1261 = vmatpush2.msra.mxu0 0.0
    %1262 = vmatprep.subr.mxu0 0.0
    %1263 = vmatpush2.msra.mxu0 0.0
    %1264 = vmatprep.subr.mxu0 0.0
    %1265 = vmatpush2.msra.mxu0 0.0
    %1266 = vmatprep.subr.mxu0 0.0
    %1267 = vmatpush2.msra.mxu0 0.0
    %1268 = vmatprep.subr.mxu0 0.0
    %1269 = vmatpush2.msra.mxu0 0.0
    %1270 = vmatprep.mubr.f32.mxu0 0.0
    %1271 = vmatmul.mubr.f32.gmra.mxu0 %v1204
    %v1272 = vpop.f32.mrf.mxu0
    %v1273 = vadd.f32 0.0, %v1272
    %v1274 = vpop.f32.mrf.mxu0
    %1275 = vdwg.mxu0
    %1276 = vrot.lane.b32.xlu0 %v354, 48
    %v1277 = vpop.permute.xlu0 %1276
    %v1280 = vsel %vm360, %v1199, 0
    %1282 = vmatprep.subr.mxu0 0.0
    %1283 = vmatpush1.msra.mxu0 0.0
    %1284 = vmatprep.subr.mxu0 0.0
    %1285 = vmatpush1.msra.mxu0 0.0
    %1286 = vmatprep.subr.mxu0 0.0
    %1287 = vmatpush1.msra.mxu0 0.0
    %1288 = vmatprep.subr.mxu0 0.0
    %1289 = vmatpush1.msra.mxu0 0.0
    %1290 = vmatprep.subr.mxu0 0.0
    %1291 = vmatpush1.msra.mxu0 0.0
    %1292 = vmatprep.subr.mxu0 0.0
    %1293 = vmatpush1.msra.mxu0 0.0
    %1294 = vmatprep.subr.mxu0 0.0
    %1295 = vmatpush1.msra.mxu0 0.0
    %1296 = vmatprep.subr.mxu0 0.0
    %1297 = vmatpush1.msra.mxu0 0.0
    %1298 = vmatprep.subr.mxu0 0.0
    %1299 = vmatpush1.msra.mxu0 0.0
    %1300 = vmatprep.subr.mxu0 0.0
    %1301 = vmatpush1.msra.mxu0 0.0
    %1302 = vmatprep.subr.mxu0 0.0
    %1303 = vmatpush1.msra.mxu0 0.0
    %1304 = vmatprep.subr.mxu0 0.0
    %1305 = vmatpush1.msra.mxu0 0.0
    %1306 = vmatprep.subr.mxu0 0.0
    %1307 = vmatpush1.msra.mxu0 0.0
    %1308 = vmatprep.subr.mxu0 0.0
    %1309 = vmatpush1.msra.mxu0 0.0
    %1310 = vmatprep.subr.mxu0 0.0
    %1311 = vmatpush1.msra.mxu0 0.0
    %1312 = vmatprep.subr.mxu0 0.0
    %1313 = vmatpush1.msra.mxu0 %v1277
    %1314 = vmatprep.subr.mxu0 0.0
    %1315 = vmatpush2.msra.mxu0 0.0
    %1316 = vmatprep.subr.mxu0 0.0
    %1317 = vmatpush2.msra.mxu0 0.0
    %1318 = vmatprep.subr.mxu0 0.0
    %1319 = vmatpush2.msra.mxu0 0.0
    %1320 = vmatprep.subr.mxu0 0.0
    %1321 = vmatpush2.msra.mxu0 0.0
    %1322 = vmatprep.subr.mxu0 0.0
    %1323 = vmatpush2.msra.mxu0 0.0
    %1324 = vmatprep.subr.mxu0 0.0
    %1325 = vmatpush2.msra.mxu0 0.0
    %1326 = vmatprep.subr.mxu0 0.0
    %1327 = vmatpush2.msra.mxu0 0.0
    %1328 = vmatprep.subr.mxu0 0.0
    %1329 = vmatpush2.msra.mxu0 0.0
    %1330 = vmatprep.subr.mxu0 0.0
    %1331 = vmatpush2.msra.mxu0 0.0
    %1332 = vmatprep.subr.mxu0 0.0
    %1333 = vmatpush2.msra.mxu0 0.0
    %1334 = vmatprep.subr.mxu0 0.0
    %1335 = vmatpush2.msra.mxu0 0.0
    %1336 = vmatprep.subr.mxu0 0.0
    %1337 = vmatpush2.msra.mxu0 0.0
    %1338 = vmatprep.subr.mxu0 0.0
    %1339 = vmatpush2.msra.mxu0 0.0
    %1340 = vmatprep.subr.mxu0 0.0
    %1341 = vmatpush2.msra.mxu0 0.0
    %1342 = vmatprep.subr.mxu0 0.0
    %1343 = vmatpush2.msra.mxu0 0.0
    %1344 = vmatprep.subr.mxu0 0.0
    %1345 = vmatpush2.msra.mxu0 0.0
    %1346 = vmatprep.mubr.f32.mxu0 0.0
    %1347 = vmatmul.mubr.f32.gmra.mxu0 %v1280
    %v1348 = vpop.f32.mrf.mxu0
    %v1349 = vadd.f32 0.0, %v1348
    %v1350 = vpop.f32.mrf.mxu0
    %1351 = vdwg.mxu0
    %1352 = vrot.lane.b32.xlu0 %v349, 104
    %v1353 = vpop.permute.xlu0 %1352
    %1354 = vrot.lane.b32.xlu0 %v349, 72
    %v1355 = vpop.permute.xlu0 %1354
    %v1356 = vsel %vm360, %v1353, 0
    %v1358 = vsel %vm360, %v1355, 0
    %1360 = vmatprep.subr.mxu0 0.0
    %1361 = vmatpush1.xpose.msra.mxu0 0.0
    %1362 = vmatprep.subr.mxu0 0.0
    %1363 = vmatpush1.xpose.msra.mxu0 0.0
    %1364 = vmatprep.subr.mxu0 0.0
    %1365 = vmatpush1.xpose.msra.mxu0 0.0
    %1366 = vmatprep.subr.mxu0 0.0
    %1367 = vmatpush1.xpose.msra.mxu0 0.0
    %1368 = vmatprep.subr.mxu0 0.0
    %1369 = vmatpush1.xpose.msra.mxu0 0.0
    %1370 = vmatprep.subr.mxu0 0.0
    %1371 = vmatpush1.xpose.msra.mxu0 0.0
    %1372 = vmatprep.subr.mxu0 0.0
    %1373 = vmatpush1.xpose.msra.mxu0 0.0
    %1374 = vmatprep.subr.mxu0 0.0
    %1375 = vmatpush1.xpose.msra.mxu0 0.0
    %1376 = vmatprep.subr.mxu0 0.0
    %1377 = vmatpush1.xpose.msra.mxu0 0.0
    %1378 = vmatprep.subr.mxu0 0.0
    %1379 = vmatpush1.xpose.msra.mxu0 0.0
    %1380 = vmatprep.subr.mxu0 0.0
    %1381 = vmatpush1.xpose.msra.mxu0 0.0
    %1382 = vmatprep.subr.mxu0 0.0
    %1383 = vmatpush1.xpose.msra.mxu0 0.0
    %1384 = vmatprep.subr.mxu0 0.0
    %1385 = vmatpush1.xpose.msra.mxu0 0.0
    %1386 = vmatprep.subr.mxu0 0.0
    %1387 = vmatpush1.xpose.msra.mxu0 0.0
    %1388 = vmatprep.subr.mxu0 0.0
    %1389 = vmatpush1.xpose.msra.mxu0 0.0
    %1390 = vmatprep.subr.mxu0 0.0
    %1391 = vmatpush1.xpose.msra.mxu0 %v1358
    %1392 = vmatprep.subr.mxu0 0.0
    %1393 = vmatpush2.xpose.msra.mxu0 0.0
    %1394 = vmatprep.subr.mxu0 0.0
    %1395 = vmatpush2.xpose.msra.mxu0 0.0
    %1396 = vmatprep.subr.mxu0 0.0
    %1397 = vmatpush2.xpose.msra.mxu0 0.0
    %1398 = vmatprep.subr.mxu0 0.0
    %1399 = vmatpush2.xpose.msra.mxu0 0.0
    %1400 = vmatprep.subr.mxu0 0.0
    %1401 = vmatpush2.xpose.msra.mxu0 0.0
    %1402 = vmatprep.subr.mxu0 0.0
    %1403 = vmatpush2.xpose.msra.mxu0 0.0
    %1404 = vmatprep.subr.mxu0 0.0
    %1405 = vmatpush2.xpose.msra.mxu0 0.0
    %1406 = vmatprep.subr.mxu0 0.0
    %1407 = vmatpush2.xpose.msra.mxu0 0.0
    %1408 = vmatprep.subr.mxu0 0.0
    %1409 = vmatpush2.xpose.msra.mxu0 0.0
    %1410 = vmatprep.subr.mxu0 0.0
    %1411 = vmatpush2.xpose.msra.mxu0 0.0
    %1412 = vmatprep.subr.mxu0 0.0
    %1413 = vmatpush2.xpose.msra.mxu0 0.0
    %1414 = vmatprep.subr.mxu0 0.0
    %1415 = vmatpush2.xpose.msra.mxu0 0.0
    %1416 = vmatprep.subr.mxu0 0.0
    %1417 = vmatpush2.xpose.msra.mxu0 0.0
    %1418 = vmatprep.subr.mxu0 0.0
    %1419 = vmatpush2.xpose.msra.mxu0 0.0
    %1420 = vmatprep.subr.mxu0 0.0
    %1421 = vmatpush2.xpose.msra.mxu0 0.0
    %1422 = vmatprep.subr.mxu0 0.0
    %1423 = vmatpush2.xpose.msra.mxu0 0.0
    %1424 = vmatprep.mubr.f32.mxu0 0.0
    %1425 = vmatmul.mubr.f32.gmra.mxu0 %v1356
    %v1426 = vpop.f32.mrf.mxu0
    %v1427 = vadd.f32 0.0, %v1426
    %v1428 = vpop.f32.mrf.mxu0
    %1429 = vdwg.mxu0
    %1430 = vrot.lane.b32.xlu0 %v354, 104
    %v1431 = vpop.permute.xlu0 %1430
    %1432 = vrot.lane.b32.xlu0 %v354, 72
    %v1433 = vpop.permute.xlu0 %1432
    %v1434 = vsel %vm360, %v1431, 0
    %v1436 = vsel %vm360, %v1433, 0
    %1438 = vmatprep.subr.mxu0 0.0
    %1439 = vmatpush1.xpose.msra.mxu0 0.0
    %1440 = vmatprep.subr.mxu0 0.0
    %1441 = vmatpush1.xpose.msra.mxu0 0.0
    %1442 = vmatprep.subr.mxu0 0.0
    %1443 = vmatpush1.xpose.msra.mxu0 0.0
    %1444 = vmatprep.subr.mxu0 0.0
    %1445 = vmatpush1.xpose.msra.mxu0 0.0
    %1446 = vmatprep.subr.mxu0 0.0
    %1447 = vmatpush1.xpose.msra.mxu0 0.0
    %1448 = vmatprep.subr.mxu0 0.0
    %1449 = vmatpush1.xpose.msra.mxu0 0.0
    %1450 = vmatprep.subr.mxu0 0.0
    %1451 = vmatpush1.xpose.msra.mxu0 0.0
    %1452 = vmatprep.subr.mxu0 0.0
    %1453 = vmatpush1.xpose.msra.mxu0 0.0
    %1454 = vmatprep.subr.mxu0 0.0
    %1455 = vmatpush1.xpose.msra.mxu0 0.0
    %1456 = vmatprep.subr.mxu0 0.0
    %1457 = vmatpush1.xpose.msra.mxu0 0.0
    %1458 = vmatprep.subr.mxu0 0.0
    %1459 = vmatpush1.xpose.msra.mxu0 0.0
    %1460 = vmatprep.subr.mxu0 0.0
    %1461 = vmatpush1.xpose.msra.mxu0 0.0
    %1462 = vmatprep.subr.mxu0 0.0
    %1463 = vmatpush1.xpose.msra.mxu0 0.0
    %1464 = vmatprep.subr.mxu0 0.0
    %1465 = vmatpush1.xpose.msra.mxu0 0.0
    %1466 = vmatprep.subr.mxu0 0.0
    %1467 = vmatpush1.xpose.msra.mxu0 0.0
    %1468 = vmatprep.subr.mxu0 0.0
    %1469 = vmatpush1.xpose.msra.mxu0 %v1436
    %1470 = vmatprep.subr.mxu0 0.0
    %1471 = vmatpush2.xpose.msra.mxu0 0.0
    %1472 = vmatprep.subr.mxu0 0.0
    %1473 = vmatpush2.xpose.msra.mxu0 0.0
    %1474 = vmatprep.subr.mxu0 0.0
    %1475 = vmatpush2.xpose.msra.mxu0 0.0
    %1476 = vmatprep.subr.mxu0 0.0
    %1477 = vmatpush2.xpose.msra.mxu0 0.0
    %1478 = vmatprep.subr.mxu0 0.0
    %1479 = vmatpush2.xpose.msra.mxu0 0.0
    %1480 = vmatprep.subr.mxu0 0.0
    %1481 = vmatpush2.xpose.msra.mxu0 0.0
    %1482 = vmatprep.subr.mxu0 0.0
    %1483 = vmatpush2.xpose.msra.mxu0 0.0
    %1484 = vmatprep.subr.mxu0 0.0
    %1485 = vmatpush2.xpose.msra.mxu0 0.0
    %1486 = vmatprep.subr.mxu0 0.0
    %1487 = vmatpush2.xpose.msra.mxu0 0.0
    %1488 = vmatprep.subr.mxu0 0.0
    %1489 = vmatpush2.xpose.msra.mxu0 0.0
    %1490 = vmatprep.subr.mxu0 0.0
    %1491 = vmatpush2.xpose.msra.mxu0 0.0
    %1492 = vmatprep.subr.mxu0 0.0
    %1493 = vmatpush2.xpose.msra.mxu0 0.0
    %1494 = vmatprep.subr.mxu0 0.0
    %1495 = vmatpush2.xpose.msra.mxu0 0.0
    %1496 = vmatprep.subr.mxu0 0.0
    %1497 = vmatpush2.xpose.msra.mxu0 0.0
    %1498 = vmatprep.subr.mxu0 0.0
    %1499 = vmatpush2.xpose.msra.mxu0 0.0
    %1500 = vmatprep.subr.mxu0 0.0
    %1501 = vmatpush2.xpose.msra.mxu0 0.0
    %1502 = vmatprep.mubr.f32.mxu0 0.0
    %1503 = vmatmul.mubr.f32.gmra.mxu0 %v1434
    %v1504 = vpop.f32.mrf.mxu0
    %v1505 = vadd.f32 0.0, %v1504
    %v1506 = vpop.f32.mrf.mxu0
    %1507 = vdwg.mxu0
    %v1508 = vmul.f32 %v1427, 0.35355338
    %v1509 = vmul.f32 %v1505, 0.35355338
    %v1510 = vsel %vm360, %v1508, -inf
    %1511 = vmax.xlane.f32.xlu0 %v1510
    %v1512 = vpop.xlane.xlu0 %1511
    %v1513 = vsel %vm360, %v1509, -inf
    %1514 = vmax.xlane.f32.xlu0 %v1513
    %v1515 = vpop.xlane.xlu0 %1514
    %v1516 = vsub.f32 %v1508, %v1512
    %v1517 = vsub.f32 %v1509, %v1515
    %v1518 = vmul.f32 %v1516, 1.442695
    %v1519 = vpow.pop %v1518
    %v1520 = vmul.f32 %v1517, 1.442695
    %v1521 = vpow.pop %v1520
    %v1522 = vsel %vm360, %v1519, 0.0
    %1523 = vadd.xlane.f32.xlu0 %v1522
    %v1524 = vpop.xlane.xlu0 %1523
    %v1525 = vsel %vm360, %v1521, 0.0
    %1526 = vadd.xlane.f32.xlu0 %v1525
    %v1527 = vpop.xlane.xlu0 %1526
    %v1528 = vrcp.pop %v1524
    %v1529 = vmul.f32 %v1519, %v1528
    %v1530 = vrcp.pop %v1527
    %v1531 = vmul.f32 %v1521, %v1530
    %1532 = vrot.lane.b32.xlu0 %v349, 40
    %v1533 = vpop.permute.xlu0 %1532
    %v1536 = vsel %vm360, %v1529, 0
    %1538 = vmatprep.subr.mxu0 0.0
    %1539 = vmatpush1.msra.mxu0 0.0
    %1540 = vmatprep.subr.mxu0 0.0
    %1541 = vmatpush1.msra.mxu0 0.0
    %1542 = vmatprep.subr.mxu0 0.0
    %1543 = vmatpush1.msra.mxu0 0.0
    %1544 = vmatprep.subr.mxu0 0.0
    %1545 = vmatpush1.msra.mxu0 0.0
    %1546 = vmatprep.subr.mxu0 0.0
    %1547 = vmatpush1.msra.mxu0 0.0
    %1548 = vmatprep.subr.mxu0 0.0
    %1549 = vmatpush1.msra.mxu0 0.0
    %1550 = vmatprep.subr.mxu0 0.0
    %1551 = vmatpush1.msra.mxu0 0.0
    %1552 = vmatprep.subr.mxu0 0.0
    %1553 = vmatpush1.msra.mxu0 0.0
    %1554 = vmatprep.subr.mxu0 0.0
    %1555 = vmatpush1.msra.mxu0 0.0
    %1556 = vmatprep.subr.mxu0 0.0
    %1557 = vmatpush1.msra.mxu0 0.0
    %1558 = vmatprep.subr.mxu0 0.0
    %1559 = vmatpush1.msra.mxu0 0.0
    %1560 = vmatprep.subr.mxu0 0.0
    %1561 = vmatpush1.msra.mxu0 0.0
    %1562 = vmatprep.subr.mxu0 0.0
    %1563 = vmatpush1.msra.mxu0 0.0
    %1564 = vmatprep.subr.mxu0 0.0
    %1565 = vmatpush1.msra.mxu0 0.0
    %1566 = vmatprep.subr.mxu0 0.0
    %1567 = vmatpush1.msra.mxu0 0.0
    %1568 = vmatprep.subr.mxu0 0.0
    %1569 = vmatpush1.msra.mxu0 %v1533
    %1570 = vmatprep.subr.mxu0 0.0
    %1571 = vmatpush2.msra.mxu0 0.0
    %1572 = vmatprep.subr.mxu0 0.0
    %1573 = vmatpush2.msra.mxu0 0.0
    %1574 = vmatprep.subr.mxu0 0.0
    %1575 = vmatpush2.msra.mxu0 0.0
    %1576 = vmatprep.subr.mxu0 0.0
    %1577 = vmatpush2.msra.mxu0 0.0
    %1578 = vmatprep.subr.mxu0 0.0
    %1579 = vmatpush2.msra.mxu0 0.0
    %1580 = vmatprep.subr.mxu0 0.0
    %1581 = vmatpush2.msra.mxu0 0.0
    %1582 = vmatprep.subr.mxu0 0.0
    %1583 = vmatpush2.msra.mxu0 0.0
    %1584 = vmatprep.subr.mxu0 0.0
    %1585 = vmatpush2.msra.mxu0 0.0
    %1586 = vmatprep.subr.mxu0 0.0
    %1587 = vmatpush2.msra.mxu0 0.0
    %1588 = vmatprep.subr.mxu0 0.0
    %1589 = vmatpush2.msra.mxu0 0.0
    %1590 = vmatprep.subr.mxu0 0.0
    %1591 = vmatpush2.msra.mxu0 0.0
    %1592 = vmatprep.subr.mxu0 0.0
    %1593 = vmatpush2.msra.mxu0 0.0
    %1594 = vmatprep.subr.mxu0 0.0
    %1595 = vmatpush2.msra.mxu0 0.0
    %1596 = vmatprep.subr.mxu0 0.0
    %1597 = vmatpush2.msra.mxu0 0.0
    %1598 = vmatprep.subr.mxu0 0.0
    %1599 = vmatpush2.msra.mxu0 0.0
    %1600 = vmatprep.subr.mxu0 0.0
    %1601 = vmatpush2.msra.mxu0 0.0
    %1602 = vmatprep.mubr.f32.mxu0 0.0
    %1603 = vmatmul.mubr.f32.gmra.mxu0 %v1536
    %v1604 = vpop.f32.mrf.mxu0
    %v1605 = vadd.f32 0.0, %v1604
    %v1606 = vpop.f32.mrf.mxu0
    %1607 = vdwg.mxu0
    %1608 = vrot.lane.b32.xlu0 %v354, 40
    %v1609 = vpop.permute.xlu0 %1608
    %v1612 = vsel %vm360, %v1531, 0
    %1614 = vmatprep.subr.mxu0 0.0
    %1615 = vmatpush1.msra.mxu0 0.0
    %1616 = vmatprep.subr.mxu0 0.0
    %1617 = vmatpush1.msra.mxu0 0.0
    %1618 = vmatprep.subr.mxu0 0.0
    %1619 = vmatpush1.msra.mxu0 0.0
    %1620 = vmatprep.subr.mxu0 0.0
    %1621 = vmatpush1.msra.mxu0 0.0
    %1622 = vmatprep.subr.mxu0 0.0
    %1623 = vmatpush1.msra.mxu0 0.0
    %1624 = vmatprep.subr.mxu0 0.0
    %1625 = vmatpush1.msra.mxu0 0.0
    %1626 = vmatprep.subr.mxu0 0.0
    %1627 = vmatpush1.msra.mxu0 0.0
    %1628 = vmatprep.subr.mxu0 0.0
    %1629 = vmatpush1.msra.mxu0 0.0
    %1630 = vmatprep.subr.mxu0 0.0
    %1631 = vmatpush1.msra.mxu0 0.0
    %1632 = vmatprep.subr.mxu0 0.0
    %1633 = vmatpush1.msra.mxu0 0.0
    %1634 = vmatprep.subr.mxu0 0.0
    %1635 = vmatpush1.msra.mxu0 0.0
    %1636 = vmatprep.subr.mxu0 0.0
    %1637 = vmatpush1.msra.mxu0 0.0
    %1638 = vmatprep.subr.mxu0 0.0
    %1639 = vmatpush1.msra.mxu0 0.0
    %1640 = vmatprep.subr.mxu0 0.0
    %1641 = vmatpush1.msra.mxu0 0.0
    %1642 = vmatprep.subr.mxu0 0.0
    %1643 = vmatpush1.msra.mxu0 0.0
    %1644 = vmatprep.subr.mxu0 0.0
    %1645 = vmatpush1.msra.mxu0 %v1609
    %1646 = vmatprep.subr.mxu0 0.0
    %1647 = vmatpush2.msra.mxu0 0.0
    %1648 = vmatprep.subr.mxu0 0.0
    %1649 = vmatpush2.msra.mxu0 0.0
    %1650 = vmatprep.subr.mxu0 0.0
    %1651 = vmatpush2.msra.mxu0 0.0
    %1652 = vmatprep.subr.mxu0 0.0
    %1653 = vmatpush2.msra.mxu0 0.0
    %1654 = vmatprep.subr.mxu0 0.0
    %1655 = vmatpush2.msra.mxu0 0.0
    %1656 = vmatprep.subr.mxu0 0.0
    %1657 = vmatpush2.msra.mxu0 0.0
    %1658 = vmatprep.subr.mxu0 0.0
    %1659 = vmatpush2.msra.mxu0 0.0
    %1660 = vmatprep.subr.mxu0 0.0
    %1661 = vmatpush2.msra.mxu0 0.0
    %1662 = vmatprep.subr.mxu0 0.0
    %1663 = vmatpush2.msra.mxu0 0.0
    %1664 = vmatprep.subr.mxu0 0.0
    %1665 = vmatpush2.msra.mxu0 0.0
    %1666 = vmatprep.subr.mxu0 0.0
    %1667 = vmatpush2.msra.mxu0 0.0
    %1668 = vmatprep.subr.mxu0 0.0
    %1669 = vmatpush2.msra.mxu0 0.0
    %1670 = vmatprep.subr.mxu0 0.0
    %1671 = vmatpush2.msra.mxu0 0.0
    %1672 = vmatprep.subr.mxu0 0.0
    %1673 = vmatpush2.msra.mxu0 0.0
    %1674 = vmatprep.subr.mxu0 0.0
    %1675 = vmatpush2.msra.mxu0 0.0
    %1676 = vmatprep.subr.mxu0 0.0
    %1677 = vmatpush2.msra.mxu0 0.0
    %1678 = vmatprep.mubr.f32.mxu0 0.0
    %1679 = vmatmul.mubr.f32.gmra.mxu0 %v1612
    %v1680 = vpop.f32.mrf.mxu0
    %v1681 = vadd.f32 0.0, %v1680
    %v1682 = vpop.f32.mrf.mxu0
    %1683 = vdwg.mxu0
    %1686 = vrot.lane.b32.xlu0 %v941, 8
    %v1687 = vpop.permute.xlu0 %1686
    %1688 = vrot.lane.b32.xlu0 %v1017, 8
    %v1689 = vpop.permute.xlu0 %1688
    %1694 = vrot.lane.b32.xlu0 %v1273, 16
    %v1695 = vpop.permute.xlu0 %1694
    %1696 = vrot.lane.b32.xlu0 %v1349, 16
    %v1697 = vpop.permute.xlu0 %1696
    %1702 = vrot.lane.b32.xlu0 %v1605, 24
    %v1703 = vpop.permute.xlu0 %1702
    %1704 = vrot.lane.b32.xlu0 %v1681, 24
    %v1705 = vpop.permute.xlu0 %1704
    %v1708 = vsel %vm360, %v609, %v1687
    %v1709 = vsel %vm360, %v685, %v1689
    %vm1710 = vcmask 130048
    %v1711 = vsel %vm1710, %v1708, %v1695
    %v1712 = vsel %vm1710, %v1709, %v1697
    %vm1713 = vcmask 195584
    %v1714 = vsel %vm1713, %v1711, %v1703
    %v1715 = vsel %vm1713, %v1712, %v1705
    %v1716 = vld [vmem:[%s8] sm:$0xff]
    %v1717 = vld [vmem:[%s8 + $0x8] sm:$0xff]
    %v1718 = vld [vmem:[%s8 + $0x10] sm:$0xff]
    %v1719 = vld [vmem:[%s8 + $0x18] sm:$0xff]
    %v1720 = vld [vmem:[%s9] sm:$0x1]
    %v1722 = vlaneseq
    %v1723 = vshrl.u32 %v1722, 7
    %v1724 = vsub.s32 0, %v1723
    %v1725 = vrot.slane %v1720, %v1724
    %v1728 = vsel %vm275, %v1714, 0
    %v1731 = vsel %vm275, %v1715, 0
    %1733 = vmatprep.subr.mxu0 0.0
    %1734 = vmatpush1.msra.mxu0 0.0
    %1735 = vmatprep.subr.mxu0 0.0
    %1736 = vmatpush1.msra.mxu0 0.0
    %1737 = vmatprep.subr.mxu0 0.0
    %1738 = vmatpush1.msra.mxu0 0.0
    %1739 = vmatprep.subr.mxu0 0.0
    %1740 = vmatpush1.msra.mxu0 0.0
    %1741 = vmatprep.subr.mxu0 0.0
    %1742 = vmatpush1.msra.mxu0 0.0
    %1743 = vmatprep.subr.mxu0 0.0
    %1744 = vmatpush1.msra.mxu0 0.0
    %1745 = vmatprep.subr.mxu0 0.0
    %1746 = vmatpush1.msra.mxu0 0.0
    %1747 = vmatprep.subr.mxu0 0.0
    %1748 = vmatpush1.msra.mxu0 0.0
    %1749 = vmatprep.subr.mxu0 0.0
    %1750 = vmatpush1.msra.mxu0 0.0
    %1751 = vmatprep.subr.mxu0 0.0
    %1752 = vmatpush1.msra.mxu0 0.0
    %1753 = vmatprep.subr.mxu0 0.0
    %1754 = vmatpush1.msra.mxu0 0.0
    %1755 = vmatprep.subr.mxu0 0.0
    %1756 = vmatpush1.msra.mxu0 0.0
    %1757 = vmatprep.subr.mxu0 0.0
    %1758 = vmatpush1.msra.mxu0 %v1719
    %1759 = vmatprep.subr.mxu0 0.0
    %1760 = vmatpush1.msra.mxu0 %v1718
    %1761 = vmatprep.subr.mxu0 0.0
    %1762 = vmatpush1.msra.mxu0 %v1717
    %1763 = vmatprep.subr.mxu0 0.0
    %1764 = vmatpush1.msra.mxu0 %v1716
    %1765 = vmatprep.subr.mxu0 0.0
    %1766 = vmatpush2.msra.mxu0 0.0
    %1767 = vmatprep.subr.mxu0 0.0
    %1768 = vmatpush2.msra.mxu0 0.0
    %1769 = vmatprep.subr.mxu0 0.0
    %1770 = vmatpush2.msra.mxu0 0.0
    %1771 = vmatprep.subr.mxu0 0.0
    %1772 = vmatpush2.msra.mxu0 0.0
    %1773 = vmatprep.subr.mxu0 0.0
    %1774 = vmatpush2.msra.mxu0 0.0
    %1775 = vmatprep.subr.mxu0 0.0
    %1776 = vmatpush2.msra.mxu0 0.0
    %1777 = vmatprep.subr.mxu0 0.0
    %1778 = vmatpush2.msra.mxu0 0.0
    %1779 = vmatprep.subr.mxu0 0.0
    %1780 = vmatpush2.msra.mxu0 0.0
    %1781 = vmatprep.subr.mxu0 0.0
    %1782 = vmatpush2.msra.mxu0 0.0
    %1783 = vmatprep.subr.mxu0 0.0
    %1784 = vmatpush2.msra.mxu0 0.0
    %1785 = vmatprep.subr.mxu0 0.0
    %1786 = vmatpush2.msra.mxu0 0.0
    %1787 = vmatprep.subr.mxu0 0.0
    %1788 = vmatpush2.msra.mxu0 0.0
    %1789 = vmatprep.subr.mxu0 0.0
    %1790 = vmatpush2.msra.mxu0 0.0
    %1791 = vmatprep.subr.mxu0 0.0
    %1792 = vmatpush2.msra.mxu0 0.0
    %1793 = vmatprep.subr.mxu0 0.0
    %1794 = vmatpush2.msra.mxu0 0.0
    %1795 = vmatprep.subr.mxu0 0.0
    %1796 = vmatpush2.msra.mxu0 0.0
    %1797 = vmatprep.mubr.f32.mxu0 0.0
    %1798 = vmatmul.mubr.f32.gmra.mxu0 %v1728
    %v1799 = vpop.f32.mrf.mxu0
    %v1800 = vadd.f32 %v1725, %v1799
    %v1801 = vpop.f32.mrf.mxu0
    %1802 = vmatprep.mubr.f32.mxu0 0.0
    %1803 = vmatmul.mubr.f32.gmra.mxu0 %v1731
    %v1804 = vpop.f32.mrf.mxu0
    %v1805 = vadd.f32 %v1725, %v1804
    %v1806 = vpop.f32.mrf.mxu0
    %1807 = vdwg.mxu0
    %v1808 = vadd.f32 %v262, %v1800
    %v1809 = vadd.f32 %v263, %v1805
    %v1810 = vld [vmem:[%s10] sm:$0x1]
    %v1811 = vld [vmem:[%s11] sm:$0x1]
    %v1812 = vsel %vm275, %v1808, 0.0
    %1813 = vadd.xlane.f32.xlu0 %v1812
    %v1814 = vpop.xlane.xlu0 %1813
    %v1815 = vsel %vm275, %v1809, 0.0
    %1816 = vadd.xlane.f32.xlu0 %v1815
    %v1817 = vpop.xlane.xlu0 %1816
    %v1818 = vrcp.pop 32.0
    %v1819 = vmul.f32 %v1814, %v1818
    %v1820 = vmul.f32 %v1817, %v1818
    %v1821 = vsub.f32 %v1808, %v1819
    %v1822 = vsub.f32 %v1809, %v1820
    %v1823 = vmul.f32 %v1821, %v1821
    %v1824 = vmul.f32 %v1822, %v1822
    %v1825 = vsel %vm275, %v1823, 0.0
    %1826 = vadd.xlane.f32.xlu0 %v1825
    %v1827 = vpop.xlane.xlu0 %1826
    %v1828 = vsel %vm275, %v1824, 0.0
    %1829 = vadd.xlane.f32.xlu0 %v1828
    %v1830 = vpop.xlane.xlu0 %1829
    %v1831 = vmul.f32 %v1827, %v1818
    %v1832 = vmul.f32 %v1830, %v1818
    %v1833 = vadd.f32 %v1831, 1e-05
    %v1834 = vadd.f32 %v1832, 1e-05
    %v1835 = vrsqrt.pop %v1833
    %v1836 = vrsqrt.pop %v1834
    %v1837 = vmul.f32 %v1821, %v1835
    %v1838 = vmul.f32 %v1822, %v1836
    %v1840 = vlaneseq
    %v1841 = vshrl.u32 %v1840, 7
    %v1842 = vsub.s32 0, %v1841
    %v1843 = vrot.slane %v1810, %v1842
    %v1845 = vmul.f32 %v1837, %v1843
    %v1846 = vmul.f32 %v1838, %v1843
    %v1848 = vlaneseq
    %v1849 = vshrl.u32 %v1848, 7
    %v1850 = vsub.s32 0, %v1849
    %v1851 = vrot.slane %v1811, %v1850
    %v1853 = vadd.f32 %v1845, %v1851
    %v1854 = vadd.f32 %v1846, %v1851
    %v1855 = vld [vmem:[%s12] sm:$0xff]
    %v1856 = vld [vmem:[%s12 + $0x8] sm:$0xff]
    %v1857 = vld [vmem:[%s12 + $0x10] sm:$0xff]
    %v1858 = vld [vmem:[%s12 + $0x18] sm:$0xff]
    %v1859 = vld [vmem:[%s13] sm:$0x1]
    %v1861 = vlaneseq
    %v1862 = vshrl.u32 %v1861, 7
    %v1863 = vsub.s32 0, %v1862
    %v1864 = vrot.slane %v1859, %v1863
    %v1867 = vsel %vm275, %v1853, 0
    %v1870 = vsel %vm275, %v1854, 0
    %1872 = vmatprep.subr.mxu0 0.0
    %1873 = vmatpush1.msra.mxu0 0.0
    %1874 = vmatprep.subr.mxu0 0.0
    %1875 = vmatpush1.msra.mxu0 0.0
    %1876 = vmatprep.subr.mxu0 0.0
    %1877 = vmatpush1.msra.mxu0 0.0
    %1878 = vmatprep.subr.mxu0 0.0
    %1879 = vmatpush1.msra.mxu0 0.0
    %1880 = vmatprep.subr.mxu0 0.0
    %1881 = vmatpush1.msra.mxu0 0.0
    %1882 = vmatprep.subr.mxu0 0.0
    %1883 = vmatpush1.msra.mxu0 0.0
    %1884 = vmatprep.subr.mxu0 0.0
    %1885 = vmatpush1.msra.mxu0 0.0
    %1886 = vmatprep.subr.mxu0 0.0
    %1887 = vmatpush1.msra.mxu0 0.0
    %1888 = vmatprep.subr.mxu0 0.0
    %1889 = vmatpush1.msra.mxu0 0.0
    %1890 = vmatprep.subr.mxu0 0.0
    %1891 = vmatpush1.msra.mxu0 0.0
    %1892 = vmatprep.subr.mxu0 0.0
    %1893 = vmatpush1.msra.mxu0 0.0
    %1894 = vmatprep.subr.mxu0 0.0
    %1895 = vmatpush1.msra.mxu0 0.0
    %1896 = vmatprep.subr.mxu0 0.0
    %1897 = vmatpush1.msra.mxu0 %v1858
    %1898 = vmatprep.subr.mxu0 0.0
    %1899 = vmatpush1.msra.mxu0 %v1857
    %1900 = vmatprep.subr.mxu0 0.0
    %1901 = vmatpush1.msra.mxu0 %v1856
    %1902 = vmatprep.subr.mxu0 0.0
    %1903 = vmatpush1.msra.mxu0 %v1855
    %1904 = vmatprep.subr.mxu0 0.0
    %1905 = vmatpush2.msra.mxu0 0.0
    %1906 = vmatprep.subr.mxu0 0.0
    %1907 = vmatpush2.msra.mxu0 0.0
    %1908 = vmatprep.subr.mxu0 0.0
    %1909 = vmatpush2.msra.mxu0 0.0
    %1910 = vmatprep.subr.mxu0 0.0
    %1911 = vmatpush2.msra.mxu0 0.0
    %1912 = vmatprep.subr.mxu0 0.0
    %1913 = vmatpush2.msra.mxu0 0.0
    %1914 = vmatprep.subr.mxu0 0.0
    %1915 = vmatpush2.msra.mxu0 0.0
    %1916 = vmatprep.subr.mxu0 0.0
    %1917 = vmatpush2.msra.mxu0 0.0
    %1918 = vmatprep.subr.mxu0 0.0
    %1919 = vmatpush2.msra.mxu0 0.0
    %1920 = vmatprep.subr.mxu0 0.0
    %1921 = vmatpush2.msra.mxu0 0.0
    %1922 = vmatprep.subr.mxu0 0.0
    %1923 = vmatpush2.msra.mxu0 0.0
    %1924 = vmatprep.subr.mxu0 0.0
    %1925 = vmatpush2.msra.mxu0 0.0
    %1926 = vmatprep.subr.mxu0 0.0
    %1927 = vmatpush2.msra.mxu0 0.0
    %1928 = vmatprep.subr.mxu0 0.0
    %1929 = vmatpush2.msra.mxu0 0.0
    %1930 = vmatprep.subr.mxu0 0.0
    %1931 = vmatpush2.msra.mxu0 0.0
    %1932 = vmatprep.subr.mxu0 0.0
    %1933 = vmatpush2.msra.mxu0 0.0
    %1934 = vmatprep.subr.mxu0 0.0
    %1935 = vmatpush2.msra.mxu0 0.0
    %1936 = vmatprep.mubr.f32.mxu0 0.0
    %1937 = vmatmul.mubr.f32.gmra.mxu0 %v1867
    %v1938 = vpop.f32.mrf.mxu0
    %v1939 = vadd.f32 %v1864, %v1938
    %v1940 = vpop.f32.mrf.mxu0
    %1941 = vmatprep.mubr.f32.mxu0 0.0
    %1942 = vmatmul.mubr.f32.gmra.mxu0 %v1870
    %v1943 = vpop.f32.mrf.mxu0
    %v1944 = vadd.f32 %v1864, %v1943
    %v1945 = vpop.f32.mrf.mxu0
    %1946 = vdwg.mxu0
    %v1947 = vmax.f32 %v1939, 0.0
    %v1948 = vmax.f32 %v1944, 0.0
    %v1949 = vld [vmem:[%s14] sm:$0xff]
    %v1950 = vld [vmem:[%s14 + $0x8] sm:$0xff]
    %v1951 = vld [vmem:[%s14 + $0x10] sm:$0xff]
    %v1952 = vld [vmem:[%s14 + $0x18] sm:$0xff]
    %v1953 = vld [vmem:[%s14 + $0x20] sm:$0xff]
    %v1954 = vld [vmem:[%s14 + $0x28] sm:$0xff]
    %v1955 = vld [vmem:[%s14 + $0x30] sm:$0xff]
    %v1956 = vld [vmem:[%s14 + $0x38] sm:$0xff]
    %v1957 = vld [vmem:[%s15] sm:$0x1]
    %v1959 = vlaneseq
    %v1960 = vshrl.u32 %v1959, 7
    %v1961 = vsub.s32 0, %v1960
    %v1962 = vrot.slane %v1957, %v1961
    %vm1964 = vcmask 523264
    %v1966 = vsel %vm1964, %v1947, 0
    %v1969 = vsel %vm1964, %v1948, 0
    %1971 = vmatprep.subr.mxu0 0.0
    %1972 = vmatpush1.msra.mxu0 0.0
    %1973 = vmatprep.subr.mxu0 0.0
    %1974 = vmatpush1.msra.mxu0 0.0
    %1975 = vmatprep.subr.mxu0 0.0
    %1976 = vmatpush1.msra.mxu0 0.0
    %1977 = vmatprep.subr.mxu0 0.0
    %1978 = vmatpush1.msra.mxu0 0.0
    %1979 = vmatprep.subr.mxu0 0.0
    %1980 = vmatpush1.msra.mxu0 0.0
    %1981 = vmatprep.subr.mxu0 0.0
    %1982 = vmatpush1.msra.mxu0 0.0
    %1983 = vmatprep.subr.mxu0 0.0
    %1984 = vmatpush1.msra.mxu0 0.0
    %1985 = vmatprep.subr.mxu0 0.0
    %1986 = vmatpush1.msra.mxu0 0.0
    %1987 = vmatprep.subr.mxu0 0.0
    %1988 = vmatpush1.msra.mxu0 %v1956
    %1989 = vmatprep.subr.mxu0 0.0
    %1990 = vmatpush1.msra.mxu0 %v1955
    %1991 = vmatprep.subr.mxu0 0.0
    %1992 = vmatpush1.msra.mxu0 %v1954
    %1993 = vmatprep.subr.mxu0 0.0
    %1994 = vmatpush1.msra.mxu0 %v1953
    %1995 = vmatprep.subr.mxu0 0.0
    %1996 = vmatpush1.msra.mxu0 %v1952
    %1997 = vmatprep.subr.mxu0 0.0
    %1998 = vmatpush1.msra.mxu0 %v1951
    %1999 = vmatprep.subr.mxu0 0.0
    %2000 = vmatpush1.msra.mxu0 %v1950
    %2001 = vmatprep.subr.mxu0 0.0
    %2002 = vmatpush1.msra.mxu0 %v1949
    %2003 = vmatprep.subr.mxu0 0.0
    %2004 = vmatpush2.msra.mxu0 0.0
    %2005 = vmatprep.subr.mxu0 0.0
    %2006 = vmatpush2.msra.mxu0 0.0
    %2007 = vmatprep.subr.mxu0 0.0
    %2008 = vmatpush2.msra.mxu0 0.0
    %2009 = vmatprep.subr.mxu0 0.0
    %2010 = vmatpush2.msra.mxu0 0.0
    %2011 = vmatprep.subr.mxu0 0.0
    %2012 = vmatpush2.msra.mxu0 0.0
    %2013 = vmatprep.subr.mxu0 0.0
    %2014 = vmatpush2.msra.mxu0 0.0
    %2015 = vmatprep.subr.mxu0 0.0
    %2016 = vmatpush2.msra.mxu0 0.0
    %2017 = vmatprep.subr.mxu0 0.0
    %2018 = vmatpush2.msra.mxu0 0.0
    %2019 = vmatprep.subr.mxu0 0.0
    %2020 = vmatpush2.msra.mxu0 0.0
    %2021 = vmatprep.subr.mxu0 0.0
    %2022 = vmatpush2.msra.mxu0 0.0
    %2023 = vmatprep.subr.mxu0 0.0
    %2024 = vmatpush2.msra.mxu0 0.0
    %2025 = vmatprep.subr.mxu0 0.0
    %2026 = vmatpush2.msra.mxu0 0.0
    %2027 = vmatprep.subr.mxu0 0.0
    %2028 = vmatpush2.msra.mxu0 0.0
    %2029 = vmatprep.subr.mxu0 0.0
    %2030 = vmatpush2.msra.mxu0 0.0
    %2031 = vmatprep.subr.mxu0 0.0
    %2032 = vmatpush2.msra.mxu0 0.0
    %2033 = vmatprep.subr.mxu0 0.0
    %2034 = vmatpush2.msra.mxu0 0.0
    %2035 = vmatprep.mubr.f32.mxu0 0.0
    %2036 = vmatmul.mubr.f32.gmra.mxu0 %v1966
    %v2037 = vpop.f32.mrf.mxu0
    %v2038 = vadd.f32 %v1962, %v2037
    %v2039 = vpop.f32.mrf.mxu0
    %2040 = vmatprep.mubr.f32.mxu0 0.0
    %2041 = vmatmul.mubr.f32.gmra.mxu0 %v1969
    %v2042 = vpop.f32.mrf.mxu0
    %v2043 = vadd.f32 %v1962, %v2042
    %v2044 = vpop.f32.mrf.mxu0
    %2045 = vdwg.mxu0
    %v2046 = vadd.f32 %v1853, %v2038
    %v2047 = vadd.f32 %v1854, %v2043
    %v2048 = vld [vmem:[%s16] sm:$0x1]
    %v2049 = vld [vmem:[%s17] sm:$0x1]
    %v2050 = vsel %vm275, %v2046, 0.0
    %2051 = vadd.xlane.f32.xlu0 %v2050
    %v2052 = vpop.xlane.xlu0 %2051
    %v2053 = vsel %vm275, %v2047, 0.0
    %2054 = vadd.xlane.f32.xlu0 %v2053
    %v2055 = vpop.xlane.xlu0 %2054
    %v2056 = vmul.f32 %v2052, %v1818
    %v2057 = vmul.f32 %v2055, %v1818
    %v2058 = vsub.f32 %v2046, %v2056
    %v2059 = vsub.f32 %v2047, %v2057
    %v2060 = vmul.f32 %v2058, %v2058
    %v2061 = vmul.f32 %v2059, %v2059
    %v2062 = vsel %vm275, %v2060, 0.0
    %2063 = vadd.xlane.f32.xlu0 %v2062
    %v2064 = vpop.xlane.xlu0 %2063
    %v2065 = vsel %vm275, %v2061, 0.0
    %2066 = vadd.xlane.f32.xlu0 %v2065
    %v2067 = vpop.xlane.xlu0 %2066
    %v2068 = vmul.f32 %v2064, %v1818
    %v2069 = vmul.f32 %v2067, %v1818
    %v2070 = vadd.f32 %v2068, 1e-05
    %v2071 = vadd.f32 %v2069, 1e-05
    %v2072 = vrsqrt.pop %v2070
    %v2073 = vrsqrt.pop %v2071
    %v2074 = vmul.f32 %v2058, %v2072
    %v2075 = vmul.f32 %v2059, %v2073
    %v2077 = vlaneseq
    %v2078 = vshrl.u32 %v2077, 7
    %v2079 = vsub.s32 0, %v2078
    %v2080 = vrot.slane %v2048, %v2079
    %v2082 = vmul.f32 %v2074, %v2080
    %v2083 = vmul.f32 %v2075, %v2080
    %v2085 = vlaneseq
    %v2086 = vshrl.u32 %v2085, 7
    %v2087 = vsub.s32 0, %v2086
    %v2088 = vrot.slane %v2049, %v2087
    %v2090 = vadd.f32 %v2082, %v2088
    %v2091 = vadd.f32 %v2083, %v2088
    %s2092 = scalar_lea.vmem %s6, 32
    %v2093 = vld [vmem:[%s2092] sm:$0xff]
    %v2094 = vld [vmem:[%s2092 + $0x8] sm:$0xff]
    %v2095 = vld [vmem:[%s2092 + $0x10] sm:$0xff]
    %v2096 = vld [vmem:[%s2092 + $0x18] sm:$0xff]
    %s2097 = scalar_lea.vmem %s7, 1
    %v2098 = vld [vmem:[%s2097] sm:$0x1]
    %v2100 = vlaneseq
    %v2101 = vshrl.u32 %v2100, 7
    %v2102 = vsub.s32 0, %v2101
    %v2103 = vrot.slane %v2098, %v2102
    %v2106 = vsel %vm275, %v2090, 0
    %v2109 = vsel %vm275, %v2091, 0
    %2111 = vmatprep.subr.mxu0 0.0
    %2112 = vmatpush1.msra.mxu0 0.0
    %2113 = vmatprep.subr.mxu0 0.0
    %2114 = vmatpush1.msra.mxu0 0.0
    %2115 = vmatprep.subr.mxu0 0.0
    %2116 = vmatpush1.msra.mxu0 0.0
    %2117 = vmatprep.subr.mxu0 0.0
    %2118 = vmatpush1.msra.mxu0 0.0
    %2119 = vmatprep.subr.mxu0 0.0
    %2120 = vmatpush1.msra.mxu0 0.0
    %2121 = vmatprep.subr.mxu0 0.0
    %2122 = vmatpush1.msra.mxu0 0.0
    %2123 = vmatprep.subr.mxu0 0.0
    %2124 = vmatpush1.msra.mxu0 0.0
    %2125 = vmatprep.subr.mxu0 0.0
    %2126 = vmatpush1.msra.mxu0 0.0
    %2127 = vmatprep.subr.mxu0 0.0
    %2128 = vmatpush1.msra.mxu0 0.0
    %2129 = vmatprep.subr.mxu0 0.0
    %2130 = vmatpush1.msra.mxu0 0.0
    %2131 = vmatprep.subr.mxu0 0.0
    %2132 = vmatpush1.msra.mxu0 0.0
    %2133 = vmatprep.subr.mxu0 0.0
    %2134 = vmatpush1.msra.mxu0 0.0
    %2135 = vmatprep.subr.mxu0 0.0
    %2136 = vmatpush1.msra.mxu0 %v2096
    %2137 = vmatprep.subr.mxu0 0.0
    %2138 = vmatpush1.msra.mxu0 %v2095
    %2139 = vmatprep.subr.mxu0 0.0
    %2140 = vmatpush1.msra.mxu0 %v2094
    %2141 = vmatprep.subr.mxu0 0.0
    %2142 = vmatpush1.msra.mxu0 %v2093
    %2143 = vmatprep.subr.mxu0 0.0
    %2144 = vmatpush2.msra.mxu0 0.0
    %2145 = vmatprep.subr.mxu0 0.0
    %2146 = vmatpush2.msra.mxu0 0.0
    %2147 = vmatprep.subr.mxu0 0.0
    %2148 = vmatpush2.msra.mxu0 0.0
    %2149 = vmatprep.subr.mxu0 0.0
    %2150 = vmatpush2.msra.mxu0 0.0
    %2151 = vmatprep.subr.mxu0 0.0
    %2152 = vmatpush2.msra.mxu0 0.0
    %2153 = vmatprep.subr.mxu0 0.0
    %2154 = vmatpush2.msra.mxu0 0.0
    %2155 = vmatprep.subr.mxu0 0.0
    %2156 = vmatpush2.msra.mxu0 0.0
    %2157 = vmatprep.subr.mxu0 0.0
    %2158 = vmatpush2.msra.mxu0 0.0
    %2159 = vmatprep.subr.mxu0 0.0
    %2160 = vmatpush2.msra.mxu0 0.0
    %2161 = vmatprep.subr.mxu0 0.0
    %2162 = vmatpush2.msra.mxu0 0.0
    %2163 = vmatprep.subr.mxu0 0.0
    %2164 = vmatpush2.msra.mxu0 0.0
    %2165 = vmatprep.subr.mxu0 0.0
    %2166 = vmatpush2.msra.mxu0 0.0
    %2167 = vmatprep.subr.mxu0 0.0
    %2168 = vmatpush2.msra.mxu0 0.0
    %2169 = vmatprep.subr.mxu0 0.0
    %2170 = vmatpush2.msra.mxu0 0.0
    %2171 = vmatprep.subr.mxu0 0.0
    %2172 = vmatpush2.msra.mxu0 0.0
    %2173 = vmatprep.subr.mxu0 0.0
    %2174 = vmatpush2.msra.mxu0 0.0
    %2175 = vmatprep.mubr.f32.mxu0 0.0
    %2176 = vmatmul.mubr.f32.gmra.mxu0 %v2106
    %v2177 = vpop.f32.mrf.mxu0
    %v2178 = vadd.f32 %v2103, %v2177
    %v2179 = vpop.f32.mrf.mxu0
    %2180 = vmatprep.mubr.f32.mxu0 0.0
    %2181 = vmatmul.mubr.f32.gmra.mxu0 %v2109
    %v2182 = vpop.f32.mrf.mxu0
    %v2183 = vadd.f32 %v2103, %v2182
    %v2184 = vpop.f32.mrf.mxu0
    %2185 = vdwg.mxu0
    %2187 = vrot.lane.b32.xlu0 %v2178, 96
    %v2188 = vpop.permute.xlu0 %2187
    %v2189 = vsel %vm360, %v2178, 0
    %v2191 = vsel %vm360, %v2188, 0
    %2193 = vmatprep.subr.mxu0 0.0
    %2194 = vmatpush1.xpose.msra.mxu0 0.0
    %2195 = vmatprep.subr.mxu0 0.0
    %2196 = vmatpush1.xpose.msra.mxu0 0.0
    %2197 = vmatprep.subr.mxu0 0.0
    %2198 = vmatpush1.xpose.msra.mxu0 0.0
    %2199 = vmatprep.subr.mxu0 0.0
    %2200 = vmatpush1.xpose.msra.mxu0 0.0
    %2201 = vmatprep.subr.mxu0 0.0
    %2202 = vmatpush1.xpose.msra.mxu0 0.0
    %2203 = vmatprep.subr.mxu0 0.0
    %2204 = vmatpush1.xpose.msra.mxu0 0.0
    %2205 = vmatprep.subr.mxu0 0.0
    %2206 = vmatpush1.xpose.msra.mxu0 0.0
    %2207 = vmatprep.subr.mxu0 0.0
    %2208 = vmatpush1.xpose.msra.mxu0 0.0
    %2209 = vmatprep.subr.mxu0 0.0
    %2210 = vmatpush1.xpose.msra.mxu0 0.0
    %2211 = vmatprep.subr.mxu0 0.0
    %2212 = vmatpush1.xpose.msra.mxu0 0.0
    %2213 = vmatprep.subr.mxu0 0.0
    %2214 = vmatpush1.xpose.msra.mxu0 0.0
    %2215 = vmatprep.subr.mxu0 0.0
    %2216 = vmatpush1.xpose.msra.mxu0 0.0
    %2217 = vmatprep.subr.mxu0 0.0
    %2218 = vmatpush1.xpose.msra.mxu0 0.0
    %2219 = vmatprep.subr.mxu0 0.0
    %2220 = vmatpush1.xpose.msra.mxu0 0.0
    %2221 = vmatprep.subr.mxu0 0.0
    %2222 = vmatpush1.xpose.msra.mxu0 0.0
    %2223 = vmatprep.subr.mxu0 0.0
    %2224 = vmatpush1.xpose.msra.mxu0 %v2191
    %2225 = vmatprep.subr.mxu0 0.0
    %2226 = vmatpush2.xpose.msra.mxu0 0.0
    %2227 = vmatprep.subr.mxu0 0.0
    %2228 = vmatpush2.xpose.msra.mxu0 0.0
    %2229 = vmatprep.subr.mxu0 0.0
    %2230 = vmatpush2.xpose.msra.mxu0 0.0
    %2231 = vmatprep.subr.mxu0 0.0
    %2232 = vmatpush2.xpose.msra.mxu0 0.0
    %2233 = vmatprep.subr.mxu0 0.0
    %2234 = vmatpush2.xpose.msra.mxu0 0.0
    %2235 = vmatprep.subr.mxu0 0.0
    %2236 = vmatpush2.xpose.msra.mxu0 0.0
    %2237 = vmatprep.subr.mxu0 0.0
    %2238 = vmatpush2.xpose.msra.mxu0 0.0
    %2239 = vmatprep.subr.mxu0 0.0
    %2240 = vmatpush2.xpose.msra.mxu0 0.0
    %2241 = vmatprep.subr.mxu0 0.0
    %2242 = vmatpush2.xpose.msra.mxu0 0.0
    %2243 = vmatprep.subr.mxu0 0.0
    %2244 = vmatpush2.xpose.msra.mxu0 0.0
    %2245 = vmatprep.subr.mxu0 0.0
    %2246 = vmatpush2.xpose.msra.mxu0 0.0
    %2247 = vmatprep.subr.mxu0 0.0
    %2248 = vmatpush2.xpose.msra.mxu0 0.0
    %2249 = vmatprep.subr.mxu0 0.0
    %2250 = vmatpush2.xpose.msra.mxu0 0.0
    %2251 = vmatprep.subr.mxu0 0.0
    %2252 = vmatpush2.xpose.msra.mxu0 0.0
    %2253 = vmatprep.subr.mxu0 0.0
    %2254 = vmatpush2.xpose.msra.mxu0 0.0
    %2255 = vmatprep.subr.mxu0 0.0
    %2256 = vmatpush2.xpose.msra.mxu0 0.0
    %2257 = vmatprep.mubr.f32.mxu0 0.0
    %2258 = vmatmul.mubr.f32.gmra.mxu0 %v2189
    %v2259 = vpop.f32.mrf.mxu0
    %v2260 = vadd.f32 0.0, %v2259
    %v2261 = vpop.f32.mrf.mxu0
    %2262 = vdwg.mxu0
    %2264 = vrot.lane.b32.xlu0 %v2183, 96
    %v2265 = vpop.permute.xlu0 %2264
    %v2266 = vsel %vm360, %v2183, 0
    %v2268 = vsel %vm360, %v2265, 0
    %2270 = vmatprep.subr.mxu0 0.0
    %2271 = vmatpush1.xpose.msra.mxu0 0.0
    %2272 = vmatprep.subr.mxu0 0.0
    %2273 = vmatpush1.xpose.msra.mxu0 0.0
    %2274 = vmatprep.subr.mxu0 0.0
    %2275 = vmatpush1.xpose.msra.mxu0 0.0
    %2276 = vmatprep.subr.mxu0 0.0
    %2277 = vmatpush1.xpose.msra.mxu0 0.0
    %2278 = vmatprep.subr.mxu0 0.0
    %2279 = vmatpush1.xpose.msra.mxu0 0.0
    %2280 = vmatprep.subr.mxu0 0.0
    %2281 = vmatpush1.xpose.msra.mxu0 0.0
    %2282 = vmatprep.subr.mxu0 0.0
    %2283 = vmatpush1.xpose.msra.mxu0 0.0
    %2284 = vmatprep.subr.mxu0 0.0
    %2285 = vmatpush1.xpose.msra.mxu0 0.0
    %2286 = vmatprep.subr.mxu0 0.0
    %2287 = vmatpush1.xpose.msra.mxu0 0.0
    %2288 = vmatprep.subr.mxu0 0.0
    %2289 = vmatpush1.xpose.msra.mxu0 0.0
    %2290 = vmatprep.subr.mxu0 0.0
    %2291 = vmatpush1.xpose.msra.mxu0 0.0
    %2292 = vmatprep.subr.mxu0 0.0
    %2293 = vmatpush1.xpose.msra.mxu0 0.0
    %2294 = vmatprep.subr.mxu0 0.0
    %2295 = vmatpush1.xpose.msra.mxu0 0.0
    %2296 = vmatprep.subr.mxu0 0.0
    %2297 = vmatpush1.xpose.msra.mxu0 0.0
    %2298 = vmatprep.subr.mxu0 0.0
    %2299 = vmatpush1.xpose.msra.mxu0 0.0
    %2300 = vmatprep.subr.mxu0 0.0
    %2301 = vmatpush1.xpose.msra.mxu0 %v2268
    %2302 = vmatprep.subr.mxu0 0.0
    %2303 = vmatpush2.xpose.msra.mxu0 0.0
    %2304 = vmatprep.subr.mxu0 0.0
    %2305 = vmatpush2.xpose.msra.mxu0 0.0
    %2306 = vmatprep.subr.mxu0 0.0
    %2307 = vmatpush2.xpose.msra.mxu0 0.0
    %2308 = vmatprep.subr.mxu0 0.0
    %2309 = vmatpush2.xpose.msra.mxu0 0.0
    %2310 = vmatprep.subr.mxu0 0.0
    %2311 = vmatpush2.xpose.msra.mxu0 0.0
    %2312 = vmatprep.subr.mxu0 0.0
    %2313 = vmatpush2.xpose.msra.mxu0 0.0
    %2314 = vmatprep.subr.mxu0 0.0
    %2315 = vmatpush2.xpose.msra.mxu0 0.0
    %2316 = vmatprep.subr.mxu0 0.0
    %2317 = vmatpush2.xpose.msra.mxu0 0.0
    %2318 = vmatprep.subr.mxu0 0.0
    %2319 = vmatpush2.xpose.msra.mxu0 0.0
    %2320 = vmatprep.subr.mxu0 0.0
    %2321 = vmatpush2.xpose.msra.mxu0 0.0
    %2322 = vmatprep.subr.mxu0 0.0
    %2323 = vmatpush2.xpose.msra.mxu0 0.0
    %2324 = vmatprep.subr.mxu0 0.0
    %2325 = vmatpush2.xpose.msra.mxu0 0.0
    %2326 = vmatprep.subr.mxu0 0.0
    %2327 = vmatpush2.xpose.msra.mxu0 0.0
    %2328 = vmatprep.subr.mxu0 0.0
    %2329 = vmatpush2.xpose.msra.mxu0 0.0
    %2330 = vmatprep.subr.mxu0 0.0
    %2331 = vmatpush2.xpose.msra.mxu0 0.0
    %2332 = vmatprep.subr.mxu0 0.0
    %2333 = vmatpush2.xpose.msra.mxu0 0.0
    %2334 = vmatprep.mubr.f32.mxu0 0.0
    %2335 = vmatmul.mubr.f32.gmra.mxu0 %v2266
    %v2336 = vpop.f32.mrf.mxu0
    %v2337 = vadd.f32 0.0, %v2336
    %v2338 = vpop.f32.mrf.mxu0
    %2339 = vdwg.mxu0
    %v2340 = vmul.f32 %v2260, 0.35355338
    %v2341 = vmul.f32 %v2337, 0.35355338
    %v2342 = vsel %vm360, %v2340, -inf
    %2343 = vmax.xlane.f32.xlu0 %v2342
    %v2344 = vpop.xlane.xlu0 %2343
    %v2345 = vsel %vm360, %v2341, -inf
    %2346 = vmax.xlane.f32.xlu0 %v2345
    %v2347 = vpop.xlane.xlu0 %2346
    %v2348 = vsub.f32 %v2340, %v2344
    %v2349 = vsub.f32 %v2341, %v2347
    %v2350 = vmul.f32 %v2348, 1.442695
    %v2351 = vpow.pop %v2350
    %v2352 = vmul.f32 %v2349, 1.442695
    %v2353 = vpow.pop %v2352
    %v2354 = vsel %vm360, %v2351, 0.0
    %2355 = vadd.xlane.f32.xlu0 %v2354
    %v2356 = vpop.xlane.xlu0 %2355
    %v2357 = vsel %vm360, %v2353, 0.0
    %2358 = vadd.xlane.f32.xlu0 %v2357
    %v2359 = vpop.xlane.xlu0 %2358
    %v2360 = vrcp.pop %v2356
    %v2361 = vmul.f32 %v2351, %v2360
    %v2362 = vrcp.pop %v2359
    %v2363 = vmul.f32 %v2353, %v2362
    %2364 = vrot.lane.b32.xlu0 %v2178, 64
    %v2365 = vpop.permute.xlu0 %2364
    %v2368 = vsel %vm360, %v2361, 0
    %2370 = vmatprep.subr.mxu0 0.0
    %2371 = vmatpush1.msra.mxu0 0.0
    %2372 = vmatprep.subr.mxu0 0.0
    %2373 = vmatpush1.msra.mxu0 0.0
    %2374 = vmatprep.subr.mxu0 0.0
    %2375 = vmatpush1.msra.mxu0 0.0
    %2376 = vmatprep.subr.mxu0 0.0
    %2377 = vmatpush1.msra.mxu0 0.0
    %2378 = vmatprep.subr.mxu0 0.0
    %2379 = vmatpush1.msra.mxu0 0.0
    %2380 = vmatprep.subr.mxu0 0.0
    %2381 = vmatpush1.msra.mxu0 0.0
    %2382 = vmatprep.subr.mxu0 0.0
    %2383 = vmatpush1.msra.mxu0 0.0
    %2384 = vmatprep.subr.mxu0 0.0
    %2385 = vmatpush1.msra.mxu0 0.0
    %2386 = vmatprep.subr.mxu0 0.0
    %2387 = vmatpush1.msra.mxu0 0.0
    %2388 = vmatprep.subr.mxu0 0.0
    %2389 = vmatpush1.msra.mxu0 0.0
    %2390 = vmatprep.subr.mxu0 0.0
    %2391 = vmatpush1.msra.mxu0 0.0
    %2392 = vmatprep.subr.mxu0 0.0
    %2393 = vmatpush1.msra.mxu0 0.0
    %2394 = vmatprep.subr.mxu0 0.0
    %2395 = vmatpush1.msra.mxu0 0.0
    %2396 = vmatprep.subr.mxu0 0.0
    %2397 = vmatpush1.msra.mxu0 0.0
    %2398 = vmatprep.subr.mxu0 0.0
    %2399 = vmatpush1.msra.mxu0 0.0
    %2400 = vmatprep.subr.mxu0 0.0
    %2401 = vmatpush1.msra.mxu0 %v2365
    %2402 = vmatprep.subr.mxu0 0.0
    %2403 = vmatpush2.msra.mxu0 0.0
    %2404 = vmatprep.subr.mxu0 0.0
    %2405 = vmatpush2.msra.mxu0 0.0
    %2406 = vmatprep.subr.mxu0 0.0
    %2407 = vmatpush2.msra.mxu0 0.0
    %2408 = vmatprep.subr.mxu0 0.0
    %2409 = vmatpush2.msra.mxu0 0.0
    %2410 = vmatprep.subr.mxu0 0.0
    %2411 = vmatpush2.msra.mxu0 0.0
    %2412 = vmatprep.subr.mxu0 0.0
    %2413 = vmatpush2.msra.mxu0 0.0
    %2414 = vmatprep.subr.mxu0 0.0
    %2415 = vmatpush2.msra.mxu0 0.0
    %2416 = vmatprep.subr.mxu0 0.0
    %2417 = vmatpush2.msra.mxu0 0.0
    %2418 = vmatprep.subr.mxu0 0.0
    %2419 = vmatpush2.msra.mxu0 0.0
    %2420 = vmatprep.subr.mxu0 0.0
    %2421 = vmatpush2.msra.mxu0 0.0
    %2422 = vmatprep.subr.mxu0 0.0
    %2423 = vmatpush2.msra.mxu0 0.0
    %2424 = vmatprep.subr.mxu0 0.0
    %2425 = vmatpush2.msra.mxu0 0.0
    %2426 = vmatprep.subr.mxu0 0.0
    %2427 = vmatpush2.msra.mxu0 0.0
    %2428 = vmatprep.subr.mxu0 0.0
    %2429 = vmatpush2.msra.mxu0 0.0
    %2430 = vmatprep.subr.mxu0 0.0
    %2431 = vmatpush2.msra.mxu0 0.0
    %2432 = vmatprep.subr.mxu0 0.0
    %2433 = vmatpush2.msra.mxu0 0.0
    %2434 = vmatprep.mubr.f32.mxu0 0.0
    %2435 = vmatmul.mubr.f32.gmra.mxu0 %v2368
    %v2436 = vpop.f32.mrf.mxu0
    %v2437 = vadd.f32 0.0, %v2436
    %v2438 = vpop.f32.mrf.mxu0
    %2439 = vdwg.mxu0
    %2440 = vrot.lane.b32.xlu0 %v2183, 64
    %v2441 = vpop.permute.xlu0 %2440
    %v2444 = vsel %vm360, %v2363, 0
    %2446 = vmatprep.subr.mxu0 0.0
    %2447 = vmatpush1.msra.mxu0 0.0
    %2448 = vmatprep.subr.mxu0 0.0
    %2449 = vmatpush1.msra.mxu0 0.0
    %2450 = vmatprep.subr.mxu0 0.0
    %2451 = vmatpush1.msra.mxu0 0.0
    %2452 = vmatprep.subr.mxu0 0.0
    %2453 = vmatpush1.msra.mxu0 0.0
    %2454 = vmatprep.subr.mxu0 0.0
    %2455 = vmatpush1.msra.mxu0 0.0
    %2456 = vmatprep.subr.mxu0 0.0
    %2457 = vmatpush1.msra.mxu0 0.0
    %2458 = vmatprep.subr.mxu0 0.0
    %2459 = vmatpush1.msra.mxu0 0.0
    %2460 = vmatprep.subr.mxu0 0.0
    %2461 = vmatpush1.msra.mxu0 0.0
    %2462 = vmatprep.subr.mxu0 0.0
    %2463 = vmatpush1.msra.mxu0 0.0
    %2464 = vmatprep.subr.mxu0 0.0
    %2465 = vmatpush1.msra.mxu0 0.0
    %2466 = vmatprep.subr.mxu0 0.0
    %2467 = vmatpush1.msra.mxu0 0.0
    %2468 = vmatprep.subr.mxu0 0.0
    %2469 = vmatpush1.msra.mxu0 0.0
    %2470 = vmatprep.subr.mxu0 0.0
    %2471 = vmatpush1.msra.mxu0 0.0
    %2472 = vmatprep.subr.mxu0 0.0
    %2473 = vmatpush1.msra.mxu0 0.0
    %2474 = vmatprep.subr.mxu0 0.0
    %2475 = vmatpush1.msra.mxu0 0.0
    %2476 = vmatprep.subr.mxu0 0.0
    %2477 = vmatpush1.msra.mxu0 %v2441
    %2478 = vmatprep.subr.mxu0 0.0
    %2479 = vmatpush2.msra.mxu0 0.0
    %2480 = vmatprep.subr.mxu0 0.0
    %2481 = vmatpush2.msra.mxu0 0.0
    %2482 = vmatprep.subr.mxu0 0.0
    %2483 = vmatpush2.msra.mxu0 0.0
    %2484 = vmatprep.subr.mxu0 0.0
    %2485 = vmatpush2.msra.mxu0 0.0
    %2486 = vmatprep.subr.mxu0 0.0
    %2487 = vmatpush2.msra.mxu0 0.0
    %2488 = vmatprep.subr.mxu0 0.0
    %2489 = vmatpush2.msra.mxu0 0.0
    %2490 = vmatprep.subr.mxu0 0.0
    %2491 = vmatpush2.msra.mxu0 0.0
    %2492 = vmatprep.subr.mxu0 0.0
    %2493 = vmatpush2.msra.mxu0 0.0
    %2494 = vmatprep.subr.mxu0 0.0
    %2495 = vmatpush2.msra.mxu0 0.0
    %2496 = vmatprep.subr.mxu0 0.0
    %2497 = vmatpush2.msra.mxu0 0.0
    %2498 = vmatprep.subr.mxu0 0.0
    %2499 = vmatpush2.msra.mxu0 0.0
    %2500 = vmatprep.subr.mxu0 0.0
    %2501 = vmatpush2.msra.mxu0 0.0
    %2502 = vmatprep.subr.mxu0 0.0
    %2503 = vmatpush2.msra.mxu0 0.0
    %2504 = vmatprep.subr.mxu0 0.0
    %2505 = vmatpush2.msra.mxu0 0.0
    %2506 = vmatprep.subr.mxu0 0.0
    %2507 = vmatpush2.msra.mxu0 0.0
    %2508 = vmatprep.subr.mxu0 0.0
    %2509 = vmatpush2.msra.mxu0 0.0
    %2510 = vmatprep.mubr.f32.mxu0 0.0
    %2511 = vmatmul.mubr.f32.gmra.mxu0 %v2444
    %v2512 = vpop.f32.mrf.mxu0
    %v2513 = vadd.f32 0.0, %v2512
    %v2514 = vpop.f32.mrf.mxu0
    %2515 = vdwg.mxu0
    %2516 = vrot.lane.b32.xlu0 %v2178, 120
    %v2517 = vpop.permute.xlu0 %2516
    %2518 = vrot.lane.b32.xlu0 %v2178, 88
    %v2519 = vpop.permute.xlu0 %2518
    %v2520 = vsel %vm360, %v2517, 0
    %v2522 = vsel %vm360, %v2519, 0
    %2524 = vmatprep.subr.mxu0 0.0
    %2525 = vmatpush1.xpose.msra.mxu0 0.0
    %2526 = vmatprep.subr.mxu0 0.0
    %2527 = vmatpush1.xpose.msra.mxu0 0.0
    %2528 = vmatprep.subr.mxu0 0.0
    %2529 = vmatpush1.xpose.msra.mxu0 0.0
    %2530 = vmatprep.subr.mxu0 0.0
    %2531 = vmatpush1.xpose.msra.mxu0 0.0
    %2532 = vmatprep.subr.mxu0 0.0
    %2533 = vmatpush1.xpose.msra.mxu0 0.0
    %2534 = vmatprep.subr.mxu0 0.0
    %2535 = vmatpush1.xpose.msra.mxu0 0.0
    %2536 = vmatprep.subr.mxu0 0.0
    %2537 = vmatpush1.xpose.msra.mxu0 0.0
    %2538 = vmatprep.subr.mxu0 0.0
    %2539 = vmatpush1.xpose.msra.mxu0 0.0
    %2540 = vmatprep.subr.mxu0 0.0
    %2541 = vmatpush1.xpose.msra.mxu0 0.0
    %2542 = vmatprep.subr.mxu0 0.0
    %2543 = vmatpush1.xpose.msra.mxu0 0.0
    %2544 = vmatprep.subr.mxu0 0.0
    %2545 = vmatpush1.xpose.msra.mxu0 0.0
    %2546 = vmatprep.subr.mxu0 0.0
    %2547 = vmatpush1.xpose.msra.mxu0 0.0
    %2548 = vmatprep.subr.mxu0 0.0
    %2549 = vmatpush1.xpose.msra.mxu0 0.0
    %2550 = vmatprep.subr.mxu0 0.0
    %2551 = vmatpush1.xpose.msra.mxu0 0.0
    %2552 = vmatprep.subr.mxu0 0.0
    %2553 = vmatpush1.xpose.msra.mxu0 0.0
    %2554 = vmatprep.subr.mxu0 0.0
    %2555 = vmatpush1.xpose.msra.mxu0 %v2522
    %2556 = vmatprep.subr.mxu0 0.0
    %2557 = vmatpush2.xpose.msra.mxu0 0.0
    %2558 = vmatprep.subr.mxu0 0.0
    %2559 = vmatpush2.xpose.msra.mxu0 0.0
    %2560 = vmatprep.subr.mxu0 0.0
    %2561 = vmatpush2.xpose.msra.mxu0 0.0
    %2562 = vmatprep.subr.mxu0 0.0
    %2563 = vmatpush2.xpose.msra.mxu0 0.0
    %2564 = vmatprep.subr.mxu0 0.0
    %2565 = vmatpush2.xpose.msra.mxu0 0.0
    %2566 = vmatprep.subr.mxu0 0.0
    %2567 = vmatpush2.xpose.msra.mxu0 0.0
    %2568 = vmatprep.subr.mxu0 0.0
    %2569 = vmatpush2.xpose.msra.mxu0 0.0
    %2570 = vmatprep.subr.mxu0 0.0
    %2571 = vmatpush2.xpose.msra.mxu0 0.0
    %2572 = vmatprep.subr.mxu0 0.0
    %2573 = vmatpush2.xpose.msra.mxu0 0.0
    %2574 = vmatprep.subr.mxu0 0.0
    %2575 = vmatpush2.xpose.msra.mxu0 0.0
    %2576 = vmatprep.subr.mxu0 0.0
    %2577 = vmatpush2.xpose.msra.mxu0 0.0
    %2578 = vmatprep.subr.mxu0 0.0
    %2579 = vmatpush2.xpose.msra.mxu0 0.0
    %2580 = vmatprep.subr.mxu0 0.0
    %2581 = vmatpush2.xpose.msra.mxu0 0.0
    %2582 = vmatprep.subr.mxu0 0.0
    %2583 = vmatpush2.xpose.msra.mxu0 0.0
    %2584 = vmatprep.subr.mxu0 0.0
    %2585 = vmatpush2.xpose.msra.mxu0 0.0
    %2586 = vmatprep.subr.mxu0 0.0
    %2587 = vmatpush2.xpose.msra.mxu0 0.0
    %2588 = vmatprep.mubr.f32.mxu0 0.0
    %2589 = vmatmul.mubr.f32.gmra.mxu0 %v2520
    %v2590 = vpop.f32.mrf.mxu0
    %v2591 = vadd.f32 0.0, %v2590
    %v2592 = vpop.f32.mrf.mxu0
    %2593 = vdwg.mxu0
    %2594 = vrot.lane.b32.xlu0 %v2183, 120
    %v2595 = vpop.permute.xlu0 %2594
    %2596 = vrot.lane.b32.xlu0 %v2183, 88
    %v2597 = vpop.permute.xlu0 %2596
    %v2598 = vsel %vm360, %v2595, 0
    %v2600 = vsel %vm360, %v2597, 0
    %2602 = vmatprep.subr.mxu0 0.0
    %2603 = vmatpush1.xpose.msra.mxu0 0.0
    %2604 = vmatprep.subr.mxu0 0.0
    %2605 = vmatpush1.xpose.msra.mxu0 0.0
    %2606 = vmatprep.subr.mxu0 0.0
    %2607 = vmatpush1.xpose.msra.mxu0 0.0
    %2608 = vmatprep.subr.mxu0 0.0
    %2609 = vmatpush1.xpose.msra.mxu0 0.0
    %2610 = vmatprep.subr.mxu0 0.0
    %2611 = vmatpush1.xpose.msra.mxu0 0.0
    %2612 = vmatprep.subr.mxu0 0.0
    %2613 = vmatpush1.xpose.msra.mxu0 0.0
    %2614 = vmatprep.subr.mxu0 0.0
    %2615 = vmatpush1.xpose.msra.mxu0 0.0
    %2616 = vmatprep.subr.mxu0 0.0
    %2617 = vmatpush1.xpose.msra.mxu0 0.0
    %2618 = vmatprep.subr.mxu0 0.0
    %2619 = vmatpush1.xpose.msra.mxu0 0.0
    %2620 = vmatprep.subr.mxu0 0.0
    %2621 = vmatpush1.xpose.msra.mxu0 0.0
    %2622 = vmatprep.subr.mxu0 0.0
    %2623 = vmatpush1.xpose.msra.mxu0 0.0
    %2624 = vmatprep.subr.mxu0 0.0
    %2625 = vmatpush1.xpose.msra.mxu0 0.0
    %2626 = vmatprep.subr.mxu0 0.0
    %2627 = vmatpush1.xpose.msra.mxu0 0.0
    %2628 = vmatprep.subr.mxu0 0.0
    %2629 = vmatpush1.xpose.msra.mxu0 0.0
    %2630 = vmatprep.subr.mxu0 0.0
    %2631 = vmatpush1.xpose.msra.mxu0 0.0
    %2632 = vmatprep.subr.mxu0 0.0
    %2633 = vmatpush1.xpose.msra.mxu0 %v2600
    %2634 = vmatprep.subr.mxu0 0.0
    %2635 = vmatpush2.xpose.msra.mxu0 0.0
    %2636 = vmatprep.subr.mxu0 0.0
    %2637 = vmatpush2.xpose.msra.mxu0 0.0
    %2638 = vmatprep.subr.mxu0 0.0
    %2639 = vmatpush2.xpose.msra.mxu0 0.0
    %2640 = vmatprep.subr.mxu0 0.0
    %2641 = vmatpush2.xpose.msra.mxu0 0.0
    %2642 = vmatprep.subr.mxu0 0.0
    %2643 = vmatpush2.xpose.msra.mxu0 0.0
    %2644 = vmatprep.subr.mxu0 0.0
    %2645 = vmatpush2.xpose.msra.mxu0 0.0
    %2646 = vmatprep.subr.mxu0 0.0
    %2647 = vmatpush2.xpose.msra.mxu0 0.0
    %2648 = vmatprep.subr.mxu0 0.0
    %2649 = vmatpush2.xpose.msra.mxu0 0.0
    %2650 = vmatprep.subr.mxu0 0.0
    %2651 = vmatpush2.xpose.msra.mxu0 0.0
    %2652 = vmatprep.subr.mxu0 0.0
    %2653 = vmatpush2.xpose.msra.mxu0 0.0
    %2654 = vmatprep.subr.mxu0 0.0
    %2655 = vmatpush2.xpose.msra.mxu0 0.0
    %2656 = vmatprep.subr.mxu0 0.0
    %2657 = vmatpush2.xpose.msra.mxu0 0.0
    %2658 = vmatprep.subr.mxu0 0.0
    %2659 = vmatpush2.xpose.msra.mxu0 0.0
    %2660 = vmatprep.subr.mxu0 0.0
    %2661 = vmatpush2.xpose.msra.mxu0 0.0
    %2662 = vmatprep.subr.mxu0 0.0
    %2663 = vmatpush2.xpose.msra.mxu0 0.0
    %2664 = vmatprep.subr.mxu0 0.0
    %2665 = vmatpush2.xpose.msra.mxu0 0.0
    %2666 = vmatprep.mubr.f32.mxu0 0.0
    %2667 = vmatmul.mubr.f32.gmra.mxu0 %v2598
    %v2668 = vpop.f32.mrf.mxu0
    %v2669 = vadd.f32 0.0, %v2668
    %v2670 = vpop.f32.mrf.mxu0
    %2671 = vdwg.mxu0
    %v2672 = vmul.f32 %v2591, 0.35355338
    %v2673 = vmul.f32 %v2669, 0.35355338
    %v2674 = vsel %vm360, %v2672, -inf
    %2675 = vmax.xlane.f32.xlu0 %v2674
    %v2676 = vpop.xlane.xlu0 %2675
    %v2677 = vsel %vm360, %v2673, -inf
    %2678 = vmax.xlane.f32.xlu0 %v2677
    %v2679 = vpop.xlane.xlu0 %2678
    %v2680 = vsub.f32 %v2672, %v2676
    %v2681 = vsub.f32 %v2673, %v2679
    %v2682 = vmul.f32 %v2680, 1.442695
    %v2683 = vpow.pop %v2682
    %v2684 = vmul.f32 %v2681, 1.442695
    %v2685 = vpow.pop %v2684
    %v2686 = vsel %vm360, %v2683, 0.0
    %2687 = vadd.xlane.f32.xlu0 %v2686
    %v2688 = vpop.xlane.xlu0 %2687
    %v2689 = vsel %vm360, %v2685, 0.0
    %2690 = vadd.xlane.f32.xlu0 %v2689
    %v2691 = vpop.xlane.xlu0 %2690
    %v2692 = vrcp.pop %v2688
    %v2693 = vmul.f32 %v2683, %v2692
    %v2694 = vrcp.pop %v2691
    %v2695 = vmul.f32 %v2685, %v2694
    %2696 = vrot.lane.b32.xlu0 %v2178, 56
    %v2697 = vpop.permute.xlu0 %2696
    %v2700 = vsel %vm360, %v2693, 0
    %2702 = vmatprep.subr.mxu0 0.0
    %2703 = vmatpush1.msra.mxu0 0.0
    %2704 = vmatprep.subr.mxu0 0.0
    %2705 = vmatpush1.msra.mxu0 0.0
    %2706 = vmatprep.subr.mxu0 0.0
    %2707 = vmatpush1.msra.mxu0 0.0
    %2708 = vmatprep.subr.mxu0 0.0
    %2709 = vmatpush1.msra.mxu0 0.0
    %2710 = vmatprep.subr.mxu0 0.0
    %2711 = vmatpush1.msra.mxu0 0.0
    %2712 = vmatprep.subr.mxu0 0.0
    %2713 = vmatpush1.msra.mxu0 0.0
    %2714 = vmatprep.subr.mxu0 0.0
    %2715 = vmatpush1.msra.mxu0 0.0
    %2716 = vmatprep.subr.mxu0 0.0
    %2717 = vmatpush1.msra.mxu0 0.0
    %2718 = vmatprep.subr.mxu0 0.0
    %2719 = vmatpush1.msra.mxu0 0.0
    %2720 = vmatprep.subr.mxu0 0.0
    %2721 = vmatpush1.msra.mxu0 0.0
    %2722 = vmatprep.subr.mxu0 0.0
    %2723 = vmatpush1.msra.mxu0 0.0
    %2724 = vmatprep.subr.mxu0 0.0
    %2725 = vmatpush1.msra.mxu0 0.0
    %2726 = vmatprep.subr.mxu0 0.0
    %2727 = vmatpush1.msra.mxu0 0.0
    %2728 = vmatprep.subr.mxu0 0.0
    %2729 = vmatpush1.msra.mxu0 0.0
    %2730 = vmatprep.subr.mxu0 0.0
    %2731 = vmatpush1.msra.mxu0 0.0
    %2732 = vmatprep.subr.mxu0 0.0
    %2733 = vmatpush1.msra.mxu0 %v2697
    %2734 = vmatprep.subr.mxu0 0.0
    %2735 = vmatpush2.msra.mxu0 0.0
    %2736 = vmatprep.subr.mxu0 0.0
    %2737 = vmatpush2.msra.mxu0 0.0
    %2738 = vmatprep.subr.mxu0 0.0
    %2739 = vmatpush2.msra.mxu0 0.0
    %2740 = vmatprep.subr.mxu0 0.0
    %2741 = vmatpush2.msra.mxu0 0.0
    %2742 = vmatprep.subr.mxu0 0.0
    %2743 = vmatpush2.msra.mxu0 0.0
    %2744 = vmatprep.subr.mxu0 0.0
    %2745 = vmatpush2.msra.mxu0 0.0
    %2746 = vmatprep.subr.mxu0 0.0
    %2747 = vmatpush2.msra.mxu0 0.0
    %2748 = vmatprep.subr.mxu0 0.0
    %2749 = vmatpush2.msra.mxu0 0.0
    %2750 = vmatprep.subr.mxu0 0.0
    %2751 = vmatpush2.msra.mxu0 0.0
    %2752 = vmatprep.subr.mxu0 0.0
    %2753 = vmatpush2.msra.mxu0 0.0
    %2754 = vmatprep.subr.mxu0 0.0
    %2755 = vmatpush2.msra.mxu0 0.0
    %2756 = vmatprep.subr.mxu0 0.0
    %2757 = vmatpush2.msra.mxu0 0.0
    %2758 = vmatprep.subr.mxu0 0.0
    %2759 = vmatpush2.msra.mxu0 0.0
    %2760 = vmatprep.subr.mxu0 0.0
    %2761 = vmatpush2.msra.mxu0 0.0
    %2762 = vmatprep.subr.mxu0 0.0
    %2763 = vmatpush2.msra.mxu0 0.0
    %2764 = vmatprep.subr.mxu0 0.0
    %2765 = vmatpush2.msra.mxu0 0.0
    %2766 = vmatprep.mubr.f32.mxu0 0.0
    %2767 = vmatmul.mubr.f32.gmra.mxu0 %v2700
    %v2768 = vpop.f32.mrf.mxu0
    %v2769 = vadd.f32 0.0, %v2768
    %v2770 = vpop.f32.mrf.mxu0
    %2771 = vdwg.mxu0
    %2772 = vrot.lane.b32.xlu0 %v2183, 56
    %v2773 = vpop.permute.xlu0 %2772
    %v2776 = vsel %vm360, %v2695, 0
    %2778 = vmatprep.subr.mxu0 0.0
    %2779 = vmatpush1.msra.mxu0 0.0
    %2780 = vmatprep.subr.mxu0 0.0
    %2781 = vmatpush1.msra.mxu0 0.0
    %2782 = vmatprep.subr.mxu0 0.0
    %2783 = vmatpush1.msra.mxu0 0.0
    %2784 = vmatprep.subr.mxu0 0.0
    %2785 = vmatpush1.msra.mxu0 0.0
    %2786 = vmatprep.subr.mxu0 0.0
    %2787 = vmatpush1.msra.mxu0 0.0
    %2788 = vmatprep.subr.mxu0 0.0
    %2789 = vmatpush1.msra.mxu0 0.0
    %2790 = vmatprep.subr.mxu0 0.0
    %2791 = vmatpush1.msra.mxu0 0.0
    %2792 = vmatprep.subr.mxu0 0.0
    %2793 = vmatpush1.msra.mxu0 0.0
    %2794 = vmatprep.subr.mxu0 0.0
    %2795 = vmatpush1.msra.mxu0 0.0
    %2796 = vmatprep.subr.mxu0 0.0
    %2797 = vmatpush1.msra.mxu0 0.0
    %2798 = vmatprep.subr.mxu0 0.0
    %2799 = vmatpush1.msra.mxu0 0.0
    %2800 = vmatprep.subr.mxu0 0.0
    %2801 = vmatpush1.msra.mxu0 0.0
    %2802 = vmatprep.subr.mxu0 0.0
    %2803 = vmatpush1.msra.mxu0 0.0
    %2804 = vmatprep.subr.mxu0 0.0
    %2805 = vmatpush1.msra.mxu0 0.0
    %2806 = vmatprep.subr.mxu0 0.0
    %2807 = vmatpush1.msra.mxu0 0.0
    %2808 = vmatprep.subr.mxu0 0.0
    %2809 = vmatpush1.msra.mxu0 %v2773
    %2810 = vmatprep.subr.mxu0 0.0
    %2811 = vmatpush2.msra.mxu0 0.0
    %2812 = vmatprep.subr.mxu0 0.0
    %2813 = vmatpush2.msra.mxu0 0.0
    %2814 = vmatprep.subr.mxu0 0.0
    %2815 = vmatpush2.msra.mxu0 0.0
    %2816 = vmatprep.subr.mxu0 0.0
    %2817 = vmatpush2.msra.mxu0 0.0
    %2818 = vmatprep.subr.mxu0 0.0
    %2819 = vmatpush2.msra.mxu0 0.0
    %2820 = vmatprep.subr.mxu0 0.0
    %2821 = vmatpush2.msra.mxu0 0.0
    %2822 = vmatprep.subr.mxu0 0.0
    %2823 = vmatpush2.msra.mxu0 0.0
    %2824 = vmatprep.subr.mxu0 0.0
    %2825 = vmatpush2.msra.mxu0 0.0
    %2826 = vmatprep.subr.mxu0 0.0
    %2827 = vmatpush2.msra.mxu0 0.0
    %2828 = vmatprep.subr.mxu0 0.0
    %2829 = vmatpush2.msra.mxu0 0.0
    %2830 = vmatprep.subr.mxu0 0.0
    %2831 = vmatpush2.msra.mxu0 0.0
    %2832 = vmatprep.subr.mxu0 0.0
    %2833 = vmatpush2.msra.mxu0 0.0
    %2834 = vmatprep.subr.mxu0 0.0
    %2835 = vmatpush2.msra.mxu0 0.0
    %2836 = vmatprep.subr.mxu0 0.0
    %2837 = vmatpush2.msra.mxu0 0.0
    %2838 = vmatprep.subr.mxu0 0.0
    %2839 = vmatpush2.msra.mxu0 0.0
    %2840 = vmatprep.subr.mxu0 0.0
    %2841 = vmatpush2.msra.mxu0 0.0
    %2842 = vmatprep.mubr.f32.mxu0 0.0
    %2843 = vmatmul.mubr.f32.gmra.mxu0 %v2776
    %v2844 = vpop.f32.mrf.mxu0
    %v2845 = vadd.f32 0.0, %v2844
    %v2846 = vpop.f32.mrf.mxu0
    %2847 = vdwg.mxu0
    %2848 = vrot.lane.b32.xlu0 %v2178, 112
    %v2849 = vpop.permute.xlu0 %2848
    %2850 = vrot.lane.b32.xlu0 %v2178, 80
    %v2851 = vpop.permute.xlu0 %2850
    %v2852 = vsel %vm360, %v2849, 0
    %v2854 = vsel %vm360, %v2851, 0
    %2856 = vmatprep.subr.mxu0 0.0
    %2857 = vmatpush1.xpose.msra.mxu0 0.0
    %2858 = vmatprep.subr.mxu0 0.0
    %2859 = vmatpush1.xpose.msra.mxu0 0.0
    %2860 = vmatprep.subr.mxu0 0.0
    %2861 = vmatpush1.xpose.msra.mxu0 0.0
    %2862 = vmatprep.subr.mxu0 0.0
    %2863 = vmatpush1.xpose.msra.mxu0 0.0
    %2864 = vmatprep.subr.mxu0 0.0
    %2865 = vmatpush1.xpose.msra.mxu0 0.0
    %2866 = vmatprep.subr.mxu0 0.0
    %2867 = vmatpush1.xpose.msra.mxu0 0.0
    %2868 = vmatprep.subr.mxu0 0.0
    %2869 = vmatpush1.xpose.msra.mxu0 0.0
    %2870 = vmatprep.subr.mxu0 0.0
    %2871 = vmatpush1.xpose.msra.mxu0 0.0
    %2872 = vmatprep.subr.mxu0 0.0
    %2873 = vmatpush1.xpose.msra.mxu0 0.0
    %2874 = vmatprep.subr.mxu0 0.0
    %2875 = vmatpush1.xpose.msra.mxu0 0.0
    %2876 = vmatprep.subr.mxu0 0.0
    %2877 = vmatpush1.xpose.msra.mxu0 0.0
    %2878 = vmatprep.subr.mxu0 0.0
    %2879 = vmatpush1.xpose.msra.mxu0 0.0
    %2880 = vmatprep.subr.mxu0 0.0
    %2881 = vmatpush1.xpose.msra.mxu0 0.0
    %2882 = vmatprep.subr.mxu0 0.0
    %2883 = vmatpush1.xpose.msra.mxu0 0.0
    %2884 = vmatprep.subr.mxu0 0.0
    %2885 = vmatpush1.xpose.msra.mxu0 0.0
    %2886 = vmatprep.subr.mxu0 0.0
    %2887 = vmatpush1.xpose.msra.mxu0 %v2854
    %2888 = vmatprep.subr.mxu0 0.0
    %2889 = vmatpush2.xpose.msra.mxu0 0.0
    %2890 = vmatprep.subr.mxu0 0.0
    %2891 = vmatpush2.xpose.msra.mxu0 0.0
    %2892 = vmatprep.subr.mxu0 0.0
    %2893 = vmatpush2.xpose.msra.mxu0 0.0
    %2894 = vmatprep.subr.mxu0 0.0
    %2895 = vmatpush2.xpose.msra.mxu0 0.0
    %2896 = vmatprep.subr.mxu0 0.0
    %2897 = vmatpush2.xpose.msra.mxu0 0.0
    %2898 = vmatprep.subr.mxu0 0.0
    %2899 = vmatpush2.xpose.msra.mxu0 0.0
    %2900 = vmatprep.subr.mxu0 0.0
    %2901 = vmatpush2.xpose.msra.mxu0 0.0
    %2902 = vmatprep.subr.mxu0 0.0
    %2903 = vmatpush2.xpose.msra.mxu0 0.0
    %2904 = vmatprep.subr.mxu0 0.0
    %2905 = vmatpush2.xpose.msra.mxu0 0.0
    %2906 = vmatprep.subr.mxu0 0.0
    %2907 = vmatpush2.xpose.msra.mxu0 0.0
    %2908 = vmatprep.subr.mxu0 0.0
    %2909 = vmatpush2.xpose.msra.mxu0 0.0
    %2910 = vmatprep.subr.mxu0 0.0
    %2911 = vmatpush2.xpose.msra.mxu0 0.0
    %2912 = vmatprep.subr.mxu0 0.0
    %2913 = vmatpush2.xpose.msra.mxu0 0.0
    %2914 = vmatprep.subr.mxu0 0.0
    %2915 = vmatpush2.xpose.msra.mxu0 0.0
    %2916 = vmatprep.subr.mxu0 0.0
    %2917 = vmatpush2.xpose.msra.mxu0 0.0
    %2918 = vmatprep.subr.mxu0 0.0
    %2919 = vmatpush2.xpose.msra.mxu0 0.0
    %2920 = vmatprep.mubr.f32.mxu0 0.0
    %2921 = vmatmul.mubr.f32.gmra.mxu0 %v2852
    %v2922 = vpop.f32.mrf.mxu0
    %v2923 = vadd.f32 0.0, %v2922
    %v2924 = vpop.f32.mrf.mxu0
    %2925 = vdwg.mxu0
    %2926 = vrot.lane.b32.xlu0 %v2183, 112
    %v2927 = vpop.permute.xlu0 %2926
    %2928 = vrot.lane.b32.xlu0 %v2183, 80
    %v2929 = vpop.permute.xlu0 %2928
    %v2930 = vsel %vm360, %v2927, 0
    %v2932 = vsel %vm360, %v2929, 0
    %2934 = vmatprep.subr.mxu0 0.0
    %2935 = vmatpush1.xpose.msra.mxu0 0.0
    %2936 = vmatprep.subr.mxu0 0.0
    %2937 = vmatpush1.xpose.msra.mxu0 0.0
    %2938 = vmatprep.subr.mxu0 0.0
    %2939 = vmatpush1.xpose.msra.mxu0 0.0
    %2940 = vmatprep.subr.mxu0 0.0
    %2941 = vmatpush1.xpose.msra.mxu0 0.0
    %2942 = vmatprep.subr.mxu0 0.0
    %2943 = vmatpush1.xpose.msra.mxu0 0.0
    %2944 = vmatprep.subr.mxu0 0.0
    %2945 = vmatpush1.xpose.msra.mxu0 0.0
    %2946 = vmatprep.subr.mxu0 0.0
    %2947 = vmatpush1.xpose.msra.mxu0 0.0
    %2948 = vmatprep.subr.mxu0 0.0
    %2949 = vmatpush1.xpose.msra.mxu0 0.0
    %2950 = vmatprep.subr.mxu0 0.0
    %2951 = vmatpush1.xpose.msra.mxu0 0.0
    %2952 = vmatprep.subr.mxu0 0.0
    %2953 = vmatpush1.xpose.msra.mxu0 0.0
    %2954 = vmatprep.subr.mxu0 0.0
    %2955 = vmatpush1.xpose.msra.mxu0 0.0
    %2956 = vmatprep.subr.mxu0 0.0
    %2957 = vmatpush1.xpose.msra.mxu0 0.0
    %2958 = vmatprep.subr.mxu0 0.0
    %2959 = vmatpush1.xpose.msra.mxu0 0.0
    %2960 = vmatprep.subr.mxu0 0.0
    %2961 = vmatpush1.xpose.msra.mxu0 0.0
    %2962 = vmatprep.subr.mxu0 0.0
    %2963 = vmatpush1.xpose.msra.mxu0 0.0
    %2964 = vmatprep.subr.mxu0 0.0
    %2965 = vmatpush1.xpose.msra.mxu0 %v2932
    %2966 = vmatprep.subr.mxu0 0.0
    %2967 = vmatpush2.xpose.msra.mxu0 0.0
    %2968 = vmatprep.subr.mxu0 0.0
    %2969 = vmatpush2.xpose.msra.mxu0 0.0
    %2970 = vmatprep.subr.mxu0 0.0
    %2971 = vmatpush2.xpose.msra.mxu0 0.0
    %2972 = vmatprep.subr.mxu0 0.0
    %2973 = vmatpush2.xpose.msra.mxu0 0.0
    %2974 = vmatprep.subr.mxu0 0.0
    %2975 = vmatpush2.xpose.msra.mxu0 0.0
    %2976 = vmatprep.subr.mxu0 0.0
    %2977 = vmatpush2.xpose.msra.mxu0 0.0
    %2978 = vmatprep.subr.mxu0 0.0
    %2979 = vmatpush2.xpose.msra.mxu0 0.0
    %2980 = vmatprep.subr.mxu0 0.0
    %2981 = vmatpush2.xpose.msra.mxu0 0.0
    %2982 = vmatprep.subr.mxu0 0.0
    %2983 = vmatpush2.xpose.msra.mxu0 0.0
    %2984 = vmatprep.subr.mxu0 0.0
    %2985 = vmatpush2.xpose.msra.mxu0 0.0
    %2986 = vmatprep.subr.mxu0 0.0
    %2987 = vmatpush2.xpose.msra.mxu0 0.0
    %2988 = vmatprep.subr.mxu0 0.0
    %2989 = vmatpush2.xpose.msra.mxu0 0.0
    %2990 = vmatprep.subr.mxu0 0.0
    %2991 = vmatpush2.xpose.msra.mxu0 0.0
    %2992 = vmatprep.subr.mxu0 0.0
    %2993 = vmatpush2.xpose.msra.mxu0 0.0
    %2994 = vmatprep.subr.mxu0 0.0
    %2995 = vmatpush2.xpose.msra.mxu0 0.0
    %2996 = vmatprep.subr.mxu0 0.0
    %2997 = vmatpush2.xpose.msra.mxu0 0.0
    %2998 = vmatprep.mubr.f32.mxu0 0.0
    %2999 = vmatmul.mubr.f32.gmra.mxu0 %v2930
    %v3000 = vpop.f32.mrf.mxu0
    %v3001 = vadd.f32 0.0, %v3000
    %v3002 = vpop.f32.mrf.mxu0
    %3003 = vdwg.mxu0
    %v3004 = vmul.f32 %v2923, 0.35355338
    %v3005 = vmul.f32 %v3001, 0.35355338
    %v3006 = vsel %vm360, %v3004, -inf
    %3007 = vmax.xlane.f32.xlu0 %v3006
    %v3008 = vpop.xlane.xlu0 %3007
    %v3009 = vsel %vm360, %v3005, -inf
    %3010 = vmax.xlane.f32.xlu0 %v3009
    %v3011 = vpop.xlane.xlu0 %3010
    %v3012 = vsub.f32 %v3004, %v3008
    %v3013 = vsub.f32 %v3005, %v3011
    %v3014 = vmul.f32 %v3012, 1.442695
    %v3015 = vpow.pop %v3014
    %v3016 = vmul.f32 %v3013, 1.442695
    %v3017 = vpow.pop %v3016
    %v3018 = vsel %vm360, %v3015, 0.0
    %3019 = vadd.xlane.f32.xlu0 %v3018
    %v3020 = vpop.xlane.xlu0 %3019
    %v3021 = vsel %vm360, %v3017, 0.0
    %3022 = vadd.xlane.f32.xlu0 %v3021
    %v3023 = vpop.xlane.xlu0 %3022
    %v3024 = vrcp.pop %v3020
    %v3025 = vmul.f32 %v3015, %v3024
    %v3026 = vrcp.pop %v3023
    %v3027 = vmul.f32 %v3017, %v3026
    %3028 = vrot.lane.b32.xlu0 %v2178, 48
    %v3029 = vpop.permute.xlu0 %3028
    %v3032 = vsel %vm360, %v3025, 0
    %3034 = vmatprep.subr.mxu0 0.0
    %3035 = vmatpush1.msra.mxu0 0.0
    %3036 = vmatprep.subr.mxu0 0.0
    %3037 = vmatpush1.msra.mxu0 0.0
    %3038 = vmatprep.subr.mxu0 0.0
    %3039 = vmatpush1.msra.mxu0 0.0
    %3040 = vmatprep.subr.mxu0 0.0
    %3041 = vmatpush1.msra.mxu0 0.0
    %3042 = vmatprep.subr.mxu0 0.0
    %3043 = vmatpush1.msra.mxu0 0.0
    %3044 = vmatprep.subr.mxu0 0.0
    %3045 = vmatpush1.msra.mxu0 0.0
    %3046 = vmatprep.subr.mxu0 0.0
    %3047 = vmatpush1.msra.mxu0 0.0
    %3048 = vmatprep.subr.mxu0 0.0
    %3049 = vmatpush1.msra.mxu0 0.0
    %3050 = vmatprep.subr.mxu0 0.0
    %3051 = vmatpush1.msra.mxu0 0.0
    %3052 = vmatprep.subr.mxu0 0.0
    %3053 = vmatpush1.msra.mxu0 0.0
    %3054 = vmatprep.subr.mxu0 0.0
    %3055 = vmatpush1.msra.mxu0 0.0
    %3056 = vmatprep.subr.mxu0 0.0
    %3057 = vmatpush1.msra.mxu0 0.0
    %3058 = vmatprep.subr.mxu0 0.0
    %3059 = vmatpush1.msra.mxu0 0.0
    %3060 = vmatprep.subr.mxu0 0.0
    %3061 = vmatpush1.msra.mxu0 0.0
    %3062 = vmatprep.subr.mxu0 0.0
    %3063 = vmatpush1.msra.mxu0 0.0
    %3064 = vmatprep.subr.mxu0 0.0
    %3065 = vmatpush1.msra.mxu0 %v3029
    %3066 = vmatprep.subr.mxu0 0.0
    %3067 = vmatpush2.msra.mxu0 0.0
    %3068 = vmatprep.subr.mxu0 0.0
    %3069 = vmatpush2.msra.mxu0 0.0
    %3070 = vmatprep.subr.mxu0 0.0
    %3071 = vmatpush2.msra.mxu0 0.0
    %3072 = vmatprep.subr.mxu0 0.0
    %3073 = vmatpush2.msra.mxu0 0.0
    %3074 = vmatprep.subr.mxu0 0.0
    %3075 = vmatpush2.msra.mxu0 0.0
    %3076 = vmatprep.subr.mxu0 0.0
    %3077 = vmatpush2.msra.mxu0 0.0
    %3078 = vmatprep.subr.mxu0 0.0
    %3079 = vmatpush2.msra.mxu0 0.0
    %3080 = vmatprep.subr.mxu0 0.0
    %3081 = vmatpush2.msra.mxu0 0.0
    %3082 = vmatprep.subr.mxu0 0.0
    %3083 = vmatpush2.msra.mxu0 0.0
    %3084 = vmatprep.subr.mxu0 0.0
    %3085 = vmatpush2.msra.mxu0 0.0
    %3086 = vmatprep.subr.mxu0 0.0
    %3087 = vmatpush2.msra.mxu0 0.0
    %3088 = vmatprep.subr.mxu0 0.0
    %3089 = vmatpush2.msra.mxu0 0.0
    %3090 = vmatprep.subr.mxu0 0.0
    %3091 = vmatpush2.msra.mxu0 0.0
    %3092 = vmatprep.subr.mxu0 0.0
    %3093 = vmatpush2.msra.mxu0 0.0
    %3094 = vmatprep.subr.mxu0 0.0
    %3095 = vmatpush2.msra.mxu0 0.0
    %3096 = vmatprep.subr.mxu0 0.0
    %3097 = vmatpush2.msra.mxu0 0.0
    %3098 = vmatprep.mubr.f32.mxu0 0.0
    %3099 = vmatmul.mubr.f32.gmra.mxu0 %v3032
    %v3100 = vpop.f32.mrf.mxu0
    %v3101 = vadd.f32 0.0, %v3100
    %v3102 = vpop.f32.mrf.mxu0
    %3103 = vdwg.mxu0
    %3104 = vrot.lane.b32.xlu0 %v2183, 48
    %v3105 = vpop.permute.xlu0 %3104
    %v3108 = vsel %vm360, %v3027, 0
    %3110 = vmatprep.subr.mxu0 0.0
    %3111 = vmatpush1.msra.mxu0 0.0
    %3112 = vmatprep.subr.mxu0 0.0
    %3113 = vmatpush1.msra.mxu0 0.0
    %3114 = vmatprep.subr.mxu0 0.0
    %3115 = vmatpush1.msra.mxu0 0.0
    %3116 = vmatprep.subr.mxu0 0.0
    %3117 = vmatpush1.msra.mxu0 0.0
    %3118 = vmatprep.subr.mxu0 0.0
    %3119 = vmatpush1.msra.mxu0 0.0
    %3120 = vmatprep.subr.mxu0 0.0
    %3121 = vmatpush1.msra.mxu0 0.0
    %3122 = vmatprep.subr.mxu0 0.0
    %3123 = vmatpush1.msra.mxu0 0.0
    %3124 = vmatprep.subr.mxu0 0.0
    %3125 = vmatpush1.msra.mxu0 0.0
    %3126 = vmatprep.subr.mxu0 0.0
    %3127 = vmatpush1.msra.mxu0 0.0
    %3128 = vmatprep.subr.mxu0 0.0
    %3129 = vmatpush1.msra.mxu0 0.0
    %3130 = vmatprep.subr.mxu0 0.0
    %3131 = vmatpush1.msra.mxu0 0.0
    %3132 = vmatprep.subr.mxu0 0.0
    %3133 = vmatpush1.msra.mxu0 0.0
    %3134 = vmatprep.subr.mxu0 0.0
    %3135 = vmatpush1.msra.mxu0 0.0
    %3136 = vmatprep.subr.mxu0 0.0
    %3137 = vmatpush1.msra.mxu0 0.0
    %3138 = vmatprep.subr.mxu0 0.0
    %3139 = vmatpush1.msra.mxu0 0.0
    %3140 = vmatprep.subr.mxu0 0.0
    %3141 = vmatpush1.msra.mxu0 %v3105
    %3142 = vmatprep.subr.mxu0 0.0
    %3143 = vmatpush2.msra.mxu0 0.0
    %3144 = vmatprep.subr.mxu0 0.0
    %3145 = vmatpush2.msra.mxu0 0.0
    %3146 = vmatprep.subr.mxu0 0.0
    %3147 = vmatpush2.msra.mxu0 0.0
    %3148 = vmatprep.subr.mxu0 0.0
    %3149 = vmatpush2.msra.mxu0 0.0
    %3150 = vmatprep.subr.mxu0 0.0
    %3151 = vmatpush2.msra.mxu0 0.0
    %3152 = vmatprep.subr.mxu0 0.0
    %3153 = vmatpush2.msra.mxu0 0.0
    %3154 = vmatprep.subr.mxu0 0.0
    %3155 = vmatpush2.msra.mxu0 0.0
    %3156 = vmatprep.subr.mxu0 0.0
    %3157 = vmatpush2.msra.mxu0 0.0
    %3158 = vmatprep.subr.mxu0 0.0
    %3159 = vmatpush2.msra.mxu0 0.0
    %3160 = vmatprep.subr.mxu0 0.0
    %3161 = vmatpush2.msra.mxu0 0.0
    %3162 = vmatprep.subr.mxu0 0.0
    %3163 = vmatpush2.msra.mxu0 0.0
    %3164 = vmatprep.subr.mxu0 0.0
    %3165 = vmatpush2.msra.mxu0 0.0
    %3166 = vmatprep.subr.mxu0 0.0
    %3167 = vmatpush2.msra.mxu0 0.0
    %3168 = vmatprep.subr.mxu0 0.0
    %3169 = vmatpush2.msra.mxu0 0.0
    %3170 = vmatprep.subr.mxu0 0.0
    %3171 = vmatpush2.msra.mxu0 0.0
    %3172 = vmatprep.subr.mxu0 0.0
    %3173 = vmatpush2.msra.mxu0 0.0
    %3174 = vmatprep.mubr.f32.mxu0 0.0
    %3175 = vmatmul.mubr.f32.gmra.mxu0 %v3108
    %v3176 = vpop.f32.mrf.mxu0
    %v3177 = vadd.f32 0.0, %v3176
    %v3178 = vpop.f32.mrf.mxu0
    %3179 = vdwg.mxu0
    %3180 = vrot.lane.b32.xlu0 %v2178, 104
    %v3181 = vpop.permute.xlu0 %3180
    %3182 = vrot.lane.b32.xlu0 %v2178, 72
    %v3183 = vpop.permute.xlu0 %3182
    %v3184 = vsel %vm360, %v3181, 0
    %v3186 = vsel %vm360, %v3183, 0
    %3188 = vmatprep.subr.mxu0 0.0
    %3189 = vmatpush1.xpose.msra.mxu0 0.0
    %3190 = vmatprep.subr.mxu0 0.0
    %3191 = vmatpush1.xpose.msra.mxu0 0.0
    %3192 = vmatprep.subr.mxu0 0.0
    %3193 = vmatpush1.xpose.msra.mxu0 0.0
    %3194 = vmatprep.subr.mxu0 0.0
    %3195 = vmatpush1.xpose.msra.mxu0 0.0
    %3196 = vmatprep.subr.mxu0 0.0
    %3197 = vmatpush1.xpose.msra.mxu0 0.0
    %3198 = vmatprep.subr.mxu0 0.0
    %3199 = vmatpush1.xpose.msra.mxu0 0.0
    %3200 = vmatprep.subr.mxu0 0.0
    %3201 = vmatpush1.xpose.msra.mxu0 0.0
    %3202 = vmatprep.subr.mxu0 0.0
    %3203 = vmatpush1.xpose.msra.mxu0 0.0
    %3204 = vmatprep.subr.mxu0 0.0
    %3205 = vmatpush1.xpose.msra.mxu0 0.0
    %3206 = vmatprep.subr.mxu0 0.0
    %3207 = vmatpush1.xpose.msra.mxu0 0.0
    %3208 = vmatprep.subr.mxu0 0.0
    %3209 = vmatpush1.xpose.msra.mxu0 0.0
    %3210 = vmatprep.subr.mxu0 0.0
    %3211 = vmatpush1.xpose.msra.mxu0 0.0
    %3212 = vmatprep.subr.mxu0 0.0
    %3213 = vmatpush1.xpose.msra.mxu0 0.0
    %3214 = vmatprep.subr.mxu0 0.0
    %3215 = vmatpush1.xpose.msra.mxu0 0.0
    %3216 = vmatprep.subr.mxu0 0.0
    %3217 = vmatpush1.xpose.msra.mxu0 0.0
    %3218 = vmatprep.subr.mxu0 0.0
    %3219 = vmatpush1.xpose.msra.mxu0 %v3186
    %3220 = vmatprep.subr.mxu0 0.0
    %3221 = vmatpush2.xpose.msra.mxu0 0.0
    %3222 = vmatprep.subr.mxu0 0.0
    %3223 = vmatpush2.xpose.msra.mxu0 0.0
    %3224 = vmatprep.subr.mxu0 0.0
    %3225 = vmatpush2.xpose.msra.mxu0 0.0
    %3226 = vmatprep.subr.mxu0 0.0
    %3227 = vmatpush2.xpose.msra.mxu0 0.0
    %3228 = vmatprep.subr.mxu0 0.0
    %3229 = vmatpush2.xpose.msra.mxu0 0.0
    %3230 = vmatprep.subr.mxu0 0.0
    %3231 = vmatpush2.xpose.msra.mxu0 0.0
    %3232 = vmatprep.subr.mxu0 0.0
    %3233 = vmatpush2.xpose.msra.mxu0 0.0
    %3234 = vmatprep.subr.mxu0 0.0
    %3235 = vmatpush2.xpose.msra.mxu0 0.0
    %3236 = vmatprep.subr.mxu0 0.0
    %3237 = vmatpush2.xpose.msra.mxu0 0.0
    %3238 = vmatprep.subr.mxu0 0.0
    %3239 = vmatpush2.xpose.msra.mxu0 0.0
    %3240 = vmatprep.subr.mxu0 0.0
    %3241 = vmatpush2.xpose.msra.mxu0 0.0
    %3242 = vmatprep.subr.mxu0 0.0
    %3243 = vmatpush2.xpose.msra.mxu0 0.0
    %3244 = vmatprep.subr.mxu0 0.0
    %3245 = vmatpush2.xpose.msra.mxu0 0.0
    %3246 = vmatprep.subr.mxu0 0.0
    %3247 = vmatpush2.xpose.msra.mxu0 0.0
    %3248 = vmatprep.subr.mxu0 0.0
    %3249 = vmatpush2.xpose.msra.mxu0 0.0
    %3250 = vmatprep.subr.mxu0 0.0
    %3251 = vmatpush2.xpose.msra.mxu0 0.0
    %3252 = vmatprep.mubr.f32.mxu0 0.0
    %3253 = vmatmul.mubr.f32.gmra.mxu0 %v3184
    %v3254 = vpop.f32.mrf.mxu0
    %v3255 = vadd.f32 0.0, %v3254
    %v3256 = vpop.f32.mrf.mxu0
    %3257 = vdwg.mxu0
    %3258 = vrot.lane.b32.xlu0 %v2183, 104
    %v3259 = vpop.permute.xlu0 %3258
    %3260 = vrot.lane.b32.xlu0 %v2183, 72
    %v3261 = vpop.permute.xlu0 %3260
    %v3262 = vsel %vm360, %v3259, 0
    %v3264 = vsel %vm360, %v3261, 0
    %3266 = vmatprep.subr.mxu0 0.0
    %3267 = vmatpush1.xpose.msra.mxu0 0.0
    %3268 = vmatprep.subr.mxu0 0.0
    %3269 = vmatpush1.xpose.msra.mxu0 0.0
    %3270 = vmatprep.subr.mxu0 0.0
    %3271 = vmatpush1.xpose.msra.mxu0 0.0
    %3272 = vmatprep.subr.mxu0 0.0
    %3273 = vmatpush1.xpose.msra.mxu0 0.0
    %3274 = vmatprep.subr.mxu0 0.0
    %3275 = vmatpush1.xpose.msra.mxu0 0.0
    %3276 = vmatprep.subr.mxu0 0.0
    %3277 = vmatpush1.xpose.msra.mxu0 0.0
    %3278 = vmatprep.subr.mxu0 0.0
    %3279 = vmatpush1.xpose.msra.mxu0 0.0
    %3280 = vmatprep.subr.mxu0 0.0
    %3281 = vmatpush1.xpose.msra.mxu0 0.0
    %3282 = vmatprep.subr.mxu0 0.0
    %3283 = vmatpush1.xpose.msra.mxu0 0.0
    %3284 = vmatprep.subr.mxu0 0.0
    %3285 = vmatpush1.xpose.msra.mxu0 0.0
    %3286 = vmatprep.subr.mxu0 0.0
    %3287 = vmatpush1.xpose.msra.mxu0 0.0
    %3288 = vmatprep.subr.mxu0 0.0
    %3289 = vmatpush1.xpose.msra.mxu0 0.0
    %3290 = vmatprep.subr.mxu0 0.0
    %3291 = vmatpush1.xpose.msra.mxu0 0.0
    %3292 = vmatprep.subr.mxu0 0.0
    %3293 = vmatpush1.xpose.msra.mxu0 0.0
    %3294 = vmatprep.subr.mxu0 0.0
    %3295 = vmatpush1.xpose.msra.mxu0 0.0
    %3296 = vmatprep.subr.mxu0 0.0
    %3297 = vmatpush1.xpose.msra.mxu0 %v3264
    %3298 = vmatprep.subr.mxu0 0.0
    %3299 = vmatpush2.xpose.msra.mxu0 0.0
    %3300 = vmatprep.subr.mxu0 0.0
    %3301 = vmatpush2.xpose.msra.mxu0 0.0
    %3302 = vmatprep.subr.mxu0 0.0
    %3303 = vmatpush2.xpose.msra.mxu0 0.0
    %3304 = vmatprep.subr.mxu0 0.0
    %3305 = vmatpush2.xpose.msra.mxu0 0.0
    %3306 = vmatprep.subr.mxu0 0.0
    %3307 = vmatpush2.xpose.msra.mxu0 0.0
    %3308 = vmatprep.subr.mxu0 0.0
    %3309 = vmatpush2.xpose.msra.mxu0 0.0
    %3310 = vmatprep.subr.mxu0 0.0
    %3311 = vmatpush2.xpose.msra.mxu0 0.0
    %3312 = vmatprep.subr.mxu0 0.0
    %3313 = vmatpush2.xpose.msra.mxu0 0.0
    %3314 = vmatprep.subr.mxu0 0.0
    %3315 = vmatpush2.xpose.msra.mxu0 0.0
    %3316 = vmatprep.subr.mxu0 0.0
    %3317 = vmatpush2.xpose.msra.mxu0 0.0
    %3318 = vmatprep.subr.mxu0 0.0
    %3319 = vmatpush2.xpose.msra.mxu0 0.0
    %3320 = vmatprep.subr.mxu0 0.0
    %3321 = vmatpush2.xpose.msra.mxu0 0.0
    %3322 = vmatprep.subr.mxu0 0.0
    %3323 = vmatpush2.xpose.msra.mxu0 0.0
    %3324 = vmatprep.subr.mxu0 0.0
    %3325 = vmatpush2.xpose.msra.mxu0 0.0
    %3326 = vmatprep.subr.mxu0 0.0
    %3327 = vmatpush2.xpose.msra.mxu0 0.0
    %3328 = vmatprep.subr.mxu0 0.0
    %3329 = vmatpush2.xpose.msra.mxu0 0.0
    %3330 = vmatprep.mubr.f32.mxu0 0.0
    %3331 = vmatmul.mubr.f32.gmra.mxu0 %v3262
    %v3332 = vpop.f32.mrf.mxu0
    %v3333 = vadd.f32 0.0, %v3332
    %v3334 = vpop.f32.mrf.mxu0
    %3335 = vdwg.mxu0
    %v3336 = vmul.f32 %v3255, 0.35355338
    %v3337 = vmul.f32 %v3333, 0.35355338
    %v3338 = vsel %vm360, %v3336, -inf
    %3339 = vmax.xlane.f32.xlu0 %v3338
    %v3340 = vpop.xlane.xlu0 %3339
    %v3341 = vsel %vm360, %v3337, -inf
    %3342 = vmax.xlane.f32.xlu0 %v3341
    %v3343 = vpop.xlane.xlu0 %3342
    %v3344 = vsub.f32 %v3336, %v3340
    %v3345 = vsub.f32 %v3337, %v3343
    %v3346 = vmul.f32 %v3344, 1.442695
    %v3347 = vpow.pop %v3346
    %v3348 = vmul.f32 %v3345, 1.442695
    %v3349 = vpow.pop %v3348
    %v3350 = vsel %vm360, %v3347, 0.0
    %3351 = vadd.xlane.f32.xlu0 %v3350
    %v3352 = vpop.xlane.xlu0 %3351
    %v3353 = vsel %vm360, %v3349, 0.0
    %3354 = vadd.xlane.f32.xlu0 %v3353
    %v3355 = vpop.xlane.xlu0 %3354
    %v3356 = vrcp.pop %v3352
    %v3357 = vmul.f32 %v3347, %v3356
    %v3358 = vrcp.pop %v3355
    %v3359 = vmul.f32 %v3349, %v3358
    %3360 = vrot.lane.b32.xlu0 %v2178, 40
    %v3361 = vpop.permute.xlu0 %3360
    %v3364 = vsel %vm360, %v3357, 0
    %3366 = vmatprep.subr.mxu0 0.0
    %3367 = vmatpush1.msra.mxu0 0.0
    %3368 = vmatprep.subr.mxu0 0.0
    %3369 = vmatpush1.msra.mxu0 0.0
    %3370 = vmatprep.subr.mxu0 0.0
    %3371 = vmatpush1.msra.mxu0 0.0
    %3372 = vmatprep.subr.mxu0 0.0
    %3373 = vmatpush1.msra.mxu0 0.0
    %3374 = vmatprep.subr.mxu0 0.0
    %3375 = vmatpush1.msra.mxu0 0.0
    %3376 = vmatprep.subr.mxu0 0.0
    %3377 = vmatpush1.msra.mxu0 0.0
    %3378 = vmatprep.subr.mxu0 0.0
    %3379 = vmatpush1.msra.mxu0 0.0
    %3380 = vmatprep.subr.mxu0 0.0
    %3381 = vmatpush1.msra.mxu0 0.0
    %3382 = vmatprep.subr.mxu0 0.0
    %3383 = vmatpush1.msra.mxu0 0.0
    %3384 = vmatprep.subr.mxu0 0.0
    %3385 = vmatpush1.msra.mxu0 0.0
    %3386 = vmatprep.subr.mxu0 0.0
    %3387 = vmatpush1.msra.mxu0 0.0
    %3388 = vmatprep.subr.mxu0 0.0
    %3389 = vmatpush1.msra.mxu0 0.0
    %3390 = vmatprep.subr.mxu0 0.0
    %3391 = vmatpush1.msra.mxu0 0.0
    %3392 = vmatprep.subr.mxu0 0.0
    %3393 = vmatpush1.msra.mxu0 0.0
    %3394 = vmatprep.subr.mxu0 0.0
    %3395 = vmatpush1.msra.mxu0 0.0
    %3396 = vmatprep.subr.mxu0 0.0
    %3397 = vmatpush1.msra.mxu0 %v3361
    %3398 = vmatprep.subr.mxu0 0.0
    %3399 = vmatpush2.msra.mxu0 0.0
    %3400 = vmatprep.subr.mxu0 0.0
    %3401 = vmatpush2.msra.mxu0 0.0
    %3402 = vmatprep.subr.mxu0 0.0
    %3403 = vmatpush2.msra.mxu0 0.0
    %3404 = vmatprep.subr.mxu0 0.0
    %3405 = vmatpush2.msra.mxu0 0.0
    %3406 = vmatprep.subr.mxu0 0.0
    %3407 = vmatpush2.msra.mxu0 0.0
    %3408 = vmatprep.subr.mxu0 0.0
    %3409 = vmatpush2.msra.mxu0 0.0
    %3410 = vmatprep.subr.mxu0 0.0
    %3411 = vmatpush2.msra.mxu0 0.0
    %3412 = vmatprep.subr.mxu0 0.0
    %3413 = vmatpush2.msra.mxu0 0.0
    %3414 = vmatprep.subr.mxu0 0.0
    %3415 = vmatpush2.msra.mxu0 0.0
    %3416 = vmatprep.subr.mxu0 0.0
    %3417 = vmatpush2.msra.mxu0 0.0
    %3418 = vmatprep.subr.mxu0 0.0
    %3419 = vmatpush2.msra.mxu0 0.0
    %3420 = vmatprep.subr.mxu0 0.0
    %3421 = vmatpush2.msra.mxu0 0.0
    %3422 = vmatprep.subr.mxu0 0.0
    %3423 = vmatpush2.msra.mxu0 0.0
    %3424 = vmatprep.subr.mxu0 0.0
    %3425 = vmatpush2.msra.mxu0 0.0
    %3426 = vmatprep.subr.mxu0 0.0
    %3427 = vmatpush2.msra.mxu0 0.0
    %3428 = vmatprep.subr.mxu0 0.0
    %3429 = vmatpush2.msra.mxu0 0.0
    %3430 = vmatprep.mubr.f32.mxu0 0.0
    %3431 = vmatmul.mubr.f32.gmra.mxu0 %v3364
    %v3432 = vpop.f32.mrf.mxu0
    %v3433 = vadd.f32 0.0, %v3432
    %v3434 = vpop.f32.mrf.mxu0
    %3435 = vdwg.mxu0
    %3436 = vrot.lane.b32.xlu0 %v2183, 40
    %v3437 = vpop.permute.xlu0 %3436
    %v3440 = vsel %vm360, %v3359, 0
    %3442 = vmatprep.subr.mxu0 0.0
    %3443 = vmatpush1.msra.mxu0 0.0
    %3444 = vmatprep.subr.mxu0 0.0
    %3445 = vmatpush1.msra.mxu0 0.0
    %3446 = vmatprep.subr.mxu0 0.0
    %3447 = vmatpush1.msra.mxu0 0.0
    %3448 = vmatprep.subr.mxu0 0.0
    %3449 = vmatpush1.msra.mxu0 0.0
    %3450 = vmatprep.subr.mxu0 0.0
    %3451 = vmatpush1.msra.mxu0 0.0
    %3452 = vmatprep.subr.mxu0 0.0
    %3453 = vmatpush1.msra.mxu0 0.0
    %3454 = vmatprep.subr.mxu0 0.0
    %3455 = vmatpush1.msra.mxu0 0.0
    %3456 = vmatprep.subr.mxu0 0.0
    %3457 = vmatpush1.msra.mxu0 0.0
    %3458 = vmatprep.subr.mxu0 0.0
    %3459 = vmatpush1.msra.mxu0 0.0
    %3460 = vmatprep.subr.mxu0 0.0
    %3461 = vmatpush1.msra.mxu0 0.0
    %3462 = vmatprep.subr.mxu0 0.0
    %3463 = vmatpush1.msra.mxu0 0.0
    %3464 = vmatprep.subr.mxu0 0.0
    %3465 = vmatpush1.msra.mxu0 0.0
    %3466 = vmatprep.subr.mxu0 0.0
    %3467 = vmatpush1.msra.mxu0 0.0
    %3468 = vmatprep.subr.mxu0 0.0
    %3469 = vmatpush1.msra.mxu0 0.0
    %3470 = vmatprep.subr.mxu0 0.0
    %3471 = vmatpush1.msra.mxu0 0.0
    %3472 = vmatprep.subr.mxu0 0.0
    %3473 = vmatpush1.msra.mxu0 %v3437
    %3474 = vmatprep.subr.mxu0 0.0
    %3475 = vmatpush2.msra.mxu0 0.0
    %3476 = vmatprep.subr.mxu0 0.0
    %3477 = vmatpush2.msra.mxu0 0.0
    %3478 = vmatprep.subr.mxu0 0.0
    %3479 = vmatpush2.msra.mxu0 0.0
    %3480 = vmatprep.subr.mxu0 0.0
    %3481 = vmatpush2.msra.mxu0 0.0
    %3482 = vmatprep.subr.mxu0 0.0
    %3483 = vmatpush2.msra.mxu0 0.0
    %3484 = vmatprep.subr.mxu0 0.0
    %3485 = vmatpush2.msra.mxu0 0.0
    %3486 = vmatprep.subr.mxu0 0.0
    %3487 = vmatpush2.msra.mxu0 0.0
    %3488 = vmatprep.subr.mxu0 0.0
    %3489 = vmatpush2.msra.mxu0 0.0
    %3490 = vmatprep.subr.mxu0 0.0
    %3491 = vmatpush2.msra.mxu0 0.0
    %3492 = vmatprep.subr.mxu0 0.0
    %3493 = vmatpush2.msra.mxu0 0.0
    %3494 = vmatprep.subr.mxu0 0.0
    %3495 = vmatpush2.msra.mxu0 0.0
    %3496 = vmatprep.subr.mxu0 0.0
    %3497 = vmatpush2.msra.mxu0 0.0
    %3498 = vmatprep.subr.mxu0 0.0
    %3499 = vmatpush2.msra.mxu0 0.0
    %3500 = vmatprep.subr.mxu0 0.0
    %3501 = vmatpush2.msra.mxu0 0.0
    %3502 = vmatprep.subr.mxu0 0.0
    %3503 = vmatpush2.msra.mxu0 0.0
    %3504 = vmatprep.subr.mxu0 0.0
    %3505 = vmatpush2.msra.mxu0 0.0
    %3506 = vmatprep.mubr.f32.mxu0 0.0
    %3507 = vmatmul.mubr.f32.gmra.mxu0 %v3440
    %v3508 = vpop.f32.mrf.mxu0
    %v3509 = vadd.f32 0.0, %v3508
    %v3510 = vpop.f32.mrf.mxu0
    %3511 = vdwg.mxu0
    %3514 = vrot.lane.b32.xlu0 %v2769, 8
    %v3515 = vpop.permute.xlu0 %3514
    %3516 = vrot.lane.b32.xlu0 %v2845, 8
    %v3517 = vpop.permute.xlu0 %3516
    %3522 = vrot.lane.b32.xlu0 %v3101, 16
    %v3523 = vpop.permute.xlu0 %3522
    %3524 = vrot.lane.b32.xlu0 %v3177, 16
    %v3525 = vpop.permute.xlu0 %3524
    %3530 = vrot.lane.b32.xlu0 %v3433, 24
    %v3531 = vpop.permute.xlu0 %3530
    %3532 = vrot.lane.b32.xlu0 %v3509, 24
    %v3533 = vpop.permute.xlu0 %3532
    %v3536 = vsel %vm360, %v2437, %v3515
    %v3537 = vsel %vm360, %v2513, %v3517
    %v3538 = vsel %vm1710, %v3536, %v3523
    %v3539 = vsel %vm1710, %v3537, %v3525
    %v3540 = vsel %vm1713, %v3538, %v3531
    %v3541 = vsel %vm1713, %v3539, %v3533
    %s3542 = scalar_lea.vmem %s8, 32
    %v3543 = vld [vmem:[%s3542] sm:$0xff]
    %v3544 = vld [vmem:[%s3542 + $0x8] sm:$0xff]
    %v3545 = vld [vmem:[%s3542 + $0x10] sm:$0xff]
    %v3546 = vld [vmem:[%s3542 + $0x18] sm:$0xff]
    %s3547 = scalar_lea.vmem %s9, 1
    %v3548 = vld [vmem:[%s3547] sm:$0x1]
    %v3550 = vlaneseq
    %v3551 = vshrl.u32 %v3550, 7
    %v3552 = vsub.s32 0, %v3551
    %v3553 = vrot.slane %v3548, %v3552
    %v3556 = vsel %vm275, %v3540, 0
    %v3559 = vsel %vm275, %v3541, 0
    %3561 = vmatprep.subr.mxu0 0.0
    %3562 = vmatpush1.msra.mxu0 0.0
    %3563 = vmatprep.subr.mxu0 0.0
    %3564 = vmatpush1.msra.mxu0 0.0
    %3565 = vmatprep.subr.mxu0 0.0
    %3566 = vmatpush1.msra.mxu0 0.0
    %3567 = vmatprep.subr.mxu0 0.0
    %3568 = vmatpush1.msra.mxu0 0.0
    %3569 = vmatprep.subr.mxu0 0.0
    %3570 = vmatpush1.msra.mxu0 0.0
    %3571 = vmatprep.subr.mxu0 0.0
    %3572 = vmatpush1.msra.mxu0 0.0
    %3573 = vmatprep.subr.mxu0 0.0
    %3574 = vmatpush1.msra.mxu0 0.0
    %3575 = vmatprep.subr.mxu0 0.0
    %3576 = vmatpush1.msra.mxu0 0.0
    %3577 = vmatprep.subr.mxu0 0.0
    %3578 = vmatpush1.msra.mxu0 0.0
    %3579 = vmatprep.subr.mxu0 0.0
    %3580 = vmatpush1.msra.mxu0 0.0
    %3581 = vmatprep.subr.mxu0 0.0
    %3582 = vmatpush1.msra.mxu0 0.0
    %3583 = vmatprep.subr.mxu0 0.0
    %3584 = vmatpush1.msra.mxu0 0.0
    %3585 = vmatprep.subr.mxu0 0.0
    %3586 = vmatpush1.msra.mxu0 %v3546
    %3587 = vmatprep.subr.mxu0 0.0
    %3588 = vmatpush1.msra.mxu0 %v3545
    %3589 = vmatprep.subr.mxu0 0.0
    %3590 = vmatpush1.msra.mxu0 %v3544
    %3591 = vmatprep.subr.mxu0 0.0
    %3592 = vmatpush1.msra.mxu0 %v3543
    %3593 = vmatprep.subr.mxu0 0.0
    %3594 = vmatpush2.msra.mxu0 0.0
    %3595 = vmatprep.subr.mxu0 0.0
    %3596 = vmatpush2.msra.mxu0 0.0
    %3597 = vmatprep.subr.mxu0 0.0
    %3598 = vmatpush2.msra.mxu0 0.0
    %3599 = vmatprep.subr.mxu0 0.0
    %3600 = vmatpush2.msra.mxu0 0.0
    %3601 = vmatprep.subr.mxu0 0.0
    %3602 = vmatpush2.msra.mxu0 0.0
    %3603 = vmatprep.subr.mxu0 0.0
    %3604 = vmatpush2.msra.mxu0 0.0
    %3605 = vmatprep.subr.mxu0 0.0
    %3606 = vmatpush2.msra.mxu0 0.0
    %3607 = vmatprep.subr.mxu0 0.0
    %3608 = vmatpush2.msra.mxu0 0.0
    %3609 = vmatprep.subr.mxu0 0.0
    %3610 = vmatpush2.msra.mxu0 0.0
    %3611 = vmatprep.subr.mxu0 0.0
    %3612 = vmatpush2.msra.mxu0 0.0
    %3613 = vmatprep.subr.mxu0 0.0
    %3614 = vmatpush2.msra.mxu0 0.0
    %3615 = vmatprep.subr.mxu0 0.0
    %3616 = vmatpush2.msra.mxu0 0.0
    %3617 = vmatprep.subr.mxu0 0.0
    %3618 = vmatpush2.msra.mxu0 0.0
    %3619 = vmatprep.subr.mxu0 0.0
    %3620 = vmatpush2.msra.mxu0 0.0
    %3621 = vmatprep.subr.mxu0 0.0
    %3622 = vmatpush2.msra.mxu0 0.0
    %3623 = vmatprep.subr.mxu0 0.0
    %3624 = vmatpush2.msra.mxu0 0.0
    %3625 = vmatprep.mubr.f32.mxu0 0.0
    %3626 = vmatmul.mubr.f32.gmra.mxu0 %v3556
    %v3627 = vpop.f32.mrf.mxu0
    %v3628 = vadd.f32 %v3553, %v3627
    %v3629 = vpop.f32.mrf.mxu0
    %3630 = vmatprep.mubr.f32.mxu0 0.0
    %3631 = vmatmul.mubr.f32.gmra.mxu0 %v3559
    %v3632 = vpop.f32.mrf.mxu0
    %v3633 = vadd.f32 %v3553, %v3632
    %v3634 = vpop.f32.mrf.mxu0
    %3635 = vdwg.mxu0
    %v3636 = vadd.f32 %v2090, %v3628
    %v3637 = vadd.f32 %v2091, %v3633
    %s3638 = scalar_lea.vmem %s10, 1
    %v3639 = vld [vmem:[%s3638] sm:$0x1]
    %s3640 = scalar_lea.vmem %s11, 1
    %v3641 = vld [vmem:[%s3640] sm:$0x1]
    %v3642 = vsel %vm275, %v3636, 0.0
    %3643 = vadd.xlane.f32.xlu0 %v3642
    %v3644 = vpop.xlane.xlu0 %3643
    %v3645 = vsel %vm275, %v3637, 0.0
    %3646 = vadd.xlane.f32.xlu0 %v3645
    %v3647 = vpop.xlane.xlu0 %3646
    %v3648 = vmul.f32 %v3644, %v1818
    %v3649 = vmul.f32 %v3647, %v1818
    %v3650 = vsub.f32 %v3636, %v3648
    %v3651 = vsub.f32 %v3637, %v3649
    %v3652 = vmul.f32 %v3650, %v3650
    %v3653 = vmul.f32 %v3651, %v3651
    %v3654 = vsel %vm275, %v3652, 0.0
    %3655 = vadd.xlane.f32.xlu0 %v3654
    %v3656 = vpop.xlane.xlu0 %3655
    %v3657 = vsel %vm275, %v3653, 0.0
    %3658 = vadd.xlane.f32.xlu0 %v3657
    %v3659 = vpop.xlane.xlu0 %3658
    %v3660 = vmul.f32 %v3656, %v1818
    %v3661 = vmul.f32 %v3659, %v1818
    %v3662 = vadd.f32 %v3660, 1e-05
    %v3663 = vadd.f32 %v3661, 1e-05
    %v3664 = vrsqrt.pop %v3662
    %v3665 = vrsqrt.pop %v3663
    %v3666 = vmul.f32 %v3650, %v3664
    %v3667 = vmul.f32 %v3651, %v3665
    %v3669 = vlaneseq
    %v3670 = vshrl.u32 %v3669, 7
    %v3671 = vsub.s32 0, %v3670
    %v3672 = vrot.slane %v3639, %v3671
    %v3674 = vmul.f32 %v3666, %v3672
    %v3675 = vmul.f32 %v3667, %v3672
    %v3677 = vlaneseq
    %v3678 = vshrl.u32 %v3677, 7
    %v3679 = vsub.s32 0, %v3678
    %v3680 = vrot.slane %v3641, %v3679
    %v3682 = vadd.f32 %v3674, %v3680
    %v3683 = vadd.f32 %v3675, %v3680
    %s3684 = scalar_lea.vmem %s12, 32
    %v3685 = vld [vmem:[%s3684] sm:$0xff]
    %v3686 = vld [vmem:[%s3684 + $0x8] sm:$0xff]
    %v3687 = vld [vmem:[%s3684 + $0x10] sm:$0xff]
    %v3688 = vld [vmem:[%s3684 + $0x18] sm:$0xff]
    %s3689 = scalar_lea.vmem %s13, 1
    %v3690 = vld [vmem:[%s3689] sm:$0x1]
    %v3692 = vlaneseq
    %v3693 = vshrl.u32 %v3692, 7
    %v3694 = vsub.s32 0, %v3693
    %v3695 = vrot.slane %v3690, %v3694
    %v3698 = vsel %vm275, %v3682, 0
    %v3701 = vsel %vm275, %v3683, 0
    %3703 = vmatprep.subr.mxu0 0.0
    %3704 = vmatpush1.msra.mxu0 0.0
    %3705 = vmatprep.subr.mxu0 0.0
    %3706 = vmatpush1.msra.mxu0 0.0
    %3707 = vmatprep.subr.mxu0 0.0
    %3708 = vmatpush1.msra.mxu0 0.0
    %3709 = vmatprep.subr.mxu0 0.0
    %3710 = vmatpush1.msra.mxu0 0.0
    %3711 = vmatprep.subr.mxu0 0.0
    %3712 = vmatpush1.msra.mxu0 0.0
    %3713 = vmatprep.subr.mxu0 0.0
    %3714 = vmatpush1.msra.mxu0 0.0
    %3715 = vmatprep.subr.mxu0 0.0
    %3716 = vmatpush1.msra.mxu0 0.0
    %3717 = vmatprep.subr.mxu0 0.0
    %3718 = vmatpush1.msra.mxu0 0.0
    %3719 = vmatprep.subr.mxu0 0.0
    %3720 = vmatpush1.msra.mxu0 0.0
    %3721 = vmatprep.subr.mxu0 0.0
    %3722 = vmatpush1.msra.mxu0 0.0
    %3723 = vmatprep.subr.mxu0 0.0
    %3724 = vmatpush1.msra.mxu0 0.0
    %3725 = vmatprep.subr.mxu0 0.0
    %3726 = vmatpush1.msra.mxu0 0.0
    %3727 = vmatprep.subr.mxu0 0.0
    %3728 = vmatpush1.msra.mxu0 %v3688
    %3729 = vmatprep.subr.mxu0 0.0
    %3730 = vmatpush1.msra.mxu0 %v3687
    %3731 = vmatprep.subr.mxu0 0.0
    %3732 = vmatpush1.msra.mxu0 %v3686
    %3733 = vmatprep.subr.mxu0 0.0
    %3734 = vmatpush1.msra.mxu0 %v3685
    %3735 = vmatprep.subr.mxu0 0.0
    %3736 = vmatpush2.msra.mxu0 0.0
    %3737 = vmatprep.subr.mxu0 0.0
    %3738 = vmatpush2.msra.mxu0 0.0
    %3739 = vmatprep.subr.mxu0 0.0
    %3740 = vmatpush2.msra.mxu0 0.0
    %3741 = vmatprep.subr.mxu0 0.0
    %3742 = vmatpush2.msra.mxu0 0.0
    %3743 = vmatprep.subr.mxu0 0.0
    %3744 = vmatpush2.msra.mxu0 0.0
    %3745 = vmatprep.subr.mxu0 0.0
    %3746 = vmatpush2.msra.mxu0 0.0
    %3747 = vmatprep.subr.mxu0 0.0
    %3748 = vmatpush2.msra.mxu0 0.0
    %3749 = vmatprep.subr.mxu0 0.0
    %3750 = vmatpush2.msra.mxu0 0.0
    %3751 = vmatprep.subr.mxu0 0.0
    %3752 = vmatpush2.msra.mxu0 0.0
    %3753 = vmatprep.subr.mxu0 0.0
    %3754 = vmatpush2.msra.mxu0 0.0
    %3755 = vmatprep.subr.mxu0 0.0
    %3756 = vmatpush2.msra.mxu0 0.0
    %3757 = vmatprep.subr.mxu0 0.0
    %3758 = vmatpush2.msra.mxu0 0.0
    %3759 = vmatprep.subr.mxu0 0.0
    %3760 = vmatpush2.msra.mxu0 0.0
    %3761 = vmatprep.subr.mxu0 0.0
    %3762 = vmatpush2.msra.mxu0 0.0
    %3763 = vmatprep.subr.mxu0 0.0
    %3764 = vmatpush2.msra.mxu0 0.0
    %3765 = vmatprep.subr.mxu0 0.0
    %3766 = vmatpush2.msra.mxu0 0.0
    %3767 = vmatprep.mubr.f32.mxu0 0.0
    %3768 = vmatmul.mubr.f32.gmra.mxu0 %v3698
    %v3769 = vpop.f32.mrf.mxu0
    %v3770 = vadd.f32 %v3695, %v3769
    %v3771 = vpop.f32.mrf.mxu0
    %3772 = vmatprep.mubr.f32.mxu0 0.0
    %3773 = vmatmul.mubr.f32.gmra.mxu0 %v3701
    %v3774 = vpop.f32.mrf.mxu0
    %v3775 = vadd.f32 %v3695, %v3774
    %v3776 = vpop.f32.mrf.mxu0
    %3777 = vdwg.mxu0
    %v3778 = vmax.f32 %v3770, 0.0
    %v3779 = vmax.f32 %v3775, 0.0
    %s3780 = scalar_lea.vmem %s14, 64
    %v3781 = vld [vmem:[%s3780] sm:$0xff]
    %v3782 = vld [vmem:[%s3780 + $0x8] sm:$0xff]
    %v3783 = vld [vmem:[%s3780 + $0x10] sm:$0xff]
    %v3784 = vld [vmem:[%s3780 + $0x18] sm:$0xff]
    %v3785 = vld [vmem:[%s3780 + $0x20] sm:$0xff]
    %v3786 = vld [vmem:[%s3780 + $0x28] sm:$0xff]
    %v3787 = vld [vmem:[%s3780 + $0x30] sm:$0xff]
    %v3788 = vld [vmem:[%s3780 + $0x38] sm:$0xff]
    %s3789 = scalar_lea.vmem %s15, 1
    %v3790 = vld [vmem:[%s3789] sm:$0x1]
    %v3792 = vlaneseq
    %v3793 = vshrl.u32 %v3792, 7
    %v3794 = vsub.s32 0, %v3793
    %v3795 = vrot.slane %v3790, %v3794
    %v3798 = vsel %vm1964, %v3778, 0
    %v3801 = vsel %vm1964, %v3779, 0
    %3803 = vmatprep.subr.mxu0 0.0
    %3804 = vmatpush1.msra.mxu0 0.0
    %3805 = vmatprep.subr.mxu0 0.0
    %3806 = vmatpush1.msra.mxu0 0.0
    %3807 = vmatprep.subr.mxu0 0.0
    %3808 = vmatpush1.msra.mxu0 0.0
    %3809 = vmatprep.subr.mxu0 0.0
    %3810 = vmatpush1.msra.mxu0 0.0
    %3811 = vmatprep.subr.mxu0 0.0
    %3812 = vmatpush1.msra.mxu0 0.0
    %3813 = vmatprep.subr.mxu0 0.0
    %3814 = vmatpush1.msra.mxu0 0.0
    %3815 = vmatprep.subr.mxu0 0.0
    %3816 = vmatpush1.msra.mxu0 0.0
    %3817 = vmatprep.subr.mxu0 0.0
    %3818 = vmatpush1.msra.mxu0 0.0
    %3819 = vmatprep.subr.mxu0 0.0
    %3820 = vmatpush1.msra.mxu0 %v3788
    %3821 = vmatprep.subr.mxu0 0.0
    %3822 = vmatpush1.msra.mxu0 %v3787
    %3823 = vmatprep.subr.mxu0 0.0
    %3824 = vmatpush1.msra.mxu0 %v3786
    %3825 = vmatprep.subr.mxu0 0.0
    %3826 = vmatpush1.msra.mxu0 %v3785
    %3827 = vmatprep.subr.mxu0 0.0
    %3828 = vmatpush1.msra.mxu0 %v3784
    %3829 = vmatprep.subr.mxu0 0.0
    %3830 = vmatpush1.msra.mxu0 %v3783
    %3831 = vmatprep.subr.mxu0 0.0
    %3832 = vmatpush1.msra.mxu0 %v3782
    %3833 = vmatprep.subr.mxu0 0.0
    %3834 = vmatpush1.msra.mxu0 %v3781
    %3835 = vmatprep.subr.mxu0 0.0
    %3836 = vmatpush2.msra.mxu0 0.0
    %3837 = vmatprep.subr.mxu0 0.0
    %3838 = vmatpush2.msra.mxu0 0.0
    %3839 = vmatprep.subr.mxu0 0.0
    %3840 = vmatpush2.msra.mxu0 0.0
    %3841 = vmatprep.subr.mxu0 0.0
    %3842 = vmatpush2.msra.mxu0 0.0
    %3843 = vmatprep.subr.mxu0 0.0
    %3844 = vmatpush2.msra.mxu0 0.0
    %3845 = vmatprep.subr.mxu0 0.0
    %3846 = vmatpush2.msra.mxu0 0.0
    %3847 = vmatprep.subr.mxu0 0.0
    %3848 = vmatpush2.msra.mxu0 0.0
    %3849 = vmatprep.subr.mxu0 0.0
    %3850 = vmatpush2.msra.mxu0 0.0
    %3851 = vmatprep.subr.mxu0 0.0
    %3852 = vmatpush2.msra.mxu0 0.0
    %3853 = vmatprep.subr.mxu0 0.0
    %3854 = vmatpush2.msra.mxu0 0.0
    %3855 = vmatprep.subr.mxu0 0.0
    %3856 = vmatpush2.msra.mxu0 0.0
    %3857 = vmatprep.subr.mxu0 0.0
    %3858 = vmatpush2.msra.mxu0 0.0
    %3859 = vmatprep.subr.mxu0 0.0
    %3860 = vmatpush2.msra.mxu0 0.0
    %3861 = vmatprep.subr.mxu0 0.0
    %3862 = vmatpush2.msra.mxu0 0.0
    %3863 = vmatprep.subr.mxu0 0.0
    %3864 = vmatpush2.msra.mxu0 0.0
    %3865 = vmatprep.subr.mxu0 0.0
    %3866 = vmatpush2.msra.mxu0 0.0
    %3867 = vmatprep.mubr.f32.mxu0 0.0
    %3868 = vmatmul.mubr.f32.gmra.mxu0 %v3798
    %v3869 = vpop.f32.mrf.mxu0
    %v3870 = vadd.f32 %v3795, %v3869
    %v3871 = vpop.f32.mrf.mxu0
    %3872 = vmatprep.mubr.f32.mxu0 0.0
    %3873 = vmatmul.mubr.f32.gmra.mxu0 %v3801
    %v3874 = vpop.f32.mrf.mxu0
    %v3875 = vadd.f32 %v3795, %v3874
    %v3876 = vpop.f32.mrf.mxu0
    %3877 = vdwg.mxu0
    %v3878 = vadd.f32 %v3682, %v3870
    %v3879 = vadd.f32 %v3683, %v3875
    %s3880 = scalar_lea.vmem %s16, 1
    %v3881 = vld [vmem:[%s3880] sm:$0x1]
    %s3882 = scalar_lea.vmem %s17, 1
    %v3883 = vld [vmem:[%s3882] sm:$0x1]
    %v3884 = vsel %vm275, %v3878, 0.0
    %3885 = vadd.xlane.f32.xlu0 %v3884
    %v3886 = vpop.xlane.xlu0 %3885
    %v3887 = vsel %vm275, %v3879, 0.0
    %3888 = vadd.xlane.f32.xlu0 %v3887
    %v3889 = vpop.xlane.xlu0 %3888
    %v3890 = vmul.f32 %v3886, %v1818
    %v3891 = vmul.f32 %v3889, %v1818
    %v3892 = vsub.f32 %v3878, %v3890
    %v3893 = vsub.f32 %v3879, %v3891
    %v3894 = vmul.f32 %v3892, %v3892
    %v3895 = vmul.f32 %v3893, %v3893
    %v3896 = vsel %vm275, %v3894, 0.0
    %3897 = vadd.xlane.f32.xlu0 %v3896
    %v3898 = vpop.xlane.xlu0 %3897
    %v3899 = vsel %vm275, %v3895, 0.0
    %3900 = vadd.xlane.f32.xlu0 %v3899
    %v3901 = vpop.xlane.xlu0 %3900
    %v3902 = vmul.f32 %v3898, %v1818
    %v3903 = vmul.f32 %v3901, %v1818
    %v3904 = vadd.f32 %v3902, 1e-05
    %v3905 = vadd.f32 %v3903, 1e-05
    %v3906 = vrsqrt.pop %v3904
    %v3907 = vrsqrt.pop %v3905
    %v3908 = vmul.f32 %v3892, %v3906
    %v3909 = vmul.f32 %v3893, %v3907
    %v3911 = vlaneseq
    %v3912 = vshrl.u32 %v3911, 7
    %v3913 = vsub.s32 0, %v3912
    %v3914 = vrot.slane %v3881, %v3913
    %v3916 = vmul.f32 %v3908, %v3914
    %v3917 = vmul.f32 %v3909, %v3914
    %v3919 = vlaneseq
    %v3920 = vshrl.u32 %v3919, 7
    %v3921 = vsub.s32 0, %v3920
    %v3922 = vrot.slane %v3883, %v3921
    %v3924 = vadd.f32 %v3916, %v3922
    %v3925 = vadd.f32 %v3917, %v3922
    %s3926 = scalar_lea.vmem %s6, 64
    %v3927 = vld [vmem:[%s3926] sm:$0xff]
    %v3928 = vld [vmem:[%s3926 + $0x8] sm:$0xff]
    %v3929 = vld [vmem:[%s3926 + $0x10] sm:$0xff]
    %v3930 = vld [vmem:[%s3926 + $0x18] sm:$0xff]
    %s3931 = scalar_lea.vmem %s7, 2
    %v3932 = vld [vmem:[%s3931] sm:$0x1]
    %v3934 = vlaneseq
    %v3935 = vshrl.u32 %v3934, 7
    %v3936 = vsub.s32 0, %v3935
    %v3937 = vrot.slane %v3932, %v3936
    %v3940 = vsel %vm275, %v3924, 0
    %v3943 = vsel %vm275, %v3925, 0
    %3945 = vmatprep.subr.mxu0 0.0
    %3946 = vmatpush1.msra.mxu0 0.0
    %3947 = vmatprep.subr.mxu0 0.0
    %3948 = vmatpush1.msra.mxu0 0.0
    %3949 = vmatprep.subr.mxu0 0.0
    %3950 = vmatpush1.msra.mxu0 0.0
    %3951 = vmatprep.subr.mxu0 0.0
    %3952 = vmatpush1.msra.mxu0 0.0
    %3953 = vmatprep.subr.mxu0 0.0
    %3954 = vmatpush1.msra.mxu0 0.0
    %3955 = vmatprep.subr.mxu0 0.0
    %3956 = vmatpush1.msra.mxu0 0.0
    %3957 = vmatprep.subr.mxu0 0.0
    %3958 = vmatpush1.msra.mxu0 0.0
    %3959 = vmatprep.subr.mxu0 0.0
    %3960 = vmatpush1.msra.mxu0 0.0
    %3961 = vmatprep.subr.mxu0 0.0
    %3962 = vmatpush1.msra.mxu0 0.0
    %3963 = vmatprep.subr.mxu0 0.0
    %3964 = vmatpush1.msra.mxu0 0.0
    %3965 = vmatprep.subr.mxu0 0.0
    %3966 = vmatpush1.msra.mxu0 0.0
    %3967 = vmatprep.subr.mxu0 0.0
    %3968 = vmatpush1.msra.mxu0 0.0
    %3969 = vmatprep.subr.mxu0 0.0
    %3970 = vmatpush1.msra.mxu0 %v3930
    %3971 = vmatprep.subr.mxu0 0.0
    %3972 = vmatpush1.msra.mxu0 %v3929
    %3973 = vmatprep.subr.mxu0 0.0
    %3974 = vmatpush1.msra.mxu0 %v3928
    %3975 = vmatprep.subr.mxu0 0.0
    %3976 = vmatpush1.msra.mxu0 %v3927
    %3977 = vmatprep.subr.mxu0 0.0
    %3978 = vmatpush2.msra.mxu0 0.0
    %3979 = vmatprep.subr.mxu0 0.0
    %3980 = vmatpush2.msra.mxu0 0.0
    %3981 = vmatprep.subr.mxu0 0.0
    %3982 = vmatpush2.msra.mxu0 0.0
    %3983 = vmatprep.subr.mxu0 0.0
    %3984 = vmatpush2.msra.mxu0 0.0
    %3985 = vmatprep.subr.mxu0 0.0
    %3986 = vmatpush2.msra.mxu0 0.0
    %3987 = vmatprep.subr.mxu0 0.0
    %3988 = vmatpush2.msra.mxu0 0.0
    %3989 = vmatprep.subr.mxu0 0.0
    %3990 = vmatpush2.msra.mxu0 0.0
    %3991 = vmatprep.subr.mxu0 0.0
    %3992 = vmatpush2.msra.mxu0 0.0
    %3993 = vmatprep.subr.mxu0 0.0
    %3994 = vmatpush2.msra.mxu0 0.0
    %3995 = vmatprep.subr.mxu0 0.0
    %3996 = vmatpush2.msra.mxu0 0.0
    %3997 = vmatprep.subr.mxu0 0.0
    %3998 = vmatpush2.msra.mxu0 0.0
    %3999 = vmatprep.subr.mxu0 0.0
    %4000 = vmatpush2.msra.mxu0 0.0
    %4001 = vmatprep.subr.mxu0 0.0
    %4002 = vmatpush2.msra.mxu0 0.0
    %4003 = vmatprep.subr.mxu0 0.0
    %4004 = vmatpush2.msra.mxu0 0.0
    %4005 = vmatprep.subr.mxu0 0.0
    %4006 = vmatpush2.msra.mxu0 0.0
    %4007 = vmatprep.subr.mxu0 0.0
    %4008 = vmatpush2.msra.mxu0 0.0
    %4009 = vmatprep.mubr.f32.mxu0 0.0
    %4010 = vmatmul.mubr.f32.gmra.mxu0 %v3940
    %v4011 = vpop.f32.mrf.mxu0
    %v4012 = vadd.f32 %v3937, %v4011
    %v4013 = vpop.f32.mrf.mxu0
    %4014 = vmatprep.mubr.f32.mxu0 0.0
    %4015 = vmatmul.mubr.f32.gmra.mxu0 %v3943
    %v4016 = vpop.f32.mrf.mxu0
    %v4017 = vadd.f32 %v3937, %v4016
    %v4018 = vpop.f32.mrf.mxu0
    %4019 = vdwg.mxu0
    %4021 = vrot.lane.b32.xlu0 %v4012, 96
    %v4022 = vpop.permute.xlu0 %4021
    %v4023 = vsel %vm360, %v4012, 0
    %v4025 = vsel %vm360, %v4022, 0
    %4027 = vmatprep.subr.mxu0 0.0
    %4028 = vmatpush1.xpose.msra.mxu0 0.0
    %4029 = vmatprep.subr.mxu0 0.0
    %4030 = vmatpush1.xpose.msra.mxu0 0.0
    %4031 = vmatprep.subr.mxu0 0.0
    %4032 = vmatpush1.xpose.msra.mxu0 0.0
    %4033 = vmatprep.subr.mxu0 0.0
    %4034 = vmatpush1.xpose.msra.mxu0 0.0
    %4035 = vmatprep.subr.mxu0 0.0
    %4036 = vmatpush1.xpose.msra.mxu0 0.0
    %4037 = vmatprep.subr.mxu0 0.0
    %4038 = vmatpush1.xpose.msra.mxu0 0.0
    %4039 = vmatprep.subr.mxu0 0.0
    %4040 = vmatpush1.xpose.msra.mxu0 0.0
    %4041 = vmatprep.subr.mxu0 0.0
    %4042 = vmatpush1.xpose.msra.mxu0 0.0
    %4043 = vmatprep.subr.mxu0 0.0
    %4044 = vmatpush1.xpose.msra.mxu0 0.0
    %4045 = vmatprep.subr.mxu0 0.0
    %4046 = vmatpush1.xpose.msra.mxu0 0.0
    %4047 = vmatprep.subr.mxu0 0.0
    %4048 = vmatpush1.xpose.msra.mxu0 0.0
    %4049 = vmatprep.subr.mxu0 0.0
    %4050 = vmatpush1.xpose.msra.mxu0 0.0
    %4051 = vmatprep.subr.mxu0 0.0
    %4052 = vmatpush1.xpose.msra.mxu0 0.0
    %4053 = vmatprep.subr.mxu0 0.0
    %4054 = vmatpush1.xpose.msra.mxu0 0.0
    %4055 = vmatprep.subr.mxu0 0.0
    %4056 = vmatpush1.xpose.msra.mxu0 0.0
    %4057 = vmatprep.subr.mxu0 0.0
    %4058 = vmatpush1.xpose.msra.mxu0 %v4025
    %4059 = vmatprep.subr.mxu0 0.0
    %4060 = vmatpush2.xpose.msra.mxu0 0.0
    %4061 = vmatprep.subr.mxu0 0.0
    %4062 = vmatpush2.xpose.msra.mxu0 0.0
    %4063 = vmatprep.subr.mxu0 0.0
    %4064 = vmatpush2.xpose.msra.mxu0 0.0
    %4065 = vmatprep.subr.mxu0 0.0
    %4066 = vmatpush2.xpose.msra.mxu0 0.0
    %4067 = vmatprep.subr.mxu0 0.0
    %4068 = vmatpush2.xpose.msra.mxu0 0.0
    %4069 = vmatprep.subr.mxu0 0.0
    %4070 = vmatpush2.xpose.msra.mxu0 0.0
    %4071 = vmatprep.subr.mxu0 0.0
    %4072 = vmatpush2.xpose.msra.mxu0 0.0
    %4073 = vmatprep.subr.mxu0 0.0
    %4074 = vmatpush2.xpose.msra.mxu0 0.0
    %4075 = vmatprep.subr.mxu0 0.0
    %4076 = vmatpush2.xpose.msra.mxu0 0.0
    %4077 = vmatprep.subr.mxu0 0.0
    %4078 = vmatpush2.xpose.msra.mxu0 0.0
    %4079 = vmatprep.subr.mxu0 0.0
    %4080 = vmatpush2.xpose.msra.mxu0 0.0
    %4081 = vmatprep.subr.mxu0 0.0
    %4082 = vmatpush2.xpose.msra.mxu0 0.0
    %4083 = vmatprep.subr.mxu0 0.0
    %4084 = vmatpush2.xpose.msra.mxu0 0.0
    %4085 = vmatprep.subr.mxu0 0.0
    %4086 = vmatpush2.xpose.msra.mxu0 0.0
    %4087 = vmatprep.subr.mxu0 0.0
    %4088 = vmatpush2.xpose.msra.mxu0 0.0
    %4089 = vmatprep.subr.mxu0 0.0
    %4090 = vmatpush2.xpose.msra.mxu0 0.0
    %4091 = vmatprep.mubr.f32.mxu0 0.0
    %4092 = vmatmul.mubr.f32.gmra.mxu0 %v4023
    %v4093 = vpop.f32.mrf.mxu0
    %v4094 = vadd.f32 0.0, %v4093
    %v4095 = vpop.f32.mrf.mxu0
    %4096 = vdwg.mxu0
    %4098 = vrot.lane.b32.xlu0 %v4017, 96
    %v4099 = vpop.permute.xlu0 %4098
    %v4100 = vsel %vm360, %v4017, 0
    %v4102 = vsel %vm360, %v4099, 0
    %4104 = vmatprep.subr.mxu0 0.0
    %4105 = vmatpush1.xpose.msra.mxu0 0.0
    %4106 = vmatprep.subr.mxu0 0.0
    %4107 = vmatpush1.xpose.msra.mxu0 0.0
    %4108 = vmatprep.subr.mxu0 0.0
    %4109 = vmatpush1.xpose.msra.mxu0 0.0
    %4110 = vmatprep.subr.mxu0 0.0
    %4111 = vmatpush1.xpose.msra.mxu0 0.0
    %4112 = vmatprep.subr.mxu0 0.0
    %4113 = vmatpush1.xpose.msra.mxu0 0.0
    %4114 = vmatprep.subr.mxu0 0.0
    %4115 = vmatpush1.xpose.msra.mxu0 0.0
    %4116 = vmatprep.subr.mxu0 0.0
    %4117 = vmatpush1.xpose.msra.mxu0 0.0
    %4118 = vmatprep.subr.mxu0 0.0
    %4119 = vmatpush1.xpose.msra.mxu0 0.0
    %4120 = vmatprep.subr.mxu0 0.0
    %4121 = vmatpush1.xpose.msra.mxu0 0.0
    %4122 = vmatprep.subr.mxu0 0.0
    %4123 = vmatpush1.xpose.msra.mxu0 0.0
    %4124 = vmatprep.subr.mxu0 0.0
    %4125 = vmatpush1.xpose.msra.mxu0 0.0
    %4126 = vmatprep.subr.mxu0 0.0
    %4127 = vmatpush1.xpose.msra.mxu0 0.0
    %4128 = vmatprep.subr.mxu0 0.0
    %4129 = vmatpush1.xpose.msra.mxu0 0.0
    %4130 = vmatprep.subr.mxu0 0.0
    %4131 = vmatpush1.xpose.msra.mxu0 0.0
    %4132 = vmatprep.subr.mxu0 0.0
    %4133 = vmatpush1.xpose.msra.mxu0 0.0
    %4134 = vmatprep.subr.mxu0 0.0
    %4135 = vmatpush1.xpose.msra.mxu0 %v4102
    %4136 = vmatprep.subr.mxu0 0.0
    %4137 = vmatpush2.xpose.msra.mxu0 0.0
    %4138 = vmatprep.subr.mxu0 0.0
    %4139 = vmatpush2.xpose.msra.mxu0 0.0
    %4140 = vmatprep.subr.mxu0 0.0
    %4141 = vmatpush2.xpose.msra.mxu0 0.0
    %4142 = vmatprep.subr.mxu0 0.0
    %4143 = vmatpush2.xpose.msra.mxu0 0.0
    %4144 = vmatprep.subr.mxu0 0.0
    %4145 = vmatpush2.xpose.msra.mxu0 0.0
    %4146 = vmatprep.subr.mxu0 0.0
    %4147 = vmatpush2.xpose.msra.mxu0 0.0
    %4148 = vmatprep.subr.mxu0 0.0
    %4149 = vmatpush2.xpose.msra.mxu0 0.0
    %4150 = vmatprep.subr.mxu0 0.0
    %4151 = vmatpush2.xpose.msra.mxu0 0.0
    %4152 = vmatprep.subr.mxu0 0.0
    %4153 = vmatpush2.xpose.msra.mxu0 0.0
    %4154 = vmatprep.subr.mxu0 0.0
    %4155 = vmatpush2.xpose.msra.mxu0 0.0
    %4156 = vmatprep.subr.mxu0 0.0
    %4157 = vmatpush2.xpose.msra.mxu0 0.0
    %4158 = vmatprep.subr.mxu0 0.0
    %4159 = vmatpush2.xpose.msra.mxu0 0.0
    %4160 = vmatprep.subr.mxu0 0.0
    %4161 = vmatpush2.xpose.msra.mxu0 0.0
    %4162 = vmatprep.subr.mxu0 0.0
    %4163 = vmatpush2.xpose.msra.mxu0 0.0
    %4164 = vmatprep.subr.mxu0 0.0
    %4165 = vmatpush2.xpose.msra.mxu0 0.0
    %4166 = vmatprep.subr.mxu0 0.0
    %4167 = vmatpush2.xpose.msra.mxu0 0.0
    %4168 = vmatprep.mubr.f32.mxu0 0.0
    %4169 = vmatmul.mubr.f32.gmra.mxu0 %v4100
    %v4170 = vpop.f32.mrf.mxu0
    %v4171 = vadd.f32 0.0, %v4170
    %v4172 = vpop.f32.mrf.mxu0
    %4173 = vdwg.mxu0
    %v4174 = vmul.f32 %v4094, 0.35355338
    %v4175 = vmul.f32 %v4171, 0.35355338
    %v4176 = vsel %vm360, %v4174, -inf
    %4177 = vmax.xlane.f32.xlu0 %v4176
    %v4178 = vpop.xlane.xlu0 %4177
    %v4179 = vsel %vm360, %v4175, -inf
    %4180 = vmax.xlane.f32.xlu0 %v4179
    %v4181 = vpop.xlane.xlu0 %4180
    %v4182 = vsub.f32 %v4174, %v4178
    %v4183 = vsub.f32 %v4175, %v4181
    %v4184 = vmul.f32 %v4182, 1.442695
    %v4185 = vpow.pop %v4184
    %v4186 = vmul.f32 %v4183, 1.442695
    %v4187 = vpow.pop %v4186
    %v4188 = vsel %vm360, %v4185, 0.0
    %4189 = vadd.xlane.f32.xlu0 %v4188
    %v4190 = vpop.xlane.xlu0 %4189
    %v4191 = vsel %vm360, %v4187, 0.0
    %4192 = vadd.xlane.f32.xlu0 %v4191
    %v4193 = vpop.xlane.xlu0 %4192
    %v4194 = vrcp.pop %v4190
    %v4195 = vmul.f32 %v4185, %v4194
    %v4196 = vrcp.pop %v4193
    %v4197 = vmul.f32 %v4187, %v4196
    %4198 = vrot.lane.b32.xlu0 %v4012, 64
    %v4199 = vpop.permute.xlu0 %4198
    %v4202 = vsel %vm360, %v4195, 0
    %4204 = vmatprep.subr.mxu0 0.0
    %4205 = vmatpush1.msra.mxu0 0.0
    %4206 = vmatprep.subr.mxu0 0.0
    %4207 = vmatpush1.msra.mxu0 0.0
    %4208 = vmatprep.subr.mxu0 0.0
    %4209 = vmatpush1.msra.mxu0 0.0
    %4210 = vmatprep.subr.mxu0 0.0
    %4211 = vmatpush1.msra.mxu0 0.0
    %4212 = vmatprep.subr.mxu0 0.0
    %4213 = vmatpush1.msra.mxu0 0.0
    %4214 = vmatprep.subr.mxu0 0.0
    %4215 = vmatpush1.msra.mxu0 0.0
    %4216 = vmatprep.subr.mxu0 0.0
    %4217 = vmatpush1.msra.mxu0 0.0
    %4218 = vmatprep.subr.mxu0 0.0
    %4219 = vmatpush1.msra.mxu0 0.0
    %4220 = vmatprep.subr.mxu0 0.0
    %4221 = vmatpush1.msra.mxu0 0.0
    %4222 = vmatprep.subr.mxu0 0.0
    %4223 = vmatpush1.msra.mxu0 0.0
    %4224 = vmatprep.subr.mxu0 0.0
    %4225 = vmatpush1.msra.mxu0 0.0
    %4226 = vmatprep.subr.mxu0 0.0
    %4227 = vmatpush1.msra.mxu0 0.0
    %4228 = vmatprep.subr.mxu0 0.0
    %4229 = vmatpush1.msra.mxu0 0.0
    %4230 = vmatprep.subr.mxu0 0.0
    %4231 = vmatpush1.msra.mxu0 0.0
    %4232 = vmatprep.subr.mxu0 0.0
    %4233 = vmatpush1.msra.mxu0 0.0
    %4234 = vmatprep.subr.mxu0 0.0
    %4235 = vmatpush1.msra.mxu0 %v4199
    %4236 = vmatprep.subr.mxu0 0.0
    %4237 = vmatpush2.msra.mxu0 0.0
    %4238 = vmatprep.subr.mxu0 0.0
    %4239 = vmatpush2.msra.mxu0 0.0
    %4240 = vmatprep.subr.mxu0 0.0
    %4241 = vmatpush2.msra.mxu0 0.0
    %4242 = vmatprep.subr.mxu0 0.0
    %4243 = vmatpush2.msra.mxu0 0.0
    %4244 = vmatprep.subr.mxu0 0.0
    %4245 = vmatpush2.msra.mxu0 0.0
    %4246 = vmatprep.subr.mxu0 0.0
    %4247 = vmatpush2.msra.mxu0 0.0
    %4248 = vmatprep.subr.mxu0 0.0
    %4249 = vmatpush2.msra.mxu0 0.0
    %4250 = vmatprep.subr.mxu0 0.0
    %4251 = vmatpush2.msra.mxu0 0.0
    %4252 = vmatprep.subr.mxu0 0.0
    %4253 = vmatpush2.msra.mxu0 0.0
    %4254 = vmatprep.subr.mxu0 0.0
    %4255 = vmatpush2.msra.mxu0 0.0
    %4256 = vmatprep.subr.mxu0 0.0
    %4257 = vmatpush2.msra.mxu0 0.0
    %4258 = vmatprep.subr.mxu0 0.0
    %4259 = vmatpush2.msra.mxu0 0.0
    %4260 = vmatprep.subr.mxu0 0.0
    %4261 = vmatpush2.msra.mxu0 0.0
    %4262 = vmatprep.subr.mxu0 0.0
    %4263 = vmatpush2.msra.mxu0 0.0
    %4264 = vmatprep.subr.mxu0 0.0
    %4265 = vmatpush2.msra.mxu0 0.0
    %4266 = vmatprep.subr.mxu0 0.0
    %4267 = vmatpush2.msra.mxu0 0.0
    %4268 = vmatprep.mubr.f32.mxu0 0.0
    %4269 = vmatmul.mubr.f32.gmra.mxu0 %v4202
    %v4270 = vpop.f32.mrf.mxu0
    %v4271 = vadd.f32 0.0, %v4270
    %v4272 = vpop.f32.mrf.mxu0
    %4273 = vdwg.mxu0
    %4274 = vrot.lane.b32.xlu0 %v4017, 64
    %v4275 = vpop.permute.xlu0 %4274
    %v4278 = vsel %vm360, %v4197, 0
    %4280 = vmatprep.subr.mxu0 0.0
    %4281 = vmatpush1.msra.mxu0 0.0
    %4282 = vmatprep.subr.mxu0 0.0
    %4283 = vmatpush1.msra.mxu0 0.0
    %4284 = vmatprep.subr.mxu0 0.0
    %4285 = vmatpush1.msra.mxu0 0.0
    %4286 = vmatprep.subr.mxu0 0.0
    %4287 = vmatpush1.msra.mxu0 0.0
    %4288 = vmatprep.subr.mxu0 0.0
    %4289 = vmatpush1.msra.mxu0 0.0
    %4290 = vmatprep.subr.mxu0 0.0
    %4291 = vmatpush1.msra.mxu0 0.0
    %4292 = vmatprep.subr.mxu0 0.0
    %4293 = vmatpush1.msra.mxu0 0.0
    %4294 = vmatprep.subr.mxu0 0.0
    %4295 = vmatpush1.msra.mxu0 0.0
    %4296 = vmatprep.subr.mxu0 0.0
    %4297 = vmatpush1.msra.mxu0 0.0
    %4298 = vmatprep.subr.mxu0 0.0
    %4299 = vmatpush1.msra.mxu0 0.0
    %4300 = vmatprep.subr.mxu0 0.0
    %4301 = vmatpush1.msra.mxu0 0.0
    %4302 = vmatprep.subr.mxu0 0.0
    %4303 = vmatpush1.msra.mxu0 0.0
    %4304 = vmatprep.subr.mxu0 0.0
    %4305 = vmatpush1.msra.mxu0 0.0
    %4306 = vmatprep.subr.mxu0 0.0
    %4307 = vmatpush1.msra.mxu0 0.0
    %4308 = vmatprep.subr.mxu0 0.0
    %4309 = vmatpush1.msra.mxu0 0.0
    %4310 = vmatprep.subr.mxu0 0.0
    %4311 = vmatpush1.msra.mxu0 %v4275
    %4312 = vmatprep.subr.mxu0 0.0
    %4313 = vmatpush2.msra.mxu0 0.0
    %4314 = vmatprep.subr.mxu0 0.0
    %4315 = vmatpush2.msra.mxu0 0.0
    %4316 = vmatprep.subr.mxu0 0.0
    %4317 = vmatpush2.msra.mxu0 0.0
    %4318 = vmatprep.subr.mxu0 0.0
    %4319 = vmatpush2.msra.mxu0 0.0
    %4320 = vmatprep.subr.mxu0 0.0
    %4321 = vmatpush2.msra.mxu0 0.0
    %4322 = vmatprep.subr.mxu0 0.0
    %4323 = vmatpush2.msra.mxu0 0.0
    %4324 = vmatprep.subr.mxu0 0.0
    %4325 = vmatpush2.msra.mxu0 0.0
    %4326 = vmatprep.subr.mxu0 0.0
    %4327 = vmatpush2.msra.mxu0 0.0
    %4328 = vmatprep.subr.mxu0 0.0
    %4329 = vmatpush2.msra.mxu0 0.0
    %4330 = vmatprep.subr.mxu0 0.0
    %4331 = vmatpush2.msra.mxu0 0.0
    %4332 = vmatprep.subr.mxu0 0.0
    %4333 = vmatpush2.msra.mxu0 0.0
    %4334 = vmatprep.subr.mxu0 0.0
    %4335 = vmatpush2.msra.mxu0 0.0
    %4336 = vmatprep.subr.mxu0 0.0
    %4337 = vmatpush2.msra.mxu0 0.0
    %4338 = vmatprep.subr.mxu0 0.0
    %4339 = vmatpush2.msra.mxu0 0.0
    %4340 = vmatprep.subr.mxu0 0.0
    %4341 = vmatpush2.msra.mxu0 0.0
    %4342 = vmatprep.subr.mxu0 0.0
    %4343 = vmatpush2.msra.mxu0 0.0
    %4344 = vmatprep.mubr.f32.mxu0 0.0
    %4345 = vmatmul.mubr.f32.gmra.mxu0 %v4278
    %v4346 = vpop.f32.mrf.mxu0
    %v4347 = vadd.f32 0.0, %v4346
    %v4348 = vpop.f32.mrf.mxu0
    %4349 = vdwg.mxu0
    %4350 = vrot.lane.b32.xlu0 %v4012, 120
    %v4351 = vpop.permute.xlu0 %4350
    %4352 = vrot.lane.b32.xlu0 %v4012, 88
    %v4353 = vpop.permute.xlu0 %4352
    %v4354 = vsel %vm360, %v4351, 0
    %v4356 = vsel %vm360, %v4353, 0
    %4358 = vmatprep.subr.mxu0 0.0
    %4359 = vmatpush1.xpose.msra.mxu0 0.0
    %4360 = vmatprep.subr.mxu0 0.0
    %4361 = vmatpush1.xpose.msra.mxu0 0.0
    %4362 = vmatprep.subr.mxu0 0.0
    %4363 = vmatpush1.xpose.msra.mxu0 0.0
    %4364 = vmatprep.subr.mxu0 0.0
    %4365 = vmatpush1.xpose.msra.mxu0 0.0
    %4366 = vmatprep.subr.mxu0 0.0
    %4367 = vmatpush1.xpose.msra.mxu0 0.0
    %4368 = vmatprep.subr.mxu0 0.0
    %4369 = vmatpush1.xpose.msra.mxu0 0.0
    %4370 = vmatprep.subr.mxu0 0.0
    %4371 = vmatpush1.xpose.msra.mxu0 0.0
    %4372 = vmatprep.subr.mxu0 0.0
    %4373 = vmatpush1.xpose.msra.mxu0 0.0
    %4374 = vmatprep.subr.mxu0 0.0
    %4375 = vmatpush1.xpose.msra.mxu0 0.0
    %4376 = vmatprep.subr.mxu0 0.0
    %4377 = vmatpush1.xpose.msra.mxu0 0.0
    %4378 = vmatprep.subr.mxu0 0.0
    %4379 = vmatpush1.xpose.msra.mxu0 0.0
    %4380 = vmatprep.subr.mxu0 0.0
    %4381 = vmatpush1.xpose.msra.mxu0 0.0
    %4382 = vmatprep.subr.mxu0 0.0
    %4383 = vmatpush1.xpose.msra.mxu0 0.0
    %4384 = vmatprep.subr.mxu0 0.0
    %4385 = vmatpush1.xpose.msra.mxu0 0.0
    %4386 = vmatprep.subr.mxu0 0.0
    %4387 = vmatpush1.xpose.msra.mxu0 0.0
    %4388 = vmatprep.subr.mxu0 0.0
    %4389 = vmatpush1.xpose.msra.mxu0 %v4356
    %4390 = vmatprep.subr.mxu0 0.0
    %4391 = vmatpush2.xpose.msra.mxu0 0.0
    %4392 = vmatprep.subr.mxu0 0.0
    %4393 = vmatpush2.xpose.msra.mxu0 0.0
    %4394 = vmatprep.subr.mxu0 0.0
    %4395 = vmatpush2.xpose.msra.mxu0 0.0
    %4396 = vmatprep.subr.mxu0 0.0
    %4397 = vmatpush2.xpose.msra.mxu0 0.0
    %4398 = vmatprep.subr.mxu0 0.0
    %4399 = vmatpush2.xpose.msra.mxu0 0.0
    %4400 = vmatprep.subr.mxu0 0.0
    %4401 = vmatpush2.xpose.msra.mxu0 0.0
    %4402 = vmatprep.subr.mxu0 0.0
    %4403 = vmatpush2.xpose.msra.mxu0 0.0
    %4404 = vmatprep.subr.mxu0 0.0
    %4405 = vmatpush2.xpose.msra.mxu0 0.0
    %4406 = vmatprep.subr.mxu0 0.0
    %4407 = vmatpush2.xpose.msra.mxu0 0.0
    %4408 = vmatprep.subr.mxu0 0.0
    %4409 = vmatpush2.xpose.msra.mxu0 0.0
    %4410 = vmatprep.subr.mxu0 0.0
    %4411 = vmatpush2.xpose.msra.mxu0 0.0
    %4412 = vmatprep.subr.mxu0 0.0
    %4413 = vmatpush2.xpose.msra.mxu0 0.0
    %4414 = vmatprep.subr.mxu0 0.0
    %4415 = vmatpush2.xpose.msra.mxu0 0.0
    %4416 = vmatprep.subr.mxu0 0.0
    %4417 = vmatpush2.xpose.msra.mxu0 0.0
    %4418 = vmatprep.subr.mxu0 0.0
    %4419 = vmatpush2.xpose.msra.mxu0 0.0
    %4420 = vmatprep.subr.mxu0 0.0
    %4421 = vmatpush2.xpose.msra.mxu0 0.0
    %4422 = vmatprep.mubr.f32.mxu0 0.0
    %4423 = vmatmul.mubr.f32.gmra.mxu0 %v4354
    %v4424 = vpop.f32.mrf.mxu0
    %v4425 = vadd.f32 0.0, %v4424
    %v4426 = vpop.f32.mrf.mxu0
    %4427 = vdwg.mxu0
    %4428 = vrot.lane.b32.xlu0 %v4017, 120
    %v4429 = vpop.permute.xlu0 %4428
    %4430 = vrot.lane.b32.xlu0 %v4017, 88
    %v4431 = vpop.permute.xlu0 %4430
    %v4432 = vsel %vm360, %v4429, 0
    %v4434 = vsel %vm360, %v4431, 0
    %4436 = vmatprep.subr.mxu0 0.0
    %4437 = vmatpush1.xpose.msra.mxu0 0.0
    %4438 = vmatprep.subr.mxu0 0.0
    %4439 = vmatpush1.xpose.msra.mxu0 0.0
    %4440 = vmatprep.subr.mxu0 0.0
    %4441 = vmatpush1.xpose.msra.mxu0 0.0
    %4442 = vmatprep.subr.mxu0 0.0
    %4443 = vmatpush1.xpose.msra.mxu0 0.0
    %4444 = vmatprep.subr.mxu0 0.0
    %4445 = vmatpush1.xpose.msra.mxu0 0.0
    %4446 = vmatprep.subr.mxu0 0.0
    %4447 = vmatpush1.xpose.msra.mxu0 0.0
    %4448 = vmatprep.subr.mxu0 0.0
    %4449 = vmatpush1.xpose.msra.mxu0 0.0
    %4450 = vmatprep.subr.mxu0 0.0
    %4451 = vmatpush1.xpose.msra.mxu0 0.0
    %4452 = vmatprep.subr.mxu0 0.0
    %4453 = vmatpush1.xpose.msra.mxu0 0.0
    %4454 = vmatprep.subr.mxu0 0.0
    %4455 = vmatpush1.xpose.msra.mxu0 0.0
    %4456 = vmatprep.subr.mxu0 0.0
    %4457 = vmatpush1.xpose.msra.mxu0 0.0
    %4458 = vmatprep.subr.mxu0 0.0
    %4459 = vmatpush1.xpose.msra.mxu0 0.0
    %4460 = vmatprep.subr.mxu0 0.0
    %4461 = vmatpush1.xpose.msra.mxu0 0.0
    %4462 = vmatprep.subr.mxu0 0.0
    %4463 = vmatpush1.xpose.msra.mxu0 0.0
    %4464 = vmatprep.subr.mxu0 0.0
    %4465 = vmatpush1.xpose.msra.mxu0 0.0
    %4466 = vmatprep.subr.mxu0 0.0
    %4467 = vmatpush1.xpose.msra.mxu0 %v4434
    %4468 = vmatprep.subr.mxu0 0.0
    %4469 = vmatpush2.xpose.msra.mxu0 0.0
    %4470 = vmatprep.subr.mxu0 0.0
    %4471 = vmatpush2.xpose.msra.mxu0 0.0
    %4472 = vmatprep.subr.mxu0 0.0
    %4473 = vmatpush2.xpose.msra.mxu0 0.0
    %4474 = vmatprep.subr.mxu0 0.0
    %4475 = vmatpush2.xpose.msra.mxu0 0.0
    %4476 = vmatprep.subr.mxu0 0.0
    %4477 = vmatpush2.xpose.msra.mxu0 0.0
    %4478 = vmatprep.subr.mxu0 0.0
    %4479 = vmatpush2.xpose.msra.mxu0 0.0
    %4480 = vmatprep.subr.mxu0 0.0
    %4481 = vmatpush2.xpose.msra.mxu0 0.0
    %4482 = vmatprep.subr.mxu0 0.0
    %4483 = vmatpush2.xpose.msra.mxu0 0.0
    %4484 = vmatprep.subr.mxu0 0.0
    %4485 = vmatpush2.xpose.msra.mxu0 0.0
    %4486 = vmatprep.subr.mxu0 0.0
    %4487 = vmatpush2.xpose.msra.mxu0 0.0
    %4488 = vmatprep.subr.mxu0 0.0
    %4489 = vmatpush2.xpose.msra.mxu0 0.0
    %4490 = vmatprep.subr.mxu0 0.0
    %4491 = vmatpush2.xpose.msra.mxu0 0.0
    %4492 = vmatprep.subr.mxu0 0.0
    %4493 = vmatpush2.xpose.msra.mxu0 0.0
    %4494 = vmatprep.subr.mxu0 0.0
    %4495 = vmatpush2.xpose.msra.mxu0 0.0
    %4496 = vmatprep.subr.mxu0 0.0
    %4497 = vmatpush2.xpose.msra.mxu0 0.0
    %4498 = vmatprep.subr.mxu0 0.0
    %4499 = vmatpush2.xpose.msra.mxu0 0.0
    %4500 = vmatprep.mubr.f32.mxu0 0.0
    %4501 = vmatmul.mubr.f32.gmra.mxu0 %v4432
    %v4502 = vpop.f32.mrf.mxu0
    %v4503 = vadd.f32 0.0, %v4502
    %v4504 = vpop.f32.mrf.mxu0
    %4505 = vdwg.mxu0
    %v4506 = vmul.f32 %v4425, 0.35355338
    %v4507 = vmul.f32 %v4503, 0.35355338
    %v4508 = vsel %vm360, %v4506, -inf
    %4509 = vmax.xlane.f32.xlu0 %v4508
    %v4510 = vpop.xlane.xlu0 %4509
    %v4511 = vsel %vm360, %v4507, -inf
    %4512 = vmax.xlane.f32.xlu0 %v4511
    %v4513 = vpop.xlane.xlu0 %4512
    %v4514 = vsub.f32 %v4506, %v4510
    %v4515 = vsub.f32 %v4507, %v4513
    %v4516 = vmul.f32 %v4514, 1.442695
    %v4517 = vpow.pop %v4516
    %v4518 = vmul.f32 %v4515, 1.442695
    %v4519 = vpow.pop %v4518
    %v4520 = vsel %vm360, %v4517, 0.0
    %4521 = vadd.xlane.f32.xlu0 %v4520
    %v4522 = vpop.xlane.xlu0 %4521
    %v4523 = vsel %vm360, %v4519, 0.0
    %4524 = vadd.xlane.f32.xlu0 %v4523
    %v4525 = vpop.xlane.xlu0 %4524
    %v4526 = vrcp.pop %v4522
    %v4527 = vmul.f32 %v4517, %v4526
    %v4528 = vrcp.pop %v4525
    %v4529 = vmul.f32 %v4519, %v4528
    %4530 = vrot.lane.b32.xlu0 %v4012, 56
    %v4531 = vpop.permute.xlu0 %4530
    %v4534 = vsel %vm360, %v4527, 0
    %4536 = vmatprep.subr.mxu0 0.0
    %4537 = vmatpush1.msra.mxu0 0.0
    %4538 = vmatprep.subr.mxu0 0.0
    %4539 = vmatpush1.msra.mxu0 0.0
    %4540 = vmatprep.subr.mxu0 0.0
    %4541 = vmatpush1.msra.mxu0 0.0
    %4542 = vmatprep.subr.mxu0 0.0
    %4543 = vmatpush1.msra.mxu0 0.0
    %4544 = vmatprep.subr.mxu0 0.0
    %4545 = vmatpush1.msra.mxu0 0.0
    %4546 = vmatprep.subr.mxu0 0.0
    %4547 = vmatpush1.msra.mxu0 0.0
    %4548 = vmatprep.subr.mxu0 0.0
    %4549 = vmatpush1.msra.mxu0 0.0
    %4550 = vmatprep.subr.mxu0 0.0
    %4551 = vmatpush1.msra.mxu0 0.0
    %4552 = vmatprep.subr.mxu0 0.0
    %4553 = vmatpush1.msra.mxu0 0.0
    %4554 = vmatprep.subr.mxu0 0.0
    %4555 = vmatpush1.msra.mxu0 0.0
    %4556 = vmatprep.subr.mxu0 0.0
    %4557 = vmatpush1.msra.mxu0 0.0
    %4558 = vmatprep.subr.mxu0 0.0
    %4559 = vmatpush1.msra.mxu0 0.0
    %4560 = vmatprep.subr.mxu0 0.0
    %4561 = vmatpush1.msra.mxu0 0.0
    %4562 = vmatprep.subr.mxu0 0.0
    %4563 = vmatpush1.msra.mxu0 0.0
    %4564 = vmatprep.subr.mxu0 0.0
    %4565 = vmatpush1.msra.mxu0 0.0
    %4566 = vmatprep.subr.mxu0 0.0
    %4567 = vmatpush1.msra.mxu0 %v4531
    %4568 = vmatprep.subr.mxu0 0.0
    %4569 = vmatpush2.msra.mxu0 0.0
    %4570 = vmatprep.subr.mxu0 0.0
    %4571 = vmatpush2.msra.mxu0 0.0
    %4572 = vmatprep.subr.mxu0 0.0
    %4573 = vmatpush2.msra.mxu0 0.0
    %4574 = vmatprep.subr.mxu0 0.0
    %4575 = vmatpush2.msra.mxu0 0.0
    %4576 = vmatprep.subr.mxu0 0.0
    %4577 = vmatpush2.msra.mxu0 0.0
    %4578 = vmatprep.subr.mxu0 0.0
    %4579 = vmatpush2.msra.mxu0 0.0
    %4580 = vmatprep.subr.mxu0 0.0
    %4581 = vmatpush2.msra.mxu0 0.0
    %4582 = vmatprep.subr.mxu0 0.0
    %4583 = vmatpush2.msra.mxu0 0.0
    %4584 = vmatprep.subr.mxu0 0.0
    %4585 = vmatpush2.msra.mxu0 0.0
    %4586 = vmatprep.subr.mxu0 0.0
    %4587 = vmatpush2.msra.mxu0 0.0
    %4588 = vmatprep.subr.mxu0 0.0
    %4589 = vmatpush2.msra.mxu0 0.0
    %4590 = vmatprep.subr.mxu0 0.0
    %4591 = vmatpush2.msra.mxu0 0.0
    %4592 = vmatprep.subr.mxu0 0.0
    %4593 = vmatpush2.msra.mxu0 0.0
    %4594 = vmatprep.subr.mxu0 0.0
    %4595 = vmatpush2.msra.mxu0 0.0
    %4596 = vmatprep.subr.mxu0 0.0
    %4597 = vmatpush2.msra.mxu0 0.0
    %4598 = vmatprep.subr.mxu0 0.0
    %4599 = vmatpush2.msra.mxu0 0.0
    %4600 = vmatprep.mubr.f32.mxu0 0.0
    %4601 = vmatmul.mubr.f32.gmra.mxu0 %v4534
    %v4602 = vpop.f32.mrf.mxu0
    %v4603 = vadd.f32 0.0, %v4602
    %v4604 = vpop.f32.mrf.mxu0
    %4605 = vdwg.mxu0
    %4606 = vrot.lane.b32.xlu0 %v4017, 56
    %v4607 = vpop.permute.xlu0 %4606
    %v4610 = vsel %vm360, %v4529, 0
    %4612 = vmatprep.subr.mxu0 0.0
    %4613 = vmatpush1.msra.mxu0 0.0
    %4614 = vmatprep.subr.mxu0 0.0
    %4615 = vmatpush1.msra.mxu0 0.0
    %4616 = vmatprep.subr.mxu0 0.0
    %4617 = vmatpush1.msra.mxu0 0.0
    %4618 = vmatprep.subr.mxu0 0.0
    %4619 = vmatpush1.msra.mxu0 0.0
    %4620 = vmatprep.subr.mxu0 0.0
    %4621 = vmatpush1.msra.mxu0 0.0
    %4622 = vmatprep.subr.mxu0 0.0
    %4623 = vmatpush1.msra.mxu0 0.0
    %4624 = vmatprep.subr.mxu0 0.0
    %4625 = vmatpush1.msra.mxu0 0.0
    %4626 = vmatprep.subr.mxu0 0.0
    %4627 = vmatpush1.msra.mxu0 0.0
    %4628 = vmatprep.subr.mxu0 0.0
    %4629 = vmatpush1.msra.mxu0 0.0
    %4630 = vmatprep.subr.mxu0 0.0
    %4631 = vmatpush1.msra.mxu0 0.0
    %4632 = vmatprep.subr.mxu0 0.0
    %4633 = vmatpush1.msra.mxu0 0.0
    %4634 = vmatprep.subr.mxu0 0.0
    %4635 = vmatpush1.msra.mxu0 0.0
    %4636 = vmatprep.subr.mxu0 0.0
    %4637 = vmatpush1.msra.mxu0 0.0
    %4638 = vmatprep.subr.mxu0 0.0
    %4639 = vmatpush1.msra.mxu0 0.0
    %4640 = vmatprep.subr.mxu0 0.0
    %4641 = vmatpush1.msra.mxu0 0.0
    %4642 = vmatprep.subr.mxu0 0.0
    %4643 = vmatpush1.msra.mxu0 %v4607
    %4644 = vmatprep.subr.mxu0 0.0
    %4645 = vmatpush2.msra.mxu0 0.0
    %4646 = vmatprep.subr.mxu0 0.0
    %4647 = vmatpush2.msra.mxu0 0.0
    %4648 = vmatprep.subr.mxu0 0.0
    %4649 = vmatpush2.msra.mxu0 0.0
    %4650 = vmatprep.subr.mxu0 0.0
    %4651 = vmatpush2.msra.mxu0 0.0
    %4652 = vmatprep.subr.mxu0 0.0
    %4653 = vmatpush2.msra.mxu0 0.0
    %4654 = vmatprep.subr.mxu0 0.0
    %4655 = vmatpush2.msra.mxu0 0.0
    %4656 = vmatprep.subr.mxu0 0.0
    %4657 = vmatpush2.msra.mxu0 0.0
    %4658 = vmatprep.subr.mxu0 0.0
    %4659 = vmatpush2.msra.mxu0 0.0
    %4660 = vmatprep.subr.mxu0 0.0
    %4661 = vmatpush2.msra.mxu0 0.0
    %4662 = vmatprep.subr.mxu0 0.0
    %4663 = vmatpush2.msra.mxu0 0.0
    %4664 = vmatprep.subr.mxu0 0.0
    %4665 = vmatpush2.msra.mxu0 0.0
    %4666 = vmatprep.subr.mxu0 0.0
    %4667 = vmatpush2.msra.mxu0 0.0
    %4668 = vmatprep.subr.mxu0 0.0
    %4669 = vmatpush2.msra.mxu0 0.0
    %4670 = vmatprep.subr.mxu0 0.0
    %4671 = vmatpush2.msra.mxu0 0.0
    %4672 = vmatprep.subr.mxu0 0.0
    %4673 = vmatpush2.msra.mxu0 0.0
    %4674 = vmatprep.subr.mxu0 0.0
    %4675 = vmatpush2.msra.mxu0 0.0
    %4676 = vmatprep.mubr.f32.mxu0 0.0
    %4677 = vmatmul.mubr.f32.gmra.mxu0 %v4610
    %v4678 = vpop.f32.mrf.mxu0
    %v4679 = vadd.f32 0.0, %v4678
    %v4680 = vpop.f32.mrf.mxu0
    %4681 = vdwg.mxu0
    %4682 = vrot.lane.b32.xlu0 %v4012, 112
    %v4683 = vpop.permute.xlu0 %4682
    %4684 = vrot.lane.b32.xlu0 %v4012, 80
    %v4685 = vpop.permute.xlu0 %4684
    %v4686 = vsel %vm360, %v4683, 0
    %v4688 = vsel %vm360, %v4685, 0
    %4690 = vmatprep.subr.mxu0 0.0
    %4691 = vmatpush1.xpose.msra.mxu0 0.0
    %4692 = vmatprep.subr.mxu0 0.0
    %4693 = vmatpush1.xpose.msra.mxu0 0.0
    %4694 = vmatprep.subr.mxu0 0.0
    %4695 = vmatpush1.xpose.msra.mxu0 0.0
    %4696 = vmatprep.subr.mxu0 0.0
    %4697 = vmatpush1.xpose.msra.mxu0 0.0
    %4698 = vmatprep.subr.mxu0 0.0
    %4699 = vmatpush1.xpose.msra.mxu0 0.0
    %4700 = vmatprep.subr.mxu0 0.0
    %4701 = vmatpush1.xpose.msra.mxu0 0.0
    %4702 = vmatprep.subr.mxu0 0.0
    %4703 = vmatpush1.xpose.msra.mxu0 0.0
    %4704 = vmatprep.subr.mxu0 0.0
    %4705 = vmatpush1.xpose.msra.mxu0 0.0
    %4706 = vmatprep.subr.mxu0 0.0
    %4707 = vmatpush1.xpose.msra.mxu0 0.0
    %4708 = vmatprep.subr.mxu0 0.0
    %4709 = vmatpush1.xpose.msra.mxu0 0.0
    %4710 = vmatprep.subr.mxu0 0.0
    %4711 = vmatpush1.xpose.msra.mxu0 0.0
    %4712 = vmatprep.subr.mxu0 0.0
    %4713 = vmatpush1.xpose.msra.mxu0 0.0
    %4714 = vmatprep.subr.mxu0 0.0
    %4715 = vmatpush1.xpose.msra.mxu0 0.0
    %4716 = vmatprep.subr.mxu0 0.0
    %4717 = vmatpush1.xpose.msra.mxu0 0.0
    %4718 = vmatprep.subr.mxu0 0.0
    %4719 = vmatpush1.xpose.msra.mxu0 0.0
    %4720 = vmatprep.subr.mxu0 0.0
    %4721 = vmatpush1.xpose.msra.mxu0 %v4688
    %4722 = vmatprep.subr.mxu0 0.0
    %4723 = vmatpush2.xpose.msra.mxu0 0.0
    %4724 = vmatprep.subr.mxu0 0.0
    %4725 = vmatpush2.xpose.msra.mxu0 0.0
    %4726 = vmatprep.subr.mxu0 0.0
    %4727 = vmatpush2.xpose.msra.mxu0 0.0
    %4728 = vmatprep.subr.mxu0 0.0
    %4729 = vmatpush2.xpose.msra.mxu0 0.0
    %4730 = vmatprep.subr.mxu0 0.0
    %4731 = vmatpush2.xpose.msra.mxu0 0.0
    %4732 = vmatprep.subr.mxu0 0.0
    %4733 = vmatpush2.xpose.msra.mxu0 0.0
    %4734 = vmatprep.subr.mxu0 0.0
    %4735 = vmatpush2.xpose.msra.mxu0 0.0
    %4736 = vmatprep.subr.mxu0 0.0
    %4737 = vmatpush2.xpose.msra.mxu0 0.0
    %4738 = vmatprep.subr.mxu0 0.0
    %4739 = vmatpush2.xpose.msra.mxu0 0.0
    %4740 = vmatprep.subr.mxu0 0.0
    %4741 = vmatpush2.xpose.msra.mxu0 0.0
    %4742 = vmatprep.subr.mxu0 0.0
    %4743 = vmatpush2.xpose.msra.mxu0 0.0
    %4744 = vmatprep.subr.mxu0 0.0
    %4745 = vmatpush2.xpose.msra.mxu0 0.0
    %4746 = vmatprep.subr.mxu0 0.0
    %4747 = vmatpush2.xpose.msra.mxu0 0.0
    %4748 = vmatprep.subr.mxu0 0.0
    %4749 = vmatpush2.xpose.msra.mxu0 0.0
    %4750 = vmatprep.subr.mxu0 0.0
    %4751 = vmatpush2.xpose.msra.mxu0 0.0
    %4752 = vmatprep.subr.mxu0 0.0
    %4753 = vmatpush2.xpose.msra.mxu0 0.0
    %4754 = vmatprep.mubr.f32.mxu0 0.0
    %4755 = vmatmul.mubr.f32.gmra.mxu0 %v4686
    %v4756 = vpop.f32.mrf.mxu0
    %v4757 = vadd.f32 0.0, %v4756
    %v4758 = vpop.f32.mrf.mxu0
    %4759 = vdwg.mxu0
    %4760 = vrot.lane.b32.xlu0 %v4017, 112
    %v4761 = vpop.permute.xlu0 %4760
    %4762 = vrot.lane.b32.xlu0 %v4017, 80
    %v4763 = vpop.permute.xlu0 %4762
    %v4764 = vsel %vm360, %v4761, 0
    %v4766 = vsel %vm360, %v4763, 0
    %4768 = vmatprep.subr.mxu0 0.0
    %4769 = vmatpush1.xpose.msra.mxu0 0.0
    %4770 = vmatprep.subr.mxu0 0.0
    %4771 = vmatpush1.xpose.msra.mxu0 0.0
    %4772 = vmatprep.subr.mxu0 0.0
    %4773 = vmatpush1.xpose.msra.mxu0 0.0
    %4774 = vmatprep.subr.mxu0 0.0
    %4775 = vmatpush1.xpose.msra.mxu0 0.0
    %4776 = vmatprep.subr.mxu0 0.0
    %4777 = vmatpush1.xpose.msra.mxu0 0.0
    %4778 = vmatprep.subr.mxu0 0.0
    %4779 = vmatpush1.xpose.msra.mxu0 0.0
    %4780 = vmatprep.subr.mxu0 0.0
    %4781 = vmatpush1.xpose.msra.mxu0 0.0
    %4782 = vmatprep.subr.mxu0 0.0
    %4783 = vmatpush1.xpose.msra.mxu0 0.0
    %4784 = vmatprep.subr.mxu0 0.0
    %4785 = vmatpush1.xpose.msra.mxu0 0.0
    %4786 = vmatprep.subr.mxu0 0.0
    %4787 = vmatpush1.xpose.msra.mxu0 0.0
    %4788 = vmatprep.subr.mxu0 0.0
    %4789 = vmatpush1.xpose.msra.mxu0 0.0
    %4790 = vmatprep.subr.mxu0 0.0
    %4791 = vmatpush1.xpose.msra.mxu0 0.0
    %4792 = vmatprep.subr.mxu0 0.0
    %4793 = vmatpush1.xpose.msra.mxu0 0.0
    %4794 = vmatprep.subr.mxu0 0.0
    %4795 = vmatpush1.xpose.msra.mxu0 0.0
    %4796 = vmatprep.subr.mxu0 0.0
    %4797 = vmatpush1.xpose.msra.mxu0 0.0
    %4798 = vmatprep.subr.mxu0 0.0
    %4799 = vmatpush1.xpose.msra.mxu0 %v4766
    %4800 = vmatprep.subr.mxu0 0.0
    %4801 = vmatpush2.xpose.msra.mxu0 0.0
    %4802 = vmatprep.subr.mxu0 0.0
    %4803 = vmatpush2.xpose.msra.mxu0 0.0
    %4804 = vmatprep.subr.mxu0 0.0
    %4805 = vmatpush2.xpose.msra.mxu0 0.0
    %4806 = vmatprep.subr.mxu0 0.0
    %4807 = vmatpush2.xpose.msra.mxu0 0.0
    %4808 = vmatprep.subr.mxu0 0.0
    %4809 = vmatpush2.xpose.msra.mxu0 0.0
    %4810 = vmatprep.subr.mxu0 0.0
    %4811 = vmatpush2.xpose.msra.mxu0 0.0
    %4812 = vmatprep.subr.mxu0 0.0
    %4813 = vmatpush2.xpose.msra.mxu0 0.0
    %4814 = vmatprep.subr.mxu0 0.0
    %4815 = vmatpush2.xpose.msra.mxu0 0.0
    %4816 = vmatprep.subr.mxu0 0.0
    %4817 = vmatpush2.xpose.msra.mxu0 0.0
    %4818 = vmatprep.subr.mxu0 0.0
    %4819 = vmatpush2.xpose.msra.mxu0 0.0
    %4820 = vmatprep.subr.mxu0 0.0
    %4821 = vmatpush2.xpose.msra.mxu0 0.0
    %4822 = vmatprep.subr.mxu0 0.0
    %4823 = vmatpush2.xpose.msra.mxu0 0.0
    %4824 = vmatprep.subr.mxu0 0.0
    %4825 = vmatpush2.xpose.msra.mxu0 0.0
    %4826 = vmatprep.subr.mxu0 0.0
    %4827 = vmatpush2.xpose.msra.mxu0 0.0
    %4828 = vmatprep.subr.mxu0 0.0
    %4829 = vmatpush2.xpose.msra.mxu0 0.0
    %4830 = vmatprep.subr.mxu0 0.0
    %4831 = vmatpush2.xpose.msra.mxu0 0.0
    %4832 = vmatprep.mubr.f32.mxu0 0.0
    %4833 = vmatmul.mubr.f32.gmra.mxu0 %v4764
    %v4834 = vpop.f32.mrf.mxu0
    %v4835 = vadd.f32 0.0, %v4834
    %v4836 = vpop.f32.mrf.mxu0
    %4837 = vdwg.mxu0
    %v4838 = vmul.f32 %v4757, 0.35355338
    %v4839 = vmul.f32 %v4835, 0.35355338
    %v4840 = vsel %vm360, %v4838, -inf
    %4841 = vmax.xlane.f32.xlu0 %v4840
    %v4842 = vpop.xlane.xlu0 %4841
    %v4843 = vsel %vm360, %v4839, -inf
    %4844 = vmax.xlane.f32.xlu0 %v4843
    %v4845 = vpop.xlane.xlu0 %4844
    %v4846 = vsub.f32 %v4838, %v4842
    %v4847 = vsub.f32 %v4839, %v4845
    %v4848 = vmul.f32 %v4846, 1.442695
    %v4849 = vpow.pop %v4848
    %v4850 = vmul.f32 %v4847, 1.442695
    %v4851 = vpow.pop %v4850
    %v4852 = vsel %vm360, %v4849, 0.0
    %4853 = vadd.xlane.f32.xlu0 %v4852
    %v4854 = vpop.xlane.xlu0 %4853
    %v4855 = vsel %vm360, %v4851, 0.0
    %4856 = vadd.xlane.f32.xlu0 %v4855
    %v4857 = vpop.xlane.xlu0 %4856
    %v4858 = vrcp.pop %v4854
    %v4859 = vmul.f32 %v4849, %v4858
    %v4860 = vrcp.pop %v4857
    %v4861 = vmul.f32 %v4851, %v4860
    %4862 = vrot.lane.b32.xlu0 %v4012, 48
    %v4863 = vpop.permute.xlu0 %4862
    %v4866 = vsel %vm360, %v4859, 0
    %4868 = vmatprep.subr.mxu0 0.0
    %4869 = vmatpush1.msra.mxu0 0.0
    %4870 = vmatprep.subr.mxu0 0.0
    %4871 = vmatpush1.msra.mxu0 0.0
    %4872 = vmatprep.subr.mxu0 0.0
    %4873 = vmatpush1.msra.mxu0 0.0
    %4874 = vmatprep.subr.mxu0 0.0
    %4875 = vmatpush1.msra.mxu0 0.0
    %4876 = vmatprep.subr.mxu0 0.0
    %4877 = vmatpush1.msra.mxu0 0.0
    %4878 = vmatprep.subr.mxu0 0.0
    %4879 = vmatpush1.msra.mxu0 0.0
    %4880 = vmatprep.subr.mxu0 0.0
    %4881 = vmatpush1.msra.mxu0 0.0
    %4882 = vmatprep.subr.mxu0 0.0
    %4883 = vmatpush1.msra.mxu0 0.0
    %4884 = vmatprep.subr.mxu0 0.0
    %4885 = vmatpush1.msra.mxu0 0.0
    %4886 = vmatprep.subr.mxu0 0.0
    %4887 = vmatpush1.msra.mxu0 0.0
    %4888 = vmatprep.subr.mxu0 0.0
    %4889 = vmatpush1.msra.mxu0 0.0
    %4890 = vmatprep.subr.mxu0 0.0
    %4891 = vmatpush1.msra.mxu0 0.0
    %4892 = vmatprep.subr.mxu0 0.0
    %4893 = vmatpush1.msra.mxu0 0.0
    %4894 = vmatprep.subr.mxu0 0.0
    %4895 = vmatpush1.msra.mxu0 0.0
    %4896 = vmatprep.subr.mxu0 0.0
    %4897 = vmatpush1.msra.mxu0 0.0
    %4898 = vmatprep.subr.mxu0 0.0
    %4899 = vmatpush1.msra.mxu0 %v4863
    %4900 = vmatprep.subr.mxu0 0.0
    %4901 = vmatpush2.msra.mxu0 0.0
    %4902 = vmatprep.subr.mxu0 0.0
    %4903 = vmatpush2.msra.mxu0 0.0
    %4904 = vmatprep.subr.mxu0 0.0
    %4905 = vmatpush2.msra.mxu0 0.0
    %4906 = vmatprep.subr.mxu0 0.0
    %4907 = vmatpush2.msra.mxu0 0.0
    %4908 = vmatprep.subr.mxu0 0.0
    %4909 = vmatpush2.msra.mxu0 0.0
    %4910 = vmatprep.subr.mxu0 0.0
    %4911 = vmatpush2.msra.mxu0 0.0
    %4912 = vmatprep.subr.mxu0 0.0
    %4913 = vmatpush2.msra.mxu0 0.0
    %4914 = vmatprep.subr.mxu0 0.0
    %4915 = vmatpush2.msra.mxu0 0.0
    %4916 = vmatprep.subr.mxu0 0.0
    %4917 = vmatpush2.msra.mxu0 0.0
    %4918 = vmatprep.subr.mxu0 0.0
    %4919 = vmatpush2.msra.mxu0 0.0
    %4920 = vmatprep.subr.mxu0 0.0
    %4921 = vmatpush2.msra.mxu0 0.0
    %4922 = vmatprep.subr.mxu0 0.0
    %4923 = vmatpush2.msra.mxu0 0.0
    %4924 = vmatprep.subr.mxu0 0.0
    %4925 = vmatpush2.msra.mxu0 0.0
    %4926 = vmatprep.subr.mxu0 0.0
    %4927 = vmatpush2.msra.mxu0 0.0
    %4928 = vmatprep.subr.mxu0 0.0
    %4929 = vmatpush2.msra.mxu0 0.0
    %4930 = vmatprep.subr.mxu0 0.0
    %4931 = vmatpush2.msra.mxu0 0.0
    %4932 = vmatprep.mubr.f32.mxu0 0.0
    %4933 = vmatmul.mubr.f32.gmra.mxu0 %v4866
    %v4934 = vpop.f32.mrf.mxu0
    %v4935 = vadd.f32 0.0, %v4934
    %v4936 = vpop.f32.mrf.mxu0
    %4937 = vdwg.mxu0
    %4938 = vrot.lane.b32.xlu0 %v4017, 48
    %v4939 = vpop.permute.xlu0 %4938
    %v4942 = vsel %vm360, %v4861, 0
    %4944 = vmatprep.subr.mxu0 0.0
    %4945 = vmatpush1.msra.mxu0 0.0
    %4946 = vmatprep.subr.mxu0 0.0
    %4947 = vmatpush1.msra.mxu0 0.0
    %4948 = vmatprep.subr.mxu0 0.0
    %4949 = vmatpush1.msra.mxu0 0.0
    %4950 = vmatprep.subr.mxu0 0.0
    %4951 = vmatpush1.msra.mxu0 0.0
    %4952 = vmatprep.subr.mxu0 0.0
    %4953 = vmatpush1.msra.mxu0 0.0
    %4954 = vmatprep.subr.mxu0 0.0
    %4955 = vmatpush1.msra.mxu0 0.0
    %4956 = vmatprep.subr.mxu0 0.0
    %4957 = vmatpush1.msra.mxu0 0.0
    %4958 = vmatprep.subr.mxu0 0.0
    %4959 = vmatpush1.msra.mxu0 0.0
    %4960 = vmatprep.subr.mxu0 0.0
    %4961 = vmatpush1.msra.mxu0 0.0
    %4962 = vmatprep.subr.mxu0 0.0
    %4963 = vmatpush1.msra.mxu0 0.0
    %4964 = vmatprep.subr.mxu0 0.0
    %4965 = vmatpush1.msra.mxu0 0.0
    %4966 = vmatprep.subr.mxu0 0.0
    %4967 = vmatpush1.msra.mxu0 0.0
    %4968 = vmatprep.subr.mxu0 0.0
    %4969 = vmatpush1.msra.mxu0 0.0
    %4970 = vmatprep.subr.mxu0 0.0
    %4971 = vmatpush1.msra.mxu0 0.0
    %4972 = vmatprep.subr.mxu0 0.0
    %4973 = vmatpush1.msra.mxu0 0.0
    %4974 = vmatprep.subr.mxu0 0.0
    %4975 = vmatpush1.msra.mxu0 %v4939
    %4976 = vmatprep.subr.mxu0 0.0
    %4977 = vmatpush2.msra.mxu0 0.0
    %4978 = vmatprep.subr.mxu0 0.0
    %4979 = vmatpush2.msra.mxu0 0.0
    %4980 = vmatprep.subr.mxu0 0.0
    %4981 = vmatpush2.msra.mxu0 0.0
    %4982 = vmatprep.subr.mxu0 0.0
    %4983 = vmatpush2.msra.mxu0 0.0
    %4984 = vmatprep.subr.mxu0 0.0
    %4985 = vmatpush2.msra.mxu0 0.0
    %4986 = vmatprep.subr.mxu0 0.0
    %4987 = vmatpush2.msra.mxu0 0.0
    %4988 = vmatprep.subr.mxu0 0.0
    %4989 = vmatpush2.msra.mxu0 0.0
    %4990 = vmatprep.subr.mxu0 0.0
    %4991 = vmatpush2.msra.mxu0 0.0
    %4992 = vmatprep.subr.mxu0 0.0
    %4993 = vmatpush2.msra.mxu0 0.0
    %4994 = vmatprep.subr.mxu0 0.0
    %4995 = vmatpush2.msra.mxu0 0.0
    %4996 = vmatprep.subr.mxu0 0.0
    %4997 = vmatpush2.msra.mxu0 0.0
    %4998 = vmatprep.subr.mxu0 0.0
    %4999 = vmatpush2.msra.mxu0 0.0
    %5000 = vmatprep.subr.mxu0 0.0
    %5001 = vmatpush2.msra.mxu0 0.0
    %5002 = vmatprep.subr.mxu0 0.0
    %5003 = vmatpush2.msra.mxu0 0.0
    %5004 = vmatprep.subr.mxu0 0.0
    %5005 = vmatpush2.msra.mxu0 0.0
    %5006 = vmatprep.subr.mxu0 0.0
    %5007 = vmatpush2.msra.mxu0 0.0
    %5008 = vmatprep.mubr.f32.mxu0 0.0
    %5009 = vmatmul.mubr.f32.gmra.mxu0 %v4942
    %v5010 = vpop.f32.mrf.mxu0
    %v5011 = vadd.f32 0.0, %v5010
    %v5012 = vpop.f32.mrf.mxu0
    %5013 = vdwg.mxu0
    %5014 = vrot.lane.b32.xlu0 %v4012, 104
    %v5015 = vpop.permute.xlu0 %5014
    %5016 = vrot.lane.b32.xlu0 %v4012, 72
    %v5017 = vpop.permute.xlu0 %5016
    %v5018 = vsel %vm360, %v5015, 0
    %v5020 = vsel %vm360, %v5017, 0
    %5022 = vmatprep.subr.mxu0 0.0
    %5023 = vmatpush1.xpose.msra.mxu0 0.0
    %5024 = vmatprep.subr.mxu0 0.0
    %5025 = vmatpush1.xpose.msra.mxu0 0.0
    %5026 = vmatprep.subr.mxu0 0.0
    %5027 = vmatpush1.xpose.msra.mxu0 0.0
    %5028 = vmatprep.subr.mxu0 0.0
    %5029 = vmatpush1.xpose.msra.mxu0 0.0
    %5030 = vmatprep.subr.mxu0 0.0
    %5031 = vmatpush1.xpose.msra.mxu0 0.0
    %5032 = vmatprep.subr.mxu0 0.0
    %5033 = vmatpush1.xpose.msra.mxu0 0.0
    %5034 = vmatprep.subr.mxu0 0.0
    %5035 = vmatpush1.xpose.msra.mxu0 0.0
    %5036 = vmatprep.subr.mxu0 0.0
    %5037 = vmatpush1.xpose.msra.mxu0 0.0
    %5038 = vmatprep.subr.mxu0 0.0
    %5039 = vmatpush1.xpose.msra.mxu0 0.0
    %5040 = vmatprep.subr.mxu0 0.0
    %5041 = vmatpush1.xpose.msra.mxu0 0.0
    %5042 = vmatprep.subr.mxu0 0.0
    %5043 = vmatpush1.xpose.msra.mxu0 0.0
    %5044 = vmatprep.subr.mxu0 0.0
    %5045 = vmatpush1.xpose.msra.mxu0 0.0
    %5046 = vmatprep.subr.mxu0 0.0
    %5047 = vmatpush1.xpose.msra.mxu0 0.0
    %5048 = vmatprep.subr.mxu0 0.0
    %5049 = vmatpush1.xpose.msra.mxu0 0.0
    %5050 = vmatprep.subr.mxu0 0.0
    %5051 = vmatpush1.xpose.msra.mxu0 0.0
    %5052 = vmatprep.subr.mxu0 0.0
    %5053 = vmatpush1.xpose.msra.mxu0 %v5020
    %5054 = vmatprep.subr.mxu0 0.0
    %5055 = vmatpush2.xpose.msra.mxu0 0.0
    %5056 = vmatprep.subr.mxu0 0.0
    %5057 = vmatpush2.xpose.msra.mxu0 0.0
    %5058 = vmatprep.subr.mxu0 0.0
    %5059 = vmatpush2.xpose.msra.mxu0 0.0
    %5060 = vmatprep.subr.mxu0 0.0
    %5061 = vmatpush2.xpose.msra.mxu0 0.0
    %5062 = vmatprep.subr.mxu0 0.0
    %5063 = vmatpush2.xpose.msra.mxu0 0.0
    %5064 = vmatprep.subr.mxu0 0.0
    %5065 = vmatpush2.xpose.msra.mxu0 0.0
    %5066 = vmatprep.subr.mxu0 0.0
    %5067 = vmatpush2.xpose.msra.mxu0 0.0
    %5068 = vmatprep.subr.mxu0 0.0
    %5069 = vmatpush2.xpose.msra.mxu0 0.0
    %5070 = vmatprep.subr.mxu0 0.0
    %5071 = vmatpush2.xpose.msra.mxu0 0.0
    %5072 = vmatprep.subr.mxu0 0.0
    %5073 = vmatpush2.xpose.msra.mxu0 0.0
    %5074 = vmatprep.subr.mxu0 0.0
    %5075 = vmatpush2.xpose.msra.mxu0 0.0
    %5076 = vmatprep.subr.mxu0 0.0
    %5077 = vmatpush2.xpose.msra.mxu0 0.0
    %5078 = vmatprep.subr.mxu0 0.0
    %5079 = vmatpush2.xpose.msra.mxu0 0.0
    %5080 = vmatprep.subr.mxu0 0.0
    %5081 = vmatpush2.xpose.msra.mxu0 0.0
    %5082 = vmatprep.subr.mxu0 0.0
    %5083 = vmatpush2.xpose.msra.mxu0 0.0
    %5084 = vmatprep.subr.mxu0 0.0
    %5085 = vmatpush2.xpose.msra.mxu0 0.0
    %5086 = vmatprep.mubr.f32.mxu0 0.0
    %5087 = vmatmul.mubr.f32.gmra.mxu0 %v5018
    %v5088 = vpop.f32.mrf.mxu0
    %v5089 = vadd.f32 0.0, %v5088
    %v5090 = vpop.f32.mrf.mxu0
    %5091 = vdwg.mxu0
    %5092 = vrot.lane.b32.xlu0 %v4017, 104
    %v5093 = vpop.permute.xlu0 %5092
    %5094 = vrot.lane.b32.xlu0 %v4017, 72
    %v5095 = vpop.permute.xlu0 %5094
    %v5096 = vsel %vm360, %v5093, 0
    %v5098 = vsel %vm360, %v5095, 0
    %5100 = vmatprep.subr.mxu0 0.0
    %5101 = vmatpush1.xpose.msra.mxu0 0.0
    %5102 = vmatprep.subr.mxu0 0.0
    %5103 = vmatpush1.xpose.msra.mxu0 0.0
    %5104 = vmatprep.subr.mxu0 0.0
    %5105 = vmatpush1.xpose.msra.mxu0 0.0
    %5106 = vmatprep.subr.mxu0 0.0
    %5107 = vmatpush1.xpose.msra.mxu0 0.0
    %5108 = vmatprep.subr.mxu0 0.0
    %5109 = vmatpush1.xpose.msra.mxu0 0.0
    %5110 = vmatprep.subr.mxu0 0.0
    %5111 = vmatpush1.xpose.msra.mxu0 0.0
    %5112 = vmatprep.subr.mxu0 0.0
    %5113 = vmatpush1.xpose.msra.mxu0 0.0
    %5114 = vmatprep.subr.mxu0 0.0
    %5115 = vmatpush1.xpose.msra.mxu0 0.0
    %5116 = vmatprep.subr.mxu0 0.0
    %5117 = vmatpush1.xpose.msra.mxu0 0.0
    %5118 = vmatprep.subr.mxu0 0.0
    %5119 = vmatpush1.xpose.msra.mxu0 0.0
    %5120 = vmatprep.subr.mxu0 0.0
    %5121 = vmatpush1.xpose.msra.mxu0 0.0
    %5122 = vmatprep.subr.mxu0 0.0
    %5123 = vmatpush1.xpose.msra.mxu0 0.0
    %5124 = vmatprep.subr.mxu0 0.0
    %5125 = vmatpush1.xpose.msra.mxu0 0.0
    %5126 = vmatprep.subr.mxu0 0.0
    %5127 = vmatpush1.xpose.msra.mxu0 0.0
    %5128 = vmatprep.subr.mxu0 0.0
    %5129 = vmatpush1.xpose.msra.mxu0 0.0
    %5130 = vmatprep.subr.mxu0 0.0
    %5131 = vmatpush1.xpose.msra.mxu0 %v5098
    %5132 = vmatprep.subr.mxu0 0.0
    %5133 = vmatpush2.xpose.msra.mxu0 0.0
    %5134 = vmatprep.subr.mxu0 0.0
    %5135 = vmatpush2.xpose.msra.mxu0 0.0
    %5136 = vmatprep.subr.mxu0 0.0
    %5137 = vmatpush2.xpose.msra.mxu0 0.0
    %5138 = vmatprep.subr.mxu0 0.0
    %5139 = vmatpush2.xpose.msra.mxu0 0.0
    %5140 = vmatprep.subr.mxu0 0.0
    %5141 = vmatpush2.xpose.msra.mxu0 0.0
    %5142 = vmatprep.subr.mxu0 0.0
    %5143 = vmatpush2.xpose.msra.mxu0 0.0
    %5144 = vmatprep.subr.mxu0 0.0
    %5145 = vmatpush2.xpose.msra.mxu0 0.0
    %5146 = vmatprep.subr.mxu0 0.0
    %5147 = vmatpush2.xpose.msra.mxu0 0.0
    %5148 = vmatprep.subr.mxu0 0.0
    %5149 = vmatpush2.xpose.msra.mxu0 0.0
    %5150 = vmatprep.subr.mxu0 0.0
    %5151 = vmatpush2.xpose.msra.mxu0 0.0
    %5152 = vmatprep.subr.mxu0 0.0
    %5153 = vmatpush2.xpose.msra.mxu0 0.0
    %5154 = vmatprep.subr.mxu0 0.0
    %5155 = vmatpush2.xpose.msra.mxu0 0.0
    %5156 = vmatprep.subr.mxu0 0.0
    %5157 = vmatpush2.xpose.msra.mxu0 0.0
    %5158 = vmatprep.subr.mxu0 0.0
    %5159 = vmatpush2.xpose.msra.mxu0 0.0
    %5160 = vmatprep.subr.mxu0 0.0
    %5161 = vmatpush2.xpose.msra.mxu0 0.0
    %5162 = vmatprep.subr.mxu0 0.0
    %5163 = vmatpush2.xpose.msra.mxu0 0.0
    %5164 = vmatprep.mubr.f32.mxu0 0.0
    %5165 = vmatmul.mubr.f32.gmra.mxu0 %v5096
    %v5166 = vpop.f32.mrf.mxu0
    %v5167 = vadd.f32 0.0, %v5166
    %v5168 = vpop.f32.mrf.mxu0
    %5169 = vdwg.mxu0
    %v5170 = vmul.f32 %v5089, 0.35355338
    %v5171 = vmul.f32 %v5167, 0.35355338
    %v5172 = vsel %vm360, %v5170, -inf
    %5173 = vmax.xlane.f32.xlu0 %v5172
    %v5174 = vpop.xlane.xlu0 %5173
    %v5175 = vsel %vm360, %v5171, -inf
    %5176 = vmax.xlane.f32.xlu0 %v5175
    %v5177 = vpop.xlane.xlu0 %5176
    %v5178 = vsub.f32 %v5170, %v5174
    %v5179 = vsub.f32 %v5171, %v5177
    %v5180 = vmul.f32 %v5178, 1.442695
    %v5181 = vpow.pop %v5180
    %v5182 = vmul.f32 %v5179, 1.442695
    %v5183 = vpow.pop %v5182
    %v5184 = vsel %vm360, %v5181, 0.0
    %5185 = vadd.xlane.f32.xlu0 %v5184
    %v5186 = vpop.xlane.xlu0 %5185
    %v5187 = vsel %vm360, %v5183, 0.0
    %5188 = vadd.xlane.f32.xlu0 %v5187
    %v5189 = vpop.xlane.xlu0 %5188
    %v5190 = vrcp.pop %v5186
    %v5191 = vmul.f32 %v5181, %v5190
    %v5192 = vrcp.pop %v5189
    %v5193 = vmul.f32 %v5183, %v5192
    %5194 = vrot.lane.b32.xlu0 %v4012, 40
    %v5195 = vpop.permute.xlu0 %5194
    %v5198 = vsel %vm360, %v5191, 0
    %5200 = vmatprep.subr.mxu0 0.0
    %5201 = vmatpush1.msra.mxu0 0.0
    %5202 = vmatprep.subr.mxu0 0.0
    %5203 = vmatpush1.msra.mxu0 0.0
    %5204 = vmatprep.subr.mxu0 0.0
    %5205 = vmatpush1.msra.mxu0 0.0
    %5206 = vmatprep.subr.mxu0 0.0
    %5207 = vmatpush1.msra.mxu0 0.0
    %5208 = vmatprep.subr.mxu0 0.0
    %5209 = vmatpush1.msra.mxu0 0.0
    %5210 = vmatprep.subr.mxu0 0.0
    %5211 = vmatpush1.msra.mxu0 0.0
    %5212 = vmatprep.subr.mxu0 0.0
    %5213 = vmatpush1.msra.mxu0 0.0
    %5214 = vmatprep.subr.mxu0 0.0
    %5215 = vmatpush1.msra.mxu0 0.0
    %5216 = vmatprep.subr.mxu0 0.0
    %5217 = vmatpush1.msra.mxu0 0.0
    %5218 = vmatprep.subr.mxu0 0.0
    %5219 = vmatpush1.msra.mxu0 0.0
    %5220 = vmatprep.subr.mxu0 0.0
    %5221 = vmatpush1.msra.mxu0 0.0
    %5222 = vmatprep.subr.mxu0 0.0
    %5223 = vmatpush1.msra.mxu0 0.0
    %5224 = vmatprep.subr.mxu0 0.0
    %5225 = vmatpush1.msra.mxu0 0.0
    %5226 = vmatprep.subr.mxu0 0.0
    %5227 = vmatpush1.msra.mxu0 0.0
    %5228 = vmatprep.subr.mxu0 0.0
    %5229 = vmatpush1.msra.mxu0 0.0
    %5230 = vmatprep.subr.mxu0 0.0
    %5231 = vmatpush1.msra.mxu0 %v5195
    %5232 = vmatprep.subr.mxu0 0.0
    %5233 = vmatpush2.msra.mxu0 0.0
    %5234 = vmatprep.subr.mxu0 0.0
    %5235 = vmatpush2.msra.mxu0 0.0
    %5236 = vmatprep.subr.mxu0 0.0
    %5237 = vmatpush2.msra.mxu0 0.0
    %5238 = vmatprep.subr.mxu0 0.0
    %5239 = vmatpush2.msra.mxu0 0.0
    %5240 = vmatprep.subr.mxu0 0.0
    %5241 = vmatpush2.msra.mxu0 0.0
    %5242 = vmatprep.subr.mxu0 0.0
    %5243 = vmatpush2.msra.mxu0 0.0
    %5244 = vmatprep.subr.mxu0 0.0
    %5245 = vmatpush2.msra.mxu0 0.0
    %5246 = vmatprep.subr.mxu0 0.0
    %5247 = vmatpush2.msra.mxu0 0.0
    %5248 = vmatprep.subr.mxu0 0.0
    %5249 = vmatpush2.msra.mxu0 0.0
    %5250 = vmatprep.subr.mxu0 0.0
    %5251 = vmatpush2.msra.mxu0 0.0
    %5252 = vmatprep.subr.mxu0 0.0
    %5253 = vmatpush2.msra.mxu0 0.0
    %5254 = vmatprep.subr.mxu0 0.0
    %5255 = vmatpush2.msra.mxu0 0.0
    %5256 = vmatprep.subr.mxu0 0.0
    %5257 = vmatpush2.msra.mxu0 0.0
    %5258 = vmatprep.subr.mxu0 0.0
    %5259 = vmatpush2.msra.mxu0 0.0
    %5260 = vmatprep.subr.mxu0 0.0
    %5261 = vmatpush2.msra.mxu0 0.0
    %5262 = vmatprep.subr.mxu0 0.0
    %5263 = vmatpush2.msra.mxu0 0.0
    %5264 = vmatprep.mubr.f32.mxu0 0.0
    %5265 = vmatmul.mubr.f32.gmra.mxu0 %v5198
    %v5266 = vpop.f32.mrf.mxu0
    %v5267 = vadd.f32 0.0, %v5266
    %v5268 = vpop.f32.mrf.mxu0
    %5269 = vdwg.mxu0
    %5270 = vrot.lane.b32.xlu0 %v4017, 40
    %v5271 = vpop.permute.xlu0 %5270
    %v5274 = vsel %vm360, %v5193, 0
    %5276 = vmatprep.subr.mxu0 0.0
    %5277 = vmatpush1.msra.mxu0 0.0
    %5278 = vmatprep.subr.mxu0 0.0
    %5279 = vmatpush1.msra.mxu0 0.0
    %5280 = vmatprep.subr.mxu0 0.0
    %5281 = vmatpush1.msra.mxu0 0.0
    %5282 = vmatprep.subr.mxu0 0.0
    %5283 = vmatpush1.msra.mxu0 0.0
    %5284 = vmatprep.subr.mxu0 0.0
    %5285 = vmatpush1.msra.mxu0 0.0
    %5286 = vmatprep.subr.mxu0 0.0
    %5287 = vmatpush1.msra.mxu0 0.0
    %5288 = vmatprep.subr.mxu0 0.0
    %5289 = vmatpush1.msra.mxu0 0.0
    %5290 = vmatprep.subr.mxu0 0.0
    %5291 = vmatpush1.msra.mxu0 0.0
    %5292 = vmatprep.subr.mxu0 0.0
    %5293 = vmatpush1.msra.mxu0 0.0
    %5294 = vmatprep.subr.mxu0 0.0
    %5295 = vmatpush1.msra.mxu0 0.0
    %5296 = vmatprep.subr.mxu0 0.0
    %5297 = vmatpush1.msra.mxu0 0.0
    %5298 = vmatprep.subr.mxu0 0.0
    %5299 = vmatpush1.msra.mxu0 0.0
    %5300 = vmatprep.subr.mxu0 0.0
    %5301 = vmatpush1.msra.mxu0 0.0
    %5302 = vmatprep.subr.mxu0 0.0
    %5303 = vmatpush1.msra.mxu0 0.0
    %5304 = vmatprep.subr.mxu0 0.0
    %5305 = vmatpush1.msra.mxu0 0.0
    %5306 = vmatprep.subr.mxu0 0.0
    %5307 = vmatpush1.msra.mxu0 %v5271
    %5308 = vmatprep.subr.mxu0 0.0
    %5309 = vmatpush2.msra.mxu0 0.0
    %5310 = vmatprep.subr.mxu0 0.0
    %5311 = vmatpush2.msra.mxu0 0.0
    %5312 = vmatprep.subr.mxu0 0.0
    %5313 = vmatpush2.msra.mxu0 0.0
    %5314 = vmatprep.subr.mxu0 0.0
    %5315 = vmatpush2.msra.mxu0 0.0
    %5316 = vmatprep.subr.mxu0 0.0
    %5317 = vmatpush2.msra.mxu0 0.0
    %5318 = vmatprep.subr.mxu0 0.0
    %5319 = vmatpush2.msra.mxu0 0.0
    %5320 = vmatprep.subr.mxu0 0.0
    %5321 = vmatpush2.msra.mxu0 0.0
    %5322 = vmatprep.subr.mxu0 0.0
    %5323 = vmatpush2.msra.mxu0 0.0
    %5324 = vmatprep.subr.mxu0 0.0
    %5325 = vmatpush2.msra.mxu0 0.0
    %5326 = vmatprep.subr.mxu0 0.0
    %5327 = vmatpush2.msra.mxu0 0.0
    %5328 = vmatprep.subr.mxu0 0.0
    %5329 = vmatpush2.msra.mxu0 0.0
    %5330 = vmatprep.subr.mxu0 0.0
    %5331 = vmatpush2.msra.mxu0 0.0
    %5332 = vmatprep.subr.mxu0 0.0
    %5333 = vmatpush2.msra.mxu0 0.0
    %5334 = vmatprep.subr.mxu0 0.0
    %5335 = vmatpush2.msra.mxu0 0.0
    %5336 = vmatprep.subr.mxu0 0.0
    %5337 = vmatpush2.msra.mxu0 0.0
    %5338 = vmatprep.subr.mxu0 0.0
    %5339 = vmatpush2.msra.mxu0 0.0
    %5340 = vmatprep.mubr.f32.mxu0 0.0
    %5341 = vmatmul.mubr.f32.gmra.mxu0 %v5274
    %v5342 = vpop.f32.mrf.mxu0
    %v5343 = vadd.f32 0.0, %v5342
    %v5344 = vpop.f32.mrf.mxu0
    %5345 = vdwg.mxu0
    %5348 = vrot.lane.b32.xlu0 %v4603, 8
    %v5349 = vpop.permute.xlu0 %5348
    %5350 = vrot.lane.b32.xlu0 %v4679, 8
    %v5351 = vpop.permute.xlu0 %5350
    %5356 = vrot.lane.b32.xlu0 %v4935, 16
    %v5357 = vpop.permute.xlu0 %5356
    %5358 = vrot.lane.b32.xlu0 %v5011, 16
    %v5359 = vpop.permute.xlu0 %5358
    %5364 = vrot.lane.b32.xlu0 %v5267, 24
    %v5365 = vpop.permute.xlu0 %5364
    %5366 = vrot.lane.b32.xlu0 %v5343, 24
    %v5367 = vpop.permute.xlu0 %5366
    %v5370 = vsel %vm360, %v4271, %v5349
    %v5371 = vsel %vm360, %v4347, %v5351
    %v5372 = vsel %vm1710, %v5370, %v5357
    %v5373 = vsel %vm1710, %v5371, %v5359
    %v5374 = vsel %vm1713, %v5372, %v5365
    %v5375 = vsel %vm1713, %v5373, %v5367
    %s5376 = scalar_lea.vmem %s8, 64
    %v5377 = vld [vmem:[%s5376] sm:$0xff]
    %v5378 = vld [vmem:[%s5376 + $0x8] sm:$0xff]
    %v5379 = vld [vmem:[%s5376 + $0x10] sm:$0xff]
    %v5380 = vld [vmem:[%s5376 + $0x18] sm:$0xff]
    %s5381 = scalar_lea.vmem %s9, 2
    %v5382 = vld [vmem:[%s5381] sm:$0x1]
    %v5384 = vlaneseq
    %v5385 = vshrl.u32 %v5384, 7
    %v5386 = vsub.s32 0, %v5385
    %v5387 = vrot.slane %v5382, %v5386
    %v5390 = vsel %vm275, %v5374, 0
    %v5393 = vsel %vm275, %v5375, 0
    %5395 = vmatprep.subr.mxu0 0.0
    %5396 = vmatpush1.msra.mxu0 0.0
    %5397 = vmatprep.subr.mxu0 0.0
    %5398 = vmatpush1.msra.mxu0 0.0
    %5399 = vmatprep.subr.mxu0 0.0
    %5400 = vmatpush1.msra.mxu0 0.0
    %5401 = vmatprep.subr.mxu0 0.0
    %5402 = vmatpush1.msra.mxu0 0.0
    %5403 = vmatprep.subr.mxu0 0.0
    %5404 = vmatpush1.msra.mxu0 0.0
    %5405 = vmatprep.subr.mxu0 0.0
    %5406 = vmatpush1.msra.mxu0 0.0
    %5407 = vmatprep.subr.mxu0 0.0
    %5408 = vmatpush1.msra.mxu0 0.0
    %5409 = vmatprep.subr.mxu0 0.0
    %5410 = vmatpush1.msra.mxu0 0.0
    %5411 = vmatprep.subr.mxu0 0.0
    %5412 = vmatpush1.msra.mxu0 0.0
    %5413 = vmatprep.subr.mxu0 0.0
    %5414 = vmatpush1.msra.mxu0 0.0
    %5415 = vmatprep.subr.mxu0 0.0
    %5416 = vmatpush1.msra.mxu0 0.0
    %5417 = vmatprep.subr.mxu0 0.0
    %5418 = vmatpush1.msra.mxu0 0.0
    %5419 = vmatprep.subr.mxu0 0.0
    %5420 = vmatpush1.msra.mxu0 %v5380
    %5421 = vmatprep.subr.mxu0 0.0
    %5422 = vmatpush1.msra.mxu0 %v5379
    %5423 = vmatprep.subr.mxu0 0.0
    %5424 = vmatpush1.msra.mxu0 %v5378
    %5425 = vmatprep.subr.mxu0 0.0
    %5426 = vmatpush1.msra.mxu0 %v5377
    %5427 = vmatprep.subr.mxu0 0.0
    %5428 = vmatpush2.msra.mxu0 0.0
    %5429 = vmatprep.subr.mxu0 0.0
    %5430 = vmatpush2.msra.mxu0 0.0
    %5431 = vmatprep.subr.mxu0 0.0
    %5432 = vmatpush2.msra.mxu0 0.0
    %5433 = vmatprep.subr.mxu0 0.0
    %5434 = vmatpush2.msra.mxu0 0.0
    %5435 = vmatprep.subr.mxu0 0.0
    %5436 = vmatpush2.msra.mxu0 0.0
    %5437 = vmatprep.subr.mxu0 0.0
    %5438 = vmatpush2.msra.mxu0 0.0
    %5439 = vmatprep.subr.mxu0 0.0
    %5440 = vmatpush2.msra.mxu0 0.0
    %5441 = vmatprep.subr.mxu0 0.0
    %5442 = vmatpush2.msra.mxu0 0.0
    %5443 = vmatprep.subr.mxu0 0.0
    %5444 = vmatpush2.msra.mxu0 0.0
    %5445 = vmatprep.subr.mxu0 0.0
    %5446 = vmatpush2.msra.mxu0 0.0
    %5447 = vmatprep.subr.mxu0 0.0
    %5448 = vmatpush2.msra.mxu0 0.0
    %5449 = vmatprep.subr.mxu0 0.0
    %5450 = vmatpush2.msra.mxu0 0.0
    %5451 = vmatprep.subr.mxu0 0.0
    %5452 = vmatpush2.msra.mxu0 0.0
    %5453 = vmatprep.subr.mxu0 0.0
    %5454 = vmatpush2.msra.mxu0 0.0
    %5455 = vmatprep.subr.mxu0 0.0
    %5456 = vmatpush2.msra.mxu0 0.0
    %5457 = vmatprep.subr.mxu0 0.0
    %5458 = vmatpush2.msra.mxu0 0.0
    %5459 = vmatprep.mubr.f32.mxu0 0.0
    %5460 = vmatmul.mubr.f32.gmra.mxu0 %v5390
    %v5461 = vpop.f32.mrf.mxu0
    %v5462 = vadd.f32 %v5387, %v5461
    %v5463 = vpop.f32.mrf.mxu0
    %5464 = vmatprep.mubr.f32.mxu0 0.0
    %5465 = vmatmul.mubr.f32.gmra.mxu0 %v5393
    %v5466 = vpop.f32.mrf.mxu0
    %v5467 = vadd.f32 %v5387, %v5466
    %v5468 = vpop.f32.mrf.mxu0
    %5469 = vdwg.mxu0
    %v5470 = vadd.f32 %v3924, %v5462
    %v5471 = vadd.f32 %v3925, %v5467
    %s5472 = scalar_lea.vmem %s10, 2
    %v5473 = vld [vmem:[%s5472] sm:$0x1]
    %s5474 = scalar_lea.vmem %s11, 2
    %v5475 = vld [vmem:[%s5474] sm:$0x1]
    %v5476 = vsel %vm275, %v5470, 0.0
    %5477 = vadd.xlane.f32.xlu0 %v5476
    %v5478 = vpop.xlane.xlu0 %5477
    %v5479 = vsel %vm275, %v5471, 0.0
    %5480 = vadd.xlane.f32.xlu0 %v5479
    %v5481 = vpop.xlane.xlu0 %5480
    %v5482 = vmul.f32 %v5478, %v1818
    %v5483 = vmul.f32 %v5481, %v1818
    %v5484 = vsub.f32 %v5470, %v5482
    %v5485 = vsub.f32 %v5471, %v5483
    %v5486 = vmul.f32 %v5484, %v5484
    %v5487 = vmul.f32 %v5485, %v5485
    %v5488 = vsel %vm275, %v5486, 0.0
    %5489 = vadd.xlane.f32.xlu0 %v5488
    %v5490 = vpop.xlane.xlu0 %5489
    %v5491 = vsel %vm275, %v5487, 0.0
    %5492 = vadd.xlane.f32.xlu0 %v5491
    %v5493 = vpop.xlane.xlu0 %5492
    %v5494 = vmul.f32 %v5490, %v1818
    %v5495 = vmul.f32 %v5493, %v1818
    %v5496 = vadd.f32 %v5494, 1e-05
    %v5497 = vadd.f32 %v5495, 1e-05
    %v5498 = vrsqrt.pop %v5496
    %v5499 = vrsqrt.pop %v5497
    %v5500 = vmul.f32 %v5484, %v5498
    %v5501 = vmul.f32 %v5485, %v5499
    %v5503 = vlaneseq
    %v5504 = vshrl.u32 %v5503, 7
    %v5505 = vsub.s32 0, %v5504
    %v5506 = vrot.slane %v5473, %v5505
    %v5508 = vmul.f32 %v5500, %v5506
    %v5509 = vmul.f32 %v5501, %v5506
    %v5511 = vlaneseq
    %v5512 = vshrl.u32 %v5511, 7
    %v5513 = vsub.s32 0, %v5512
    %v5514 = vrot.slane %v5475, %v5513
    %v5516 = vadd.f32 %v5508, %v5514
    %v5517 = vadd.f32 %v5509, %v5514
    %s5518 = scalar_lea.vmem %s12, 64
    %v5519 = vld [vmem:[%s5518] sm:$0xff]
    %v5520 = vld [vmem:[%s5518 + $0x8] sm:$0xff]
    %v5521 = vld [vmem:[%s5518 + $0x10] sm:$0xff]
    %v5522 = vld [vmem:[%s5518 + $0x18] sm:$0xff]
    %s5523 = scalar_lea.vmem %s13, 2
    %v5524 = vld [vmem:[%s5523] sm:$0x1]
    %v5526 = vlaneseq
    %v5527 = vshrl.u32 %v5526, 7
    %v5528 = vsub.s32 0, %v5527
    %v5529 = vrot.slane %v5524, %v5528
    %v5532 = vsel %vm275, %v5516, 0
    %v5535 = vsel %vm275, %v5517, 0
    %5537 = vmatprep.subr.mxu0 0.0
    %5538 = vmatpush1.msra.mxu0 0.0
    %5539 = vmatprep.subr.mxu0 0.0
    %5540 = vmatpush1.msra.mxu0 0.0
    %5541 = vmatprep.subr.mxu0 0.0
    %5542 = vmatpush1.msra.mxu0 0.0
    %5543 = vmatprep.subr.mxu0 0.0
    %5544 = vmatpush1.msra.mxu0 0.0
    %5545 = vmatprep.subr.mxu0 0.0
    %5546 = vmatpush1.msra.mxu0 0.0
    %5547 = vmatprep.subr.mxu0 0.0
    %5548 = vmatpush1.msra.mxu0 0.0
    %5549 = vmatprep.subr.mxu0 0.0
    %5550 = vmatpush1.msra.mxu0 0.0
    %5551 = vmatprep.subr.mxu0 0.0
    %5552 = vmatpush1.msra.mxu0 0.0
    %5553 = vmatprep.subr.mxu0 0.0
    %5554 = vmatpush1.msra.mxu0 0.0
    %5555 = vmatprep.subr.mxu0 0.0
    %5556 = vmatpush1.msra.mxu0 0.0
    %5557 = vmatprep.subr.mxu0 0.0
    %5558 = vmatpush1.msra.mxu0 0.0
    %5559 = vmatprep.subr.mxu0 0.0
    %5560 = vmatpush1.msra.mxu0 0.0
    %5561 = vmatprep.subr.mxu0 0.0
    %5562 = vmatpush1.msra.mxu0 %v5522
    %5563 = vmatprep.subr.mxu0 0.0
    %5564 = vmatpush1.msra.mxu0 %v5521
    %5565 = vmatprep.subr.mxu0 0.0
    %5566 = vmatpush1.msra.mxu0 %v5520
    %5567 = vmatprep.subr.mxu0 0.0
    %5568 = vmatpush1.msra.mxu0 %v5519
    %5569 = vmatprep.subr.mxu0 0.0
    %5570 = vmatpush2.msra.mxu0 0.0
    %5571 = vmatprep.subr.mxu0 0.0
    %5572 = vmatpush2.msra.mxu0 0.0
    %5573 = vmatprep.subr.mxu0 0.0
    %5574 = vmatpush2.msra.mxu0 0.0
    %5575 = vmatprep.subr.mxu0 0.0
    %5576 = vmatpush2.msra.mxu0 0.0
    %5577 = vmatprep.subr.mxu0 0.0
    %5578 = vmatpush2.msra.mxu0 0.0
    %5579 = vmatprep.subr.mxu0 0.0
    %5580 = vmatpush2.msra.mxu0 0.0
    %5581 = vmatprep.subr.mxu0 0.0
    %5582 = vmatpush2.msra.mxu0 0.0
    %5583 = vmatprep.subr.mxu0 0.0
    %5584 = vmatpush2.msra.mxu0 0.0
    %5585 = vmatprep.subr.mxu0 0.0
    %5586 = vmatpush2.msra.mxu0 0.0
    %5587 = vmatprep.subr.mxu0 0.0
    %5588 = vmatpush2.msra.mxu0 0.0
    %5589 = vmatprep.subr.mxu0 0.0
    %5590 = vmatpush2.msra.mxu0 0.0
    %5591 = vmatprep.subr.mxu0 0.0
    %5592 = vmatpush2.msra.mxu0 0.0
    %5593 = vmatprep.subr.mxu0 0.0
    %5594 = vmatpush2.msra.mxu0 0.0
    %5595 = vmatprep.subr.mxu0 0.0
    %5596 = vmatpush2.msra.mxu0 0.0
    %5597 = vmatprep.subr.mxu0 0.0
    %5598 = vmatpush2.msra.mxu0 0.0
    %5599 = vmatprep.subr.mxu0 0.0
    %5600 = vmatpush2.msra.mxu0 0.0
    %5601 = vmatprep.mubr.f32.mxu0 0.0
    %5602 = vmatmul.mubr.f32.gmra.mxu0 %v5532
    %v5603 = vpop.f32.mrf.mxu0
    %v5604 = vadd.f32 %v5529, %v5603
    %v5605 = vpop.f32.mrf.mxu0
    %5606 = vmatprep.mubr.f32.mxu0 0.0
    %5607 = vmatmul.mubr.f32.gmra.mxu0 %v5535
    %v5608 = vpop.f32.mrf.mxu0
    %v5609 = vadd.f32 %v5529, %v5608
    %v5610 = vpop.f32.mrf.mxu0
    %5611 = vdwg.mxu0
    %v5612 = vmax.f32 %v5604, 0.0
    %v5613 = vmax.f32 %v5609, 0.0
    %s5614 = scalar_lea.vmem %s14, 128
    %v5615 = vld [vmem:[%s5614] sm:$0xff]
    %v5616 = vld [vmem:[%s5614 + $0x8] sm:$0xff]
    %v5617 = vld [vmem:[%s5614 + $0x10] sm:$0xff]
    %v5618 = vld [vmem:[%s5614 + $0x18] sm:$0xff]
    %v5619 = vld [vmem:[%s5614 + $0x20] sm:$0xff]
    %v5620 = vld [vmem:[%s5614 + $0x28] sm:$0xff]
    %v5621 = vld [vmem:[%s5614 + $0x30] sm:$0xff]
    %v5622 = vld [vmem:[%s5614 + $0x38] sm:$0xff]
    %s5623 = scalar_lea.vmem %s15, 2
    %v5624 = vld [vmem:[%s5623] sm:$0x1]
    %v5626 = vlaneseq
    %v5627 = vshrl.u32 %v5626, 7
    %v5628 = vsub.s32 0, %v5627
    %v5629 = vrot.slane %v5624, %v5628
    %v5632 = vsel %vm1964, %v5612, 0
    %v5635 = vsel %vm1964, %v5613, 0
    %5637 = vmatprep.subr.mxu0 0.0
    %5638 = vmatpush1.msra.mxu0 0.0
    %5639 = vmatprep.subr.mxu0 0.0
    %5640 = vmatpush1.msra.mxu0 0.0
    %5641 = vmatprep.subr.mxu0 0.0
    %5642 = vmatpush1.msra.mxu0 0.0
    %5643 = vmatprep.subr.mxu0 0.0
    %5644 = vmatpush1.msra.mxu0 0.0
    %5645 = vmatprep.subr.mxu0 0.0
    %5646 = vmatpush1.msra.mxu0 0.0
    %5647 = vmatprep.subr.mxu0 0.0
    %5648 = vmatpush1.msra.mxu0 0.0
    %5649 = vmatprep.subr.mxu0 0.0
    %5650 = vmatpush1.msra.mxu0 0.0
    %5651 = vmatprep.subr.mxu0 0.0
    %5652 = vmatpush1.msra.mxu0 0.0
    %5653 = vmatprep.subr.mxu0 0.0
    %5654 = vmatpush1.msra.mxu0 %v5622
    %5655 = vmatprep.subr.mxu0 0.0
    %5656 = vmatpush1.msra.mxu0 %v5621
    %5657 = vmatprep.subr.mxu0 0.0
    %5658 = vmatpush1.msra.mxu0 %v5620
    %5659 = vmatprep.subr.mxu0 0.0
    %5660 = vmatpush1.msra.mxu0 %v5619
    %5661 = vmatprep.subr.mxu0 0.0
    %5662 = vmatpush1.msra.mxu0 %v5618
    %5663 = vmatprep.subr.mxu0 0.0
    %5664 = vmatpush1.msra.mxu0 %v5617
    %5665 = vmatprep.subr.mxu0 0.0
    %5666 = vmatpush1.msra.mxu0 %v5616
    %5667 = vmatprep.subr.mxu0 0.0
    %5668 = vmatpush1.msra.mxu0 %v5615
    %5669 = vmatprep.subr.mxu0 0.0
    %5670 = vmatpush2.msra.mxu0 0.0
    %5671 = vmatprep.subr.mxu0 0.0
    %5672 = vmatpush2.msra.mxu0 0.0
    %5673 = vmatprep.subr.mxu0 0.0
    %5674 = vmatpush2.msra.mxu0 0.0
    %5675 = vmatprep.subr.mxu0 0.0
    %5676 = vmatpush2.msra.mxu0 0.0
    %5677 = vmatprep.subr.mxu0 0.0
    %5678 = vmatpush2.msra.mxu0 0.0
    %5679 = vmatprep.subr.mxu0 0.0
    %5680 = vmatpush2.msra.mxu0 0.0
    %5681 = vmatprep.subr.mxu0 0.0
    %5682 = vmatpush2.msra.mxu0 0.0
    %5683 = vmatprep.subr.mxu0 0.0
    %5684 = vmatpush2.msra.mxu0 0.0
    %5685 = vmatprep.subr.mxu0 0.0
    %5686 = vmatpush2.msra.mxu0 0.0
    %5687 = vmatprep.subr.mxu0 0.0
    %5688 = vmatpush2.msra.mxu0 0.0
    %5689 = vmatprep.subr.mxu0 0.0
    %5690 = vmatpush2.msra.mxu0 0.0
    %5691 = vmatprep.subr.mxu0 0.0
    %5692 = vmatpush2.msra.mxu0 0.0
    %5693 = vmatprep.subr.mxu0 0.0
    %5694 = vmatpush2.msra.mxu0 0.0
    %5695 = vmatprep.subr.mxu0 0.0
    %5696 = vmatpush2.msra.mxu0 0.0
    %5697 = vmatprep.subr.mxu0 0.0
    %5698 = vmatpush2.msra.mxu0 0.0
    %5699 = vmatprep.subr.mxu0 0.0
    %5700 = vmatpush2.msra.mxu0 0.0
    %5701 = vmatprep.mubr.f32.mxu0 0.0
    %5702 = vmatmul.mubr.f32.gmra.mxu0 %v5632
    %v5703 = vpop.f32.mrf.mxu0
    %v5704 = vadd.f32 %v5629, %v5703
    %v5705 = vpop.f32.mrf.mxu0
    %5706 = vmatprep.mubr.f32.mxu0 0.0
    %5707 = vmatmul.mubr.f32.gmra.mxu0 %v5635
    %v5708 = vpop.f32.mrf.mxu0
    %v5709 = vadd.f32 %v5629, %v5708
    %v5710 = vpop.f32.mrf.mxu0
    %5711 = vdwg.mxu0
    %v5712 = vadd.f32 %v5516, %v5704
    %v5713 = vadd.f32 %v5517, %v5709
    %s5714 = scalar_lea.vmem %s16, 2
    %v5715 = vld [vmem:[%s5714] sm:$0x1]
    %s5716 = scalar_lea.vmem %s17, 2
    %v5717 = vld [vmem:[%s5716] sm:$0x1]
    %v5718 = vsel %vm275, %v5712, 0.0
    %5719 = vadd.xlane.f32.xlu0 %v5718
    %v5720 = vpop.xlane.xlu0 %5719
    %v5721 = vsel %vm275, %v5713, 0.0
    %5722 = vadd.xlane.f32.xlu0 %v5721
    %v5723 = vpop.xlane.xlu0 %5722
    %v5724 = vmul.f32 %v5720, %v1818
    %v5725 = vmul.f32 %v5723, %v1818
    %v5726 = vsub.f32 %v5712, %v5724
    %v5727 = vsub.f32 %v5713, %v5725
    %v5728 = vmul.f32 %v5726, %v5726
    %v5729 = vmul.f32 %v5727, %v5727
    %v5730 = vsel %vm275, %v5728, 0.0
    %5731 = vadd.xlane.f32.xlu0 %v5730
    %v5732 = vpop.xlane.xlu0 %5731
    %v5733 = vsel %vm275, %v5729, 0.0
    %5734 = vadd.xlane.f32.xlu0 %v5733
    %v5735 = vpop.xlane.xlu0 %5734
    %v5736 = vmul.f32 %v5732, %v1818
    %v5737 = vmul.f32 %v5735, %v1818
    %v5738 = vadd.f32 %v5736, 1e-05
    %v5739 = vadd.f32 %v5737, 1e-05
    %v5740 = vrsqrt.pop %v5738
    %v5741 = vrsqrt.pop %v5739
    %v5742 = vmul.f32 %v5726, %v5740
    %v5743 = vmul.f32 %v5727, %v5741
    %v5745 = vlaneseq
    %v5746 = vshrl.u32 %v5745, 7
    %v5747 = vsub.s32 0, %v5746
    %v5748 = vrot.slane %v5715, %v5747
    %v5750 = vmul.f32 %v5742, %v5748
    %v5751 = vmul.f32 %v5743, %v5748
    %v5753 = vlaneseq
    %v5754 = vshrl.u32 %v5753, 7
    %v5755 = vsub.s32 0, %v5754
    %v5756 = vrot.slane %v5717, %v5755
    %v5758 = vadd.f32 %v5750, %v5756
    %v5759 = vadd.f32 %v5751, %v5756
    %5760 = vst.msk [vmem:[#allocation9] sm:$0xff] %vm275, %v5758
    %5761 = vst.msk [vmem:[#allocation9 + $0x8] sm:$0xff] %vm275, %v5759
    %v5762 = vld [vmem:[%s5] sm:$0x3]
    %v5764 = vsel %vm1710, %v5762, 0
    %5766 = vmatprep.subr.mxu0 0.0
    %5767 = vmatpush1.msra.mxu0 0.0
    %5768 = vmatprep.subr.mxu0 0.0
    %5769 = vmatpush1.msra.mxu0 0.0
    %5770 = vmatprep.subr.mxu0 0.0
    %5771 = vmatpush1.msra.mxu0 0.0
    %5772 = vmatprep.subr.mxu0 0.0
    %5773 = vmatpush1.msra.mxu0 0.0
    %5774 = vmatprep.subr.mxu0 0.0
    %5775 = vmatpush1.msra.mxu0 0.0
    %5776 = vmatprep.subr.mxu0 0.0
    %5777 = vmatpush1.msra.mxu0 0.0
    %5778 = vmatprep.subr.mxu0 0.0
    %5779 = vmatpush1.msra.mxu0 0.0
    %5780 = vmatprep.subr.mxu0 0.0
    %5781 = vmatpush1.msra.mxu0 0.0
    %5782 = vmatprep.subr.mxu0 0.0
    %5783 = vmatpush1.msra.mxu0 0.0
    %5784 = vmatprep.subr.mxu0 0.0
    %5785 = vmatpush1.msra.mxu0 0.0
    %5786 = vmatprep.subr.mxu0 0.0
    %5787 = vmatpush1.msra.mxu0 0.0
    %5788 = vmatprep.subr.mxu0 0.0
    %5789 = vmatpush1.msra.mxu0 0.0
    %5790 = vmatprep.subr.mxu0 0.0
    %5791 = vmatpush1.msra.mxu0 0.0
    %5792 = vmatprep.subr.mxu0 0.0
    %5793 = vmatpush1.msra.mxu0 0.0
    %5794 = vmatprep.subr.mxu0 0.0
    %5795 = vmatpush1.msra.mxu0 %v5759
    %5796 = vmatprep.subr.mxu0 0.0
    %5797 = vmatpush1.msra.mxu0 %v5758
    %5798 = vmatprep.subr.mxu0 0.0
    %5799 = vmatpush2.msra.mxu0 0.0
    %5800 = vmatprep.subr.mxu0 0.0
    %5801 = vmatpush2.msra.mxu0 0.0
    %5802 = vmatprep.subr.mxu0 0.0
    %5803 = vmatpush2.msra.mxu0 0.0
    %5804 = vmatprep.subr.mxu0 0.0
    %5805 = vmatpush2.msra.mxu0 0.0
    %5806 = vmatprep.subr.mxu0 0.0
    %5807 = vmatpush2.msra.mxu0 0.0
    %5808 = vmatprep.subr.mxu0 0.0
    %5809 = vmatpush2.msra.mxu0 0.0
    %5810 = vmatprep.subr.mxu0 0.0
    %5811 = vmatpush2.msra.mxu0 0.0
    %5812 = vmatprep.subr.mxu0 0.0
    %5813 = vmatpush2.msra.mxu0 0.0
    %5814 = vmatprep.subr.mxu0 0.0
    %5815 = vmatpush2.msra.mxu0 0.0
    %5816 = vmatprep.subr.mxu0 0.0
    %5817 = vmatpush2.msra.mxu0 0.0
    %5818 = vmatprep.subr.mxu0 0.0
    %5819 = vmatpush2.msra.mxu0 0.0
    %5820 = vmatprep.subr.mxu0 0.0
    %5821 = vmatpush2.msra.mxu0 0.0
    %5822 = vmatprep.subr.mxu0 0.0
    %5823 = vmatpush2.msra.mxu0 0.0
    %5824 = vmatprep.subr.mxu0 0.0
    %5825 = vmatpush2.msra.mxu0 0.0
    %5826 = vmatprep.subr.mxu0 0.0
    %5827 = vmatpush2.msra.mxu0 0.0
    %5828 = vmatprep.subr.mxu0 0.0
    %5829 = vmatpush2.msra.mxu0 0.0
    %5830 = vmatprep.mubr.f32.mxu0 0.0
    %5831 = vmatmul.mubr.f32.gmra.mxu0 %v5764
    %v5832 = vpop.f32.mrf.mxu0
    %v5833 = vadd.f32 0.0, %v5832
    %v5834 = vpop.f32.mrf.mxu0
    %5835 = vdwg.mxu0
    %v5836 = vld [vmem:[%s18] sm:$0xff]
    %v5837 = vld [vmem:[%s18 + $0x8] sm:$0xff]
    %v5838 = vld [vmem:[%s18 + $0x10] sm:$0xff]
    %v5839 = vld [vmem:[%s18 + $0x18] sm:$0xff]
    %v5840 = vld [vmem:[%s19] sm:$0x1]
    %v5842 = vlaneseq
    %v5843 = vshrl.u32 %v5842, 7
    %v5844 = vsub.s32 0, %v5843
    %v5845 = vrot.slane %v5840, %v5844
    %v5848 = vsel %vm275, %v5833, 0
    %5850 = vmatprep.subr.mxu0 0.0
    %5851 = vmatpush1.msra.mxu0 0.0
    %5852 = vmatprep.subr.mxu0 0.0
    %5853 = vmatpush1.msra.mxu0 0.0
    %5854 = vmatprep.subr.mxu0 0.0
    %5855 = vmatpush1.msra.mxu0 0.0
    %5856 = vmatprep.subr.mxu0 0.0
    %5857 = vmatpush1.msra.mxu0 0.0
    %5858 = vmatprep.subr.mxu0 0.0
    %5859 = vmatpush1.msra.mxu0 0.0
    %5860 = vmatprep.subr.mxu0 0.0
    %5861 = vmatpush1.msra.mxu0 0.0
    %5862 = vmatprep.subr.mxu0 0.0
    %5863 = vmatpush1.msra.mxu0 0.0
    %5864 = vmatprep.subr.mxu0 0.0
    %5865 = vmatpush1.msra.mxu0 0.0
    %5866 = vmatprep.subr.mxu0 0.0
    %5867 = vmatpush1.msra.mxu0 0.0
    %5868 = vmatprep.subr.mxu0 0.0
    %5869 = vmatpush1.msra.mxu0 0.0
    %5870 = vmatprep.subr.mxu0 0.0
    %5871 = vmatpush1.msra.mxu0 0.0
    %5872 = vmatprep.subr.mxu0 0.0
    %5873 = vmatpush1.msra.mxu0 0.0
    %5874 = vmatprep.subr.mxu0 0.0
    %5875 = vmatpush1.msra.mxu0 %v5839
    %5876 = vmatprep.subr.mxu0 0.0
    %5877 = vmatpush1.msra.mxu0 %v5838
    %5878 = vmatprep.subr.mxu0 0.0
    %5879 = vmatpush1.msra.mxu0 %v5837
    %5880 = vmatprep.subr.mxu0 0.0
    %5881 = vmatpush1.msra.mxu0 %v5836
    %5882 = vmatprep.subr.mxu0 0.0
    %5883 = vmatpush2.msra.mxu0 0.0
    %5884 = vmatprep.subr.mxu0 0.0
    %5885 = vmatpush2.msra.mxu0 0.0
    %5886 = vmatprep.subr.mxu0 0.0
    %5887 = vmatpush2.msra.mxu0 0.0
    %5888 = vmatprep.subr.mxu0 0.0
    %5889 = vmatpush2.msra.mxu0 0.0
    %5890 = vmatprep.subr.mxu0 0.0
    %5891 = vmatpush2.msra.mxu0 0.0
    %5892 = vmatprep.subr.mxu0 0.0
    %5893 = vmatpush2.msra.mxu0 0.0
    %5894 = vmatprep.subr.mxu0 0.0
    %5895 = vmatpush2.msra.mxu0 0.0
    %5896 = vmatprep.subr.mxu0 0.0
    %5897 = vmatpush2.msra.mxu0 0.0
    %5898 = vmatprep.subr.mxu0 0.0
    %5899 = vmatpush2.msra.mxu0 0.0
    %5900 = vmatprep.subr.mxu0 0.0
    %5901 = vmatpush2.msra.mxu0 0.0
    %5902 = vmatprep.subr.mxu0 0.0
    %5903 = vmatpush2.msra.mxu0 0.0
    %5904 = vmatprep.subr.mxu0 0.0
    %5905 = vmatpush2.msra.mxu0 0.0
    %5906 = vmatprep.subr.mxu0 0.0
    %5907 = vmatpush2.msra.mxu0 0.0
    %5908 = vmatprep.subr.mxu0 0.0
    %5909 = vmatpush2.msra.mxu0 0.0
    %5910 = vmatprep.subr.mxu0 0.0
    %5911 = vmatpush2.msra.mxu0 0.0
    %5912 = vmatprep.subr.mxu0 0.0
    %5913 = vmatpush2.msra.mxu0 0.0
    %5914 = vmatprep.mubr.f32.mxu0 0.0
    %5915 = vmatmul.mubr.f32.gmra.mxu0 %v5848
    %v5916 = vpop.f32.mrf.mxu0
    %v5917 = vadd.f32 %v5845, %v5916
    %v5918 = vpop.f32.mrf.mxu0
    %5919 = vdwg.mxu0
    %v5920 = vmax.f32 %v5917, 0.0
    %v5921 = vld [vmem:[%s20] sm:$0xff]
    %v5922 = vld [vmem:[%s20 + $0x8] sm:$0xff]
    %v5923 = vld [vmem:[%s20 + $0x10] sm:$0xff]
    %v5924 = vld [vmem:[%s20 + $0x18] sm:$0xff]
    %v5925 = vld [vmem:[#allocation3] sm:$0x1]
    %v5927 = vlaneseq
    %v5928 = vshrl.u32 %v5927, 7
    %v5929 = vsub.s32 0, %v5928
    %v5930 = vrot.slane %v5925, %v5929
    %v5933 = vsel %vm275, %v5920, 0
    %5935 = vmatprep.subr.mxu0 0.0
    %5936 = vmatpush1.msra.mxu0 0.0
    %5937 = vmatprep.subr.mxu0 0.0
    %5938 = vmatpush1.msra.mxu0 0.0
    %5939 = vmatprep.subr.mxu0 0.0
    %5940 = vmatpush1.msra.mxu0 0.0
    %5941 = vmatprep.subr.mxu0 0.0
    %5942 = vmatpush1.msra.mxu0 0.0
    %5943 = vmatprep.subr.mxu0 0.0
    %5944 = vmatpush1.msra.mxu0 0.0
    %5945 = vmatprep.subr.mxu0 0.0
    %5946 = vmatpush1.msra.mxu0 0.0
    %5947 = vmatprep.subr.mxu0 0.0
    %5948 = vmatpush1.msra.mxu0 0.0
    %5949 = vmatprep.subr.mxu0 0.0
    %5950 = vmatpush1.msra.mxu0 0.0
    %5951 = vmatprep.subr.mxu0 0.0
    %5952 = vmatpush1.msra.mxu0 0.0
    %5953 = vmatprep.subr.mxu0 0.0
    %5954 = vmatpush1.msra.mxu0 0.0
    %5955 = vmatprep.subr.mxu0 0.0
    %5956 = vmatpush1.msra.mxu0 0.0
    %5957 = vmatprep.subr.mxu0 0.0
    %5958 = vmatpush1.msra.mxu0 0.0
    %5959 = vmatprep.subr.mxu0 0.0
    %5960 = vmatpush1.msra.mxu0 %v5924
    %5961 = vmatprep.subr.mxu0 0.0
    %5962 = vmatpush1.msra.mxu0 %v5923
    %5963 = vmatprep.subr.mxu0 0.0
    %5964 = vmatpush1.msra.mxu0 %v5922
    %5965 = vmatprep.subr.mxu0 0.0
    %5966 = vmatpush1.msra.mxu0 %v5921
    %5967 = vmatprep.subr.mxu0 0.0
    %5968 = vmatpush2.msra.mxu0 0.0
    %5969 = vmatprep.subr.mxu0 0.0
    %5970 = vmatpush2.msra.mxu0 0.0
    %5971 = vmatprep.subr.mxu0 0.0
    %5972 = vmatpush2.msra.mxu0 0.0
    %5973 = vmatprep.subr.mxu0 0.0
    %5974 = vmatpush2.msra.mxu0 0.0
    %5975 = vmatprep.subr.mxu0 0.0
    %5976 = vmatpush2.msra.mxu0 0.0
    %5977 = vmatprep.subr.mxu0 0.0
    %5978 = vmatpush2.msra.mxu0 0.0
    %5979 = vmatprep.subr.mxu0 0.0
    %5980 = vmatpush2.msra.mxu0 0.0
    %5981 = vmatprep.subr.mxu0 0.0
    %5982 = vmatpush2.msra.mxu0 0.0
    %5983 = vmatprep.subr.mxu0 0.0
    %5984 = vmatpush2.msra.mxu0 0.0
    %5985 = vmatprep.subr.mxu0 0.0
    %5986 = vmatpush2.msra.mxu0 0.0
    %5987 = vmatprep.subr.mxu0 0.0
    %5988 = vmatpush2.msra.mxu0 0.0
    %5989 = vmatprep.subr.mxu0 0.0
    %5990 = vmatpush2.msra.mxu0 0.0
    %5991 = vmatprep.subr.mxu0 0.0
    %5992 = vmatpush2.msra.mxu0 0.0
    %5993 = vmatprep.subr.mxu0 0.0
    %5994 = vmatpush2.msra.mxu0 0.0
    %5995 = vmatprep.subr.mxu0 0.0
    %5996 = vmatpush2.msra.mxu0 0.0
    %5997 = vmatprep.subr.mxu0 0.0
    %5998 = vmatpush2.msra.mxu0 0.0
    %5999 = vmatprep.mubr.f32.mxu0 0.0
    %6000 = vmatmul.mubr.f32.gmra.mxu0 %v5933
    %v6001 = vpop.f32.mrf.mxu0
    %v6002 = vadd.f32 %v5930, %v6001
    %v6003 = vpop.f32.mrf.mxu0
    %6004 = vdwg.mxu0
    %vm6005 = vcmask 1024
    %6006 = vst.msk [vmem:[%s23] sm:$0x3] %vm6005, %v6002
    // Predicated region
    $region98: #{tpu_custom_call.1} parent=1 // pred_check
      _
    $region99: #{tpu_custom_call.1} parent=1 // pred_check_branch
      %6008 = sbr.rel (0) target = $region101
    $region100: #{tpu_custom_call.1} parent=1 // pred_region
      %s6010 = ssub.s32 256, 256
      %6011 = vsyncadd [#allocation5], %s6010
      %s6012 = sshll.u32 [#allocation9], 4
      %s6013 = int_to_ptr.vmem [resolvable:$true] %s6012
      %6018 = dma.vmem_to_hbm [thread:$0]  %s6013, 256, %s22, [#allocation5], 128, 128, 8
    $region101: #{tpu_custom_call.1} parent=1 // pred_fallthru
      _
    // Predicated region
    $region102: #{tpu_custom_call.1} parent=1 // pred_check
      _
    $region103: #{tpu_custom_call.1} parent=1 // pred_check_branch
      %6020 = sbr.rel (0) target = $region105
    $region104: #{tpu_custom_call.1} parent=1 // pred_region
      _
    $region105: #{tpu_custom_call.1} parent=1 // pred_fallthru
      _
    // Predicated region
    $region106: #{tpu_custom_call.1} parent=1 // pred_check
      _
    $region107: #{tpu_custom_call.1} parent=1 // pred_check_branch
      %6022 = sbr.rel (0) target = $region109
    $region108: #{tpu_custom_call.1} parent=1 // pred_region
      %6023 = dma.done [#allocation5], 256
    $region109: #{tpu_custom_call.1} parent=1 // pred_fallthru
      _
    // Predicated region
    $region110: #{tpu_custom_call.1} parent=1 // pred_check
      _
    $region111: #{tpu_custom_call.1} parent=1 // pred_check_branch
      %6025 = sbr.rel (0) target = $region113
    $region112: #{tpu_custom_call.1} parent=1 // pred_region
      _
    $region113: #{tpu_custom_call.1} parent=1 // pred_fallthru
      _
    %6026 = vsyncpa [#allocation5], 1
    %6027 = vsyncpa [#allocation6], 1
    %6028 = vsyncpa [#allocation8], 1

</llo_original>
